<compile_context>
chip_gen: v7x
topology: tpu7x:2x2x1
jax: 0.10.0
libtpu: 0.0.40
codegen_flags: <defaults>
</compile_context>

<pallas_src>
import math
from functools import partial

import jax
import jax.numpy as jnp
from jax import lax
from jax.experimental import pallas as pl
from jax.experimental.pallas import tpu as pltpu

_LANES = 128
# Conservative fused-chain VMEM budget that fits every generation's scoped
# default (v5e 16 MiB, v6e 32 MiB, v7x 32/64 MiB) without an explicit limit.
_FUSED_VMEM_BUDGET = 14 * 1024 * 1024


def _round_up(x, m):
    return (x + m - 1) // m * m


# ----------------------------------------------------------------------------
# Weight / bias preparation (pure JAX, tiny tensors).
# ----------------------------------------------------------------------------
def _prep_stem_w(w, kp, cp):
    # [Cout, Cin, KH, KW] -> [KH*KW*Cin, Cout] tap-major rows, zero padded.
    cout, cin, kh, kw = w.shape
    k = cin * kh * kw
    wm = jnp.transpose(w, (2, 3, 1, 0)).reshape(k, cout)
    wm = jnp.pad(wm, ((0, kp - k), (0, cp - cout)))
    return wm.astype(jnp.bfloat16)


def _prep_res_w_flat(w, cp):
    # [Cout, Cin, 3, 3] -> [9*Cp, Cp] tap-major deep-K weight, zero padded.
    # Row index = tap * Cp + cin, matching the in-kernel lane-concat of taps.
    cout, cin, kh, kw = w.shape
    wt = jnp.transpose(w, (2, 3, 1, 0))                      # [3, 3, Cin, Cout]
    wt = jnp.pad(wt, ((0, 0), (0, 0), (0, cp - cin), (0, cp - cout)))
    return wt.reshape(kh * kw * cp, cp).astype(jnp.bfloat16)


# ----------------------------------------------------------------------------
# Stem conv: tap-major im2col + tiled fused matmul kernel.
# ----------------------------------------------------------------------------
def _stem_kernel(p_ref, w_ref, b_ref, o_ref):
    acc = jnp.dot(p_ref[...], w_ref[...], preferred_element_type=jnp.float32)
    o_ref[...] = (acc + b_ref[...]).astype(o_ref.dtype)


def _im2col(x, kh, kw, stride, pad):
    """Tap-major im2col: feature order (kh*kw, Cin), so no patch transpose."""
    N, H, W, C = x.shape
    xp = jnp.pad(x, ((0, 0), (pad, pad), (pad, pad), (0, 0)))
    Ho = (H + 2 * pad - kh) // stride + 1
    Wo = (W + 2 * pad - kw) // stride + 1
    cols = []
    for i in range(kh):
        for j in range(kw):
            cols.append(xp[:, i:i + Ho * stride:stride, j:j + Wo * stride:stride, :])
    pats = jnp.stack(cols, axis=3)                           # [N, Ho, Wo, KH*KW, C]
    return pats.reshape(N * Ho * Wo, kh * kw * C), (N, Ho, Wo)


def stem_conv_pallas(x_nhwc, w, b, *, stride, padding, cp, tm=1024):
    # TODO(synk): at production resolutions fuse the 5x5/s2 patch extraction
    # into the kernel (strided shifted matmuls) instead of materializing the
    # XLA im2col tensor; at the small shapes exercised here it is negligible.
    cout, cin, kh, kw = w.shape
    patches, (N, Ho, Wo) = _im2col(x_nhwc.astype(jnp.bfloat16), kh, kw,
                                   stride, padding)
    M, K = patches.shape
    Kp = _round_up(K, _LANES)
    if M <= tm:
        TM = Mp = _round_up(M, 16)       # bf16 packs 16 sublanes per vreg
    else:
        TM = tm
        Mp = _round_up(M, TM)
    patches = jnp.pad(patches, ((0, Mp - M), (0, Kp - K)))
    w_mat = _prep_stem_w(w, Kp, cp)
    b_mat = jnp.pad(b, (0, cp - cout)).reshape(1, cp).astype(jnp.float32)

    out = pl.pallas_call(
        _stem_kernel,
        out_shape=jax.ShapeDtypeStruct((Mp, cp), jnp.bfloat16),
        grid=(Mp // TM,),
        in_specs=[pl.BlockSpec((TM, Kp), lambda i: (i, 0)),
                  pl.BlockSpec((Kp, cp), lambda i: (0, 0)),
                  pl.BlockSpec((1, cp), lambda i: (0, 0))],
        out_specs=pl.BlockSpec((TM, cp), lambda i: (i, 0)),
        compiler_params=pltpu.CompilerParams(
            dimension_semantics=("parallel",)),
        cost_estimate=pl.CostEstimate(
            flops=2 * Mp * Kp * cp, transcendentals=0,
            bytes_accessed=2 * (Mp * Kp + Kp * cp + Mp * cp) + 4 * cp),
    )(patches, w_mat, b_mat)
    return out[:M].reshape(N, Ho, Wo, cp)


# ----------------------------------------------------------------------------
# Fused residual-chain kernel: the whole image and all six conv weights stay in
# VMEM; 3 residual blocks + FeaEncoder's final `out + x` in one pallas_call.
# ----------------------------------------------------------------------------
def _res_chain_kernel(H, W, Cp, n_blocks,
                      x_ref, w_ref, b_ref, o_ref, buf_in, buf_mid):
    """Flat "padded-width" layout: padded pixel (py, px) lives at flat row
    py*Wp + px (Wp = W + 2) of a [Rbuf, Cp] scratch.  A 3x3 tap (di, dj) is
    then the contiguous slice starting at di*Wp + dj, so all nine taps are
    lane-concatenated into one [R, 9*Cp] patch matrix and each conv is a
    single deep-K MXU matmul.  The conv is evaluated at R = H*Wp positions;
    the 2 garbage columns per row fall exactly on the zero-border slots of the
    next padded buffer and are masked to zero there."""
    Wp = W + 2
    R = H * Wp
    INT = Wp + 1                              # flat offset of interior pixel (0, 0)
    Rbuf = buf_in.shape[0]
    offs = [di * Wp + dj for di in range(3) for dj in range(3)]

    # Top/bottom border rows are never overwritten by the interior stores, so
    # zero them here.  Done unconditionally: it is tiny and keeps the kernel
    # correct under any megacore split of the (parallel) batch grid.
    for buf in (buf_in, buf_mid):
        buf[0:INT, :] = jnp.zeros((INT, Cp), jnp.bfloat16)
        buf[INT + R:Rbuf, :] = jnp.zeros((Rbuf - INT - R, Cp), jnp.bfloat16)

    # Stage this image into the padded flat layout (2 zero cols appended per
    # row); the stem activation block is already resident in VMEM.
    x = x_ref[0]                                                 # [H, W, Cp] bf16
    x_flat = jnp.concatenate(
        [x, jnp.zeros((H, 2, Cp), jnp.bfloat16)], axis=1).reshape(R, Cp)

    # Columns W, W+1 of every flat row are border/garbage positions.
    col = lax.broadcasted_iota(jnp.int32, (R, 1), 0) % Wp
    valid = col < W

    def conv3x3(src_ref, k):
        # Nine contiguous tap slices -> one [R, 9*Cp] patch matrix -> one
        # deep-K matmul.  (Per-tap K stays Cp lanes; real-channel packing
        # would need lane-offset partial stores and the MXU has slack here.)
        pats = jnp.concatenate([src_ref[o:o + R, :] for o in offs], axis=1)
        return (jnp.dot(pats, w_ref[k], preferred_element_type=jnp.float32)
                + b_ref[k:k + 1, :])

    cur = x_flat                               # current block input (flat bf16)
    buf_in[INT:INT + R, :] = cur
    res = None
    for blk in range(n_blocks):
        # conv1 -> ReLU; garbage columns are zeroed so they double as conv2's
        # zero padding when stored into buf_mid's interior.
        a1 = jnp.maximum(conv3x3(buf_in, 2 * blk), 0.0)
        a1 = jnp.where(valid, a1, 0.0)
        buf_mid[INT:INT + R, :] = a1.astype(jnp.bfloat16)
        # conv2 + skip (skip == the block input, already resident as `cur`).
        res = conv3x3(buf_mid, 2 * blk + 1) + cur.astype(jnp.float32)
        if blk + 1 < n_blocks:
            cur = jnp.where(valid, res, 0.0).astype(jnp.bfloat16)
            buf_in[INT:INT + R, :] = cur

    # FeaEncoder epilogue: + stem activation, drop garbage columns, store.
    out = res.reshape(H, Wp, Cp)[:, :W, :] + x.astype(jnp.float32)
    o_ref[0] = out.astype(o_ref.dtype)


def residual_chain_pallas(h, ws, bs):
    """h: [N, H, W, Cp] channel-padded bf16 stem output.
    ws/bs: interleaved [conv1, conv2] * n_blocks weights / biases."""
    N, H, W, Cp = h.shape
    n_blocks = len(ws) // 2
    Wp = W + 2
    R = H * Wp
    # +2 rows so the tap slices feeding garbage output positions never read
    # out of bounds; rounded to 16 for clean bf16 sublane tiling.
    Rbuf = _round_up((H + 2) * Wp + 2, 16)

    w_all = jnp.stack([_prep_res_w_flat(w, Cp) for w in ws])      # [2n, 9*Cp, Cp]
    b_all = jnp.stack([jnp.pad(b, (0, Cp - b.shape[0])) for b in bs]
                      ).astype(jnp.float32)                       # [2n, Cp]

    # Fused-chain path keeps one image (double-buffered in/out), both staging
    # buffers and all conv weights resident in VMEM.
    act_bytes = H * W * Cp * 2
    need = (4 * act_bytes + 2 * w_all.size * 2 + 2 * b_all.size * 4
            + 2 * Rbuf * Cp * 2)
    if need > _FUSED_VMEM_BUDGET:
        # TODO(synk): row-tiled per-block fallback (haloed manual DMA) for
        # resolutions where a whole image no longer fits in VMEM.
        raise NotImplementedError("activation too large for fused residual chain")

    kernel = partial(_res_chain_kernel, H, W, Cp, n_blocks)
    flops = 2 * (2 * n_blocks) * N * R * (9 * Cp) * Cp
    bytes_accessed = 2 * (2 * N * H * W * Cp + w_all.size) + 4 * b_all.size

    # TODO(synk): for N == 1 on v7x split the row axis into a second
    # "parallel" grid dimension so both TensorCores get work.
    return pl.pallas_call(
        kernel,
        out_shape=jax.ShapeDtypeStruct((N, H, W, Cp), jnp.bfloat16),
        grid=(N,),
        in_specs=[pl.BlockSpec((1, H, W, Cp), lambda n: (n, 0, 0, 0)),
                  pl.BlockSpec((2 * n_blocks, 9 * Cp, Cp), lambda n: (0, 0, 0)),
                  pl.BlockSpec((2 * n_blocks, Cp), lambda n: (0, 0))],
        out_specs=pl.BlockSpec((1, H, W, Cp), lambda n: (n, 0, 0, 0)),
        scratch_shapes=[pltpu.VMEM((Rbuf, Cp), jnp.bfloat16),   # block input (padded flat)
                        pltpu.VMEM((Rbuf, Cp), jnp.bfloat16)],  # relu(conv1) (padded flat)
        compiler_params=pltpu.CompilerParams(
            dimension_semantics=("parallel",)),
        cost_estimate=pl.CostEstimate(flops=flops, transcendentals=0,
                                      bytes_accessed=bytes_accessed),
    )(h.astype(jnp.bfloat16), w_all, b_all)


# ----------------------------------------------------------------------------
# FeaEncoder forward (Pallas). Input / output are NCHW like the PyTorch module.
# ----------------------------------------------------------------------------
def fea_encoder_pallas(x_nchw, params, *, kernel_size=5, stride=2):
    x = jnp.transpose(x_nchw, (0, 2, 3, 1))                 # NCHW -> NHWC
    cw, cb = params["conv"]
    cout = cw.shape[0]
    cp = _round_up(cout, _LANES)                             # lane-dense channel pad

    h = stem_conv_pallas(x, cw, cb, stride=stride,
                         padding=kernel_size // 2, cp=cp)

    ws, bs = [], []
    for i in range(3):
        w1, b1, w2, b2 = params[f"res{i}"]
        ws += [w1, w2]
        bs += [b1, b2]
    out = residual_chain_pallas(h, ws, bs)

    out = out[..., :cout].astype(jnp.float32)
    return jnp.transpose(out, (0, 3, 1, 2))                  # NHWC -> NCHW


# ----------------------------------------------------------------------------
# Pure-JAX reference (lax.conv, f32) for correctness checking.
# ----------------------------------------------------------------------------
def _conv_ref(x_nhwc, w_oihw, b, stride, padding):
    w_hwio = jnp.transpose(w_oihw, (2, 3, 1, 0))
    y = lax.conv_general_dilated(
        x_nhwc, w_hwio, (stride, stride),
        [(padding, padding), (padding, padding)],
        dimension_numbers=("NHWC", "HWIO", "NHWC"))
    return y + b.reshape(1, 1, 1, -1)


def fea_encoder_ref(x_nchw, params, *, kernel_size=5, stride=2):
    x = jnp.transpose(x_nchw, (0, 2, 3, 1))
    cw, cb = params["conv"]
    h = _conv_ref(x, cw, cb, stride, kernel_size // 2)
    out = h
    for i in range(3):
        w1, b1, w2, b2 = params[f"res{i}"]
        t = jnp.maximum(_conv_ref(out, w1, b1, 1, 1), 0.0)
        out = _conv_ref(t, w2, b2, 1, 1) + out
    out = out + h
    return jnp.transpose(out, (0, 3, 1, 2))


# ----------------------------------------------------------------------------
# Deterministic parameter init (PyTorch-style uniform fan-in scaling).
# ----------------------------------------------------------------------------
def init_params(key, in_ch, out_ch, kernel_size):
    def init_conv(k, cout, cin, ks):
        kw, kb = jax.random.split(k)
        scale = 1.0 / math.sqrt(cin * ks * ks)
        w = jax.random.uniform(kw, (cout, cin, ks, ks), jnp.float32, -scale, scale)
        b = jax.random.uniform(kb, (cout,), jnp.float32, -scale, scale)
        return w, b

    keys = jax.random.split(key, 7)
    params = {"conv": init_conv(keys[0], out_ch, in_ch, kernel_size)}
    for i in range(3):
        w1, b1 = init_conv(keys[1 + 2 * i], out_ch, out_ch, 3)
        w2, b2 = init_conv(keys[2 + 2 * i], out_ch, out_ch, 3)
        params[f"res{i}"] = (w1, b1, w2, b2)
    return params


if __name__ == "__main__":
    key = jax.random.PRNGKey(0)
    N, Cin, H, W = 2, 3, 16, 16        # small NCHW input (module default in_ch=3)
    Cout = 64                          # module default out_ch

    kx, kp = jax.random.split(key)
    x = jax.random.normal(kx, (N, Cin, H, W), jnp.float32)
    params = init_params(kp, Cin, Cout, kernel_size=5)

    run = jax.jit(fea_encoder_pallas)
    out = jax.block_until_ready(run(x, params))

    ref = fea_encoder_ref(x, params)
    assert out.shape == (N, Cout, H // 2, W // 2), out.shape
    # bf16 activation/weight streams (f32 accumulation) => ~1e-2 level agreement.
    assert jnp.allclose(out, ref, rtol=5e-2, atol=5e-2), float(
        jnp.max(jnp.abs(out - ref)))

    print("KERNEL_OK")
</pallas_src>

<mosaic_0001>
module attributes {stable_mosaic.version = 11 : i64} {
  func.func @_stem_kernel(%arg0: i32, %arg1: memref<128x128xbf16, #tpu.memory_space<vmem>>, %arg2: memref<128x128xbf16, #tpu.memory_space<vmem>>, %arg3: memref<1x128xf32, #tpu.memory_space<vmem>>, %arg4: memref<128x128xbf16, #tpu.memory_space<vmem>>) attributes {dimension_semantics = [#tpu.dimension_semantics<parallel>], iteration_bounds = array<i64: 1>, scalar_prefetch = 0 : i64, scratch_operands = 0 : i64, tpu.core_type = #tpu.core_type<tc>, window_params = [{transform_indices = @transform_0, window_bounds = array<i64: 128, 128>}, {pipeline_mode = #tpu.pipeline_mode<synchronous>, transform_indices = @transform_1, window_bounds = array<i64: 128, 128>}, {pipeline_mode = #tpu.pipeline_mode<synchronous>, transform_indices = @transform_2, window_bounds = array<i64: 1, 128>}, {transform_indices = @transform_3, window_bounds = array<i64: 128, 128>}]} {
    %c0 = arith.constant 0 : index
    %c0_0 = arith.constant 0 : index
    %0 = vector.load %arg1[%c0, %c0_0] : memref<128x128xbf16, #tpu.memory_space<vmem>>, vector<128x128xbf16>
    %c0_1 = arith.constant 0 : index
    %c0_2 = arith.constant 0 : index
    %1 = vector.load %arg2[%c0_1, %c0_2] : memref<128x128xbf16, #tpu.memory_space<vmem>>, vector<128x128xbf16>
    %cst = arith.constant dense<0.000000e+00> : vector<128x128xf32>
    %2 = tpu.matmul %0, %1, %cst {dimension_numbers = #tpu.dot_dimension_numbers<[1], [0], [0], [1], [0, 0, 1, 1], [], []>} : vector<128x128xbf16>, vector<128x128xbf16>, vector<128x128xf32> -> vector<128x128xf32>
    %c0_3 = arith.constant 0 : index
    %c0_4 = arith.constant 0 : index
    %3 = vector.load %arg3[%c0_3, %c0_4] : memref<1x128xf32, #tpu.memory_space<vmem>>, vector<1x128xf32>
    %4 = vector.broadcast %3 : vector<1x128xf32> to vector<128x128xf32>
    %5 = arith.addf %2, %4 : vector<128x128xf32>
    %6 = arith.truncf %5 : vector<128x128xf32> to vector<128x128xbf16>
    %c0_5 = arith.constant 0 : index
    %c0_6 = arith.constant 0 : index
    %7 = vector.load %arg4[%c0_5, %c0_6] : memref<128x128xbf16, #tpu.memory_space<vmem>>, vector<128x128xbf16>
    tpu.vector_store %arg4[%c0_5, %c0_6], %6 {strides = array<i32>} : memref<128x128xbf16, #tpu.memory_space<vmem>>, vector<128x128xbf16>,
    return
  }
  func.func @transform_0(%arg0: i32) -> (i32, i32) {
    %c0_i32 = arith.constant 0 : i32
    %c0_i32_0 = arith.constant 0 : i32
    return %arg0, %c0_i32 : i32, i32
  }
  func.func @transform_1(%arg0: i32) -> (i32, i32) {
    %c0_i32 = arith.constant 0 : i32
    %c0_i32_0 = arith.constant 0 : i32
    %c0_i32_1 = arith.constant 0 : i32
    return %c0_i32, %c0_i32_0 : i32, i32
  }
  func.func @transform_2(%arg0: i32) -> (i32, i32) {
    %c0_i32 = arith.constant 0 : i32
    %c0_i32_0 = arith.constant 0 : i32
    %c0_i32_1 = arith.constant 0 : i32
    return %c0_i32, %c0_i32_0 : i32, i32
  }
  func.func @transform_3(%arg0: i32) -> (i32, i32) {
    %c0_i32 = arith.constant 0 : i32
    %c0_i32_0 = arith.constant 0 : i32
    return %arg0, %c0_i32 : i32, i32
  }
}

module attributes {stable_mosaic.version = 11 : i64} {
  func.func @_res_chain_kernel(%arg0: i32, %arg1: memref<1x8x8x128xbf16, #tpu.memory_space<vmem>>, %arg2: memref<6x1152x128xbf16, #tpu.memory_space<vmem>>, %arg3: memref<6x128xf32, #tpu.memory_space<vmem>>, %arg4: memref<1x8x8x128xbf16, #tpu.memory_space<vmem>>, %arg5: memref<112x128xbf16, #tpu.memory_space<vmem>>, %arg6: memref<112x128xbf16, #tpu.memory_space<vmem>>) attributes {dimension_semantics = [#tpu.dimension_semantics<parallel>], iteration_bounds = array<i64: 2>, scalar_prefetch = 0 : i64, scratch_operands = 2 : i64, tpu.core_type = #tpu.core_type<tc>, window_params = [{transform_indices = @transform_0, window_bounds = array<i64: 1, 8, 8, 128>}, {pipeline_mode = #tpu.pipeline_mode<synchronous>, transform_indices = @transform_1, window_bounds = array<i64: 6, 1152, 128>}, {pipeline_mode = #tpu.pipeline_mode<synchronous>, transform_indices = @transform_2, window_bounds = array<i64: 6, 128>}, {transform_indices = @transform_3, window_bounds = array<i64: 1, 8, 8, 128>}]} {
    %cst = arith.constant 0.000000e+00 : bf16
    %0 = vector.broadcast %cst : bf16 to vector<11x128xbf16>
    %c0 = arith.constant 0 : index
    %c0_0 = arith.constant 0 : index
    %1 = vector.load %arg5[%c0, %c0_0] : memref<112x128xbf16, #tpu.memory_space<vmem>>, vector<11x128xbf16>
    tpu.vector_store %arg5[%c0, %c0_0], %0 {strides = array<i32>} : memref<112x128xbf16, #tpu.memory_space<vmem>>, vector<11x128xbf16>,
    %cst_1 = arith.constant 0.000000e+00 : bf16
    %2 = vector.broadcast %cst_1 : bf16 to vector<21x128xbf16>
    %c91 = arith.constant 91 : index
    %c0_2 = arith.constant 0 : index
    %3 = vector.load %arg5[%c91, %c0_2] : memref<112x128xbf16, #tpu.memory_space<vmem>>, vector<21x128xbf16>
    tpu.vector_store %arg5[%c91, %c0_2], %2 {strides = array<i32>} : memref<112x128xbf16, #tpu.memory_space<vmem>>, vector<21x128xbf16>,
    %cst_3 = arith.constant 0.000000e+00 : bf16
    %4 = vector.broadcast %cst_3 : bf16 to vector<11x128xbf16>
    %c0_4 = arith.constant 0 : index
    %c0_5 = arith.constant 0 : index
    %5 = vector.load %arg6[%c0_4, %c0_5] : memref<112x128xbf16, #tpu.memory_space<vmem>>, vector<11x128xbf16>
    tpu.vector_store %arg6[%c0_4, %c0_5], %4 {strides = array<i32>} : memref<112x128xbf16, #tpu.memory_space<vmem>>, vector<11x128xbf16>,
    %cst_6 = arith.constant 0.000000e+00 : bf16
    %6 = vector.broadcast %cst_6 : bf16 to vector<21x128xbf16>
    %c91_7 = arith.constant 91 : index
    %c0_8 = arith.constant 0 : index
    %7 = vector.load %arg6[%c91_7, %c0_8] : memref<112x128xbf16, #tpu.memory_space<vmem>>, vector<21x128xbf16>
    tpu.vector_store %arg6[%c91_7, %c0_8], %6 {strides = array<i32>} : memref<112x128xbf16, #tpu.memory_space<vmem>>, vector<21x128xbf16>,
    %c0_9 = arith.constant 0 : index
    %c0_10 = arith.constant 0 : index
    %c0_11 = arith.constant 0 : index
    %c0_12 = arith.constant 0 : index
    %8 = vector.load %arg1[%c0_9, %c0_10, %c0_11, %c0_12] : memref<1x8x8x128xbf16, #tpu.memory_space<vmem>>, vector<1x8x8x128xbf16>
    %9 = vector.shape_cast %8 : vector<1x8x8x128xbf16> to vector<8x8x128xbf16>
    %cst_13 = arith.constant 0.000000e+00 : bf16
    %10 = vector.broadcast %cst_13 : bf16 to vector<8x2x128xbf16>
    %11 = tpu.concatenate %9, %10 in 1 : vector<8x8x128xbf16>, vector<8x2x128xbf16> -> vector<8x10x128xbf16>
    %12 = vector.shape_cast %11 : vector<8x10x128xbf16> to vector<80x128xbf16>
    %13 = tpu.iota {dimensions = array<i32: 0>} : vector<80x1xi32>
    %c10_i32 = arith.constant 10 : i32
    %c0_i32 = arith.constant 0 : i32
    %14 = arith.cmpi eq, %c10_i32, %c0_i32 : i32
    %c1_i32 = arith.constant 1 : i32
    %15 = arith.select %14, %c1_i32, %c10_i32 : i32
    %16 = vector.broadcast %15 : i32 to vector<80x1xi32>
    %17 = arith.remsi %13, %16 : vector<80x1xi32>
    %c0_i32_14 = arith.constant 0 : i32
    %18 = vector.broadcast %c0_i32_14 : i32 to vector<80x1xi32>
    %19 = arith.cmpi ne, %17, %18 : vector<80x1xi32>
    %c0_i32_15 = arith.constant 0 : i32
    %20 = vector.broadcast %c0_i32_15 : i32 to vector<80x1xi32>
    %21 = arith.cmpi slt, %17, %20 : vector<80x1xi32>
    %c0_i32_16 = arith.constant 0 : i32
    %22 = arith.cmpi slt, %15, %c0_i32_16 : i32
    %23 = vector.broadcast %22 : i1 to vector<80x1xi1>
    %24 = vector.broadcast %23 : vector<80x1xi1> to vector<80x1xi1>
    %25 = arith.xori %21, %24 : vector<80x1xi1>
    %26 = arith.andi %25, %19 : vector<80x1xi1>
    %27 = vector.broadcast %15 : i32 to vector<80x1xi32>
    %28 = arith.addi %17, %27 : vector<80x1xi32>
    %29 = arith.select %26, %28, %17 : vector<80x1xi1>, vector<80x1xi32>
    %c8_i32 = arith.constant 8 : i32
    %30 = vector.broadcast %c8_i32 : i32 to vector<80x1xi32>
    %31 = arith.cmpi slt, %29, %30 : vector<80x1xi32>
    %c11 = arith.constant 11 : index
    %c0_17 = arith.constant 0 : index
    %32 = vector.load %arg5[%c11, %c0_17] : memref<112x128xbf16, #tpu.memory_space<vmem>>, vector<80x128xbf16>
    tpu.vector_store %arg5[%c11, %c0_17], %12 {strides = array<i32>} : memref<112x128xbf16, #tpu.memory_space<vmem>>, vector<80x128xbf16>,
    %c0_18 = arith.constant 0 : index
    %c0_19 = arith.constant 0 : index
    %33 = vector.load %arg5[%c0_18, %c0_19] : memref<112x128xbf16, #tpu.memory_space<vmem>>, vector<80x128xbf16>
    %c1 = arith.constant 1 : index
    %c0_20 = arith.constant 0 : index
    %34 = vector.load %arg5[%c1, %c0_20] : memref<112x128xbf16, #tpu.memory_space<vmem>>, vector<80x128xbf16>
    %c2 = arith.constant 2 : index
    %c0_21 = arith.constant 0 : index
    %35 = vector.load %arg5[%c2, %c0_21] : memref<112x128xbf16, #tpu.memory_space<vmem>>, vector<80x128xbf16>
    %c10 = arith.constant 10 : index
    %c0_22 = arith.constant 0 : index
    %36 = vector.load %arg5[%c10, %c0_22] : memref<112x128xbf16, #tpu.memory_space<vmem>>, vector<80x128xbf16>
    %c11_23 = arith.constant 11 : index
    %c0_24 = arith.constant 0 : index
    %37 = vector.load %arg5[%c11_23, %c0_24] : memref<112x128xbf16, #tpu.memory_space<vmem>>, vector<80x128xbf16>
    %c12 = arith.constant 12 : index
    %c0_25 = arith.constant 0 : index
    %38 = vector.load %arg5[%c12, %c0_25] : memref<112x128xbf16, #tpu.memory_space<vmem>>, vector<80x128xbf16>
    %c20 = arith.constant 20 : index
    %c0_26 = arith.constant 0 : index
    %39 = vector.load %arg5[%c20, %c0_26] : memref<112x128xbf16, #tpu.memory_space<vmem>>, vector<80x128xbf16>
    %c21 = arith.constant 21 : index
    %c0_27 = arith.constant 0 : index
    %40 = vector.load %arg5[%c21, %c0_27] : memref<112x128xbf16, #tpu.memory_space<vmem>>, vector<80x128xbf16>
    %c22 = arith.constant 22 : index
    %c0_28 = arith.constant 0 : index
    %41 = vector.load %arg5[%c22, %c0_28] : memref<112x128xbf16, #tpu.memory_space<vmem>>, vector<80x128xbf16>
    %42 = tpu.concatenate %33, %34, %35, %36, %37, %38, %39, %40, %41 in 1 : vector<80x128xbf16>, vector<80x128xbf16>, vector<80x128xbf16>, vector<80x128xbf16>, vector<80x128xbf16>, vector<80x128xbf16>, vector<80x128xbf16>, vector<80x128xbf16>, vector<80x128xbf16> -> vector<80x1152xbf16>
    %c0_29 = arith.constant 0 : index
    %c0_30 = arith.constant 0 : index
    %c0_31 = arith.constant 0 : index
    %43 = vector.load %arg2[%c0_29, %c0_30, %c0_31] : memref<6x1152x128xbf16, #tpu.memory_space<vmem>>, vector<1x1152x128xbf16>
    %44 = vector.shape_cast %43 : vector<1x1152x128xbf16> to vector<1152x128xbf16>
    %cst_32 = arith.constant dense<0.000000e+00> : vector<80x128xf32>
    %45 = tpu.matmul %42, %44, %cst_32 {dimension_numbers = #tpu.dot_dimension_numbers<[1], [0], [0], [1], [0, 0, 1, 1], [], []>} : vector<80x1152xbf16>, vector<1152x128xbf16>, vector<80x128xf32> -> vector<80x128xf32>
    %c0_33 = arith.constant 0 : index
    %c0_34 = arith.constant 0 : index
    %46 = vector.load %arg3[%c0_33, %c0_34] : memref<6x128xf32, #tpu.memory_space<vmem>>, vector<1x128xf32>
    %47 = vector.broadcast %46 : vector<1x128xf32> to vector<80x128xf32>
    %48 = arith.addf %45, %47 : vector<80x128xf32>
    %cst_35 = arith.constant 0.000000e+00 : f32
    %49 = vector.broadcast %cst_35 : f32 to vector<80x128xf32>
    %50 = arith.maximumf %48, %49 : vector<80x128xf32>
    %cst_36 = arith.constant 0.000000e+00 : f32
    %51 = vector.shape_cast %31 : vector<80x1xi1> to vector<80x1xi1>
    %52 = vector.broadcast %51 : vector<80x1xi1> to vector<80x128xi1>
    %53 = vector.broadcast %cst_36 : f32 to vector<80x128xf32>
    %54 = arith.select %52, %50, %53 : vector<80x128xi1>, vector<80x128xf32>
    %55 = arith.truncf %54 : vector<80x128xf32> to vector<80x128xbf16>
    %c11_37 = arith.constant 11 : index
    %c0_38 = arith.constant 0 : index
    %56 = vector.load %arg6[%c11_37, %c0_38] : memref<112x128xbf16, #tpu.memory_space<vmem>>, vector<80x128xbf16>
    tpu.vector_store %arg6[%c11_37, %c0_38], %55 {strides = array<i32>} : memref<112x128xbf16, #tpu.memory_space<vmem>>, vector<80x128xbf16>,
    %c0_39 = arith.constant 0 : index
    %c0_40 = arith.constant 0 : index
    %57 = vector.load %arg6[%c0_39, %c0_40] : memref<112x128xbf16, #tpu.memory_space<vmem>>, vector<80x128xbf16>
    %c1_41 = arith.constant 1 : index
    %c0_42 = arith.constant 0 : index
    %58 = vector.load %arg6[%c1_41, %c0_42] : memref<112x128xbf16, #tpu.memory_space<vmem>>, vector<80x128xbf16>
    %c2_43 = arith.constant 2 : index
    %c0_44 = arith.constant 0 : index
    %59 = vector.load %arg6[%c2_43, %c0_44] : memref<112x128xbf16, #tpu.memory_space<vmem>>, vector<80x128xbf16>
    %c10_45 = arith.constant 10 : index
    %c0_46 = arith.constant 0 : index
    %60 = vector.load %arg6[%c10_45, %c0_46] : memref<112x128xbf16, #tpu.memory_space<vmem>>, vector<80x128xbf16>
    %c11_47 = arith.constant 11 : index
    %c0_48 = arith.constant 0 : index
    %61 = vector.load %arg6[%c11_47, %c0_48] : memref<112x128xbf16, #tpu.memory_space<vmem>>, vector<80x128xbf16>
    %c12_49 = arith.constant 12 : index
    %c0_50 = arith.constant 0 : index
    %62 = vector.load %arg6[%c12_49, %c0_50] : memref<112x128xbf16, #tpu.memory_space<vmem>>, vector<80x128xbf16>
    %c20_51 = arith.constant 20 : index
    %c0_52 = arith.constant 0 : index
    %63 = vector.load %arg6[%c20_51, %c0_52] : memref<112x128xbf16, #tpu.memory_space<vmem>>, vector<80x128xbf16>
    %c21_53 = arith.constant 21 : index
    %c0_54 = arith.constant 0 : index
    %64 = vector.load %arg6[%c21_53, %c0_54] : memref<112x128xbf16, #tpu.memory_space<vmem>>, vector<80x128xbf16>
    %c22_55 = arith.constant 22 : index
    %c0_56 = arith.constant 0 : index
    %65 = vector.load %arg6[%c22_55, %c0_56] : memref<112x128xbf16, #tpu.memory_space<vmem>>, vector<80x128xbf16>
    %66 = tpu.concatenate %57, %58, %59, %60, %61, %62, %63, %64, %65 in 1 : vector<80x128xbf16>, vector<80x128xbf16>, vector<80x128xbf16>, vector<80x128xbf16>, vector<80x128xbf16>, vector<80x128xbf16>, vector<80x128xbf16>, vector<80x128xbf16>, vector<80x128xbf16> -> vector<80x1152xbf16>
    %c1_57 = arith.constant 1 : index
    %c0_58 = arith.constant 0 : index
    %c0_59 = arith.constant 0 : index
    %67 = vector.load %arg2[%c1_57, %c0_58, %c0_59] : memref<6x1152x128xbf16, #tpu.memory_space<vmem>>, vector<1x1152x128xbf16>
    %68 = vector.shape_cast %67 : vector<1x1152x128xbf16> to vector<1152x128xbf16>
    %cst_60 = arith.constant dense<0.000000e+00> : vector<80x128xf32>
    %69 = tpu.matmul %66, %68, %cst_60 {dimension_numbers = #tpu.dot_dimension_numbers<[1], [0], [0], [1], [0, 0, 1, 1], [], []>} : vector<80x1152xbf16>, vector<1152x128xbf16>, vector<80x128xf32> -> vector<80x128xf32>
    %c1_61 = arith.constant 1 : index
    %c0_62 = arith.constant 0 : index
    %70 = vector.load %arg3[%c1_61, %c0_62] : memref<6x128xf32, #tpu.memory_space<vmem>>, vector<1x128xf32>
    %71 = vector.broadcast %70 : vector<1x128xf32> to vector<80x128xf32>
    %72 = arith.addf %69, %71 : vector<80x128xf32>
    %73 = arith.extf %12 : vector<80x128xbf16> to vector<80x128xf32>
    %74 = arith.addf %72, %73 : vector<80x128xf32>
    %cst_63 = arith.constant 0.000000e+00 : f32
    %75 = vector.shape_cast %31 : vector<80x1xi1> to vector<80x1xi1>
    %76 = vector.broadcast %75 : vector<80x1xi1> to vector<80x128xi1>
    %77 = vector.broadcast %cst_63 : f32 to vector<80x128xf32>
    %78 = arith.select %76, %74, %77 : vector<80x128xi1>, vector<80x128xf32>
    %79 = arith.truncf %78 : vector<80x128xf32> to vector<80x128xbf16>
    %c11_64 = arith.constant 11 : index
    %c0_65 = arith.constant 0 : index
    %80 = vector.load %arg5[%c11_64, %c0_65] : memref<112x128xbf16, #tpu.memory_space<vmem>>, vector<80x128xbf16>
    tpu.vector_store %arg5[%c11_64, %c0_65], %79 {strides = array<i32>} : memref<112x128xbf16, #tpu.memory_space<vmem>>, vector<80x128xbf16>,
    %c0_66 = arith.constant 0 : index
    %c0_67 = arith.constant 0 : index
    %81 = vector.load %arg5[%c0_66, %c0_67] : memref<112x128xbf16, #tpu.memory_space<vmem>>, vector<80x128xbf16>
    %c1_68 = arith.constant 1 : index
    %c0_69 = arith.constant 0 : index
    %82 = vector.load %arg5[%c1_68, %c0_69] : memref<112x128xbf16, #tpu.memory_space<vmem>>, vector<80x128xbf16>
    %c2_70 = arith.constant 2 : index
    %c0_71 = arith.constant 0 : index
    %83 = vector.load %arg5[%c2_70, %c0_71] : memref<112x128xbf16, #tpu.memory_space<vmem>>, vector<80x128xbf16>
    %c10_72 = arith.constant 10 : index
    %c0_73 = arith.constant 0 : index
    %84 = vector.load %arg5[%c10_72, %c0_73] : memref<112x128xbf16, #tpu.memory_space<vmem>>, vector<80x128xbf16>
    %c11_74 = arith.constant 11 : index
    %c0_75 = arith.constant 0 : index
    %85 = vector.load %arg5[%c11_74, %c0_75] : memref<112x128xbf16, #tpu.memory_space<vmem>>, vector<80x128xbf16>
    %c12_76 = arith.constant 12 : index
    %c0_77 = arith.constant 0 : index
    %86 = vector.load %arg5[%c12_76, %c0_77] : memref<112x128xbf16, #tpu.memory_space<vmem>>, vector<80x128xbf16>
    %c20_78 = arith.constant 20 : index
    %c0_79 = arith.constant 0 : index
    %87 = vector.load %arg5[%c20_78, %c0_79] : memref<112x128xbf16, #tpu.memory_space<vmem>>, vector<80x128xbf16>
    %c21_80 = arith.constant 21 : index
    %c0_81 = arith.constant 0 : index
    %88 = vector.load %arg5[%c21_80, %c0_81] : memref<112x128xbf16, #tpu.memory_space<vmem>>, vector<80x128xbf16>
    %c22_82 = arith.constant 22 : index
    %c0_83 = arith.constant 0 : index
    %89 = vector.load %arg5[%c22_82, %c0_83] : memref<112x128xbf16, #tpu.memory_space<vmem>>, vector<80x128xbf16>
    %90 = tpu.concatenate %81, %82, %83, %84, %85, %86, %87, %88, %89 in 1 : vector<80x128xbf16>, vector<80x128xbf16>, vector<80x128xbf16>, vector<80x128xbf16>, vector<80x128xbf16>, vector<80x128xbf16>, vector<80x128xbf16>, vector<80x128xbf16>, vector<80x128xbf16> -> vector<80x1152xbf16>
    %c2_84 = arith.constant 2 : index
    %c0_85 = arith.constant 0 : index
    %c0_86 = arith.constant 0 : index
    %91 = vector.load %arg2[%c2_84, %c0_85, %c0_86] : memref<6x1152x128xbf16, #tpu.memory_space<vmem>>, vector<1x1152x128xbf16>
    %92 = vector.shape_cast %91 : vector<1x1152x128xbf16> to vector<1152x128xbf16>
    %cst_87 = arith.constant dense<0.000000e+00> : vector<80x128xf32>
    %93 = tpu.matmul %90, %92, %cst_87 {dimension_numbers = #tpu.dot_dimension_numbers<[1], [0], [0], [1], [0, 0, 1, 1], [], []>} : vector<80x1152xbf16>, vector<1152x128xbf16>, vector<80x128xf32> -> vector<80x128xf32>
    %c2_88 = arith.constant 2 : index
    %c0_89 = arith.constant 0 : index
    %94 = vector.load %arg3[%c2_88, %c0_89] : memref<6x128xf32, #tpu.memory_space<vmem>>, vector<1x128xf32>
    %95 = vector.broadcast %94 : vector<1x128xf32> to vector<80x128xf32>
    %96 = arith.addf %93, %95 : vector<80x128xf32>
    %cst_90 = arith.constant 0.000000e+00 : f32
    %97 = vector.broadcast %cst_90 : f32 to vector<80x128xf32>
    %98 = arith.maximumf %96, %97 : vector<80x128xf32>
    %cst_91 = arith.constant 0.000000e+00 : f32
    %99 = vector.shape_cast %31 : vector<80x1xi1> to vector<80x1xi1>
    %100 = vector.broadcast %99 : vector<80x1xi1> to vector<80x128xi1>
    %101 = vector.broadcast %cst_91 : f32 to vector<80x128xf32>
    %102 = arith.select %100, %98, %101 : vector<80x128xi1>, vector<80x128xf32>
    %103 = arith.truncf %102 : vector<80x128xf32> to vector<80x128xbf16>
    %c11_92 = arith.constant 11 : index
    %c0_93 = arith.constant 0 : index
    %104 = vector.load %arg6[%c11_92, %c0_93] : memref<112x128xbf16, #tpu.memory_space<vmem>>, vector<80x128xbf16>
    tpu.vector_store %arg6[%c11_92, %c0_93], %103 {strides = array<i32>} : memref<112x128xbf16, #tpu.memory_space<vmem>>, vector<80x128xbf16>,
    %c0_94 = arith.constant 0 : index
    %c0_95 = arith.constant 0 : index
    %105 = vector.load %arg6[%c0_94, %c0_95] : memref<112x128xbf16, #tpu.memory_space<vmem>>, vector<80x128xbf16>
    %c1_96 = arith.constant 1 : index
    %c0_97 = arith.constant 0 : index
    %106 = vector.load %arg6[%c1_96, %c0_97] : memref<112x128xbf16, #tpu.memory_space<vmem>>, vector<80x128xbf16>
    %c2_98 = arith.constant 2 : index
    %c0_99 = arith.constant 0 : index
    %107 = vector.load %arg6[%c2_98, %c0_99] : memref<112x128xbf16, #tpu.memory_space<vmem>>, vector<80x128xbf16>
    %c10_100 = arith.constant 10 : index
    %c0_101 = arith.constant 0 : index
    %108 = vector.load %arg6[%c10_100, %c0_101] : memref<112x128xbf16, #tpu.memory_space<vmem>>, vector<80x128xbf16>
    %c11_102 = arith.constant 11 : index
    %c0_103 = arith.constant 0 : index
    %109 = vector.load %arg6[%c11_102, %c0_103] : memref<112x128xbf16, #tpu.memory_space<vmem>>, vector<80x128xbf16>
    %c12_104 = arith.constant 12 : index
    %c0_105 = arith.constant 0 : index
    %110 = vector.load %arg6[%c12_104, %c0_105] : memref<112x128xbf16, #tpu.memory_space<vmem>>, vector<80x128xbf16>
    %c20_106 = arith.constant 20 : index
    %c0_107 = arith.constant 0 : index
    %111 = vector.load %arg6[%c20_106, %c0_107] : memref<112x128xbf16, #tpu.memory_space<vmem>>, vector<80x128xbf16>
    %c21_108 = arith.constant 21 : index
    %c0_109 = arith.constant 0 : index
    %112 = vector.load %arg6[%c21_108, %c0_109] : memref<112x128xbf16, #tpu.memory_space<vmem>>, vector<80x128xbf16>
    %c22_110 = arith.constant 22 : index
    %c0_111 = arith.constant 0 : index
    %113 = vector.load %arg6[%c22_110, %c0_111] : memref<112x128xbf16, #tpu.memory_space<vmem>>, vector<80x128xbf16>
    %114 = tpu.concatenate %105, %106, %107, %108, %109, %110, %111, %112, %113 in 1 : vector<80x128xbf16>, vector<80x128xbf16>, vector<80x128xbf16>, vector<80x128xbf16>, vector<80x128xbf16>, vector<80x128xbf16>, vector<80x128xbf16>, vector<80x128xbf16>, vector<80x128xbf16> -> vector<80x1152xbf16>
    %c3 = arith.constant 3 : index
    %c0_112 = arith.constant 0 : index
    %c0_113 = arith.constant 0 : index
    %115 = vector.load %arg2[%c3, %c0_112, %c0_113] : memref<6x1152x128xbf16, #tpu.memory_space<vmem>>, vector<1x1152x128xbf16>
    %116 = vector.shape_cast %115 : vector<1x1152x128xbf16> to vector<1152x128xbf16>
    %cst_114 = arith.constant dense<0.000000e+00> : vector<80x128xf32>
    %117 = tpu.matmul %114, %116, %cst_114 {dimension_numbers = #tpu.dot_dimension_numbers<[1], [0], [0], [1], [0, 0, 1, 1], [], []>} : vector<80x1152xbf16>, vector<1152x128xbf16>, vector<80x128xf32> -> vector<80x128xf32>
    %c3_115 = arith.constant 3 : index
    %c0_116 = arith.constant 0 : index
    %118 = vector.load %arg3[%c3_115, %c0_116] : memref<6x128xf32, #tpu.memory_space<vmem>>, vector<1x128xf32>
    %119 = vector.broadcast %118 : vector<1x128xf32> to vector<80x128xf32>
    %120 = arith.addf %117, %119 : vector<80x128xf32>
    %121 = arith.extf %79 : vector<80x128xbf16> to vector<80x128xf32>
    %122 = arith.addf %120, %121 : vector<80x128xf32>
    %cst_117 = arith.constant 0.000000e+00 : f32
    %123 = vector.shape_cast %31 : vector<80x1xi1> to vector<80x1xi1>
    %124 = vector.broadcast %123 : vector<80x1xi1> to vector<80x128xi1>
    %125 = vector.broadcast %cst_117 : f32 to vector<80x128xf32>
    %126 = arith.select %124, %122, %125 : vector<80x128xi1>, vector<80x128xf32>
    %127 = arith.truncf %126 : vector<80x128xf32> to vector<80x128xbf16>
    %c11_118 = arith.constant 11 : index
    %c0_119 = arith.constant 0 : index
    %128 = vector.load %arg5[%c11_118, %c0_119] : memref<112x128xbf16, #tpu.memory_space<vmem>>, vector<80x128xbf16>
    tpu.vector_store %arg5[%c11_118, %c0_119], %127 {strides = array<i32>} : memref<112x128xbf16, #tpu.memory_space<vmem>>, vector<80x128xbf16>,
    %c0_120 = arith.constant 0 : index
    %c0_121 = arith.constant 0 : index
    %129 = vector.load %arg5[%c0_120, %c0_121] : memref<112x128xbf16, #tpu.memory_space<vmem>>, vector<80x128xbf16>
    %c1_122 = arith.constant 1 : index
    %c0_123 = arith.constant 0 : index
    %130 = vector.load %arg5[%c1_122, %c0_123] : memref<112x128xbf16, #tpu.memory_space<vmem>>, vector<80x128xbf16>
    %c2_124 = arith.constant 2 : index
    %c0_125 = arith.constant 0 : index
    %131 = vector.load %arg5[%c2_124, %c0_125] : memref<112x128xbf16, #tpu.memory_space<vmem>>, vector<80x128xbf16>
    %c10_126 = arith.constant 10 : index
    %c0_127 = arith.constant 0 : index
    %132 = vector.load %arg5[%c10_126, %c0_127] : memref<112x128xbf16, #tpu.memory_space<vmem>>, vector<80x128xbf16>
    %c11_128 = arith.constant 11 : index
    %c0_129 = arith.constant 0 : index
    %133 = vector.load %arg5[%c11_128, %c0_129] : memref<112x128xbf16, #tpu.memory_space<vmem>>, vector<80x128xbf16>
    %c12_130 = arith.constant 12 : index
    %c0_131 = arith.constant 0 : index
    %134 = vector.load %arg5[%c12_130, %c0_131] : memref<112x128xbf16, #tpu.memory_space<vmem>>, vector<80x128xbf16>
    %c20_132 = arith.constant 20 : index
    %c0_133 = arith.constant 0 : index
    %135 = vector.load %arg5[%c20_132, %c0_133] : memref<112x128xbf16, #tpu.memory_space<vmem>>, vector<80x128xbf16>
    %c21_134 = arith.constant 21 : index
    %c0_135 = arith.constant 0 : index
    %136 = vector.load %arg5[%c21_134, %c0_135] : memref<112x128xbf16, #tpu.memory_space<vmem>>, vector<80x128xbf16>
    %c22_136 = arith.constant 22 : index
    %c0_137 = arith.constant 0 : index
    %137 = vector.load %arg5[%c22_136, %c0_137] : memref<112x128xbf16, #tpu.memory_space<vmem>>, vector<80x128xbf16>
    %138 = tpu.concatenate %129, %130, %131, %132, %133, %134, %135, %136, %137 in 1 : vector<80x128xbf16>, vector<80x128xbf16>, vector<80x128xbf16>, vector<80x128xbf16>, vector<80x128xbf16>, vector<80x128xbf16>, vector<80x128xbf16>, vector<80x128xbf16>, vector<80x128xbf16> -> vector<80x1152xbf16>
    %c4 = arith.constant 4 : index
    %c0_138 = arith.constant 0 : index
    %c0_139 = arith.constant 0 : index
    %139 = vector.load %arg2[%c4, %c0_138, %c0_139] : memref<6x1152x128xbf16, #tpu.memory_space<vmem>>, vector<1x1152x128xbf16>
    %140 = vector.shape_cast %139 : vector<1x1152x128xbf16> to vector<1152x128xbf16>
    %cst_140 = arith.constant dense<0.000000e+00> : vector<80x128xf32>
    %141 = tpu.matmul %138, %140, %cst_140 {dimension_numbers = #tpu.dot_dimension_numbers<[1], [0], [0], [1], [0, 0, 1, 1], [], []>} : vector<80x1152xbf16>, vector<1152x128xbf16>, vector<80x128xf32> -> vector<80x128xf32>
    %c4_141 = arith.constant 4 : index
    %c0_142 = arith.constant 0 : index
    %142 = vector.load %arg3[%c4_141, %c0_142] : memref<6x128xf32, #tpu.memory_space<vmem>>, vector<1x128xf32>
    %143 = vector.broadcast %142 : vector<1x128xf32> to vector<80x128xf32>
    %144 = arith.addf %141, %143 : vector<80x128xf32>
    %cst_143 = arith.constant 0.000000e+00 : f32
    %145 = vector.broadcast %cst_143 : f32 to vector<80x128xf32>
    %146 = arith.maximumf %144, %145 : vector<80x128xf32>
    %cst_144 = arith.constant 0.000000e+00 : f32
    %147 = vector.shape_cast %31 : vector<80x1xi1> to vector<80x1xi1>
    %148 = vector.broadcast %147 : vector<80x1xi1> to vector<80x128xi1>
    %149 = vector.broadcast %cst_144 : f32 to vector<80x128xf32>
    %150 = arith.select %148, %146, %149 : vector<80x128xi1>, vector<80x128xf32>
    %151 = arith.truncf %150 : vector<80x128xf32> to vector<80x128xbf16>
    %c11_145 = arith.constant 11 : index
    %c0_146 = arith.constant 0 : index
    %152 = vector.load %arg6[%c11_145, %c0_146] : memref<112x128xbf16, #tpu.memory_space<vmem>>, vector<80x128xbf16>
    tpu.vector_store %arg6[%c11_145, %c0_146], %151 {strides = array<i32>} : memref<112x128xbf16, #tpu.memory_space<vmem>>, vector<80x128xbf16>,
    %c0_147 = arith.constant 0 : index
    %c0_148 = arith.constant 0 : index
    %153 = vector.load %arg6[%c0_147, %c0_148] : memref<112x128xbf16, #tpu.memory_space<vmem>>, vector<80x128xbf16>
    %c1_149 = arith.constant 1 : index
    %c0_150 = arith.constant 0 : index
    %154 = vector.load %arg6[%c1_149, %c0_150] : memref<112x128xbf16, #tpu.memory_space<vmem>>, vector<80x128xbf16>
    %c2_151 = arith.constant 2 : index
    %c0_152 = arith.constant 0 : index
    %155 = vector.load %arg6[%c2_151, %c0_152] : memref<112x128xbf16, #tpu.memory_space<vmem>>, vector<80x128xbf16>
    %c10_153 = arith.constant 10 : index
    %c0_154 = arith.constant 0 : index
    %156 = vector.load %arg6[%c10_153, %c0_154] : memref<112x128xbf16, #tpu.memory_space<vmem>>, vector<80x128xbf16>
    %c11_155 = arith.constant 11 : index
    %c0_156 = arith.constant 0 : index
    %157 = vector.load %arg6[%c11_155, %c0_156] : memref<112x128xbf16, #tpu.memory_space<vmem>>, vector<80x128xbf16>
    %c12_157 = arith.constant 12 : index
    %c0_158 = arith.constant 0 : index
    %158 = vector.load %arg6[%c12_157, %c0_158] : memref<112x128xbf16, #tpu.memory_space<vmem>>, vector<80x128xbf16>
    %c20_159 = arith.constant 20 : index
    %c0_160 = arith.constant 0 : index
    %159 = vector.load %arg6[%c20_159, %c0_160] : memref<112x128xbf16, #tpu.memory_space<vmem>>, vector<80x128xbf16>
    %c21_161 = arith.constant 21 : index
    %c0_162 = arith.constant 0 : index
    %160 = vector.load %arg6[%c21_161, %c0_162] : memref<112x128xbf16, #tpu.memory_space<vmem>>, vector<80x128xbf16>
    %c22_163 = arith.constant 22 : index
    %c0_164 = arith.constant 0 : index
    %161 = vector.load %arg6[%c22_163, %c0_164] : memref<112x128xbf16, #tpu.memory_space<vmem>>, vector<80x128xbf16>
    %162 = tpu.concatenate %153, %154, %155, %156, %157, %158, %159, %160, %161 in 1 : vector<80x128xbf16>, vector<80x128xbf16>, vector<80x128xbf16>, vector<80x128xbf16>, vector<80x128xbf16>, vector<80x128xbf16>, vector<80x128xbf16>, vector<80x128xbf16>, vector<80x128xbf16> -> vector<80x1152xbf16>
    %c5 = arith.constant 5 : index
    %c0_165 = arith.constant 0 : index
    %c0_166 = arith.constant 0 : index
    %163 = vector.load %arg2[%c5, %c0_165, %c0_166] : memref<6x1152x128xbf16, #tpu.memory_space<vmem>>, vector<1x1152x128xbf16>
    %164 = vector.shape_cast %163 : vector<1x1152x128xbf16> to vector<1152x128xbf16>
    %cst_167 = arith.constant dense<0.000000e+00> : vector<80x128xf32>
    %165 = tpu.matmul %162, %164, %cst_167 {dimension_numbers = #tpu.dot_dimension_numbers<[1], [0], [0], [1], [0, 0, 1, 1], [], []>} : vector<80x1152xbf16>, vector<1152x128xbf16>, vector<80x128xf32> -> vector<80x128xf32>
    %c5_168 = arith.constant 5 : index
    %c0_169 = arith.constant 0 : index
    %166 = vector.load %arg3[%c5_168, %c0_169] : memref<6x128xf32, #tpu.memory_space<vmem>>, vector<1x128xf32>
    %167 = vector.broadcast %166 : vector<1x128xf32> to vector<80x128xf32>
    %168 = arith.addf %165, %167 : vector<80x128xf32>
    %169 = arith.extf %127 : vector<80x128xbf16> to vector<80x128xf32>
    %170 = arith.addf %168, %169 : vector<80x128xf32>
    %171 = vector.shape_cast %170 : vector<80x128xf32> to vector<8x10x128xf32>
    %172 = vector.extract_strided_slice %171 {offsets = [0, 0, 0], sizes = [8, 8, 128], strides = [1, 1, 1]} : vector<8x10x128xf32> to vector<8x8x128xf32>
    %173 = arith.extf %9 : vector<8x8x128xbf16> to vector<8x8x128xf32>
    %174 = arith.addf %172, %173 : vector<8x8x128xf32>
    %175 = arith.truncf %174 : vector<8x8x128xf32> to vector<8x8x128xbf16>
    %c0_170 = arith.constant 0 : index
    %c0_171 = arith.constant 0 : index
    %c0_172 = arith.constant 0 : index
    %c0_173 = arith.constant 0 : index
    %176 = vector.load %arg4[%c0_170, %c0_171, %c0_172, %c0_173] : memref<1x8x8x128xbf16, #tpu.memory_space<vmem>>, vector<1x8x8x128xbf16>
    %177 = vector.shape_cast %176 : vector<1x8x8x128xbf16> to vector<8x8x128xbf16>
    %178 = vector.shape_cast %175 : vector<8x8x128xbf16> to vector<1x8x8x128xbf16>
    tpu.vector_store %arg4[%c0_170, %c0_171, %c0_172, %c0_173], %178 {strides = array<i32>} : memref<1x8x8x128xbf16, #tpu.memory_space<vmem>>, vector<1x8x8x128xbf16>,
    return
  }
  func.func @transform_0(%arg0: i32) -> (i32, i32, i32, i32) {
    %c0_i32 = arith.constant 0 : i32
    %c0_i32_0 = arith.constant 0 : i32
    %c0_i32_1 = arith.constant 0 : i32
    %c0_i32_2 = arith.constant 0 : i32
    return %arg0, %c0_i32, %c0_i32_0, %c0_i32_1 : i32, i32, i32, i32
  }
  func.func @transform_1(%arg0: i32) -> (i32, i32, i32) {
    %c0_i32 = arith.constant 0 : i32
    %c0_i32_0 = arith.constant 0 : i32
    %c0_i32_1 = arith.constant 0 : i32
    %c0_i32_2 = arith.constant 0 : i32
    return %c0_i32, %c0_i32_0, %c0_i32_1 : i32, i32, i32
  }
  func.func @transform_2(%arg0: i32) -> (i32, i32) {
    %c0_i32 = arith.constant 0 : i32
    %c0_i32_0 = arith.constant 0 : i32
    %c0_i32_1 = arith.constant 0 : i32
    return %c0_i32, %c0_i32_0 : i32, i32
  }
  func.func @transform_3(%arg0: i32) -> (i32, i32, i32, i32) {
    %c0_i32 = arith.constant 0 : i32
    %c0_i32_0 = arith.constant 0 : i32
    %c0_i32_1 = arith.constant 0 : i32
    %c0_i32_2 = arith.constant 0 : i32
    return %arg0, %c0_i32, %c0_i32_0, %c0_i32_1 : i32, i32, i32, i32
  }
}

</mosaic_0001>

<llo_original>
// kernel: fea_encoder_pallas.2
$region0: #{fea_encoder_pallas.2}
  #allocation0 [shape = 'u32[]', space=smem, size = 0x4, offset = 0x4, fixed_abs, tag = 'smem constant byte address 0x4 - core index']
  #allocation1 [shape = 'u32[144,128]{1,0:T(1,128)}', space=vmem, size = 0x12000, scoped, tag = 'internal scratch']
  %s0 = inlined_call_operand.vmem [shape: bf16[128,128], index: 0, kind: input, shape index: {}]
  %s1 = inlined_call_operand.vmem [shape: bf16[128,128], index: 1, kind: input, shape index: {}]
  %s2 = inlined_call_operand.vmem [shape: f32[1,128], index: 2, kind: input, shape index: {}]
  %s3 = inlined_call_operand.vmem [shape: bf16[128,128], index: 3, kind: output, shape index: {}]
  %s4 = sld [smem:[#allocation0]]
  $region22: #{fea_encoder_pallas.2} parent=0
    _
  %s6 = ssub.s32 1, %s4
  %s7 = scalar_select 0, %s6, %s4
  // Predicated region
  $region2: #{fea_encoder_pallas.2} parent=0 // pred_check
    _
  $region3: #{fea_encoder_pallas.2} parent=0 // pred_check_branch
    %9 = sbr.rel (0) target = $region5
  $region4: #{fea_encoder_pallas.2} parent=0 // pred_region
    _
  $region5: #{fea_encoder_pallas.2} parent=0 // pred_fallthru
    _
  // Predicated region
  $region6: #{fea_encoder_pallas.2} parent=0 // pred_check
    _
  $region7: #{fea_encoder_pallas.2} parent=0 // pred_check_branch
    %11 = sbr.rel (0) target = $region9
  $region8: #{fea_encoder_pallas.2} parent=0 // pred_region
    _
  $region9: #{fea_encoder_pallas.2} parent=0 // pred_fallthru
    _
  // Predicated region
  $region10: #{fea_encoder_pallas.2} parent=0 // pred_check
    _
  $region11: #{fea_encoder_pallas.2} parent=0 // pred_check_branch
    %13 = sbr.rel (0) target = $region13
  $region12: #{fea_encoder_pallas.2} parent=0 // pred_region
    _
  $region13: #{fea_encoder_pallas.2} parent=0 // pred_fallthru
    _
  %v15 = vld [vmem:[%s0] sm:$0xf]
  %v16 = vld [vmem:[%s0 + $0x4] sm:$0xf]
  %v17 = vld [vmem:[%s0 + $0x8] sm:$0xf]
  %v18 = vld [vmem:[%s0 + $0xc] sm:$0xf]
  %v19 = vld [vmem:[%s0 + $0x10] sm:$0xf]
  %v20 = vld [vmem:[%s0 + $0x14] sm:$0xf]
  %v21 = vld [vmem:[%s0 + $0x18] sm:$0xf]
  %v22 = vld [vmem:[%s0 + $0x1c] sm:$0xf]
  %v23 = vld [vmem:[%s0 + $0x20] sm:$0xf]
  %v24 = vld [vmem:[%s0 + $0x24] sm:$0xf]
  %v25 = vld [vmem:[%s0 + $0x28] sm:$0xf]
  %v26 = vld [vmem:[%s0 + $0x2c] sm:$0xf]
  %v27 = vld [vmem:[%s0 + $0x30] sm:$0xf]
  %v28 = vld [vmem:[%s0 + $0x34] sm:$0xf]
  %v29 = vld [vmem:[%s0 + $0x38] sm:$0xf]
  %v30 = vld [vmem:[%s0 + $0x3c] sm:$0xf]
  %v31 = vld [vmem:[%s1] sm:$0xf]
  %v32 = vld [vmem:[%s1 + $0x4] sm:$0xf]
  %v33 = vld [vmem:[%s1 + $0x8] sm:$0xf]
  %v34 = vld [vmem:[%s1 + $0xc] sm:$0xf]
  %v35 = vld [vmem:[%s1 + $0x10] sm:$0xf]
  %v36 = vld [vmem:[%s1 + $0x14] sm:$0xf]
  %v37 = vld [vmem:[%s1 + $0x18] sm:$0xf]
  %v38 = vld [vmem:[%s1 + $0x1c] sm:$0xf]
  %v39 = vld [vmem:[%s1 + $0x20] sm:$0xf]
  %v40 = vld [vmem:[%s1 + $0x24] sm:$0xf]
  %v41 = vld [vmem:[%s1 + $0x28] sm:$0xf]
  %v42 = vld [vmem:[%s1 + $0x2c] sm:$0xf]
  %v43 = vld [vmem:[%s1 + $0x30] sm:$0xf]
  %v44 = vld [vmem:[%s1 + $0x34] sm:$0xf]
  %v45 = vld [vmem:[%s1 + $0x38] sm:$0xf]
  %v46 = vld [vmem:[%s1 + $0x3c] sm:$0xf]
  %v47 = vld [vmem:[%s2] sm:$0x1]
  %v49 = vlaneseq
  %v50 = vshrl.u32 %v49, 7
  %v51 = vsub.s32 0, %v50
  %v52 = vrot.slane %v47, %v51
  %v70 = vunpack.c.l.b16 %v15
  %v71 = vunpack.c.l.b16 %v16
  %v72 = vunpack.c.l.b16 %v17
  %v73 = vunpack.c.l.b16 %v18
  %v74 = vunpack.c.l.b16 %v19
  %v75 = vunpack.c.l.b16 %v20
  %v76 = vunpack.c.l.b16 %v21
  %v77 = vunpack.c.l.b16 %v22
  %v78 = vunpack.c.l.b16 %v23
  %v79 = vunpack.c.l.b16 %v24
  %v80 = vunpack.c.l.b16 %v25
  %v81 = vunpack.c.l.b16 %v26
  %v82 = vunpack.c.l.b16 %v27
  %v83 = vunpack.c.l.b16 %v28
  %v84 = vunpack.c.l.b16 %v29
  %v85 = vunpack.c.l.b16 %v30
  %v86 = vpack.c.b16 %v71, %v70
  %v87 = vpack.c.b16 %v73, %v72
  %v88 = vpack.c.b16 %v75, %v74
  %v89 = vpack.c.b16 %v77, %v76
  %v90 = vpack.c.b16 %v79, %v78
  %v91 = vpack.c.b16 %v81, %v80
  %v92 = vpack.c.b16 %v83, %v82
  %v93 = vpack.c.b16 %v85, %v84
  %v118 = vunpack.c.l.b16 %v31
  %v119 = vunpack.c.l.b16 %v32
  %v120 = vunpack.c.l.b16 %v33
  %v121 = vunpack.c.l.b16 %v34
  %v122 = vunpack.c.l.b16 %v35
  %v123 = vunpack.c.l.b16 %v36
  %v124 = vunpack.c.l.b16 %v37
  %v125 = vunpack.c.l.b16 %v38
  %v126 = vunpack.c.l.b16 %v39
  %v127 = vunpack.c.l.b16 %v40
  %v128 = vunpack.c.l.b16 %v41
  %v129 = vunpack.c.l.b16 %v42
  %v130 = vunpack.c.l.b16 %v43
  %v131 = vunpack.c.l.b16 %v44
  %v132 = vunpack.c.l.b16 %v45
  %v133 = vunpack.c.l.b16 %v46
  %v134 = vpack.c.b16 %v119, %v118
  %v135 = vpack.c.b16 %v121, %v120
  %v136 = vpack.c.b16 %v123, %v122
  %v137 = vpack.c.b16 %v125, %v124
  %v138 = vpack.c.b16 %v127, %v126
  %v139 = vpack.c.b16 %v129, %v128
  %v140 = vpack.c.b16 %v131, %v130
  %v141 = vpack.c.b16 %v133, %v132
  %150 = vmatprep.subr.bf16.mxu0 0
  %151 = vmatpush1.bf16.msra.mxu0 %v134
  %152 = vmatprep.subr.bf16.mxu0 0
  %153 = vmatpush1.bf16.msra.mxu0 %v135
  %154 = vmatprep.subr.bf16.mxu0 0
  %155 = vmatpush1.bf16.msra.mxu0 %v136
  %156 = vmatprep.subr.bf16.mxu0 0
  %157 = vmatpush1.bf16.msra.mxu0 %v137
  %158 = vmatprep.subr.bf16.mxu0 0
  %159 = vmatpush1.bf16.msra.mxu0 %v138
  %160 = vmatprep.subr.bf16.mxu0 0
  %161 = vmatpush1.bf16.msra.mxu0 %v139
  %162 = vmatprep.subr.bf16.mxu0 0
  %163 = vmatpush1.bf16.msra.mxu0 %v140
  %164 = vmatprep.subr.bf16.mxu0 0
  %165 = vmatpush1.bf16.msra.mxu0 %v141
  %166 = vmatprep.subr.bf16.mxu0 0
  %167 = vmatpush1.bf16.msra.mxu0 0
  %168 = vmatprep.subr.bf16.mxu0 0
  %169 = vmatpush1.bf16.msra.mxu0 0
  %170 = vmatprep.subr.bf16.mxu0 0
  %171 = vmatpush1.bf16.msra.mxu0 0
  %172 = vmatprep.subr.bf16.mxu0 0
  %173 = vmatpush1.bf16.msra.mxu0 0
  %174 = vmatprep.subr.bf16.mxu0 0
  %175 = vmatpush1.bf16.msra.mxu0 0
  %176 = vmatprep.subr.bf16.mxu0 0
  %177 = vmatpush1.bf16.msra.mxu0 0
  %178 = vmatprep.subr.bf16.mxu0 0
  %179 = vmatpush1.bf16.msra.mxu0 0
  %180 = vmatprep.subr.bf16.mxu0 0
  %181 = vmatpush1.bf16.msra.mxu0 0
  %182 = vmatprep.mubr.bf16.mxu0 0
  %183 = vmatmul.mubr.bf16.gmra.mrb[0].mxu0 %v86
  %v184 = vpop.f32.mrb[0].mxu0
  %v185 = vadd.f32 %v52, %v184
  %v186 = vpop.f32.mrb[0].mxu0
  %v187 = vpop.f32.mrb[0].mxu0
  %v188 = vadd.f32 %v52, %v187
  %v189 = vpop.f32.mrb[0].mxu0
  %190 = vmatprep.mubr.bf16.mxu0 0
  %191 = vmatmul.mubr.bf16.gmra.mrb[0].mxu0 %v87
  %v192 = vpop.f32.mrb[0].mxu0
  %v193 = vadd.f32 %v52, %v192
  %v194 = vpop.f32.mrb[0].mxu0
  %v195 = vpop.f32.mrb[0].mxu0
  %v196 = vadd.f32 %v52, %v195
  %v197 = vpop.f32.mrb[0].mxu0
  %198 = vmatprep.mubr.bf16.mxu0 0
  %199 = vmatmul.mubr.bf16.gmra.mrb[0].mxu0 %v88
  %v200 = vpop.f32.mrb[0].mxu0
  %v201 = vadd.f32 %v52, %v200
  %v202 = vpop.f32.mrb[0].mxu0
  %v203 = vpop.f32.mrb[0].mxu0
  %v204 = vadd.f32 %v52, %v203
  %v205 = vpop.f32.mrb[0].mxu0
  %206 = vmatprep.mubr.bf16.mxu0 0
  %207 = vmatmul.mubr.bf16.gmra.mrb[0].mxu0 %v89
  %v208 = vpop.f32.mrb[0].mxu0
  %v209 = vadd.f32 %v52, %v208
  %v210 = vpop.f32.mrb[0].mxu0
  %v211 = vpop.f32.mrb[0].mxu0
  %v212 = vadd.f32 %v52, %v211
  %v213 = vpop.f32.mrb[0].mxu0
  %214 = vmatprep.mubr.bf16.mxu0 0
  %215 = vmatmul.mubr.bf16.gmra.mrb[0].mxu0 %v90
  %v216 = vpop.f32.mrb[0].mxu0
  %v217 = vadd.f32 %v52, %v216
  %v218 = vpop.f32.mrb[0].mxu0
  %v219 = vpop.f32.mrb[0].mxu0
  %v220 = vadd.f32 %v52, %v219
  %v221 = vpop.f32.mrb[0].mxu0
  %222 = vmatprep.mubr.bf16.mxu0 0
  %223 = vmatmul.mubr.bf16.gmra.mrb[0].mxu0 %v91
  %v224 = vpop.f32.mrb[0].mxu0
  %v225 = vadd.f32 %v52, %v224
  %v226 = vpop.f32.mrb[0].mxu0
  %v227 = vpop.f32.mrb[0].mxu0
  %v228 = vadd.f32 %v52, %v227
  %v229 = vpop.f32.mrb[0].mxu0
  %230 = vmatprep.mubr.bf16.mxu0 0
  %231 = vmatmul.mubr.bf16.gmra.mrb[0].mxu0 %v92
  %v232 = vpop.f32.mrb[0].mxu0
  %v233 = vadd.f32 %v52, %v232
  %v234 = vpop.f32.mrb[0].mxu0
  %v235 = vpop.f32.mrb[0].mxu0
  %v236 = vadd.f32 %v52, %v235
  %v237 = vpop.f32.mrb[0].mxu0
  %238 = vmatprep.mubr.bf16.mxu0 0
  %239 = vmatmul.mubr.bf16.gmra.mrb[0].mxu0 %v93
  %v240 = vpop.f32.mrb[0].mxu0
  %v241 = vadd.f32 %v52, %v240
  %v242 = vpop.f32.mrb[0].mxu0
  %v243 = vpop.f32.mrb[0].mxu0
  %v244 = vadd.f32 %v52, %v243
  %v245 = vpop.f32.mrb[0].mxu0
  %246 = vdwg.mxu0
  %v247 = vpack.c.bf16 %v188, %v185
  %v248 = vpack.c.bf16 %v196, %v193
  %v249 = vpack.c.bf16 %v204, %v201
  %v250 = vpack.c.bf16 %v212, %v209
  %v251 = vpack.c.bf16 %v220, %v217
  %v252 = vpack.c.bf16 %v228, %v225
  %v253 = vpack.c.bf16 %v236, %v233
  %v254 = vpack.c.bf16 %v244, %v241
  %v263 = vunpack.c.l.b16 %v247
  %v264 = vunpack.c.h.b16 %v247
  %v265 = vunpack.c.l.b16 %v248
  %v266 = vunpack.c.h.b16 %v248
  %v267 = vunpack.c.l.b16 %v249
  %v268 = vunpack.c.h.b16 %v249
  %v269 = vunpack.c.l.b16 %v250
  %v270 = vunpack.c.h.b16 %v250
  %v271 = vunpack.c.l.b16 %v251
  %v272 = vunpack.c.h.b16 %v251
  %v273 = vunpack.c.l.b16 %v252
  %v274 = vunpack.c.h.b16 %v252
  %v275 = vunpack.c.l.b16 %v253
  %v276 = vunpack.c.h.b16 %v253
  %v277 = vunpack.c.l.b16 %v254
  %v278 = vunpack.c.h.b16 %v254
  %v279 = vpack.c.b16 %v263, %v263
  %v280 = vpack.c.b16 %v264, %v264
  %v281 = vpack.c.b16 %v265, %v265
  %v282 = vpack.c.b16 %v266, %v266
  %v283 = vpack.c.b16 %v267, %v267
  %v284 = vpack.c.b16 %v268, %v268
  %v285 = vpack.c.b16 %v269, %v269
  %v286 = vpack.c.b16 %v270, %v270
  %v287 = vpack.c.b16 %v271, %v271
  %v288 = vpack.c.b16 %v272, %v272
  %v289 = vpack.c.b16 %v273, %v273
  %v290 = vpack.c.b16 %v274, %v274
  %v291 = vpack.c.b16 %v275, %v275
  %v292 = vpack.c.b16 %v276, %v276
  %v293 = vpack.c.b16 %v277, %v277
  %v294 = vpack.c.b16 %v278, %v278
  %311 = vst [vmem:[%s3] sm:$0xf] %v279
  %312 = vst [vmem:[%s3 + $0x4] sm:$0xf] %v280
  %313 = vst [vmem:[%s3 + $0x8] sm:$0xf] %v281
  %314 = vst [vmem:[%s3 + $0xc] sm:$0xf] %v282
  %315 = vst [vmem:[%s3 + $0x10] sm:$0xf] %v283
  %316 = vst [vmem:[%s3 + $0x14] sm:$0xf] %v284
  %317 = vst [vmem:[%s3 + $0x18] sm:$0xf] %v285
  %318 = vst [vmem:[%s3 + $0x1c] sm:$0xf] %v286
  %319 = vst [vmem:[%s3 + $0x20] sm:$0xf] %v287
  %320 = vst [vmem:[%s3 + $0x24] sm:$0xf] %v288
  %321 = vst [vmem:[%s3 + $0x28] sm:$0xf] %v289
  %322 = vst [vmem:[%s3 + $0x2c] sm:$0xf] %v290
  %323 = vst [vmem:[%s3 + $0x30] sm:$0xf] %v291
  %324 = vst [vmem:[%s3 + $0x34] sm:$0xf] %v292
  %325 = vst [vmem:[%s3 + $0x38] sm:$0xf] %v293
  %326 = vst [vmem:[%s3 + $0x3c] sm:$0xf] %v294
  // Predicated region
  $region14: #{fea_encoder_pallas.2} parent=0 // pred_check
    _
  $region15: #{fea_encoder_pallas.2} parent=0 // pred_check_branch
    %328 = sbr.rel (0) target = $region17
  $region16: #{fea_encoder_pallas.2} parent=0 // pred_region
    _
  $region17: #{fea_encoder_pallas.2} parent=0 // pred_fallthru
    _
  // Predicated region
  $region18: #{fea_encoder_pallas.2} parent=0 // pred_check
    _
  $region19: #{fea_encoder_pallas.2} parent=0 // pred_check_branch
    %330 = sbr.rel (0) target = $region21
  $region20: #{fea_encoder_pallas.2} parent=0 // pred_region
    _
  $region21: #{fea_encoder_pallas.2} parent=0 // pred_fallthru
    _

// kernel: fea_encoder_pallas.3
$region0: #{fea_encoder_pallas.3}
  #allocation0 [shape = 'u32[]', space=smem, size = 0x4, offset = 0x4, fixed_abs, tag = 'smem constant byte address 0x4 - core index']
  #allocation1 [shape = 'u32[144,128]{1,0:T(1,128)}', space=vmem, size = 0x12000, scoped, tag = 'internal scratch']
  #allocation2 [shape = 'bf16[112,128]{1,0:T(16,128)(2,1)}', space=vmem, size = 0x7000, scoped, tag = 'scratch operand']
  #allocation3 [shape = 'bf16[112,128]{1,0:T(16,128)(2,1)}', space=vmem, size = 0x7000, scoped, tag = 'scratch operand']
  %s0 = inlined_call_operand.vmem [shape: bf16[2,8,8,128], index: 0, kind: input, shape index: {}]
  %s1 = inlined_call_operand.vmem [shape: bf16[6,1152,128], index: 1, kind: input, shape index: {}]
  %s2 = inlined_call_operand.vmem [shape: f32[6,128], index: 2, kind: input, shape index: {}]
  %s3 = inlined_call_operand.vmem [shape: bf16[2,8,8,128], index: 3, kind: output, shape index: {}]
  %s4 = sld [smem:[#allocation0]]
  $region45: #{fea_encoder_pallas.3} parent=0
    _
  %s6 = ssub.s32 1, %s4
  %s7 = scalar_select 0, %s6, %s4
  loop: start=0, step=1, limit=4
  $region2: #{fea_encoder_pallas.3} parent=0 // loop_pre_header
    _
  $region3: #{fea_encoder_pallas.3} parent=0 // loop_header
    %s9 = sphi 0, %s13
    %p10 = scmp.ge.s32.totalorder %s9, 4
    %s19 = sphi 0, %s21
    %s22 = sphi 0, %s19
    %s23 = sphi 0, %s22
    %s39 = sphi 0, %s23
    %s43 = sphi 0, %s43
    %s45 = sphi 0, %s43
    %s46 = sphi 0, %s45
    %s60 = sphi 0, %s46
    %s64 = sphi 0, %s64
    %s66 = sphi 0, %s64
    %s67 = sphi 0, %s66
    %s81 = sphi 0, %s67
    %s87 = sphi 0, %s89
    %s90 = sphi 0, %s87
    %s91 = sphi 0, %s90
    %s107 = sphi 0, %s91
  $region4: #{fea_encoder_pallas.3} parent=0 // loop_header_branch
    %12 = sbr.rel (%p10) target = $region8
  $region5: #{fea_encoder_pallas.3} parent=0 // loop_body
    %s14 = ssub.s32 %s9, 1
    %s15 = ssub.s32 %s9, 2
    %s16 = sadd.s32 %s9, 1
    %s17 = ssub.s32 %s9, %s16
    %p18 = scmp.eq.s32.totalorder %s17, 0
    %s20 = sadd.s32 %s19, 1
    %s21 = scalar_select %p18, %s19, %s20
    %p24 = pneg %p18
    %p25 = scmp.eq.s32.totalorder %s9, 1
    %p26 = por %p24, %p25
    %p27 = scmp.ne.s32.totalorder %s19, %s22
    %p28 = scmp.eq.s32.totalorder %s9, 0
    %p29 = por %p27, %p28
    %p30 = scmp.ne.s32.totalorder %s19, %s22
    %p31 = scmp.eq.s32.totalorder %s14, 1
    %p32 = por %p30, %p31
    %p33 = scmp.ne.s32.totalorder %s22, %s23
    %p34 = scmp.eq.s32.totalorder %s14, 0
    %p35 = por %p33, %p34
    %p36 = scmp.ne.s32.totalorder %s22, %s23
    %p37 = scmp.eq.s32.totalorder %s15, 1
    %p38 = por %p36, %p37
    %p40 = scmp.ne.s32.totalorder %s23, %s39
    %p41 = scmp.eq.s32.totalorder %s15, 0
    %p42 = por %p40, %p41
    %s44 = sadd.s32 %s43, 1
    %p47 = scmp.eq.s32.totalorder %s9, 1
    %p48 = scmp.ne.s32.totalorder %s43, %s45
    %p49 = scmp.eq.s32.totalorder %s9, 0
    %p50 = por %p48, %p49
    %p51 = scmp.ne.s32.totalorder %s43, %s45
    %p52 = scmp.eq.s32.totalorder %s14, 1
    %p53 = por %p51, %p52
    %p54 = scmp.ne.s32.totalorder %s45, %s46
    %p55 = scmp.eq.s32.totalorder %s14, 0
    %p56 = por %p54, %p55
    %p57 = scmp.ne.s32.totalorder %s45, %s46
    %p58 = scmp.eq.s32.totalorder %s15, 1
    %p59 = por %p57, %p58
    %p61 = scmp.ne.s32.totalorder %s46, %s60
    %p62 = scmp.eq.s32.totalorder %s15, 0
    %p63 = por %p61, %p62
    %s65 = sadd.s32 %s64, 1
    %p68 = scmp.eq.s32.totalorder %s9, 1
    %p69 = scmp.ne.s32.totalorder %s64, %s66
    %p70 = scmp.eq.s32.totalorder %s9, 0
    %p71 = por %p69, %p70
    %p72 = scmp.ne.s32.totalorder %s64, %s66
    %p73 = scmp.eq.s32.totalorder %s14, 1
    %p74 = por %p72, %p73
    %p75 = scmp.ne.s32.totalorder %s66, %s67
    %p76 = scmp.eq.s32.totalorder %s14, 0
    %p77 = por %p75, %p76
    %p78 = scmp.ne.s32.totalorder %s66, %s67
    %p79 = scmp.eq.s32.totalorder %s15, 1
    %p80 = por %p78, %p79
    %p82 = scmp.ne.s32.totalorder %s67, %s81
    %p83 = scmp.eq.s32.totalorder %s15, 0
    %p84 = por %p82, %p83
    %s85 = ssub.s32 %s9, %s16
    %p86 = scmp.eq.s32.totalorder %s85, 0
    %s88 = sadd.s32 %s87, 1
    %s89 = scalar_select %p86, %s87, %s88
    %p92 = pneg %p86
    %p93 = scmp.eq.s32.totalorder %s9, 1
    %p94 = por %p92, %p93
    %p95 = scmp.ne.s32.totalorder %s87, %s90
    %p96 = scmp.eq.s32.totalorder %s9, 0
    %p97 = por %p95, %p96
    %p98 = scmp.ne.s32.totalorder %s87, %s90
    %p99 = scmp.eq.s32.totalorder %s14, 1
    %p100 = por %p98, %p99
    %p101 = scmp.ne.s32.totalorder %s90, %s91
    %p102 = scmp.eq.s32.totalorder %s14, 0
    %p103 = por %p101, %p102
    %p104 = scmp.ne.s32.totalorder %s90, %s91
    %p105 = scmp.eq.s32.totalorder %s15, 1
    %p106 = por %p104, %p105
    %p108 = scmp.ne.s32.totalorder %s91, %s107
    %p109 = scmp.eq.s32.totalorder %s15, 0
    %p110 = por %p108, %p109
    %p111 = scmp.le.s32.totalorder 1, %s9
    %p112 = scmp.lt.s32.totalorder %s9, 3
    %p113 = pnand %p111, %p112
    %p114 = pneg %p113
    // Predicated region
    $region9: #{fea_encoder_pallas.3} parent=5 // pred_check
      _
    $region10: #{fea_encoder_pallas.3} parent=5 // pred_check_branch
      %116 = sbr.rel (%p113) target = $region12
    $region11: #{fea_encoder_pallas.3} parent=5 // pred_region
      %s117 = ssub.s32 %s9, 1
      // Predicated region
      $region13: #{fea_encoder_pallas.3} parent=11 // pred_check
        %p118 = pneg %p56
      $region14: #{fea_encoder_pallas.3} parent=11 // pred_check_branch
        %120 = sbr.rel (%p118) target = $region16
      $region15: #{fea_encoder_pallas.3} parent=11 // pred_region
        _
      $region16: #{fea_encoder_pallas.3} parent=11 // pred_fallthru
        _
      // Predicated region
      $region17: #{fea_encoder_pallas.3} parent=11 // pred_check
        %p121 = pneg %p77
      $region18: #{fea_encoder_pallas.3} parent=11 // pred_check_branch
        %123 = sbr.rel (%p121) target = $region20
      $region19: #{fea_encoder_pallas.3} parent=11 // pred_region
        _
      $region20: #{fea_encoder_pallas.3} parent=11 // pred_fallthru
        _
    $region12: #{fea_encoder_pallas.3} parent=5 // pred_fallthru
      _
    %p124 = scmp.lt.s32.totalorder %s9, 2
    // Predicated region
    $region21: #{fea_encoder_pallas.3} parent=5 // pred_check
      %p125 = pneg %p124
    $region22: #{fea_encoder_pallas.3} parent=5 // pred_check_branch
      %127 = sbr.rel (%p125) target = $region24
    $region23: #{fea_encoder_pallas.3} parent=5 // pred_region
      // Predicated region
      $region25: #{fea_encoder_pallas.3} parent=23 // pred_check
        %p128 = pneg %p29
      $region26: #{fea_encoder_pallas.3} parent=23 // pred_check_branch
        %130 = sbr.rel (%p128) target = $region28
      $region27: #{fea_encoder_pallas.3} parent=23 // pred_region
        %p131 = scmp.lt.s32.totalorder %s9, 1
        %s132 = scalar_select %p131, %s9, 1
        %s133 = smul.addr %s132, 8
        %s134 = smul.addr %s133, 4
        %s135 = scalar_lea.vmem %s0, %s134
      $region28: #{fea_encoder_pallas.3} parent=23 // pred_fallthru
        _
    $region24: #{fea_encoder_pallas.3} parent=5 // pred_fallthru
      _
    %p136 = scmp.le.s32.totalorder 1, %s9
    %p137 = scmp.lt.s32.totalorder %s9, 3
    %p138 = pnand %p136, %p137
    %p139 = pneg %p138
    // Predicated region
    $region29: #{fea_encoder_pallas.3} parent=5 // pred_check
      _
    $region30: #{fea_encoder_pallas.3} parent=5 // pred_check_branch
      %141 = sbr.rel (%p138) target = $region32
    $region31: #{fea_encoder_pallas.3} parent=5 // pred_region
      %s142 = ssub.s32 %s9, 1
      %p143 = scmp.lt.s32.totalorder %s14, 1
      %s144 = scalar_select %p143, %s14, 1
      %s145 = smul.addr %s144, 8
      %s146 = smul.addr %s145, 4
      %s147 = scalar_lea.vmem %s0, %s146
      %p148 = pneg %p35
      %p149 = pneg %p32
      %p150 = pneg %p56
      %p151 = pneg %p53
      %p152 = pneg %p77
      %p153 = pneg %p74
      %p154 = pneg %p103
      %p155 = pneg %p100
      %p156 = scmp.lt.s32.totalorder %s14, 1
      %s157 = scalar_select %p156, %s14, 1
      %s158 = smul.addr %s157, 8
      %s159 = smul.addr %s158, 4
      %s160 = scalar_lea.vmem %s3, %s159
      %p161 = scmp.lt.s32.totalorder %s14, 1
      %s162 = scalar_select %p161, %s14, 1
      %s163 = smul.addr %s162, 8
      %s164 = smul.addr %s163, 4
      %s165 = scalar_lea.vmem %s0, %s164
      %p166 = scmp.lt.s32.totalorder %s14, 1
      %s167 = scalar_select %p166, %s14, 1
      %s168 = smul.addr %s167, 8
      %s169 = smul.addr %s168, 4
      %s170 = scalar_lea.vmem %s3, %s169
      %vm172 = vcmask 1045504
      %vm173 = vsmask.f32 5376
      %vm174 = vmand %vm172, %vm173
      %v175 = vld [vmem:[#allocation2] sm:$0x3f]
      %v176 = vsel %vm174, 0, %v175
      %177 = vst [vmem:[#allocation2] sm:$0x3f] %v176
      %vm178 = vcmask 1047557
      %vm179 = vsmask.f32 7958
      %vm180 = vmand %vm178, %vm179
      %v181 = vld [vmem:[#allocation2 + $0x28] sm:$0xe0]
      %v182 = vsel %vm180, 0, %v181
      %183 = vst [vmem:[#allocation2 + $0x28] sm:$0xe0] %v182
      %184 = vst [vmem:[#allocation2 + $0x30] sm:$0xff] 0
      %v185 = vld [vmem:[#allocation3] sm:$0x3f]
      %v186 = vsel %vm174, 0, %v185
      %187 = vst [vmem:[#allocation3] sm:$0x3f] %v186
      %v188 = vld [vmem:[#allocation3 + $0x28] sm:$0xe0]
      %v189 = vsel %vm180, 0, %v188
      %190 = vst [vmem:[#allocation3 + $0x28] sm:$0xe0] %v189
      %191 = vst [vmem:[#allocation3 + $0x30] sm:$0xff] 0
      %v192 = vld [vmem:[%s165] sm:$0xf]
      %v193 = vld [vmem:[%s165 + $0x4] sm:$0xf]
      %v194 = vld [vmem:[%s165 + $0x8] sm:$0xf]
      %v195 = vld [vmem:[%s165 + $0xc] sm:$0xf]
      %v196 = vld [vmem:[%s165 + $0x10] sm:$0xf]
      %v197 = vld [vmem:[%s165 + $0x14] sm:$0xf]
      %v198 = vld [vmem:[%s165 + $0x18] sm:$0xf]
      %v199 = vld [vmem:[%s165 + $0x1c] sm:$0xf]
      %vm200 = vcmask 1043456
      %v203 = vsel %vm200, %v192, 0
      %v205 = vsel %vm200, %v193, 0
      %v207 = vsel %vm200, %v194, 0
      %v209 = vsel %vm200, %v195, 0
      %v211 = vsel %vm200, %v196, 0
      %v213 = vsel %vm200, %v197, 0
      %v215 = vsel %vm200, %v198, 0
      %v217 = vsel %vm200, %v199, 0
      %v226 = vcombine.high %v203, %v203
      %v228 = vunpack.c.l.s4 1966171168
      %v229 = vunpack.c.0.s8 %v228
      %v230 = vlaneseq
      %v231 = vshrl.u32 %v230, 7
      %v232 = vsub.s32 %v229, %v231
      %v233 = vrot.slane %v203, %v232
      %v235 = vunpack.c.l.s4 1966171168
      %v236 = vunpack.c.0.s8 %v235
      %v237 = vlaneseq
      %v238 = vshrl.u32 %v237, 7
      %v239 = vsub.s32 %v236, %v238
      %v240 = vrot.slane %v226, %v239
      %v241 = vcombine.high %v233, %v233
      %v243 = vunpack.c.l.s4 1966171168
      %v244 = vunpack.c.0.s8 %v243
      %v245 = vlaneseq
      %v246 = vshrl.u32 %v245, 7
      %v247 = vsub.s32 %v244, %v246
      %v248 = vrot.slane %v233, %v247
      %v250 = vunpack.c.l.s4 1966171168
      %v251 = vunpack.c.0.s8 %v250
      %v252 = vlaneseq
      %v253 = vshrl.u32 %v252, 7
      %v254 = vsub.s32 %v251, %v253
      %v255 = vrot.slane %v240, %v254
      %v257 = vunpack.c.l.s4 1966171168
      %v258 = vunpack.c.0.s8 %v257
      %v259 = vlaneseq
      %v260 = vshrl.u32 %v259, 7
      %v261 = vsub.s32 %v258, %v260
      %v262 = vrot.slane %v241, %v261
      %v263 = vcombine.high %v248, %v248
      %v264 = vcombine.high %v262, %v262
      %v265 = vcombine.high %v205, %v205
      %v267 = vunpack.c.l.s4 1966171168
      %v268 = vunpack.c.0.s8 %v267
      %v269 = vlaneseq
      %v270 = vshrl.u32 %v269, 7
      %v271 = vsub.s32 %v268, %v270
      %v272 = vrot.slane %v205, %v271
      %v274 = vunpack.c.l.s4 1966171168
      %v275 = vunpack.c.0.s8 %v274
      %v276 = vlaneseq
      %v277 = vshrl.u32 %v276, 7
      %v278 = vsub.s32 %v275, %v277
      %v279 = vrot.slane %v265, %v278
      %v280 = vcombine.high %v272, %v272
      %v282 = vunpack.c.l.s4 1966171168
      %v283 = vunpack.c.0.s8 %v282
      %v284 = vlaneseq
      %v285 = vshrl.u32 %v284, 7
      %v286 = vsub.s32 %v283, %v285
      %v287 = vrot.slane %v272, %v286
      %v289 = vunpack.c.l.s4 1966171168
      %v290 = vunpack.c.0.s8 %v289
      %v291 = vlaneseq
      %v292 = vshrl.u32 %v291, 7
      %v293 = vsub.s32 %v290, %v292
      %v294 = vrot.slane %v279, %v293
      %v296 = vunpack.c.l.s4 1966171168
      %v297 = vunpack.c.0.s8 %v296
      %v298 = vlaneseq
      %v299 = vshrl.u32 %v298, 7
      %v300 = vsub.s32 %v297, %v299
      %v301 = vrot.slane %v280, %v300
      %v302 = vcombine.high %v287, %v287
      %v303 = vcombine.high %v301, %v301
      %v304 = vcombine.high %v207, %v207
      %v306 = vunpack.c.l.s4 1966171168
      %v307 = vunpack.c.0.s8 %v306
      %v308 = vlaneseq
      %v309 = vshrl.u32 %v308, 7
      %v310 = vsub.s32 %v307, %v309
      %v311 = vrot.slane %v207, %v310
      %v313 = vunpack.c.l.s4 1966171168
      %v314 = vunpack.c.0.s8 %v313
      %v315 = vlaneseq
      %v316 = vshrl.u32 %v315, 7
      %v317 = vsub.s32 %v314, %v316
      %v318 = vrot.slane %v304, %v317
      %v319 = vcombine.high %v311, %v311
      %v321 = vunpack.c.l.s4 1966171168
      %v322 = vunpack.c.0.s8 %v321
      %v323 = vlaneseq
      %v324 = vshrl.u32 %v323, 7
      %v325 = vsub.s32 %v322, %v324
      %v326 = vrot.slane %v311, %v325
      %v328 = vunpack.c.l.s4 1966171168
      %v329 = vunpack.c.0.s8 %v328
      %v330 = vlaneseq
      %v331 = vshrl.u32 %v330, 7
      %v332 = vsub.s32 %v329, %v331
      %v333 = vrot.slane %v318, %v332
      %v335 = vunpack.c.l.s4 1966171168
      %v336 = vunpack.c.0.s8 %v335
      %v337 = vlaneseq
      %v338 = vshrl.u32 %v337, 7
      %v339 = vsub.s32 %v336, %v338
      %v340 = vrot.slane %v319, %v339
      %v341 = vcombine.high %v326, %v326
      %v342 = vcombine.high %v340, %v340
      %v343 = vcombine.high %v209, %v209
      %v345 = vunpack.c.l.s4 1966171168
      %v346 = vunpack.c.0.s8 %v345
      %v347 = vlaneseq
      %v348 = vshrl.u32 %v347, 7
      %v349 = vsub.s32 %v346, %v348
      %v350 = vrot.slane %v209, %v349
      %v352 = vunpack.c.l.s4 1966171168
      %v353 = vunpack.c.0.s8 %v352
      %v354 = vlaneseq
      %v355 = vshrl.u32 %v354, 7
      %v356 = vsub.s32 %v353, %v355
      %v357 = vrot.slane %v343, %v356
      %v358 = vcombine.high %v350, %v350
      %v360 = vunpack.c.l.s4 1966171168
      %v361 = vunpack.c.0.s8 %v360
      %v362 = vlaneseq
      %v363 = vshrl.u32 %v362, 7
      %v364 = vsub.s32 %v361, %v363
      %v365 = vrot.slane %v350, %v364
      %v367 = vunpack.c.l.s4 1966171168
      %v368 = vunpack.c.0.s8 %v367
      %v369 = vlaneseq
      %v370 = vshrl.u32 %v369, 7
      %v371 = vsub.s32 %v368, %v370
      %v372 = vrot.slane %v357, %v371
      %v374 = vunpack.c.l.s4 1966171168
      %v375 = vunpack.c.0.s8 %v374
      %v376 = vlaneseq
      %v377 = vshrl.u32 %v376, 7
      %v378 = vsub.s32 %v375, %v377
      %v379 = vrot.slane %v358, %v378
      %v380 = vcombine.high %v365, %v365
      %v381 = vcombine.high %v379, %v379
      %v382 = vcombine.high %v211, %v211
      %v384 = vunpack.c.l.s4 1966171168
      %v385 = vunpack.c.0.s8 %v384
      %v386 = vlaneseq
      %v387 = vshrl.u32 %v386, 7
      %v388 = vsub.s32 %v385, %v387
      %v389 = vrot.slane %v211, %v388
      %v391 = vunpack.c.l.s4 1966171168
      %v392 = vunpack.c.0.s8 %v391
      %v393 = vlaneseq
      %v394 = vshrl.u32 %v393, 7
      %v395 = vsub.s32 %v392, %v394
      %v396 = vrot.slane %v382, %v395
      %v397 = vcombine.high %v389, %v389
      %v399 = vunpack.c.l.s4 1966171168
      %v400 = vunpack.c.0.s8 %v399
      %v401 = vlaneseq
      %v402 = vshrl.u32 %v401, 7
      %v403 = vsub.s32 %v400, %v402
      %v404 = vrot.slane %v389, %v403
      %v406 = vunpack.c.l.s4 1966171168
      %v407 = vunpack.c.0.s8 %v406
      %v408 = vlaneseq
      %v409 = vshrl.u32 %v408, 7
      %v410 = vsub.s32 %v407, %v409
      %v411 = vrot.slane %v396, %v410
      %v413 = vunpack.c.l.s4 1966171168
      %v414 = vunpack.c.0.s8 %v413
      %v415 = vlaneseq
      %v416 = vshrl.u32 %v415, 7
      %v417 = vsub.s32 %v414, %v416
      %v418 = vrot.slane %v397, %v417
      %v419 = vcombine.high %v404, %v404
      %v420 = vcombine.high %v418, %v418
      %v421 = vcombine.high %v213, %v213
      %v423 = vunpack.c.l.s4 1966171168
      %v424 = vunpack.c.0.s8 %v423
      %v425 = vlaneseq
      %v426 = vshrl.u32 %v425, 7
      %v427 = vsub.s32 %v424, %v426
      %v428 = vrot.slane %v213, %v427
      %v430 = vunpack.c.l.s4 1966171168
      %v431 = vunpack.c.0.s8 %v430
      %v432 = vlaneseq
      %v433 = vshrl.u32 %v432, 7
      %v434 = vsub.s32 %v431, %v433
      %v435 = vrot.slane %v421, %v434
      %v436 = vcombine.high %v428, %v428
      %v438 = vunpack.c.l.s4 1966171168
      %v439 = vunpack.c.0.s8 %v438
      %v440 = vlaneseq
      %v441 = vshrl.u32 %v440, 7
      %v442 = vsub.s32 %v439, %v441
      %v443 = vrot.slane %v428, %v442
      %v445 = vunpack.c.l.s4 1966171168
      %v446 = vunpack.c.0.s8 %v445
      %v447 = vlaneseq
      %v448 = vshrl.u32 %v447, 7
      %v449 = vsub.s32 %v446, %v448
      %v450 = vrot.slane %v435, %v449
      %v452 = vunpack.c.l.s4 1966171168
      %v453 = vunpack.c.0.s8 %v452
      %v454 = vlaneseq
      %v455 = vshrl.u32 %v454, 7
      %v456 = vsub.s32 %v453, %v455
      %v457 = vrot.slane %v436, %v456
      %v458 = vcombine.high %v443, %v443
      %v459 = vcombine.high %v457, %v457
      %v460 = vcombine.high %v215, %v215
      %v462 = vunpack.c.l.s4 1966171168
      %v463 = vunpack.c.0.s8 %v462
      %v464 = vlaneseq
      %v465 = vshrl.u32 %v464, 7
      %v466 = vsub.s32 %v463, %v465
      %v467 = vrot.slane %v215, %v466
      %v469 = vunpack.c.l.s4 1966171168
      %v470 = vunpack.c.0.s8 %v469
      %v471 = vlaneseq
      %v472 = vshrl.u32 %v471, 7
      %v473 = vsub.s32 %v470, %v472
      %v474 = vrot.slane %v460, %v473
      %v475 = vcombine.high %v467, %v467
      %v477 = vunpack.c.l.s4 1966171168
      %v478 = vunpack.c.0.s8 %v477
      %v479 = vlaneseq
      %v480 = vshrl.u32 %v479, 7
      %v481 = vsub.s32 %v478, %v480
      %v482 = vrot.slane %v467, %v481
      %v484 = vunpack.c.l.s4 1966171168
      %v485 = vunpack.c.0.s8 %v484
      %v486 = vlaneseq
      %v487 = vshrl.u32 %v486, 7
      %v488 = vsub.s32 %v485, %v487
      %v489 = vrot.slane %v474, %v488
      %v491 = vunpack.c.l.s4 1966171168
      %v492 = vunpack.c.0.s8 %v491
      %v493 = vlaneseq
      %v494 = vshrl.u32 %v493, 7
      %v495 = vsub.s32 %v492, %v494
      %v496 = vrot.slane %v475, %v495
      %v497 = vcombine.high %v482, %v482
      %v498 = vcombine.high %v496, %v496
      %v499 = vcombine.high %v217, %v217
      %v501 = vunpack.c.l.s4 1966171168
      %v502 = vunpack.c.0.s8 %v501
      %v503 = vlaneseq
      %v504 = vshrl.u32 %v503, 7
      %v505 = vsub.s32 %v502, %v504
      %v506 = vrot.slane %v217, %v505
      %v508 = vunpack.c.l.s4 1966171168
      %v509 = vunpack.c.0.s8 %v508
      %v510 = vlaneseq
      %v511 = vshrl.u32 %v510, 7
      %v512 = vsub.s32 %v509, %v511
      %v513 = vrot.slane %v499, %v512
      %v514 = vcombine.high %v506, %v506
      %v516 = vunpack.c.l.s4 1966171168
      %v517 = vunpack.c.0.s8 %v516
      %v518 = vlaneseq
      %v519 = vshrl.u32 %v518, 7
      %v520 = vsub.s32 %v517, %v519
      %v521 = vrot.slane %v506, %v520
      %v523 = vunpack.c.l.s4 1966171168
      %v524 = vunpack.c.0.s8 %v523
      %v525 = vlaneseq
      %v526 = vshrl.u32 %v525, 7
      %v527 = vsub.s32 %v524, %v526
      %v528 = vrot.slane %v513, %v527
      %v530 = vunpack.c.l.s4 1966171168
      %v531 = vunpack.c.0.s8 %v530
      %v532 = vlaneseq
      %v533 = vshrl.u32 %v532, 7
      %v534 = vsub.s32 %v531, %v533
      %v535 = vrot.slane %v514, %v534
      %v536 = vcombine.high %v521, %v521
      %v537 = vcombine.high %v535, %v535
      %v578 = vlaneseq
      %v579 = vshrl.u32 %v578, 7
      %v580 = vadd.s32 %v579, 8
      %v581 = vadd.s32 %v579, 16
      %v582 = vadd.s32 %v579, 24
      %v583 = vadd.s32 %v579, 32
      %v584 = vadd.s32 %v579, 40
      %v585 = vadd.s32 %v579, 48
      %v586 = vadd.s32 %v579, 56
      %v587 = vadd.s32 %v579, 64
      %v588 = vadd.s32 %v579, 72
      %vm589 = vcmp.lt.s32.totalorder %v579, 0
      %v590 = vsub.s32 0, %v579
      %v591 = vsel %vm589, %v590, %v579
      %v592 = vmul.u32.u64.compose %v591, 3435973837
      %v593 = vextract.low.u32 %v592
      %v594 = vextract.high.u32 %v592
      %v595 = vshrl.u32 %v594, 3
      %v596 = vmul.u32 %v595, 10
      %v597 = vsub.s32 %v591, %v596
      %v598 = vsub.s32 0, %v597
      %v599 = vsel %vm589, %v598, %v597
      %vm600 = vcmp.lt.s32.totalorder %v580, 0
      %v601 = vsub.s32 0, %v580
      %v602 = vsel %vm600, %v601, %v580
      %v603 = vmul.u32.u64.compose %v602, 3435973837
      %v604 = vextract.low.u32 %v603
      %v605 = vextract.high.u32 %v603
      %v606 = vshrl.u32 %v605, 3
      %v607 = vmul.u32 %v606, 10
      %v608 = vsub.s32 %v602, %v607
      %v609 = vsub.s32 0, %v608
      %v610 = vsel %vm600, %v609, %v608
      %vm611 = vcmp.lt.s32.totalorder %v581, 0
      %v612 = vsub.s32 0, %v581
      %v613 = vsel %vm611, %v612, %v581
      %v614 = vmul.u32.u64.compose %v613, 3435973837
      %v615 = vextract.low.u32 %v614
      %v616 = vextract.high.u32 %v614
      %v617 = vshrl.u32 %v616, 3
      %v618 = vmul.u32 %v617, 10
      %v619 = vsub.s32 %v613, %v618
      %v620 = vsub.s32 0, %v619
      %v621 = vsel %vm611, %v620, %v619
      %vm622 = vcmp.lt.s32.totalorder %v582, 0
      %v623 = vsub.s32 0, %v582
      %v624 = vsel %vm622, %v623, %v582
      %v625 = vmul.u32.u64.compose %v624, 3435973837
      %v626 = vextract.low.u32 %v625
      %v627 = vextract.high.u32 %v625
      %v628 = vshrl.u32 %v627, 3
      %v629 = vmul.u32 %v628, 10
      %v630 = vsub.s32 %v624, %v629
      %v631 = vsub.s32 0, %v630
      %v632 = vsel %vm622, %v631, %v630
      %vm633 = vcmp.lt.s32.totalorder %v583, 0
      %v634 = vsub.s32 0, %v583
      %v635 = vsel %vm633, %v634, %v583
      %v636 = vmul.u32.u64.compose %v635, 3435973837
      %v637 = vextract.low.u32 %v636
      %v638 = vextract.high.u32 %v636
      %v639 = vshrl.u32 %v638, 3
      %v640 = vmul.u32 %v639, 10
      %v641 = vsub.s32 %v635, %v640
      %v642 = vsub.s32 0, %v641
      %v643 = vsel %vm633, %v642, %v641
      %vm644 = vcmp.lt.s32.totalorder %v584, 0
      %v645 = vsub.s32 0, %v584
      %v646 = vsel %vm644, %v645, %v584
      %v647 = vmul.u32.u64.compose %v646, 3435973837
      %v648 = vextract.low.u32 %v647
      %v649 = vextract.high.u32 %v647
      %v650 = vshrl.u32 %v649, 3
      %v651 = vmul.u32 %v650, 10
      %v652 = vsub.s32 %v646, %v651
      %v653 = vsub.s32 0, %v652
      %v654 = vsel %vm644, %v653, %v652
      %vm655 = vcmp.lt.s32.totalorder %v585, 0
      %v656 = vsub.s32 0, %v585
      %v657 = vsel %vm655, %v656, %v585
      %v658 = vmul.u32.u64.compose %v657, 3435973837
      %v659 = vextract.low.u32 %v658
      %v660 = vextract.high.u32 %v658
      %v661 = vshrl.u32 %v660, 3
      %v662 = vmul.u32 %v661, 10
      %v663 = vsub.s32 %v657, %v662
      %v664 = vsub.s32 0, %v663
      %v665 = vsel %vm655, %v664, %v663
      %vm666 = vcmp.lt.s32.totalorder %v586, 0
      %v667 = vsub.s32 0, %v586
      %v668 = vsel %vm666, %v667, %v586
      %v669 = vmul.u32.u64.compose %v668, 3435973837
      %v670 = vextract.low.u32 %v669
      %v671 = vextract.high.u32 %v669
      %v672 = vshrl.u32 %v671, 3
      %v673 = vmul.u32 %v672, 10
      %v674 = vsub.s32 %v668, %v673
      %v675 = vsub.s32 0, %v674
      %v676 = vsel %vm666, %v675, %v674
      %vm677 = vcmp.lt.s32.totalorder %v587, 0
      %v678 = vsub.s32 0, %v587
      %v679 = vsel %vm677, %v678, %v587
      %v680 = vmul.u32.u64.compose %v679, 3435973837
      %v681 = vextract.low.u32 %v680
      %v682 = vextract.high.u32 %v680
      %v683 = vshrl.u32 %v682, 3
      %v684 = vmul.u32 %v683, 10
      %v685 = vsub.s32 %v679, %v684
      %v686 = vsub.s32 0, %v685
      %v687 = vsel %vm677, %v686, %v685
      %vm688 = vcmp.lt.s32.totalorder %v588, 0
      %v689 = vsub.s32 0, %v588
      %v690 = vsel %vm688, %v689, %v588
      %v691 = vmul.u32.u64.compose %v690, 3435973837
      %v692 = vextract.low.u32 %v691
      %v693 = vextract.high.u32 %v691
      %v694 = vshrl.u32 %v693, 3
      %v695 = vmul.u32 %v694, 10
      %v696 = vsub.s32 %v690, %v695
      %v697 = vsub.s32 0, %v696
      %v698 = vsel %vm688, %v697, %v696
      %vm699 = vcmp.ne.s32.totalorder %v599, 0
      %vm700 = vcmp.ne.s32.totalorder %v610, 0
      %vm701 = vcmp.ne.s32.totalorder %v621, 0
      %vm702 = vcmp.ne.s32.totalorder %v632, 0
      %vm703 = vcmp.ne.s32.totalorder %v643, 0
      %vm704 = vcmp.ne.s32.totalorder %v654, 0
      %vm705 = vcmp.ne.s32.totalorder %v665, 0
      %vm706 = vcmp.ne.s32.totalorder %v676, 0
      %vm707 = vcmp.ne.s32.totalorder %v687, 0
      %vm708 = vcmp.ne.s32.totalorder %v698, 0
      %vm709 = vcmp.lt.s32.totalorder %v599, 0
      %vm710 = vcmp.lt.s32.totalorder %v610, 0
      %vm711 = vcmp.lt.s32.totalorder %v621, 0
      %vm712 = vcmp.lt.s32.totalorder %v632, 0
      %vm713 = vcmp.lt.s32.totalorder %v643, 0
      %vm714 = vcmp.lt.s32.totalorder %v654, 0
      %vm715 = vcmp.lt.s32.totalorder %v665, 0
      %vm716 = vcmp.lt.s32.totalorder %v676, 0
      %vm717 = vcmp.lt.s32.totalorder %v687, 0
      %vm718 = vcmp.lt.s32.totalorder %v698, 0
      %vm719 = vmand %vm709, %vm699
      %vm720 = vmand %vm710, %vm700
      %vm721 = vmand %vm711, %vm701
      %vm722 = vmand %vm712, %vm702
      %vm723 = vmand %vm713, %vm703
      %vm724 = vmand %vm714, %vm704
      %vm725 = vmand %vm715, %vm705
      %vm726 = vmand %vm716, %vm706
      %vm727 = vmand %vm717, %vm707
      %vm728 = vmand %vm718, %vm708
      %v729 = vadd.s32 %v599, 10
      %v730 = vadd.s32 %v610, 10
      %v731 = vadd.s32 %v621, 10
      %v732 = vadd.s32 %v632, 10
      %v733 = vadd.s32 %v643, 10
      %v734 = vadd.s32 %v654, 10
      %v735 = vadd.s32 %v665, 10
      %v736 = vadd.s32 %v676, 10
      %v737 = vadd.s32 %v687, 10
      %v738 = vadd.s32 %v698, 10
      %v739 = vsel %vm719, %v729, %v599
      %v740 = vsel %vm720, %v730, %v610
      %v741 = vsel %vm721, %v731, %v621
      %v742 = vsel %vm722, %v732, %v632
      %v743 = vsel %vm723, %v733, %v643
      %v744 = vsel %vm724, %v734, %v654
      %v745 = vsel %vm725, %v735, %v665
      %v746 = vsel %vm726, %v736, %v676
      %v747 = vsel %vm727, %v737, %v687
      %v748 = vsel %vm728, %v738, %v698
      %vm749 = vcmp.lt.s32.totalorder %v739, 8
      %vm750 = vcmp.lt.s32.totalorder %v740, 8
      %vm751 = vcmp.lt.s32.totalorder %v741, 8
      %vm752 = vcmp.lt.s32.totalorder %v742, 8
      %vm753 = vcmp.lt.s32.totalorder %v743, 8
      %vm754 = vcmp.lt.s32.totalorder %v744, 8
      %vm755 = vcmp.lt.s32.totalorder %v745, 8
      %vm756 = vcmp.lt.s32.totalorder %v746, 8
      %vm757 = vcmp.lt.s32.totalorder %v747, 8
      %vm758 = vcmp.lt.s32.totalorder %v748, 8
      %v759 = vcombine.low %v248, %v262
      %v760 = vcombine.low %v263, %v264
      %v761 = vcombine.low %v255, %v287
      %v762 = vcombine.low %v301, %v302
      %v764 = vunpack.c.l.s4 1966171168
      %v765 = vunpack.c.0.s8 %v764
      %v766 = vlaneseq
      %v767 = vshrl.u32 %v766, 7
      %v768 = vsub.s32 %v765, %v767
      %v769 = vrot.slane %v759, %v768
      %v771 = vunpack.c.l.s4 1966171168
      %v772 = vunpack.c.0.s8 %v771
      %v773 = vlaneseq
      %v774 = vshrl.u32 %v773, 7
      %v775 = vsub.s32 %v772, %v774
      %v776 = vrot.slane %v760, %v775
      %v778 = vunpack.c.l.s4 1966171168
      %v779 = vunpack.c.0.s8 %v778
      %v780 = vlaneseq
      %v781 = vshrl.u32 %v780, 7
      %v782 = vsub.s32 %v779, %v781
      %v783 = vrot.slane %v761, %v782
      %v785 = vunpack.c.l.s4 1966171168
      %v786 = vunpack.c.0.s8 %v785
      %v787 = vlaneseq
      %v788 = vshrl.u32 %v787, 7
      %v789 = vsub.s32 %v786, %v788
      %v790 = vrot.slane %v762, %v789
      %v791 = vcombine.low %v769, %v776
      %v792 = vcombine.low %v783, %v790
      %v794 = vunpack.c.l.s4 1966171168
      %v795 = vunpack.c.0.s8 %v794
      %v796 = vlaneseq
      %v797 = vshrl.u32 %v796, 7
      %v798 = vsub.s32 %v795, %v797
      %v799 = vrot.slane %v791, %v798
      %v801 = vunpack.c.l.s4 1966171168
      %v802 = vunpack.c.0.s8 %v801
      %v803 = vlaneseq
      %v804 = vshrl.u32 %v803, 7
      %v805 = vsub.s32 %v802, %v804
      %v806 = vrot.slane %v792, %v805
      %v807 = vcombine.low %v799, %v806
      %v808 = vcombine.low %v303, %v294
      %v809 = vcombine.low %v326, %v340
      %v810 = vcombine.low %v341, %v342
      %v811 = vcombine.low %v333, %v365
      %v813 = vunpack.c.l.s4 1966171168
      %v814 = vunpack.c.0.s8 %v813
      %v815 = vlaneseq
      %v816 = vshrl.u32 %v815, 7
      %v817 = vsub.s32 %v814, %v816
      %v818 = vrot.slane %v808, %v817
      %v820 = vunpack.c.l.s4 1966171168
      %v821 = vunpack.c.0.s8 %v820
      %v822 = vlaneseq
      %v823 = vshrl.u32 %v822, 7
      %v824 = vsub.s32 %v821, %v823
      %v825 = vrot.slane %v809, %v824
      %v827 = vunpack.c.l.s4 1966171168
      %v828 = vunpack.c.0.s8 %v827
      %v829 = vlaneseq
      %v830 = vshrl.u32 %v829, 7
      %v831 = vsub.s32 %v828, %v830
      %v832 = vrot.slane %v810, %v831
      %v834 = vunpack.c.l.s4 1966171168
      %v835 = vunpack.c.0.s8 %v834
      %v836 = vlaneseq
      %v837 = vshrl.u32 %v836, 7
      %v838 = vsub.s32 %v835, %v837
      %v839 = vrot.slane %v811, %v838
      %v840 = vcombine.low %v818, %v825
      %v841 = vcombine.low %v832, %v839
      %v843 = vunpack.c.l.s4 1966171168
      %v844 = vunpack.c.0.s8 %v843
      %v845 = vlaneseq
      %v846 = vshrl.u32 %v845, 7
      %v847 = vsub.s32 %v844, %v846
      %v848 = vrot.slane %v840, %v847
      %v850 = vunpack.c.l.s4 1966171168
      %v851 = vunpack.c.0.s8 %v850
      %v852 = vlaneseq
      %v853 = vshrl.u32 %v852, 7
      %v854 = vsub.s32 %v851, %v853
      %v855 = vrot.slane %v841, %v854
      %v856 = vcombine.low %v848, %v855
      %v857 = vcombine.low %v379, %v380
      %v858 = vcombine.low %v381, %v372
      %v859 = vcombine.low %v404, %v418
      %v860 = vcombine.low %v419, %v420
      %v862 = vunpack.c.l.s4 1966171168
      %v863 = vunpack.c.0.s8 %v862
      %v864 = vlaneseq
      %v865 = vshrl.u32 %v864, 7
      %v866 = vsub.s32 %v863, %v865
      %v867 = vrot.slane %v857, %v866
      %v869 = vunpack.c.l.s4 1966171168
      %v870 = vunpack.c.0.s8 %v869
      %v871 = vlaneseq
      %v872 = vshrl.u32 %v871, 7
      %v873 = vsub.s32 %v870, %v872
      %v874 = vrot.slane %v858, %v873
      %v876 = vunpack.c.l.s4 1966171168
      %v877 = vunpack.c.0.s8 %v876
      %v878 = vlaneseq
      %v879 = vshrl.u32 %v878, 7
      %v880 = vsub.s32 %v877, %v879
      %v881 = vrot.slane %v859, %v880
      %v883 = vunpack.c.l.s4 1966171168
      %v884 = vunpack.c.0.s8 %v883
      %v885 = vlaneseq
      %v886 = vshrl.u32 %v885, 7
      %v887 = vsub.s32 %v884, %v886
      %v888 = vrot.slane %v860, %v887
      %v889 = vcombine.low %v867, %v874
      %v890 = vcombine.low %v881, %v888
      %v892 = vunpack.c.l.s4 1966171168
      %v893 = vunpack.c.0.s8 %v892
      %v894 = vlaneseq
      %v895 = vshrl.u32 %v894, 7
      %v896 = vsub.s32 %v893, %v895
      %v897 = vrot.slane %v889, %v896
      %v899 = vunpack.c.l.s4 1966171168
      %v900 = vunpack.c.0.s8 %v899
      %v901 = vlaneseq
      %v902 = vshrl.u32 %v901, 7
      %v903 = vsub.s32 %v900, %v902
      %v904 = vrot.slane %v890, %v903
      %v905 = vcombine.low %v897, %v904
      %v906 = vcombine.low %v411, %v443
      %v907 = vcombine.low %v457, %v458
      %v908 = vcombine.low %v459, %v450
      %v909 = vcombine.low %v482, %v496
      %v911 = vunpack.c.l.s4 1966171168
      %v912 = vunpack.c.0.s8 %v911
      %v913 = vlaneseq
      %v914 = vshrl.u32 %v913, 7
      %v915 = vsub.s32 %v912, %v914
      %v916 = vrot.slane %v906, %v915
      %v918 = vunpack.c.l.s4 1966171168
      %v919 = vunpack.c.0.s8 %v918
      %v920 = vlaneseq
      %v921 = vshrl.u32 %v920, 7
      %v922 = vsub.s32 %v919, %v921
      %v923 = vrot.slane %v907, %v922
      %v925 = vunpack.c.l.s4 1966171168
      %v926 = vunpack.c.0.s8 %v925
      %v927 = vlaneseq
      %v928 = vshrl.u32 %v927, 7
      %v929 = vsub.s32 %v926, %v928
      %v930 = vrot.slane %v908, %v929
      %v932 = vunpack.c.l.s4 1966171168
      %v933 = vunpack.c.0.s8 %v932
      %v934 = vlaneseq
      %v935 = vshrl.u32 %v934, 7
      %v936 = vsub.s32 %v933, %v935
      %v937 = vrot.slane %v909, %v936
      %v938 = vcombine.low %v916, %v923
      %v939 = vcombine.low %v930, %v937
      %v941 = vunpack.c.l.s4 1966171168
      %v942 = vunpack.c.0.s8 %v941
      %v943 = vlaneseq
      %v944 = vshrl.u32 %v943, 7
      %v945 = vsub.s32 %v942, %v944
      %v946 = vrot.slane %v938, %v945
      %v948 = vunpack.c.l.s4 1966171168
      %v949 = vunpack.c.0.s8 %v948
      %v950 = vlaneseq
      %v951 = vshrl.u32 %v950, 7
      %v952 = vsub.s32 %v949, %v951
      %v953 = vrot.slane %v939, %v952
      %v954 = vcombine.low %v946, %v953
      %v955 = vcombine.low %v497, %v498
      %v956 = vcombine.low %v489, %v521
      %v957 = vcombine.low %v535, %v536
      %v958 = vcombine.low %v537, %v528
      %v960 = vunpack.c.l.s4 1966171168
      %v961 = vunpack.c.0.s8 %v960
      %v962 = vlaneseq
      %v963 = vshrl.u32 %v962, 7
      %v964 = vsub.s32 %v961, %v963
      %v965 = vrot.slane %v955, %v964
      %v967 = vunpack.c.l.s4 1966171168
      %v968 = vunpack.c.0.s8 %v967
      %v969 = vlaneseq
      %v970 = vshrl.u32 %v969, 7
      %v971 = vsub.s32 %v968, %v970
      %v972 = vrot.slane %v956, %v971
      %v974 = vunpack.c.l.s4 1966171168
      %v975 = vunpack.c.0.s8 %v974
      %v976 = vlaneseq
      %v977 = vshrl.u32 %v976, 7
      %v978 = vsub.s32 %v975, %v977
      %v979 = vrot.slane %v957, %v978
      %v981 = vunpack.c.l.s4 1966171168
      %v982 = vunpack.c.0.s8 %v981
      %v983 = vlaneseq
      %v984 = vshrl.u32 %v983, 7
      %v985 = vsub.s32 %v982, %v984
      %v986 = vrot.slane %v958, %v985
      %v987 = vcombine.low %v965, %v972
      %v988 = vcombine.low %v979, %v986
      %v990 = vunpack.c.l.s4 1966171168
      %v991 = vunpack.c.0.s8 %v990
      %v992 = vlaneseq
      %v993 = vshrl.u32 %v992, 7
      %v994 = vsub.s32 %v991, %v993
      %v995 = vrot.slane %v987, %v994
      %v997 = vunpack.c.l.s4 1966171168
      %v998 = vunpack.c.0.s8 %v997
      %v999 = vlaneseq
      %v1000 = vshrl.u32 %v999, 7
      %v1001 = vsub.s32 %v998, %v1000
      %v1002 = vrot.slane %v988, %v1001
      %v1003 = vcombine.low %v995, %v1002
      %v1005 = vshrl.u32 %v807, 16
      %v1007 = vrot.slane %v1005, 2
      %v1008 = vshll.u32 %v807, 16
      %v1010 = vrot.slane %v1008, 3
      %v1011 = vor.u32 %v1007, %v1010
      %v1013 = vshrl.u32 %v856, 16
      %v1015 = vrot.slane %v1013, 2
      %v1016 = vshll.u32 %v856, 16
      %v1018 = vrot.slane %v1016, 3
      %v1019 = vor.u32 %v1015, %v1018
      %v1020 = vsel %vm173, %v1011, %v1019
      %v1022 = vshrl.u32 %v905, 16
      %v1024 = vrot.slane %v1022, 2
      %v1025 = vshll.u32 %v905, 16
      %v1027 = vrot.slane %v1025, 3
      %v1028 = vor.u32 %v1024, %v1027
      %v1029 = vsel %vm173, %v1019, %v1028
      %v1031 = vshrl.u32 %v954, 16
      %v1033 = vrot.slane %v1031, 2
      %v1034 = vshll.u32 %v954, 16
      %v1036 = vrot.slane %v1034, 3
      %v1037 = vor.u32 %v1033, %v1036
      %v1038 = vsel %vm173, %v1028, %v1037
      %v1040 = vshrl.u32 %v1003, 16
      %v1042 = vrot.slane %v1040, 2
      %v1043 = vshll.u32 %v1003, 16
      %v1045 = vrot.slane %v1043, 3
      %v1046 = vor.u32 %v1042, %v1045
      %v1047 = vsel %vm173, %v1037, %v1046
      %v1054 = vld [vmem:[#allocation2] sm:$0xe0]
      %v1055 = vsel %vm180, %v1011, %v1054
      %1056 = vst [vmem:[#allocation2] sm:$0xe0] %v1055
      %1057 = vst [vmem:[#allocation2 + $0x8] sm:$0xff] %v1020
      %1058 = vst [vmem:[#allocation2 + $0x10] sm:$0xff] %v1029
      %1059 = vst [vmem:[#allocation2 + $0x18] sm:$0xff] %v1038
      %1060 = vst [vmem:[#allocation2 + $0x20] sm:$0xff] %v1047
      %v1061 = vld [vmem:[#allocation2 + $0x28] sm:$0x3f]
      %v1062 = vsel %vm174, %v1046, %v1061
      %1063 = vst [vmem:[#allocation2 + $0x28] sm:$0x3f] %v1062
      %v1064 = vld [vmem:[#allocation2] sm:$0xff]
      %v1065 = vld [vmem:[#allocation2 + $0x8] sm:$0xff]
      %v1066 = vld [vmem:[#allocation2 + $0x10] sm:$0xff]
      %v1067 = vld [vmem:[#allocation2 + $0x18] sm:$0xff]
      %v1068 = vld [vmem:[#allocation2 + $0x20] sm:$0xff]
      %v1069 = vld [vmem:[#allocation2 + $0x28] sm:$0x1]
      %v1070 = vld [vmem:[#allocation2] sm:$0xfe]
      %v1071 = vld [vmem:[#allocation2] sm:$0xe0]
      %v1072 = vld [vmem:[#allocation2 + $0x28] sm:$0x1f]
      %v1073 = vld [vmem:[#allocation2 + $0x28] sm:$0x3f]
      %v1074 = vld [vmem:[#allocation2] sm:$0xc0]
      %v1075 = vld [vmem:[#allocation2 + $0x8] sm:$0xfc]
      %v1076 = vld [vmem:[#allocation2 + $0x10] sm:$0xff]
      %v1077 = vld [vmem:[#allocation2 + $0x18] sm:$0xff]
      %v1078 = vld [vmem:[#allocation2 + $0x20] sm:$0xff]
      %v1079 = vld [vmem:[#allocation2 + $0x28] sm:$0xff]
      %v1080 = vld [vmem:[#allocation2 + $0x30] sm:$0x3]
      %v1081 = vld [vmem:[#allocation2 + $0x30] sm:$0x7]
      %v1082 = vld [vmem:[#allocation2 + $0x8] sm:$0xf8]
      %vm1083 = vsmask.f32 7424
      %v1085 = vshrl.u32 %v1064, 16
      %v1087 = vshll.u32 %v1064, 16
      %v1089 = vrot.slane %v1087, 1
      %v1090 = vor.u32 %v1085, %v1089
      %v1092 = vshll.u32 %v1065, 16
      %v1094 = vrot.slane %v1092, 1
      %v1095 = vsel %vm1083, %v1090, %v1094
      %v1096 = vshrl.u32 %v1065, 16
      %v1098 = vor.u32 %v1096, %v1094
      %v1100 = vshll.u32 %v1066, 16
      %v1102 = vrot.slane %v1100, 1
      %v1103 = vsel %vm1083, %v1098, %v1102
      %v1104 = vshrl.u32 %v1066, 16
      %v1106 = vor.u32 %v1104, %v1102
      %v1108 = vshll.u32 %v1067, 16
      %v1110 = vrot.slane %v1108, 1
      %v1111 = vsel %vm1083, %v1106, %v1110
      %v1112 = vshrl.u32 %v1067, 16
      %v1114 = vor.u32 %v1112, %v1110
      %v1116 = vshll.u32 %v1068, 16
      %v1118 = vrot.slane %v1116, 1
      %v1119 = vsel %vm1083, %v1114, %v1118
      %v1120 = vshrl.u32 %v1068, 16
      %v1122 = vor.u32 %v1120, %v1118
      %v1124 = vshll.u32 %v1069, 16
      %v1126 = vrot.slane %v1124, 1
      %v1127 = vsel %vm1083, %v1122, %v1126
      %vm1139 = vcmask 1046528
      %v1140 = vrot.slane %v1070, 1
      %v1141 = vrot.slane %v1065, 1
      %v1142 = vsel %vm1139, %v1140, %v1141
      %v1143 = vrot.slane %v1066, 1
      %v1144 = vsel %vm1139, %v1141, %v1143
      %v1145 = vrot.slane %v1067, 1
      %v1146 = vsel %vm1139, %v1143, %v1145
      %v1147 = vrot.slane %v1068, 1
      %v1148 = vsel %vm1139, %v1145, %v1147
      %v1149 = vrot.slane %v1069, 1
      %v1150 = vsel %vm1139, %v1147, %v1149
      %vm1158 = vcmask 1042432
      %v1159 = vrot.slane %v1071, 5
      %v1160 = vrot.slane %v1065, 5
      %v1161 = vsel %vm1158, %v1159, %v1160
      %v1162 = vrot.slane %v1066, 5
      %v1163 = vsel %vm1158, %v1160, %v1162
      %v1164 = vrot.slane %v1067, 5
      %v1165 = vsel %vm1158, %v1162, %v1164
      %v1166 = vrot.slane %v1068, 5
      %v1167 = vsel %vm1158, %v1164, %v1166
      %v1168 = vrot.slane %v1072, 5
      %v1169 = vsel %vm1158, %v1166, %v1168
      %vm1175 = vsmask.f32 2304
      %v1177 = vshrl.u32 %v1071, 16
      %v1179 = vrot.slane %v1177, 5
      %v1180 = vshll.u32 %v1071, 16
      %v1182 = vrot.slane %v1180, 6
      %v1183 = vor.u32 %v1179, %v1182
      %v1184 = vrot.slane %v1096, 5
      %v1185 = vrot.slane %v1092, 6
      %v1186 = vor.u32 %v1184, %v1185
      %v1187 = vsel %vm1175, %v1183, %v1186
      %v1188 = vrot.slane %v1104, 5
      %v1189 = vrot.slane %v1100, 6
      %v1190 = vor.u32 %v1188, %v1189
      %v1191 = vsel %vm1175, %v1186, %v1190
      %v1192 = vrot.slane %v1112, 5
      %v1193 = vrot.slane %v1108, 6
      %v1194 = vor.u32 %v1192, %v1193
      %v1195 = vsel %vm1175, %v1190, %v1194
      %v1196 = vrot.slane %v1120, 5
      %v1197 = vrot.slane %v1116, 6
      %v1198 = vor.u32 %v1196, %v1197
      %v1199 = vsel %vm1175, %v1194, %v1198
      %v1201 = vshrl.u32 %v1073, 16
      %v1203 = vrot.slane %v1201, 5
      %v1204 = vshll.u32 %v1073, 16
      %v1206 = vrot.slane %v1204, 6
      %v1207 = vor.u32 %v1203, %v1206
      %v1208 = vsel %vm1175, %v1198, %v1207
      %vm1216 = vcmask 1041408
      %v1217 = vrot.slane %v1074, 6
      %v1218 = vrot.slane %v1065, 6
      %v1219 = vsel %vm1216, %v1217, %v1218
      %v1220 = vrot.slane %v1066, 6
      %v1221 = vsel %vm1216, %v1218, %v1220
      %v1222 = vrot.slane %v1067, 6
      %v1223 = vsel %vm1216, %v1220, %v1222
      %v1224 = vrot.slane %v1068, 6
      %v1225 = vsel %vm1216, %v1222, %v1224
      %v1226 = vrot.slane %v1073, 6
      %v1227 = vsel %vm1216, %v1224, %v1226
      %v1239 = vrot.slane %v1075, 2
      %v1240 = vrot.slane %v1076, 2
      %v1241 = vsel %vm172, %v1239, %v1240
      %v1242 = vrot.slane %v1077, 2
      %v1243 = vsel %vm172, %v1240, %v1242
      %v1244 = vrot.slane %v1078, 2
      %v1245 = vsel %vm172, %v1242, %v1244
      %v1246 = vrot.slane %v1079, 2
      %v1247 = vsel %vm172, %v1244, %v1246
      %v1248 = vrot.slane %v1080, 2
      %v1249 = vsel %vm172, %v1246, %v1248
      %v1256 = vshrl.u32 %v1075, 16
      %v1258 = vrot.slane %v1256, 2
      %v1259 = vshll.u32 %v1075, 16
      %v1261 = vrot.slane %v1259, 3
      %v1262 = vor.u32 %v1258, %v1261
      %v1264 = vshrl.u32 %v1076, 16
      %v1266 = vrot.slane %v1264, 2
      %v1267 = vshll.u32 %v1076, 16
      %v1269 = vrot.slane %v1267, 3
      %v1270 = vor.u32 %v1266, %v1269
      %v1271 = vsel %vm173, %v1262, %v1270
      %v1273 = vshrl.u32 %v1077, 16
      %v1275 = vrot.slane %v1273, 2
      %v1276 = vshll.u32 %v1077, 16
      %v1278 = vrot.slane %v1276, 3
      %v1279 = vor.u32 %v1275, %v1278
      %v1280 = vsel %vm173, %v1270, %v1279
      %v1282 = vshrl.u32 %v1078, 16
      %v1284 = vrot.slane %v1282, 2
      %v1285 = vshll.u32 %v1078, 16
      %v1287 = vrot.slane %v1285, 3
      %v1288 = vor.u32 %v1284, %v1287
      %v1289 = vsel %vm173, %v1279, %v1288
      %v1291 = vshrl.u32 %v1079, 16
      %v1293 = vrot.slane %v1291, 2
      %v1294 = vshll.u32 %v1079, 16
      %v1296 = vrot.slane %v1294, 3
      %v1297 = vor.u32 %v1293, %v1296
      %v1298 = vsel %vm173, %v1288, %v1297
      %v1300 = vshrl.u32 %v1081, 16
      %v1302 = vrot.slane %v1300, 2
      %v1303 = vshll.u32 %v1081, 16
      %v1305 = vrot.slane %v1303, 3
      %v1306 = vor.u32 %v1302, %v1305
      %v1307 = vsel %vm173, %v1297, %v1306
      %vm1315 = vcmask 1044480
      %v1316 = vrot.slane %v1082, 3
      %v1317 = vrot.slane %v1076, 3
      %v1318 = vsel %vm1315, %v1316, %v1317
      %v1319 = vrot.slane %v1077, 3
      %v1320 = vsel %vm1315, %v1317, %v1319
      %v1321 = vrot.slane %v1078, 3
      %v1322 = vsel %vm1315, %v1319, %v1321
      %v1323 = vrot.slane %v1079, 3
      %v1324 = vsel %vm1315, %v1321, %v1323
      %v1325 = vrot.slane %v1081, 3
      %v1326 = vsel %vm1315, %v1323, %v1325
      %v1332 = vld [vmem:[%s1] sm:$0xf]
      %v1333 = vld [vmem:[%s1 + $0x4] sm:$0xf]
      %v1334 = vld [vmem:[%s1 + $0x8] sm:$0xf]
      %v1335 = vld [vmem:[%s1 + $0xc] sm:$0xf]
      %v1336 = vld [vmem:[%s1 + $0x10] sm:$0xf]
      %v1337 = vld [vmem:[%s1 + $0x14] sm:$0xf]
      %v1338 = vld [vmem:[%s1 + $0x18] sm:$0xf]
      %v1339 = vld [vmem:[%s1 + $0x1c] sm:$0xf]
      %v1340 = vld [vmem:[%s1 + $0x20] sm:$0xf]
      %v1341 = vld [vmem:[%s1 + $0x24] sm:$0xf]
      %v1342 = vld [vmem:[%s1 + $0x28] sm:$0xf]
      %v1343 = vld [vmem:[%s1 + $0x2c] sm:$0xf]
      %v1344 = vld [vmem:[%s1 + $0x30] sm:$0xf]
      %v1345 = vld [vmem:[%s1 + $0x34] sm:$0xf]
      %v1346 = vld [vmem:[%s1 + $0x38] sm:$0xf]
      %v1347 = vld [vmem:[%s1 + $0x3c] sm:$0xf]
      %v1348 = vld [vmem:[%s1 + $0x40] sm:$0xf]
      %v1349 = vld [vmem:[%s1 + $0x44] sm:$0xf]
      %v1350 = vld [vmem:[%s1 + $0x48] sm:$0xf]
      %v1351 = vld [vmem:[%s1 + $0x4c] sm:$0xf]
      %v1352 = vld [vmem:[%s1 + $0x50] sm:$0xf]
      %v1353 = vld [vmem:[%s1 + $0x54] sm:$0xf]
      %v1354 = vld [vmem:[%s1 + $0x58] sm:$0xf]
      %v1355 = vld [vmem:[%s1 + $0x5c] sm:$0xf]
      %v1356 = vld [vmem:[%s1 + $0x60] sm:$0xf]
      %v1357 = vld [vmem:[%s1 + $0x64] sm:$0xf]
      %v1358 = vld [vmem:[%s1 + $0x68] sm:$0xf]
      %v1359 = vld [vmem:[%s1 + $0x6c] sm:$0xf]
      %v1360 = vld [vmem:[%s1 + $0x70] sm:$0xf]
      %v1361 = vld [vmem:[%s1 + $0x74] sm:$0xf]
      %v1362 = vld [vmem:[%s1 + $0x78] sm:$0xf]
      %v1363 = vld [vmem:[%s1 + $0x7c] sm:$0xf]
      %v1364 = vld [vmem:[%s1 + $0x80] sm:$0xf]
      %v1365 = vld [vmem:[%s1 + $0x84] sm:$0xf]
      %v1366 = vld [vmem:[%s1 + $0x88] sm:$0xf]
      %v1367 = vld [vmem:[%s1 + $0x8c] sm:$0xf]
      %v1368 = vld [vmem:[%s1 + $0x90] sm:$0xf]
      %v1369 = vld [vmem:[%s1 + $0x94] sm:$0xf]
      %v1370 = vld [vmem:[%s1 + $0x98] sm:$0xf]
      %v1371 = vld [vmem:[%s1 + $0x9c] sm:$0xf]
      %v1372 = vld [vmem:[%s1 + $0xa0] sm:$0xf]
      %v1373 = vld [vmem:[%s1 + $0xa4] sm:$0xf]
      %v1374 = vld [vmem:[%s1 + $0xa8] sm:$0xf]
      %v1375 = vld [vmem:[%s1 + $0xac] sm:$0xf]
      %v1376 = vld [vmem:[%s1 + $0xb0] sm:$0xf]
      %v1377 = vld [vmem:[%s1 + $0xb4] sm:$0xf]
      %v1378 = vld [vmem:[%s1 + $0xb8] sm:$0xf]
      %v1379 = vld [vmem:[%s1 + $0xbc] sm:$0xf]
      %v1380 = vld [vmem:[%s1 + $0xc0] sm:$0xf]
      %v1381 = vld [vmem:[%s1 + $0xc4] sm:$0xf]
      %v1382 = vld [vmem:[%s1 + $0xc8] sm:$0xf]
      %v1383 = vld [vmem:[%s1 + $0xcc] sm:$0xf]
      %v1384 = vld [vmem:[%s1 + $0xd0] sm:$0xf]
      %v1385 = vld [vmem:[%s1 + $0xd4] sm:$0xf]
      %v1386 = vld [vmem:[%s1 + $0xd8] sm:$0xf]
      %v1387 = vld [vmem:[%s1 + $0xdc] sm:$0xf]
      %v1388 = vld [vmem:[%s1 + $0xe0] sm:$0xf]
      %v1389 = vld [vmem:[%s1 + $0xe4] sm:$0xf]
      %v1390 = vld [vmem:[%s1 + $0xe8] sm:$0xf]
      %v1391 = vld [vmem:[%s1 + $0xec] sm:$0xf]
      %v1392 = vld [vmem:[%s1 + $0xf0] sm:$0xf]
      %v1393 = vld [vmem:[%s1 + $0xf4] sm:$0xf]
      %v1394 = vld [vmem:[%s1 + $0xf8] sm:$0xf]
      %v1395 = vld [vmem:[%s1 + $0xfc] sm:$0xf]
      %v1396 = vld [vmem:[%s1 + $0x100] sm:$0xf]
      %v1397 = vld [vmem:[%s1 + $0x104] sm:$0xf]
      %v1398 = vld [vmem:[%s1 + $0x108] sm:$0xf]
      %v1399 = vld [vmem:[%s1 + $0x10c] sm:$0xf]
      %v1400 = vld [vmem:[%s1 + $0x110] sm:$0xf]
      %v1401 = vld [vmem:[%s1 + $0x114] sm:$0xf]
      %v1402 = vld [vmem:[%s1 + $0x118] sm:$0xf]
      %v1403 = vld [vmem:[%s1 + $0x11c] sm:$0xf]
      %v1404 = vld [vmem:[%s1 + $0x120] sm:$0xf]
      %v1405 = vld [vmem:[%s1 + $0x124] sm:$0xf]
      %v1406 = vld [vmem:[%s1 + $0x128] sm:$0xf]
      %v1407 = vld [vmem:[%s1 + $0x12c] sm:$0xf]
      %v1408 = vld [vmem:[%s1 + $0x130] sm:$0xf]
      %v1409 = vld [vmem:[%s1 + $0x134] sm:$0xf]
      %v1410 = vld [vmem:[%s1 + $0x138] sm:$0xf]
      %v1411 = vld [vmem:[%s1 + $0x13c] sm:$0xf]
      %v1412 = vld [vmem:[%s1 + $0x140] sm:$0xf]
      %v1413 = vld [vmem:[%s1 + $0x144] sm:$0xf]
      %v1414 = vld [vmem:[%s1 + $0x148] sm:$0xf]
      %v1415 = vld [vmem:[%s1 + $0x14c] sm:$0xf]
      %v1416 = vld [vmem:[%s1 + $0x150] sm:$0xf]
      %v1417 = vld [vmem:[%s1 + $0x154] sm:$0xf]
      %v1418 = vld [vmem:[%s1 + $0x158] sm:$0xf]
      %v1419 = vld [vmem:[%s1 + $0x15c] sm:$0xf]
      %v1420 = vld [vmem:[%s1 + $0x160] sm:$0xf]
      %v1421 = vld [vmem:[%s1 + $0x164] sm:$0xf]
      %v1422 = vld [vmem:[%s1 + $0x168] sm:$0xf]
      %v1423 = vld [vmem:[%s1 + $0x16c] sm:$0xf]
      %v1424 = vld [vmem:[%s1 + $0x170] sm:$0xf]
      %v1425 = vld [vmem:[%s1 + $0x174] sm:$0xf]
      %v1426 = vld [vmem:[%s1 + $0x178] sm:$0xf]
      %v1427 = vld [vmem:[%s1 + $0x17c] sm:$0xf]
      %v1428 = vld [vmem:[%s1 + $0x180] sm:$0xf]
      %v1429 = vld [vmem:[%s1 + $0x184] sm:$0xf]
      %v1430 = vld [vmem:[%s1 + $0x188] sm:$0xf]
      %v1431 = vld [vmem:[%s1 + $0x18c] sm:$0xf]
      %v1432 = vld [vmem:[%s1 + $0x190] sm:$0xf]
      %v1433 = vld [vmem:[%s1 + $0x194] sm:$0xf]
      %v1434 = vld [vmem:[%s1 + $0x198] sm:$0xf]
      %v1435 = vld [vmem:[%s1 + $0x19c] sm:$0xf]
      %v1436 = vld [vmem:[%s1 + $0x1a0] sm:$0xf]
      %v1437 = vld [vmem:[%s1 + $0x1a4] sm:$0xf]
      %v1438 = vld [vmem:[%s1 + $0x1a8] sm:$0xf]
      %v1439 = vld [vmem:[%s1 + $0x1ac] sm:$0xf]
      %v1440 = vld [vmem:[%s1 + $0x1b0] sm:$0xf]
      %v1441 = vld [vmem:[%s1 + $0x1b4] sm:$0xf]
      %v1442 = vld [vmem:[%s1 + $0x1b8] sm:$0xf]
      %v1443 = vld [vmem:[%s1 + $0x1bc] sm:$0xf]
      %v1444 = vld [vmem:[%s1 + $0x1c0] sm:$0xf]
      %v1445 = vld [vmem:[%s1 + $0x1c4] sm:$0xf]
      %v1446 = vld [vmem:[%s1 + $0x1c8] sm:$0xf]
      %v1447 = vld [vmem:[%s1 + $0x1cc] sm:$0xf]
      %v1448 = vld [vmem:[%s1 + $0x1d0] sm:$0xf]
      %v1449 = vld [vmem:[%s1 + $0x1d4] sm:$0xf]
      %v1450 = vld [vmem:[%s1 + $0x1d8] sm:$0xf]
      %v1451 = vld [vmem:[%s1 + $0x1dc] sm:$0xf]
      %v1452 = vld [vmem:[%s1 + $0x1e0] sm:$0xf]
      %v1453 = vld [vmem:[%s1 + $0x1e4] sm:$0xf]
      %v1454 = vld [vmem:[%s1 + $0x1e8] sm:$0xf]
      %v1455 = vld [vmem:[%s1 + $0x1ec] sm:$0xf]
      %v1456 = vld [vmem:[%s1 + $0x1f0] sm:$0xf]
      %v1457 = vld [vmem:[%s1 + $0x1f4] sm:$0xf]
      %v1458 = vld [vmem:[%s1 + $0x1f8] sm:$0xf]
      %v1459 = vld [vmem:[%s1 + $0x1fc] sm:$0xf]
      %v1460 = vld [vmem:[%s1 + $0x200] sm:$0xf]
      %v1461 = vld [vmem:[%s1 + $0x204] sm:$0xf]
      %v1462 = vld [vmem:[%s1 + $0x208] sm:$0xf]
      %v1463 = vld [vmem:[%s1 + $0x20c] sm:$0xf]
      %v1464 = vld [vmem:[%s1 + $0x210] sm:$0xf]
      %v1465 = vld [vmem:[%s1 + $0x214] sm:$0xf]
      %v1466 = vld [vmem:[%s1 + $0x218] sm:$0xf]
      %v1467 = vld [vmem:[%s1 + $0x21c] sm:$0xf]
      %v1468 = vld [vmem:[%s1 + $0x220] sm:$0xf]
      %v1469 = vld [vmem:[%s1 + $0x224] sm:$0xf]
      %v1470 = vld [vmem:[%s1 + $0x228] sm:$0xf]
      %v1471 = vld [vmem:[%s1 + $0x22c] sm:$0xf]
      %v1472 = vld [vmem:[%s1 + $0x230] sm:$0xf]
      %v1473 = vld [vmem:[%s1 + $0x234] sm:$0xf]
      %v1474 = vld [vmem:[%s1 + $0x238] sm:$0xf]
      %v1475 = vld [vmem:[%s1 + $0x23c] sm:$0xf]
      %v1476 = vld [vmem:[%s2] sm:$0x1]
      %v1477 = vlaneseq
      %v1478 = vshrl.u32 %v1477, 7
      %v1479 = vsub.s32 0, %v1478
      %v1480 = vrot.slane %v1476, %v1479
      %v1625 = vunpack.c.l.b16 %v1332
      %v1626 = vunpack.c.l.b16 %v1333
      %v1627 = vunpack.c.l.b16 %v1334
      %v1628 = vunpack.c.l.b16 %v1335
      %v1629 = vunpack.c.l.b16 %v1336
      %v1630 = vunpack.c.l.b16 %v1337
      %v1631 = vunpack.c.l.b16 %v1338
      %v1632 = vunpack.c.l.b16 %v1339
      %v1633 = vunpack.c.l.b16 %v1340
      %v1634 = vunpack.c.l.b16 %v1341
      %v1635 = vunpack.c.l.b16 %v1342
      %v1636 = vunpack.c.l.b16 %v1343
      %v1637 = vunpack.c.l.b16 %v1344
      %v1638 = vunpack.c.l.b16 %v1345
      %v1639 = vunpack.c.l.b16 %v1346
      %v1640 = vunpack.c.l.b16 %v1347
      %v1641 = vunpack.c.l.b16 %v1348
      %v1642 = vunpack.c.l.b16 %v1349
      %v1643 = vunpack.c.l.b16 %v1350
      %v1644 = vunpack.c.l.b16 %v1351
      %v1645 = vunpack.c.l.b16 %v1352
      %v1646 = vunpack.c.l.b16 %v1353
      %v1647 = vunpack.c.l.b16 %v1354
      %v1648 = vunpack.c.l.b16 %v1355
      %v1649 = vunpack.c.l.b16 %v1356
      %v1650 = vunpack.c.l.b16 %v1357
      %v1651 = vunpack.c.l.b16 %v1358
      %v1652 = vunpack.c.l.b16 %v1359
      %v1653 = vunpack.c.l.b16 %v1360
      %v1654 = vunpack.c.l.b16 %v1361
      %v1655 = vunpack.c.l.b16 %v1362
      %v1656 = vunpack.c.l.b16 %v1363
      %v1657 = vunpack.c.l.b16 %v1364
      %v1658 = vunpack.c.l.b16 %v1365
      %v1659 = vunpack.c.l.b16 %v1366
      %v1660 = vunpack.c.l.b16 %v1367
      %v1661 = vunpack.c.l.b16 %v1368
      %v1662 = vunpack.c.l.b16 %v1369
      %v1663 = vunpack.c.l.b16 %v1370
      %v1664 = vunpack.c.l.b16 %v1371
      %v1665 = vunpack.c.l.b16 %v1372
      %v1666 = vunpack.c.l.b16 %v1373
      %v1667 = vunpack.c.l.b16 %v1374
      %v1668 = vunpack.c.l.b16 %v1375
      %v1669 = vunpack.c.l.b16 %v1376
      %v1670 = vunpack.c.l.b16 %v1377
      %v1671 = vunpack.c.l.b16 %v1378
      %v1672 = vunpack.c.l.b16 %v1379
      %v1673 = vunpack.c.l.b16 %v1380
      %v1674 = vunpack.c.l.b16 %v1381
      %v1675 = vunpack.c.l.b16 %v1382
      %v1676 = vunpack.c.l.b16 %v1383
      %v1677 = vunpack.c.l.b16 %v1384
      %v1678 = vunpack.c.l.b16 %v1385
      %v1679 = vunpack.c.l.b16 %v1386
      %v1680 = vunpack.c.l.b16 %v1387
      %v1681 = vunpack.c.l.b16 %v1388
      %v1682 = vunpack.c.l.b16 %v1389
      %v1683 = vunpack.c.l.b16 %v1390
      %v1684 = vunpack.c.l.b16 %v1391
      %v1685 = vunpack.c.l.b16 %v1392
      %v1686 = vunpack.c.l.b16 %v1393
      %v1687 = vunpack.c.l.b16 %v1394
      %v1688 = vunpack.c.l.b16 %v1395
      %v1689 = vunpack.c.l.b16 %v1396
      %v1690 = vunpack.c.l.b16 %v1397
      %v1691 = vunpack.c.l.b16 %v1398
      %v1692 = vunpack.c.l.b16 %v1399
      %v1693 = vunpack.c.l.b16 %v1400
      %v1694 = vunpack.c.l.b16 %v1401
      %v1695 = vunpack.c.l.b16 %v1402
      %v1696 = vunpack.c.l.b16 %v1403
      %v1697 = vunpack.c.l.b16 %v1404
      %v1698 = vunpack.c.l.b16 %v1405
      %v1699 = vunpack.c.l.b16 %v1406
      %v1700 = vunpack.c.l.b16 %v1407
      %v1701 = vunpack.c.l.b16 %v1408
      %v1702 = vunpack.c.l.b16 %v1409
      %v1703 = vunpack.c.l.b16 %v1410
      %v1704 = vunpack.c.l.b16 %v1411
      %v1705 = vunpack.c.l.b16 %v1412
      %v1706 = vunpack.c.l.b16 %v1413
      %v1707 = vunpack.c.l.b16 %v1414
      %v1708 = vunpack.c.l.b16 %v1415
      %v1709 = vunpack.c.l.b16 %v1416
      %v1710 = vunpack.c.l.b16 %v1417
      %v1711 = vunpack.c.l.b16 %v1418
      %v1712 = vunpack.c.l.b16 %v1419
      %v1713 = vunpack.c.l.b16 %v1420
      %v1714 = vunpack.c.l.b16 %v1421
      %v1715 = vunpack.c.l.b16 %v1422
      %v1716 = vunpack.c.l.b16 %v1423
      %v1717 = vunpack.c.l.b16 %v1424
      %v1718 = vunpack.c.l.b16 %v1425
      %v1719 = vunpack.c.l.b16 %v1426
      %v1720 = vunpack.c.l.b16 %v1427
      %v1721 = vunpack.c.l.b16 %v1428
      %v1722 = vunpack.c.l.b16 %v1429
      %v1723 = vunpack.c.l.b16 %v1430
      %v1724 = vunpack.c.l.b16 %v1431
      %v1725 = vunpack.c.l.b16 %v1432
      %v1726 = vunpack.c.l.b16 %v1433
      %v1727 = vunpack.c.l.b16 %v1434
      %v1728 = vunpack.c.l.b16 %v1435
      %v1729 = vunpack.c.l.b16 %v1436
      %v1730 = vunpack.c.l.b16 %v1437
      %v1731 = vunpack.c.l.b16 %v1438
      %v1732 = vunpack.c.l.b16 %v1439
      %v1733 = vunpack.c.l.b16 %v1440
      %v1734 = vunpack.c.l.b16 %v1441
      %v1735 = vunpack.c.l.b16 %v1442
      %v1736 = vunpack.c.l.b16 %v1443
      %v1737 = vunpack.c.l.b16 %v1444
      %v1738 = vunpack.c.l.b16 %v1445
      %v1739 = vunpack.c.l.b16 %v1446
      %v1740 = vunpack.c.l.b16 %v1447
      %v1741 = vunpack.c.l.b16 %v1448
      %v1742 = vunpack.c.l.b16 %v1449
      %v1743 = vunpack.c.l.b16 %v1450
      %v1744 = vunpack.c.l.b16 %v1451
      %v1745 = vunpack.c.l.b16 %v1452
      %v1746 = vunpack.c.l.b16 %v1453
      %v1747 = vunpack.c.l.b16 %v1454
      %v1748 = vunpack.c.l.b16 %v1455
      %v1749 = vunpack.c.l.b16 %v1456
      %v1750 = vunpack.c.l.b16 %v1457
      %v1751 = vunpack.c.l.b16 %v1458
      %v1752 = vunpack.c.l.b16 %v1459
      %v1753 = vunpack.c.l.b16 %v1460
      %v1754 = vunpack.c.l.b16 %v1461
      %v1755 = vunpack.c.l.b16 %v1462
      %v1756 = vunpack.c.l.b16 %v1463
      %v1757 = vunpack.c.l.b16 %v1464
      %v1758 = vunpack.c.l.b16 %v1465
      %v1759 = vunpack.c.l.b16 %v1466
      %v1760 = vunpack.c.l.b16 %v1467
      %v1761 = vunpack.c.l.b16 %v1468
      %v1762 = vunpack.c.l.b16 %v1469
      %v1763 = vunpack.c.l.b16 %v1470
      %v1764 = vunpack.c.l.b16 %v1471
      %v1765 = vunpack.c.l.b16 %v1472
      %v1766 = vunpack.c.l.b16 %v1473
      %v1767 = vunpack.c.l.b16 %v1474
      %v1768 = vunpack.c.l.b16 %v1475
      %v1769 = vpack.c.b16 %v1626, %v1625
      %v1770 = vpack.c.b16 %v1628, %v1627
      %v1771 = vpack.c.b16 %v1630, %v1629
      %v1772 = vpack.c.b16 %v1632, %v1631
      %v1773 = vpack.c.b16 %v1634, %v1633
      %v1774 = vpack.c.b16 %v1636, %v1635
      %v1775 = vpack.c.b16 %v1638, %v1637
      %v1776 = vpack.c.b16 %v1640, %v1639
      %v1777 = vpack.c.b16 %v1642, %v1641
      %v1778 = vpack.c.b16 %v1644, %v1643
      %v1779 = vpack.c.b16 %v1646, %v1645
      %v1780 = vpack.c.b16 %v1648, %v1647
      %v1781 = vpack.c.b16 %v1650, %v1649
      %v1782 = vpack.c.b16 %v1652, %v1651
      %v1783 = vpack.c.b16 %v1654, %v1653
      %v1784 = vpack.c.b16 %v1656, %v1655
      %v1785 = vpack.c.b16 %v1658, %v1657
      %v1786 = vpack.c.b16 %v1660, %v1659
      %v1787 = vpack.c.b16 %v1662, %v1661
      %v1788 = vpack.c.b16 %v1664, %v1663
      %v1789 = vpack.c.b16 %v1666, %v1665
      %v1790 = vpack.c.b16 %v1668, %v1667
      %v1791 = vpack.c.b16 %v1670, %v1669
      %v1792 = vpack.c.b16 %v1672, %v1671
      %v1793 = vpack.c.b16 %v1674, %v1673
      %v1794 = vpack.c.b16 %v1676, %v1675
      %v1795 = vpack.c.b16 %v1678, %v1677
      %v1796 = vpack.c.b16 %v1680, %v1679
      %v1797 = vpack.c.b16 %v1682, %v1681
      %v1798 = vpack.c.b16 %v1684, %v1683
      %v1799 = vpack.c.b16 %v1686, %v1685
      %v1800 = vpack.c.b16 %v1688, %v1687
      %v1801 = vpack.c.b16 %v1690, %v1689
      %v1802 = vpack.c.b16 %v1692, %v1691
      %v1803 = vpack.c.b16 %v1694, %v1693
      %v1804 = vpack.c.b16 %v1696, %v1695
      %v1805 = vpack.c.b16 %v1698, %v1697
      %v1806 = vpack.c.b16 %v1700, %v1699
      %v1807 = vpack.c.b16 %v1702, %v1701
      %v1808 = vpack.c.b16 %v1704, %v1703
      %v1809 = vpack.c.b16 %v1706, %v1705
      %v1810 = vpack.c.b16 %v1708, %v1707
      %v1811 = vpack.c.b16 %v1710, %v1709
      %v1812 = vpack.c.b16 %v1712, %v1711
      %v1813 = vpack.c.b16 %v1714, %v1713
      %v1814 = vpack.c.b16 %v1716, %v1715
      %v1815 = vpack.c.b16 %v1718, %v1717
      %v1816 = vpack.c.b16 %v1720, %v1719
      %v1817 = vpack.c.b16 %v1722, %v1721
      %v1818 = vpack.c.b16 %v1724, %v1723
      %v1819 = vpack.c.b16 %v1726, %v1725
      %v1820 = vpack.c.b16 %v1728, %v1727
      %v1821 = vpack.c.b16 %v1730, %v1729
      %v1822 = vpack.c.b16 %v1732, %v1731
      %v1823 = vpack.c.b16 %v1734, %v1733
      %v1824 = vpack.c.b16 %v1736, %v1735
      %v1825 = vpack.c.b16 %v1738, %v1737
      %v1826 = vpack.c.b16 %v1740, %v1739
      %v1827 = vpack.c.b16 %v1742, %v1741
      %v1828 = vpack.c.b16 %v1744, %v1743
      %v1829 = vpack.c.b16 %v1746, %v1745
      %v1830 = vpack.c.b16 %v1748, %v1747
      %v1831 = vpack.c.b16 %v1750, %v1749
      %v1832 = vpack.c.b16 %v1752, %v1751
      %v1833 = vpack.c.b16 %v1754, %v1753
      %v1834 = vpack.c.b16 %v1756, %v1755
      %v1835 = vpack.c.b16 %v1758, %v1757
      %v1836 = vpack.c.b16 %v1760, %v1759
      %v1837 = vpack.c.b16 %v1762, %v1761
      %v1838 = vpack.c.b16 %v1764, %v1763
      %v1839 = vpack.c.b16 %v1766, %v1765
      %v1840 = vpack.c.b16 %v1768, %v1767
      %1913 = vmatprep.subr.bf16.mxu0 0
      %1914 = vmatpush1.bf16.msra.mxu0 %v1769
      %1915 = vmatprep.subr.bf16.mxu0 0
      %1916 = vmatpush1.bf16.msra.mxu0 %v1770
      %1917 = vmatprep.subr.bf16.mxu0 0
      %1918 = vmatpush1.bf16.msra.mxu0 %v1771
      %1919 = vmatprep.subr.bf16.mxu0 0
      %1920 = vmatpush1.bf16.msra.mxu0 %v1772
      %1921 = vmatprep.subr.bf16.mxu0 0
      %1922 = vmatpush1.bf16.msra.mxu0 %v1773
      %1923 = vmatprep.subr.bf16.mxu0 0
      %1924 = vmatpush1.bf16.msra.mxu0 %v1774
      %1925 = vmatprep.subr.bf16.mxu0 0
      %1926 = vmatpush1.bf16.msra.mxu0 %v1775
      %1927 = vmatprep.subr.bf16.mxu0 0
      %1928 = vmatpush1.bf16.msra.mxu0 %v1776
      %1929 = vmatprep.subr.bf16.mxu0 0
      %1930 = vmatpush1.bf16.msra.mxu0 %v1777
      %1931 = vmatprep.subr.bf16.mxu0 0
      %1932 = vmatpush1.bf16.msra.mxu0 %v1778
      %1933 = vmatprep.subr.bf16.mxu0 0
      %1934 = vmatpush1.bf16.msra.mxu0 %v1779
      %1935 = vmatprep.subr.bf16.mxu0 0
      %1936 = vmatpush1.bf16.msra.mxu0 %v1780
      %1937 = vmatprep.subr.bf16.mxu0 0
      %1938 = vmatpush1.bf16.msra.mxu0 %v1781
      %1939 = vmatprep.subr.bf16.mxu0 0
      %1940 = vmatpush1.bf16.msra.mxu0 %v1782
      %1941 = vmatprep.subr.bf16.mxu0 0
      %1942 = vmatpush1.bf16.msra.mxu0 %v1783
      %1943 = vmatprep.subr.bf16.mxu0 0
      %1944 = vmatpush1.bf16.msra.mxu0 %v1784
      %1945 = vmatprep.mubr.bf16.mxu0 %v1095
      %1946 = vmatmul.mubr.bf16.gmra.mrb[0].mxu0 %v1064
      %v1947 = vpop.f32.mrb[0].mxu0
      %v1948 = vadd.f32 %v1480, %v1947
      %v1949 = vpop.f32.mrb[0].mxu0
      %v1950 = vpop.f32.mrb[0].mxu0
      %v1951 = vadd.f32 %v1480, %v1950
      %v1952 = vpop.f32.mrb[0].mxu0
      %1953 = vmatprep.mubr.bf16.mxu0 %v1103
      %1954 = vmatmul.mubr.bf16.gmra.mrb[0].mxu0 %v1065
      %v1955 = vpop.f32.mrb[0].mxu0
      %v1956 = vadd.f32 %v1480, %v1955
      %v1957 = vpop.f32.mrb[0].mxu0
      %v1958 = vpop.f32.mrb[0].mxu0
      %v1959 = vadd.f32 %v1480, %v1958
      %v1960 = vpop.f32.mrb[0].mxu0
      %1961 = vmatprep.mubr.bf16.mxu0 %v1111
      %1962 = vmatmul.mubr.bf16.gmra.mrb[0].mxu0 %v1066
      %v1963 = vpop.f32.mrb[0].mxu0
      %v1964 = vadd.f32 %v1480, %v1963
      %v1965 = vpop.f32.mrb[0].mxu0
      %v1966 = vpop.f32.mrb[0].mxu0
      %v1967 = vadd.f32 %v1480, %v1966
      %v1968 = vpop.f32.mrb[0].mxu0
      %1969 = vmatprep.mubr.bf16.mxu0 %v1119
      %1970 = vmatmul.mubr.bf16.gmra.mrb[0].mxu0 %v1067
      %v1971 = vpop.f32.mrb[0].mxu0
      %v1972 = vadd.f32 %v1480, %v1971
      %v1973 = vpop.f32.mrb[0].mxu0
      %v1974 = vpop.f32.mrb[0].mxu0
      %v1975 = vadd.f32 %v1480, %v1974
      %v1976 = vpop.f32.mrb[0].mxu0
      %1977 = vmatprep.mubr.bf16.mxu0 %v1127
      %1978 = vmatmul.mubr.bf16.gmra.mrb[0].mxu0 %v1068
      %v1979 = vpop.f32.mrb[0].mxu0
      %v1980 = vadd.f32 %v1480, %v1979
      %v1981 = vpop.f32.mrb[0].mxu0
      %v1982 = vpop.f32.mrb[0].mxu0
      %v1983 = vadd.f32 %v1480, %v1982
      %v1984 = vpop.f32.mrb[0].mxu0
      %1985 = vdwg.mxu0
      %1986 = vmatprep.subr.bf16.mxu0 0
      %1987 = vmatpush1.bf16.msra.mxu0 %v1785
      %1988 = vmatprep.subr.bf16.mxu0 0
      %1989 = vmatpush1.bf16.msra.mxu0 %v1786
      %1990 = vmatprep.subr.bf16.mxu0 0
      %1991 = vmatpush1.bf16.msra.mxu0 %v1787
      %1992 = vmatprep.subr.bf16.mxu0 0
      %1993 = vmatpush1.bf16.msra.mxu0 %v1788
      %1994 = vmatprep.subr.bf16.mxu0 0
      %1995 = vmatpush1.bf16.msra.mxu0 %v1789
      %1996 = vmatprep.subr.bf16.mxu0 0
      %1997 = vmatpush1.bf16.msra.mxu0 %v1790
      %1998 = vmatprep.subr.bf16.mxu0 0
      %1999 = vmatpush1.bf16.msra.mxu0 %v1791
      %2000 = vmatprep.subr.bf16.mxu0 0
      %2001 = vmatpush1.bf16.msra.mxu0 %v1792
      %2002 = vmatprep.subr.bf16.mxu0 0
      %2003 = vmatpush1.bf16.msra.mxu0 %v1793
      %2004 = vmatprep.subr.bf16.mxu0 0
      %2005 = vmatpush1.bf16.msra.mxu0 %v1794
      %2006 = vmatprep.subr.bf16.mxu0 0
      %2007 = vmatpush1.bf16.msra.mxu0 %v1795
      %2008 = vmatprep.subr.bf16.mxu0 0
      %2009 = vmatpush1.bf16.msra.mxu0 %v1796
      %2010 = vmatprep.subr.bf16.mxu0 0
      %2011 = vmatpush1.bf16.msra.mxu0 %v1797
      %2012 = vmatprep.subr.bf16.mxu0 0
      %2013 = vmatpush1.bf16.msra.mxu0 %v1798
      %2014 = vmatprep.subr.bf16.mxu0 0
      %2015 = vmatpush1.bf16.msra.mxu0 %v1799
      %2016 = vmatprep.subr.bf16.mxu0 0
      %2017 = vmatpush1.bf16.msra.mxu0 %v1800
      %2018 = vmatprep.mubr.bf16.mxu0 %v1161
      %2019 = vmatmul.mubr.bf16.gmra.mrb[0].mxu0 %v1142
      %v2020 = vpop.f32.mrb[0].mxu0
      %v2021 = vadd.f32 %v1948, %v2020
      %v2022 = vpop.f32.mrb[0].mxu0
      %v2023 = vpop.f32.mrb[0].mxu0
      %v2024 = vadd.f32 %v1951, %v2023
      %v2025 = vpop.f32.mrb[0].mxu0
      %2026 = vmatprep.mubr.bf16.mxu0 %v1163
      %2027 = vmatmul.mubr.bf16.gmra.mrb[0].mxu0 %v1144
      %v2028 = vpop.f32.mrb[0].mxu0
      %v2029 = vadd.f32 %v1956, %v2028
      %v2030 = vpop.f32.mrb[0].mxu0
      %v2031 = vpop.f32.mrb[0].mxu0
      %v2032 = vadd.f32 %v1959, %v2031
      %v2033 = vpop.f32.mrb[0].mxu0
      %2034 = vmatprep.mubr.bf16.mxu0 %v1165
      %2035 = vmatmul.mubr.bf16.gmra.mrb[0].mxu0 %v1146
      %v2036 = vpop.f32.mrb[0].mxu0
      %v2037 = vadd.f32 %v1964, %v2036
      %v2038 = vpop.f32.mrb[0].mxu0
      %v2039 = vpop.f32.mrb[0].mxu0
      %v2040 = vadd.f32 %v1967, %v2039
      %v2041 = vpop.f32.mrb[0].mxu0
      %2042 = vmatprep.mubr.bf16.mxu0 %v1167
      %2043 = vmatmul.mubr.bf16.gmra.mrb[0].mxu0 %v1148
      %v2044 = vpop.f32.mrb[0].mxu0
      %v2045 = vadd.f32 %v1972, %v2044
      %v2046 = vpop.f32.mrb[0].mxu0
      %v2047 = vpop.f32.mrb[0].mxu0
      %v2048 = vadd.f32 %v1975, %v2047
      %v2049 = vpop.f32.mrb[0].mxu0
      %2050 = vmatprep.mubr.bf16.mxu0 %v1169
      %2051 = vmatmul.mubr.bf16.gmra.mrb[0].mxu0 %v1150
      %v2052 = vpop.f32.mrb[0].mxu0
      %v2053 = vadd.f32 %v1980, %v2052
      %v2054 = vpop.f32.mrb[0].mxu0
      %v2055 = vpop.f32.mrb[0].mxu0
      %v2056 = vadd.f32 %v1983, %v2055
      %v2057 = vpop.f32.mrb[0].mxu0
      %2058 = vdwg.mxu0
      %2059 = vmatprep.subr.bf16.mxu0 0
      %2060 = vmatpush1.bf16.msra.mxu0 %v1801
      %2061 = vmatprep.subr.bf16.mxu0 0
      %2062 = vmatpush1.bf16.msra.mxu0 %v1802
      %2063 = vmatprep.subr.bf16.mxu0 0
      %2064 = vmatpush1.bf16.msra.mxu0 %v1803
      %2065 = vmatprep.subr.bf16.mxu0 0
      %2066 = vmatpush1.bf16.msra.mxu0 %v1804
      %2067 = vmatprep.subr.bf16.mxu0 0
      %2068 = vmatpush1.bf16.msra.mxu0 %v1805
      %2069 = vmatprep.subr.bf16.mxu0 0
      %2070 = vmatpush1.bf16.msra.mxu0 %v1806
      %2071 = vmatprep.subr.bf16.mxu0 0
      %2072 = vmatpush1.bf16.msra.mxu0 %v1807
      %2073 = vmatprep.subr.bf16.mxu0 0
      %2074 = vmatpush1.bf16.msra.mxu0 %v1808
      %2075 = vmatprep.subr.bf16.mxu0 0
      %2076 = vmatpush1.bf16.msra.mxu0 %v1809
      %2077 = vmatprep.subr.bf16.mxu0 0
      %2078 = vmatpush1.bf16.msra.mxu0 %v1810
      %2079 = vmatprep.subr.bf16.mxu0 0
      %2080 = vmatpush1.bf16.msra.mxu0 %v1811
      %2081 = vmatprep.subr.bf16.mxu0 0
      %2082 = vmatpush1.bf16.msra.mxu0 %v1812
      %2083 = vmatprep.subr.bf16.mxu0 0
      %2084 = vmatpush1.bf16.msra.mxu0 %v1813
      %2085 = vmatprep.subr.bf16.mxu0 0
      %2086 = vmatpush1.bf16.msra.mxu0 %v1814
      %2087 = vmatprep.subr.bf16.mxu0 0
      %2088 = vmatpush1.bf16.msra.mxu0 %v1815
      %2089 = vmatprep.subr.bf16.mxu0 0
      %2090 = vmatpush1.bf16.msra.mxu0 %v1816
      %2091 = vmatprep.mubr.bf16.mxu0 %v1219
      %2092 = vmatmul.mubr.bf16.gmra.mrb[0].mxu0 %v1187
      %v2093 = vpop.f32.mrb[0].mxu0
      %v2094 = vadd.f32 %v2021, %v2093
      %v2095 = vpop.f32.mrb[0].mxu0
      %v2096 = vpop.f32.mrb[0].mxu0
      %v2097 = vadd.f32 %v2024, %v2096
      %v2098 = vpop.f32.mrb[0].mxu0
      %2099 = vmatprep.mubr.bf16.mxu0 %v1221
      %2100 = vmatmul.mubr.bf16.gmra.mrb[0].mxu0 %v1191
      %v2101 = vpop.f32.mrb[0].mxu0
      %v2102 = vadd.f32 %v2029, %v2101
      %v2103 = vpop.f32.mrb[0].mxu0
      %v2104 = vpop.f32.mrb[0].mxu0
      %v2105 = vadd.f32 %v2032, %v2104
      %v2106 = vpop.f32.mrb[0].mxu0
      %2107 = vmatprep.mubr.bf16.mxu0 %v1223
      %2108 = vmatmul.mubr.bf16.gmra.mrb[0].mxu0 %v1195
      %v2109 = vpop.f32.mrb[0].mxu0
      %v2110 = vadd.f32 %v2037, %v2109
      %v2111 = vpop.f32.mrb[0].mxu0
      %v2112 = vpop.f32.mrb[0].mxu0
      %v2113 = vadd.f32 %v2040, %v2112
      %v2114 = vpop.f32.mrb[0].mxu0
      %2115 = vmatprep.mubr.bf16.mxu0 %v1225
      %2116 = vmatmul.mubr.bf16.gmra.mrb[0].mxu0 %v1199
      %v2117 = vpop.f32.mrb[0].mxu0
      %v2118 = vadd.f32 %v2045, %v2117
      %v2119 = vpop.f32.mrb[0].mxu0
      %v2120 = vpop.f32.mrb[0].mxu0
      %v2121 = vadd.f32 %v2048, %v2120
      %v2122 = vpop.f32.mrb[0].mxu0
      %2123 = vmatprep.mubr.bf16.mxu0 %v1227
      %2124 = vmatmul.mubr.bf16.gmra.mrb[0].mxu0 %v1208
      %v2125 = vpop.f32.mrb[0].mxu0
      %v2126 = vadd.f32 %v2053, %v2125
      %v2127 = vpop.f32.mrb[0].mxu0
      %v2128 = vpop.f32.mrb[0].mxu0
      %v2129 = vadd.f32 %v2056, %v2128
      %v2130 = vpop.f32.mrb[0].mxu0
      %2131 = vdwg.mxu0
      %2132 = vmatprep.subr.bf16.mxu0 0
      %2133 = vmatpush1.bf16.msra.mxu0 %v1817
      %2134 = vmatprep.subr.bf16.mxu0 0
      %2135 = vmatpush1.bf16.msra.mxu0 %v1818
      %2136 = vmatprep.subr.bf16.mxu0 0
      %2137 = vmatpush1.bf16.msra.mxu0 %v1819
      %2138 = vmatprep.subr.bf16.mxu0 0
      %2139 = vmatpush1.bf16.msra.mxu0 %v1820
      %2140 = vmatprep.subr.bf16.mxu0 0
      %2141 = vmatpush1.bf16.msra.mxu0 %v1821
      %2142 = vmatprep.subr.bf16.mxu0 0
      %2143 = vmatpush1.bf16.msra.mxu0 %v1822
      %2144 = vmatprep.subr.bf16.mxu0 0
      %2145 = vmatpush1.bf16.msra.mxu0 %v1823
      %2146 = vmatprep.subr.bf16.mxu0 0
      %2147 = vmatpush1.bf16.msra.mxu0 %v1824
      %2148 = vmatprep.subr.bf16.mxu0 0
      %2149 = vmatpush1.bf16.msra.mxu0 %v1825
      %2150 = vmatprep.subr.bf16.mxu0 0
      %2151 = vmatpush1.bf16.msra.mxu0 %v1826
      %2152 = vmatprep.subr.bf16.mxu0 0
      %2153 = vmatpush1.bf16.msra.mxu0 %v1827
      %2154 = vmatprep.subr.bf16.mxu0 0
      %2155 = vmatpush1.bf16.msra.mxu0 %v1828
      %2156 = vmatprep.subr.bf16.mxu0 0
      %2157 = vmatpush1.bf16.msra.mxu0 %v1829
      %2158 = vmatprep.subr.bf16.mxu0 0
      %2159 = vmatpush1.bf16.msra.mxu0 %v1830
      %2160 = vmatprep.subr.bf16.mxu0 0
      %2161 = vmatpush1.bf16.msra.mxu0 %v1831
      %2162 = vmatprep.subr.bf16.mxu0 0
      %2163 = vmatpush1.bf16.msra.mxu0 %v1832
      %2164 = vmatprep.mubr.bf16.mxu0 %v1271
      %2165 = vmatmul.mubr.bf16.gmra.mrb[0].mxu0 %v1241
      %v2166 = vpop.f32.mrb[0].mxu0
      %v2167 = vadd.f32 %v2094, %v2166
      %v2168 = vpop.f32.mrb[0].mxu0
      %v2169 = vpop.f32.mrb[0].mxu0
      %v2170 = vadd.f32 %v2097, %v2169
      %v2171 = vpop.f32.mrb[0].mxu0
      %2172 = vmatprep.mubr.bf16.mxu0 %v1280
      %2173 = vmatmul.mubr.bf16.gmra.mrb[0].mxu0 %v1243
      %v2174 = vpop.f32.mrb[0].mxu0
      %v2175 = vadd.f32 %v2102, %v2174
      %v2176 = vpop.f32.mrb[0].mxu0
      %v2177 = vpop.f32.mrb[0].mxu0
      %v2178 = vadd.f32 %v2105, %v2177
      %v2179 = vpop.f32.mrb[0].mxu0
      %2180 = vmatprep.mubr.bf16.mxu0 %v1289
      %2181 = vmatmul.mubr.bf16.gmra.mrb[0].mxu0 %v1245
      %v2182 = vpop.f32.mrb[0].mxu0
      %v2183 = vadd.f32 %v2110, %v2182
      %v2184 = vpop.f32.mrb[0].mxu0
      %v2185 = vpop.f32.mrb[0].mxu0
      %v2186 = vadd.f32 %v2113, %v2185
      %v2187 = vpop.f32.mrb[0].mxu0
      %2188 = vmatprep.mubr.bf16.mxu0 %v1298
      %2189 = vmatmul.mubr.bf16.gmra.mrb[0].mxu0 %v1247
      %v2190 = vpop.f32.mrb[0].mxu0
      %v2191 = vadd.f32 %v2118, %v2190
      %v2192 = vpop.f32.mrb[0].mxu0
      %v2193 = vpop.f32.mrb[0].mxu0
      %v2194 = vadd.f32 %v2121, %v2193
      %v2195 = vpop.f32.mrb[0].mxu0
      %2196 = vmatprep.mubr.bf16.mxu0 %v1307
      %2197 = vmatmul.mubr.bf16.gmra.mrb[0].mxu0 %v1249
      %v2198 = vpop.f32.mrb[0].mxu0
      %v2199 = vadd.f32 %v2126, %v2198
      %v2200 = vpop.f32.mrb[0].mxu0
      %v2201 = vpop.f32.mrb[0].mxu0
      %v2202 = vadd.f32 %v2129, %v2201
      %v2203 = vpop.f32.mrb[0].mxu0
      %2204 = vdwg.mxu0
      %2205 = vmatprep.subr.bf16.mxu0 0
      %2206 = vmatpush1.bf16.msra.mxu0 %v1833
      %2207 = vmatprep.subr.bf16.mxu0 0
      %2208 = vmatpush1.bf16.msra.mxu0 %v1834
      %2209 = vmatprep.subr.bf16.mxu0 0
      %2210 = vmatpush1.bf16.msra.mxu0 %v1835
      %2211 = vmatprep.subr.bf16.mxu0 0
      %2212 = vmatpush1.bf16.msra.mxu0 %v1836
      %2213 = vmatprep.subr.bf16.mxu0 0
      %2214 = vmatpush1.bf16.msra.mxu0 %v1837
      %2215 = vmatprep.subr.bf16.mxu0 0
      %2216 = vmatpush1.bf16.msra.mxu0 %v1838
      %2217 = vmatprep.subr.bf16.mxu0 0
      %2218 = vmatpush1.bf16.msra.mxu0 %v1839
      %2219 = vmatprep.subr.bf16.mxu0 0
      %2220 = vmatpush1.bf16.msra.mxu0 %v1840
      %2221 = vmatprep.subr.bf16.mxu0 0
      %2222 = vmatpush1.bf16.msra.mxu0 0
      %2223 = vmatprep.subr.bf16.mxu0 0
      %2224 = vmatpush1.bf16.msra.mxu0 0
      %2225 = vmatprep.subr.bf16.mxu0 0
      %2226 = vmatpush1.bf16.msra.mxu0 0
      %2227 = vmatprep.subr.bf16.mxu0 0
      %2228 = vmatpush1.bf16.msra.mxu0 0
      %2229 = vmatprep.subr.bf16.mxu0 0
      %2230 = vmatpush1.bf16.msra.mxu0 0
      %2231 = vmatprep.subr.bf16.mxu0 0
      %2232 = vmatpush1.bf16.msra.mxu0 0
      %2233 = vmatprep.subr.bf16.mxu0 0
      %2234 = vmatpush1.bf16.msra.mxu0 0
      %2235 = vmatprep.subr.bf16.mxu0 0
      %2236 = vmatpush1.bf16.msra.mxu0 0
      %2237 = vmatprep.mubr.bf16.mxu0 0
      %2238 = vmatmul.mubr.bf16.gmra.mrb[0].mxu0 %v1318
      %v2239 = vpop.f32.mrb[0].mxu0
      %v2240 = vadd.f32 %v2167, %v2239
      %v2241 = vpop.f32.mrb[0].mxu0
      %v2242 = vpop.f32.mrb[0].mxu0
      %v2243 = vadd.f32 %v2170, %v2242
      %v2244 = vpop.f32.mrb[0].mxu0
      %2245 = vmatprep.mubr.bf16.mxu0 0
      %2246 = vmatmul.mubr.bf16.gmra.mrb[0].mxu0 %v1320
      %v2247 = vpop.f32.mrb[0].mxu0
      %v2248 = vadd.f32 %v2175, %v2247
      %v2249 = vpop.f32.mrb[0].mxu0
      %v2250 = vpop.f32.mrb[0].mxu0
      %v2251 = vadd.f32 %v2178, %v2250
      %v2252 = vpop.f32.mrb[0].mxu0
      %2253 = vmatprep.mubr.bf16.mxu0 0
      %2254 = vmatmul.mubr.bf16.gmra.mrb[0].mxu0 %v1322
      %v2255 = vpop.f32.mrb[0].mxu0
      %v2256 = vadd.f32 %v2183, %v2255
      %v2257 = vpop.f32.mrb[0].mxu0
      %v2258 = vpop.f32.mrb[0].mxu0
      %v2259 = vadd.f32 %v2186, %v2258
      %v2260 = vpop.f32.mrb[0].mxu0
      %2261 = vmatprep.mubr.bf16.mxu0 0
      %2262 = vmatmul.mubr.bf16.gmra.mrb[0].mxu0 %v1324
      %v2263 = vpop.f32.mrb[0].mxu0
      %v2264 = vadd.f32 %v2191, %v2263
      %v2265 = vpop.f32.mrb[0].mxu0
      %v2266 = vpop.f32.mrb[0].mxu0
      %v2267 = vadd.f32 %v2194, %v2266
      %v2268 = vpop.f32.mrb[0].mxu0
      %2269 = vmatprep.mubr.bf16.mxu0 0
      %2270 = vmatmul.mubr.bf16.gmra.mrb[0].mxu0 %v1326
      %v2271 = vpop.f32.mrb[0].mxu0
      %v2272 = vadd.f32 %v2199, %v2271
      %v2273 = vpop.f32.mrb[0].mxu0
      %v2274 = vpop.f32.mrb[0].mxu0
      %v2275 = vadd.f32 %v2202, %v2274
      %v2276 = vpop.f32.mrb[0].mxu0
      %2277 = vdwg.mxu0
      %v2278 = vmax.f32 %v2240, 0.0
      %v2279 = vmax.f32 %v2243, 0.0
      %v2280 = vmax.f32 %v2248, 0.0
      %v2281 = vmax.f32 %v2251, 0.0
      %v2282 = vmax.f32 %v2256, 0.0
      %v2283 = vmax.f32 %v2259, 0.0
      %v2284 = vmax.f32 %v2264, 0.0
      %v2285 = vmax.f32 %v2267, 0.0
      %v2286 = vmax.f32 %v2272, 0.0
      %v2287 = vmax.f32 %v2275, 0.0
      %v2288 = vsel %vm749, 1, 0
      %v2289 = vsel %vm750, 1, 0
      %v2290 = vsel %vm751, 1, 0
      %v2291 = vsel %vm752, 1, 0
      %v2292 = vsel %vm753, 1, 0
      %v2293 = vsel %vm754, 1, 0
      %v2294 = vsel %vm755, 1, 0
      %v2295 = vsel %vm756, 1, 0
      %v2296 = vsel %vm757, 1, 0
      %v2297 = vsel %vm758, 1, 0
      %vm2298 = vcmp.eq.s32.totalorder %v2288, 1
      %vm2299 = vcmp.eq.s32.totalorder %v2289, 1
      %vm2300 = vcmp.eq.s32.totalorder %v2290, 1
      %vm2301 = vcmp.eq.s32.totalorder %v2291, 1
      %vm2302 = vcmp.eq.s32.totalorder %v2292, 1
      %vm2303 = vcmp.eq.s32.totalorder %v2293, 1
      %vm2304 = vcmp.eq.s32.totalorder %v2294, 1
      %vm2305 = vcmp.eq.s32.totalorder %v2295, 1
      %vm2306 = vcmp.eq.s32.totalorder %v2296, 1
      %vm2307 = vcmp.eq.s32.totalorder %v2297, 1
      %v2308 = vsel %vm2298, %v2278, 0.0
      %v2309 = vsel %vm2299, %v2279, 0.0
      %v2310 = vsel %vm2300, %v2280, 0.0
      %v2311 = vsel %vm2301, %v2281, 0.0
      %v2312 = vsel %vm2302, %v2282, 0.0
      %v2313 = vsel %vm2303, %v2283, 0.0
      %v2314 = vsel %vm2304, %v2284, 0.0
      %v2315 = vsel %vm2305, %v2285, 0.0
      %v2316 = vsel %vm2306, %v2286, 0.0
      %v2317 = vsel %vm2307, %v2287, 0.0
      %v2318 = vpack.c.bf16 %v2309, %v2308
      %v2319 = vpack.c.bf16 %v2311, %v2310
      %v2320 = vpack.c.bf16 %v2313, %v2312
      %v2321 = vpack.c.bf16 %v2315, %v2314
      %v2322 = vpack.c.bf16 %v2317, %v2316
      %v2324 = vshrl.u32 %v2318, 16
      %v2326 = vrot.slane %v2324, 2
      %v2327 = vshll.u32 %v2318, 16
      %v2329 = vrot.slane %v2327, 3
      %v2330 = vor.u32 %v2326, %v2329
      %v2332 = vshrl.u32 %v2319, 16
      %v2334 = vrot.slane %v2332, 2
      %v2335 = vshll.u32 %v2319, 16
      %v2337 = vrot.slane %v2335, 3
      %v2338 = vor.u32 %v2334, %v2337
      %v2339 = vsel %vm173, %v2330, %v2338
      %v2341 = vshrl.u32 %v2320, 16
      %v2343 = vrot.slane %v2341, 2
      %v2344 = vshll.u32 %v2320, 16
      %v2346 = vrot.slane %v2344, 3
      %v2347 = vor.u32 %v2343, %v2346
      %v2348 = vsel %vm173, %v2338, %v2347
      %v2350 = vshrl.u32 %v2321, 16
      %v2352 = vrot.slane %v2350, 2
      %v2353 = vshll.u32 %v2321, 16
      %v2355 = vrot.slane %v2353, 3
      %v2356 = vor.u32 %v2352, %v2355
      %v2357 = vsel %vm173, %v2347, %v2356
      %v2359 = vshrl.u32 %v2322, 16
      %v2361 = vrot.slane %v2359, 2
      %v2362 = vshll.u32 %v2322, 16
      %v2364 = vrot.slane %v2362, 3
      %v2365 = vor.u32 %v2361, %v2364
      %v2366 = vsel %vm173, %v2356, %v2365
      %v2373 = vld [vmem:[#allocation3] sm:$0xe0]
      %v2374 = vsel %vm180, %v2330, %v2373
      %2375 = vst [vmem:[#allocation3] sm:$0xe0] %v2374
      %2376 = vst [vmem:[#allocation3 + $0x8] sm:$0xff] %v2339
      %2377 = vst [vmem:[#allocation3 + $0x10] sm:$0xff] %v2348
      %2378 = vst [vmem:[#allocation3 + $0x18] sm:$0xff] %v2357
      %2379 = vst [vmem:[#allocation3 + $0x20] sm:$0xff] %v2366
      %v2380 = vld [vmem:[#allocation3 + $0x28] sm:$0x3f]
      %v2381 = vsel %vm174, %v2365, %v2380
      %2382 = vst [vmem:[#allocation3 + $0x28] sm:$0x3f] %v2381
      %v2383 = vld [vmem:[#allocation3] sm:$0xff]
      %v2384 = vld [vmem:[#allocation3 + $0x8] sm:$0xff]
      %v2385 = vld [vmem:[#allocation3 + $0x10] sm:$0xff]
      %v2386 = vld [vmem:[#allocation3 + $0x18] sm:$0xff]
      %v2387 = vld [vmem:[#allocation3 + $0x20] sm:$0xff]
      %v2388 = vld [vmem:[#allocation3 + $0x28] sm:$0x1]
      %v2389 = vld [vmem:[#allocation3] sm:$0xfe]
      %v2390 = vld [vmem:[#allocation3] sm:$0xe0]
      %v2391 = vld [vmem:[#allocation3 + $0x28] sm:$0x1f]
      %v2392 = vld [vmem:[#allocation3 + $0x28] sm:$0x3f]
      %v2393 = vld [vmem:[#allocation3] sm:$0xc0]
      %v2394 = vld [vmem:[#allocation3 + $0x8] sm:$0xfc]
      %v2395 = vld [vmem:[#allocation3 + $0x10] sm:$0xff]
      %v2396 = vld [vmem:[#allocation3 + $0x18] sm:$0xff]
      %v2397 = vld [vmem:[#allocation3 + $0x20] sm:$0xff]
      %v2398 = vld [vmem:[#allocation3 + $0x28] sm:$0xff]
      %v2399 = vld [vmem:[#allocation3 + $0x30] sm:$0x3]
      %v2400 = vld [vmem:[#allocation3 + $0x30] sm:$0x7]
      %v2401 = vld [vmem:[#allocation3 + $0x8] sm:$0xf8]
      %v2403 = vshrl.u32 %v2383, 16
      %v2405 = vshll.u32 %v2383, 16
      %v2407 = vrot.slane %v2405, 1
      %v2408 = vor.u32 %v2403, %v2407
      %v2410 = vshll.u32 %v2384, 16
      %v2412 = vrot.slane %v2410, 1
      %v2413 = vsel %vm1083, %v2408, %v2412
      %v2414 = vshrl.u32 %v2384, 16
      %v2416 = vor.u32 %v2414, %v2412
      %v2418 = vshll.u32 %v2385, 16
      %v2420 = vrot.slane %v2418, 1
      %v2421 = vsel %vm1083, %v2416, %v2420
      %v2422 = vshrl.u32 %v2385, 16
      %v2424 = vor.u32 %v2422, %v2420
      %v2426 = vshll.u32 %v2386, 16
      %v2428 = vrot.slane %v2426, 1
      %v2429 = vsel %vm1083, %v2424, %v2428
      %v2430 = vshrl.u32 %v2386, 16
      %v2432 = vor.u32 %v2430, %v2428
      %v2434 = vshll.u32 %v2387, 16
      %v2436 = vrot.slane %v2434, 1
      %v2437 = vsel %vm1083, %v2432, %v2436
      %v2438 = vshrl.u32 %v2387, 16
      %v2440 = vor.u32 %v2438, %v2436
      %v2442 = vshll.u32 %v2388, 16
      %v2444 = vrot.slane %v2442, 1
      %v2445 = vsel %vm1083, %v2440, %v2444
      %v2457 = vrot.slane %v2389, 1
      %v2458 = vrot.slane %v2384, 1
      %v2459 = vsel %vm1139, %v2457, %v2458
      %v2460 = vrot.slane %v2385, 1
      %v2461 = vsel %vm1139, %v2458, %v2460
      %v2462 = vrot.slane %v2386, 1
      %v2463 = vsel %vm1139, %v2460, %v2462
      %v2464 = vrot.slane %v2387, 1
      %v2465 = vsel %vm1139, %v2462, %v2464
      %v2466 = vrot.slane %v2388, 1
      %v2467 = vsel %vm1139, %v2464, %v2466
      %v2475 = vrot.slane %v2390, 5
      %v2476 = vrot.slane %v2384, 5
      %v2477 = vsel %vm1158, %v2475, %v2476
      %v2478 = vrot.slane %v2385, 5
      %v2479 = vsel %vm1158, %v2476, %v2478
      %v2480 = vrot.slane %v2386, 5
      %v2481 = vsel %vm1158, %v2478, %v2480
      %v2482 = vrot.slane %v2387, 5
      %v2483 = vsel %vm1158, %v2480, %v2482
      %v2484 = vrot.slane %v2391, 5
      %v2485 = vsel %vm1158, %v2482, %v2484
      %v2492 = vshrl.u32 %v2390, 16
      %v2494 = vrot.slane %v2492, 5
      %v2495 = vshll.u32 %v2390, 16
      %v2497 = vrot.slane %v2495, 6
      %v2498 = vor.u32 %v2494, %v2497
      %v2499 = vrot.slane %v2414, 5
      %v2500 = vrot.slane %v2410, 6
      %v2501 = vor.u32 %v2499, %v2500
      %v2502 = vsel %vm1175, %v2498, %v2501
      %v2503 = vrot.slane %v2422, 5
      %v2504 = vrot.slane %v2418, 6
      %v2505 = vor.u32 %v2503, %v2504
      %v2506 = vsel %vm1175, %v2501, %v2505
      %v2507 = vrot.slane %v2430, 5
      %v2508 = vrot.slane %v2426, 6
      %v2509 = vor.u32 %v2507, %v2508
      %v2510 = vsel %vm1175, %v2505, %v2509
      %v2511 = vrot.slane %v2438, 5
      %v2512 = vrot.slane %v2434, 6
      %v2513 = vor.u32 %v2511, %v2512
      %v2514 = vsel %vm1175, %v2509, %v2513
      %v2516 = vshrl.u32 %v2392, 16
      %v2518 = vrot.slane %v2516, 5
      %v2519 = vshll.u32 %v2392, 16
      %v2521 = vrot.slane %v2519, 6
      %v2522 = vor.u32 %v2518, %v2521
      %v2523 = vsel %vm1175, %v2513, %v2522
      %v2531 = vrot.slane %v2393, 6
      %v2532 = vrot.slane %v2384, 6
      %v2533 = vsel %vm1216, %v2531, %v2532
      %v2534 = vrot.slane %v2385, 6
      %v2535 = vsel %vm1216, %v2532, %v2534
      %v2536 = vrot.slane %v2386, 6
      %v2537 = vsel %vm1216, %v2534, %v2536
      %v2538 = vrot.slane %v2387, 6
      %v2539 = vsel %vm1216, %v2536, %v2538
      %v2540 = vrot.slane %v2392, 6
      %v2541 = vsel %vm1216, %v2538, %v2540
      %v2553 = vrot.slane %v2394, 2
      %v2554 = vrot.slane %v2395, 2
      %v2555 = vsel %vm172, %v2553, %v2554
      %v2556 = vrot.slane %v2396, 2
      %v2557 = vsel %vm172, %v2554, %v2556
      %v2558 = vrot.slane %v2397, 2
      %v2559 = vsel %vm172, %v2556, %v2558
      %v2560 = vrot.slane %v2398, 2
      %v2561 = vsel %vm172, %v2558, %v2560
      %v2562 = vrot.slane %v2399, 2
      %v2563 = vsel %vm172, %v2560, %v2562
      %v2570 = vshrl.u32 %v2394, 16
      %v2572 = vrot.slane %v2570, 2
      %v2573 = vshll.u32 %v2394, 16
      %v2575 = vrot.slane %v2573, 3
      %v2576 = vor.u32 %v2572, %v2575
      %v2578 = vshrl.u32 %v2395, 16
      %v2580 = vrot.slane %v2578, 2
      %v2581 = vshll.u32 %v2395, 16
      %v2583 = vrot.slane %v2581, 3
      %v2584 = vor.u32 %v2580, %v2583
      %v2585 = vsel %vm173, %v2576, %v2584
      %v2587 = vshrl.u32 %v2396, 16
      %v2589 = vrot.slane %v2587, 2
      %v2590 = vshll.u32 %v2396, 16
      %v2592 = vrot.slane %v2590, 3
      %v2593 = vor.u32 %v2589, %v2592
      %v2594 = vsel %vm173, %v2584, %v2593
      %v2596 = vshrl.u32 %v2397, 16
      %v2598 = vrot.slane %v2596, 2
      %v2599 = vshll.u32 %v2397, 16
      %v2601 = vrot.slane %v2599, 3
      %v2602 = vor.u32 %v2598, %v2601
      %v2603 = vsel %vm173, %v2593, %v2602
      %v2605 = vshrl.u32 %v2398, 16
      %v2607 = vrot.slane %v2605, 2
      %v2608 = vshll.u32 %v2398, 16
      %v2610 = vrot.slane %v2608, 3
      %v2611 = vor.u32 %v2607, %v2610
      %v2612 = vsel %vm173, %v2602, %v2611
      %v2614 = vshrl.u32 %v2400, 16
      %v2616 = vrot.slane %v2614, 2
      %v2617 = vshll.u32 %v2400, 16
      %v2619 = vrot.slane %v2617, 3
      %v2620 = vor.u32 %v2616, %v2619
      %v2621 = vsel %vm173, %v2611, %v2620
      %v2629 = vrot.slane %v2401, 3
      %v2630 = vrot.slane %v2395, 3
      %v2631 = vsel %vm1315, %v2629, %v2630
      %v2632 = vrot.slane %v2396, 3
      %v2633 = vsel %vm1315, %v2630, %v2632
      %v2634 = vrot.slane %v2397, 3
      %v2635 = vsel %vm1315, %v2632, %v2634
      %v2636 = vrot.slane %v2398, 3
      %v2637 = vsel %vm1315, %v2634, %v2636
      %v2638 = vrot.slane %v2400, 3
      %v2639 = vsel %vm1315, %v2636, %v2638
      %s2645 = scalar_lea.vmem %s1, 576
      %v2646 = vld [vmem:[%s2645] sm:$0xf]
      %v2647 = vld [vmem:[%s2645 + $0x4] sm:$0xf]
      %v2648 = vld [vmem:[%s2645 + $0x8] sm:$0xf]
      %v2649 = vld [vmem:[%s2645 + $0xc] sm:$0xf]
      %v2650 = vld [vmem:[%s2645 + $0x10] sm:$0xf]
      %v2651 = vld [vmem:[%s2645 + $0x14] sm:$0xf]
      %v2652 = vld [vmem:[%s2645 + $0x18] sm:$0xf]
      %v2653 = vld [vmem:[%s2645 + $0x1c] sm:$0xf]
      %v2654 = vld [vmem:[%s2645 + $0x20] sm:$0xf]
      %v2655 = vld [vmem:[%s2645 + $0x24] sm:$0xf]
      %v2656 = vld [vmem:[%s2645 + $0x28] sm:$0xf]
      %v2657 = vld [vmem:[%s2645 + $0x2c] sm:$0xf]
      %v2658 = vld [vmem:[%s2645 + $0x30] sm:$0xf]
      %v2659 = vld [vmem:[%s2645 + $0x34] sm:$0xf]
      %v2660 = vld [vmem:[%s2645 + $0x38] sm:$0xf]
      %v2661 = vld [vmem:[%s2645 + $0x3c] sm:$0xf]
      %v2662 = vld [vmem:[%s2645 + $0x40] sm:$0xf]
      %v2663 = vld [vmem:[%s2645 + $0x44] sm:$0xf]
      %v2664 = vld [vmem:[%s2645 + $0x48] sm:$0xf]
      %v2665 = vld [vmem:[%s2645 + $0x4c] sm:$0xf]
      %v2666 = vld [vmem:[%s2645 + $0x50] sm:$0xf]
      %v2667 = vld [vmem:[%s2645 + $0x54] sm:$0xf]
      %v2668 = vld [vmem:[%s2645 + $0x58] sm:$0xf]
      %v2669 = vld [vmem:[%s2645 + $0x5c] sm:$0xf]
      %v2670 = vld [vmem:[%s2645 + $0x60] sm:$0xf]
      %v2671 = vld [vmem:[%s2645 + $0x64] sm:$0xf]
      %v2672 = vld [vmem:[%s2645 + $0x68] sm:$0xf]
      %v2673 = vld [vmem:[%s2645 + $0x6c] sm:$0xf]
      %v2674 = vld [vmem:[%s2645 + $0x70] sm:$0xf]
      %v2675 = vld [vmem:[%s2645 + $0x74] sm:$0xf]
      %v2676 = vld [vmem:[%s2645 + $0x78] sm:$0xf]
      %v2677 = vld [vmem:[%s2645 + $0x7c] sm:$0xf]
      %v2678 = vld [vmem:[%s2645 + $0x80] sm:$0xf]
      %v2679 = vld [vmem:[%s2645 + $0x84] sm:$0xf]
      %v2680 = vld [vmem:[%s2645 + $0x88] sm:$0xf]
      %v2681 = vld [vmem:[%s2645 + $0x8c] sm:$0xf]
      %v2682 = vld [vmem:[%s2645 + $0x90] sm:$0xf]
      %v2683 = vld [vmem:[%s2645 + $0x94] sm:$0xf]
      %v2684 = vld [vmem:[%s2645 + $0x98] sm:$0xf]
      %v2685 = vld [vmem:[%s2645 + $0x9c] sm:$0xf]
      %v2686 = vld [vmem:[%s2645 + $0xa0] sm:$0xf]
      %v2687 = vld [vmem:[%s2645 + $0xa4] sm:$0xf]
      %v2688 = vld [vmem:[%s2645 + $0xa8] sm:$0xf]
      %v2689 = vld [vmem:[%s2645 + $0xac] sm:$0xf]
      %v2690 = vld [vmem:[%s2645 + $0xb0] sm:$0xf]
      %v2691 = vld [vmem:[%s2645 + $0xb4] sm:$0xf]
      %v2692 = vld [vmem:[%s2645 + $0xb8] sm:$0xf]
      %v2693 = vld [vmem:[%s2645 + $0xbc] sm:$0xf]
      %v2694 = vld [vmem:[%s2645 + $0xc0] sm:$0xf]
      %v2695 = vld [vmem:[%s2645 + $0xc4] sm:$0xf]
      %v2696 = vld [vmem:[%s2645 + $0xc8] sm:$0xf]
      %v2697 = vld [vmem:[%s2645 + $0xcc] sm:$0xf]
      %v2698 = vld [vmem:[%s2645 + $0xd0] sm:$0xf]
      %v2699 = vld [vmem:[%s2645 + $0xd4] sm:$0xf]
      %v2700 = vld [vmem:[%s2645 + $0xd8] sm:$0xf]
      %v2701 = vld [vmem:[%s2645 + $0xdc] sm:$0xf]
      %v2702 = vld [vmem:[%s2645 + $0xe0] sm:$0xf]
      %v2703 = vld [vmem:[%s2645 + $0xe4] sm:$0xf]
      %v2704 = vld [vmem:[%s2645 + $0xe8] sm:$0xf]
      %v2705 = vld [vmem:[%s2645 + $0xec] sm:$0xf]
      %v2706 = vld [vmem:[%s2645 + $0xf0] sm:$0xf]
      %v2707 = vld [vmem:[%s2645 + $0xf4] sm:$0xf]
      %v2708 = vld [vmem:[%s2645 + $0xf8] sm:$0xf]
      %v2709 = vld [vmem:[%s2645 + $0xfc] sm:$0xf]
      %v2710 = vld [vmem:[%s2645 + $0x100] sm:$0xf]
      %v2711 = vld [vmem:[%s2645 + $0x104] sm:$0xf]
      %v2712 = vld [vmem:[%s2645 + $0x108] sm:$0xf]
      %v2713 = vld [vmem:[%s2645 + $0x10c] sm:$0xf]
      %v2714 = vld [vmem:[%s2645 + $0x110] sm:$0xf]
      %v2715 = vld [vmem:[%s2645 + $0x114] sm:$0xf]
      %v2716 = vld [vmem:[%s2645 + $0x118] sm:$0xf]
      %v2717 = vld [vmem:[%s2645 + $0x11c] sm:$0xf]
      %v2718 = vld [vmem:[%s2645 + $0x120] sm:$0xf]
      %v2719 = vld [vmem:[%s2645 + $0x124] sm:$0xf]
      %v2720 = vld [vmem:[%s2645 + $0x128] sm:$0xf]
      %v2721 = vld [vmem:[%s2645 + $0x12c] sm:$0xf]
      %v2722 = vld [vmem:[%s2645 + $0x130] sm:$0xf]
      %v2723 = vld [vmem:[%s2645 + $0x134] sm:$0xf]
      %v2724 = vld [vmem:[%s2645 + $0x138] sm:$0xf]
      %v2725 = vld [vmem:[%s2645 + $0x13c] sm:$0xf]
      %v2726 = vld [vmem:[%s2645 + $0x140] sm:$0xf]
      %v2727 = vld [vmem:[%s2645 + $0x144] sm:$0xf]
      %v2728 = vld [vmem:[%s2645 + $0x148] sm:$0xf]
      %v2729 = vld [vmem:[%s2645 + $0x14c] sm:$0xf]
      %v2730 = vld [vmem:[%s2645 + $0x150] sm:$0xf]
      %v2731 = vld [vmem:[%s2645 + $0x154] sm:$0xf]
      %v2732 = vld [vmem:[%s2645 + $0x158] sm:$0xf]
      %v2733 = vld [vmem:[%s2645 + $0x15c] sm:$0xf]
      %v2734 = vld [vmem:[%s2645 + $0x160] sm:$0xf]
      %v2735 = vld [vmem:[%s2645 + $0x164] sm:$0xf]
      %v2736 = vld [vmem:[%s2645 + $0x168] sm:$0xf]
      %v2737 = vld [vmem:[%s2645 + $0x16c] sm:$0xf]
      %v2738 = vld [vmem:[%s2645 + $0x170] sm:$0xf]
      %v2739 = vld [vmem:[%s2645 + $0x174] sm:$0xf]
      %v2740 = vld [vmem:[%s2645 + $0x178] sm:$0xf]
      %v2741 = vld [vmem:[%s2645 + $0x17c] sm:$0xf]
      %v2742 = vld [vmem:[%s2645 + $0x180] sm:$0xf]
      %v2743 = vld [vmem:[%s2645 + $0x184] sm:$0xf]
      %v2744 = vld [vmem:[%s2645 + $0x188] sm:$0xf]
      %v2745 = vld [vmem:[%s2645 + $0x18c] sm:$0xf]
      %v2746 = vld [vmem:[%s2645 + $0x190] sm:$0xf]
      %v2747 = vld [vmem:[%s2645 + $0x194] sm:$0xf]
      %v2748 = vld [vmem:[%s2645 + $0x198] sm:$0xf]
      %v2749 = vld [vmem:[%s2645 + $0x19c] sm:$0xf]
      %v2750 = vld [vmem:[%s2645 + $0x1a0] sm:$0xf]
      %v2751 = vld [vmem:[%s2645 + $0x1a4] sm:$0xf]
      %v2752 = vld [vmem:[%s2645 + $0x1a8] sm:$0xf]
      %v2753 = vld [vmem:[%s2645 + $0x1ac] sm:$0xf]
      %v2754 = vld [vmem:[%s2645 + $0x1b0] sm:$0xf]
      %v2755 = vld [vmem:[%s2645 + $0x1b4] sm:$0xf]
      %v2756 = vld [vmem:[%s2645 + $0x1b8] sm:$0xf]
      %v2757 = vld [vmem:[%s2645 + $0x1bc] sm:$0xf]
      %v2758 = vld [vmem:[%s2645 + $0x1c0] sm:$0xf]
      %v2759 = vld [vmem:[%s2645 + $0x1c4] sm:$0xf]
      %v2760 = vld [vmem:[%s2645 + $0x1c8] sm:$0xf]
      %v2761 = vld [vmem:[%s2645 + $0x1cc] sm:$0xf]
      %v2762 = vld [vmem:[%s2645 + $0x1d0] sm:$0xf]
      %v2763 = vld [vmem:[%s2645 + $0x1d4] sm:$0xf]
      %v2764 = vld [vmem:[%s2645 + $0x1d8] sm:$0xf]
      %v2765 = vld [vmem:[%s2645 + $0x1dc] sm:$0xf]
      %v2766 = vld [vmem:[%s2645 + $0x1e0] sm:$0xf]
      %v2767 = vld [vmem:[%s2645 + $0x1e4] sm:$0xf]
      %v2768 = vld [vmem:[%s2645 + $0x1e8] sm:$0xf]
      %v2769 = vld [vmem:[%s2645 + $0x1ec] sm:$0xf]
      %v2770 = vld [vmem:[%s2645 + $0x1f0] sm:$0xf]
      %v2771 = vld [vmem:[%s2645 + $0x1f4] sm:$0xf]
      %v2772 = vld [vmem:[%s2645 + $0x1f8] sm:$0xf]
      %v2773 = vld [vmem:[%s2645 + $0x1fc] sm:$0xf]
      %v2774 = vld [vmem:[%s2645 + $0x200] sm:$0xf]
      %v2775 = vld [vmem:[%s2645 + $0x204] sm:$0xf]
      %v2776 = vld [vmem:[%s2645 + $0x208] sm:$0xf]
      %v2777 = vld [vmem:[%s2645 + $0x20c] sm:$0xf]
      %v2778 = vld [vmem:[%s2645 + $0x210] sm:$0xf]
      %v2779 = vld [vmem:[%s2645 + $0x214] sm:$0xf]
      %v2780 = vld [vmem:[%s2645 + $0x218] sm:$0xf]
      %v2781 = vld [vmem:[%s2645 + $0x21c] sm:$0xf]
      %v2782 = vld [vmem:[%s2645 + $0x220] sm:$0xf]
      %v2783 = vld [vmem:[%s2645 + $0x224] sm:$0xf]
      %v2784 = vld [vmem:[%s2645 + $0x228] sm:$0xf]
      %v2785 = vld [vmem:[%s2645 + $0x22c] sm:$0xf]
      %v2786 = vld [vmem:[%s2645 + $0x230] sm:$0xf]
      %v2787 = vld [vmem:[%s2645 + $0x234] sm:$0xf]
      %v2788 = vld [vmem:[%s2645 + $0x238] sm:$0xf]
      %v2789 = vld [vmem:[%s2645 + $0x23c] sm:$0xf]
      %v2790 = vld [vmem:[%s2 + $0x1] sm:$0x1]
      %v2791 = vlaneseq
      %v2792 = vshrl.u32 %v2791, 7
      %v2793 = vsub.s32 0, %v2792
      %v2794 = vrot.slane %v2790, %v2793
      %v2939 = vunpack.c.l.b16 %v2646
      %v2940 = vunpack.c.l.b16 %v2647
      %v2941 = vunpack.c.l.b16 %v2648
      %v2942 = vunpack.c.l.b16 %v2649
      %v2943 = vunpack.c.l.b16 %v2650
      %v2944 = vunpack.c.l.b16 %v2651
      %v2945 = vunpack.c.l.b16 %v2652
      %v2946 = vunpack.c.l.b16 %v2653
      %v2947 = vunpack.c.l.b16 %v2654
      %v2948 = vunpack.c.l.b16 %v2655
      %v2949 = vunpack.c.l.b16 %v2656
      %v2950 = vunpack.c.l.b16 %v2657
      %v2951 = vunpack.c.l.b16 %v2658
      %v2952 = vunpack.c.l.b16 %v2659
      %v2953 = vunpack.c.l.b16 %v2660
      %v2954 = vunpack.c.l.b16 %v2661
      %v2955 = vunpack.c.l.b16 %v2662
      %v2956 = vunpack.c.l.b16 %v2663
      %v2957 = vunpack.c.l.b16 %v2664
      %v2958 = vunpack.c.l.b16 %v2665
      %v2959 = vunpack.c.l.b16 %v2666
      %v2960 = vunpack.c.l.b16 %v2667
      %v2961 = vunpack.c.l.b16 %v2668
      %v2962 = vunpack.c.l.b16 %v2669
      %v2963 = vunpack.c.l.b16 %v2670
      %v2964 = vunpack.c.l.b16 %v2671
      %v2965 = vunpack.c.l.b16 %v2672
      %v2966 = vunpack.c.l.b16 %v2673
      %v2967 = vunpack.c.l.b16 %v2674
      %v2968 = vunpack.c.l.b16 %v2675
      %v2969 = vunpack.c.l.b16 %v2676
      %v2970 = vunpack.c.l.b16 %v2677
      %v2971 = vunpack.c.l.b16 %v2678
      %v2972 = vunpack.c.l.b16 %v2679
      %v2973 = vunpack.c.l.b16 %v2680
      %v2974 = vunpack.c.l.b16 %v2681
      %v2975 = vunpack.c.l.b16 %v2682
      %v2976 = vunpack.c.l.b16 %v2683
      %v2977 = vunpack.c.l.b16 %v2684
      %v2978 = vunpack.c.l.b16 %v2685
      %v2979 = vunpack.c.l.b16 %v2686
      %v2980 = vunpack.c.l.b16 %v2687
      %v2981 = vunpack.c.l.b16 %v2688
      %v2982 = vunpack.c.l.b16 %v2689
      %v2983 = vunpack.c.l.b16 %v2690
      %v2984 = vunpack.c.l.b16 %v2691
      %v2985 = vunpack.c.l.b16 %v2692
      %v2986 = vunpack.c.l.b16 %v2693
      %v2987 = vunpack.c.l.b16 %v2694
      %v2988 = vunpack.c.l.b16 %v2695
      %v2989 = vunpack.c.l.b16 %v2696
      %v2990 = vunpack.c.l.b16 %v2697
      %v2991 = vunpack.c.l.b16 %v2698
      %v2992 = vunpack.c.l.b16 %v2699
      %v2993 = vunpack.c.l.b16 %v2700
      %v2994 = vunpack.c.l.b16 %v2701
      %v2995 = vunpack.c.l.b16 %v2702
      %v2996 = vunpack.c.l.b16 %v2703
      %v2997 = vunpack.c.l.b16 %v2704
      %v2998 = vunpack.c.l.b16 %v2705
      %v2999 = vunpack.c.l.b16 %v2706
      %v3000 = vunpack.c.l.b16 %v2707
      %v3001 = vunpack.c.l.b16 %v2708
      %v3002 = vunpack.c.l.b16 %v2709
      %v3003 = vunpack.c.l.b16 %v2710
      %v3004 = vunpack.c.l.b16 %v2711
      %v3005 = vunpack.c.l.b16 %v2712
      %v3006 = vunpack.c.l.b16 %v2713
      %v3007 = vunpack.c.l.b16 %v2714
      %v3008 = vunpack.c.l.b16 %v2715
      %v3009 = vunpack.c.l.b16 %v2716
      %v3010 = vunpack.c.l.b16 %v2717
      %v3011 = vunpack.c.l.b16 %v2718
      %v3012 = vunpack.c.l.b16 %v2719
      %v3013 = vunpack.c.l.b16 %v2720
      %v3014 = vunpack.c.l.b16 %v2721
      %v3015 = vunpack.c.l.b16 %v2722
      %v3016 = vunpack.c.l.b16 %v2723
      %v3017 = vunpack.c.l.b16 %v2724
      %v3018 = vunpack.c.l.b16 %v2725
      %v3019 = vunpack.c.l.b16 %v2726
      %v3020 = vunpack.c.l.b16 %v2727
      %v3021 = vunpack.c.l.b16 %v2728
      %v3022 = vunpack.c.l.b16 %v2729
      %v3023 = vunpack.c.l.b16 %v2730
      %v3024 = vunpack.c.l.b16 %v2731
      %v3025 = vunpack.c.l.b16 %v2732
      %v3026 = vunpack.c.l.b16 %v2733
      %v3027 = vunpack.c.l.b16 %v2734
      %v3028 = vunpack.c.l.b16 %v2735
      %v3029 = vunpack.c.l.b16 %v2736
      %v3030 = vunpack.c.l.b16 %v2737
      %v3031 = vunpack.c.l.b16 %v2738
      %v3032 = vunpack.c.l.b16 %v2739
      %v3033 = vunpack.c.l.b16 %v2740
      %v3034 = vunpack.c.l.b16 %v2741
      %v3035 = vunpack.c.l.b16 %v2742
      %v3036 = vunpack.c.l.b16 %v2743
      %v3037 = vunpack.c.l.b16 %v2744
      %v3038 = vunpack.c.l.b16 %v2745
      %v3039 = vunpack.c.l.b16 %v2746
      %v3040 = vunpack.c.l.b16 %v2747
      %v3041 = vunpack.c.l.b16 %v2748
      %v3042 = vunpack.c.l.b16 %v2749
      %v3043 = vunpack.c.l.b16 %v2750
      %v3044 = vunpack.c.l.b16 %v2751
      %v3045 = vunpack.c.l.b16 %v2752
      %v3046 = vunpack.c.l.b16 %v2753
      %v3047 = vunpack.c.l.b16 %v2754
      %v3048 = vunpack.c.l.b16 %v2755
      %v3049 = vunpack.c.l.b16 %v2756
      %v3050 = vunpack.c.l.b16 %v2757
      %v3051 = vunpack.c.l.b16 %v2758
      %v3052 = vunpack.c.l.b16 %v2759
      %v3053 = vunpack.c.l.b16 %v2760
      %v3054 = vunpack.c.l.b16 %v2761
      %v3055 = vunpack.c.l.b16 %v2762
      %v3056 = vunpack.c.l.b16 %v2763
      %v3057 = vunpack.c.l.b16 %v2764
      %v3058 = vunpack.c.l.b16 %v2765
      %v3059 = vunpack.c.l.b16 %v2766
      %v3060 = vunpack.c.l.b16 %v2767
      %v3061 = vunpack.c.l.b16 %v2768
      %v3062 = vunpack.c.l.b16 %v2769
      %v3063 = vunpack.c.l.b16 %v2770
      %v3064 = vunpack.c.l.b16 %v2771
      %v3065 = vunpack.c.l.b16 %v2772
      %v3066 = vunpack.c.l.b16 %v2773
      %v3067 = vunpack.c.l.b16 %v2774
      %v3068 = vunpack.c.l.b16 %v2775
      %v3069 = vunpack.c.l.b16 %v2776
      %v3070 = vunpack.c.l.b16 %v2777
      %v3071 = vunpack.c.l.b16 %v2778
      %v3072 = vunpack.c.l.b16 %v2779
      %v3073 = vunpack.c.l.b16 %v2780
      %v3074 = vunpack.c.l.b16 %v2781
      %v3075 = vunpack.c.l.b16 %v2782
      %v3076 = vunpack.c.l.b16 %v2783
      %v3077 = vunpack.c.l.b16 %v2784
      %v3078 = vunpack.c.l.b16 %v2785
      %v3079 = vunpack.c.l.b16 %v2786
      %v3080 = vunpack.c.l.b16 %v2787
      %v3081 = vunpack.c.l.b16 %v2788
      %v3082 = vunpack.c.l.b16 %v2789
      %v3083 = vpack.c.b16 %v2940, %v2939
      %v3084 = vpack.c.b16 %v2942, %v2941
      %v3085 = vpack.c.b16 %v2944, %v2943
      %v3086 = vpack.c.b16 %v2946, %v2945
      %v3087 = vpack.c.b16 %v2948, %v2947
      %v3088 = vpack.c.b16 %v2950, %v2949
      %v3089 = vpack.c.b16 %v2952, %v2951
      %v3090 = vpack.c.b16 %v2954, %v2953
      %v3091 = vpack.c.b16 %v2956, %v2955
      %v3092 = vpack.c.b16 %v2958, %v2957
      %v3093 = vpack.c.b16 %v2960, %v2959
      %v3094 = vpack.c.b16 %v2962, %v2961
      %v3095 = vpack.c.b16 %v2964, %v2963
      %v3096 = vpack.c.b16 %v2966, %v2965
      %v3097 = vpack.c.b16 %v2968, %v2967
      %v3098 = vpack.c.b16 %v2970, %v2969
      %v3099 = vpack.c.b16 %v2972, %v2971
      %v3100 = vpack.c.b16 %v2974, %v2973
      %v3101 = vpack.c.b16 %v2976, %v2975
      %v3102 = vpack.c.b16 %v2978, %v2977
      %v3103 = vpack.c.b16 %v2980, %v2979
      %v3104 = vpack.c.b16 %v2982, %v2981
      %v3105 = vpack.c.b16 %v2984, %v2983
      %v3106 = vpack.c.b16 %v2986, %v2985
      %v3107 = vpack.c.b16 %v2988, %v2987
      %v3108 = vpack.c.b16 %v2990, %v2989
      %v3109 = vpack.c.b16 %v2992, %v2991
      %v3110 = vpack.c.b16 %v2994, %v2993
      %v3111 = vpack.c.b16 %v2996, %v2995
      %v3112 = vpack.c.b16 %v2998, %v2997
      %v3113 = vpack.c.b16 %v3000, %v2999
      %v3114 = vpack.c.b16 %v3002, %v3001
      %v3115 = vpack.c.b16 %v3004, %v3003
      %v3116 = vpack.c.b16 %v3006, %v3005
      %v3117 = vpack.c.b16 %v3008, %v3007
      %v3118 = vpack.c.b16 %v3010, %v3009
      %v3119 = vpack.c.b16 %v3012, %v3011
      %v3120 = vpack.c.b16 %v3014, %v3013
      %v3121 = vpack.c.b16 %v3016, %v3015
      %v3122 = vpack.c.b16 %v3018, %v3017
      %v3123 = vpack.c.b16 %v3020, %v3019
      %v3124 = vpack.c.b16 %v3022, %v3021
      %v3125 = vpack.c.b16 %v3024, %v3023
      %v3126 = vpack.c.b16 %v3026, %v3025
      %v3127 = vpack.c.b16 %v3028, %v3027
      %v3128 = vpack.c.b16 %v3030, %v3029
      %v3129 = vpack.c.b16 %v3032, %v3031
      %v3130 = vpack.c.b16 %v3034, %v3033
      %v3131 = vpack.c.b16 %v3036, %v3035
      %v3132 = vpack.c.b16 %v3038, %v3037
      %v3133 = vpack.c.b16 %v3040, %v3039
      %v3134 = vpack.c.b16 %v3042, %v3041
      %v3135 = vpack.c.b16 %v3044, %v3043
      %v3136 = vpack.c.b16 %v3046, %v3045
      %v3137 = vpack.c.b16 %v3048, %v3047
      %v3138 = vpack.c.b16 %v3050, %v3049
      %v3139 = vpack.c.b16 %v3052, %v3051
      %v3140 = vpack.c.b16 %v3054, %v3053
      %v3141 = vpack.c.b16 %v3056, %v3055
      %v3142 = vpack.c.b16 %v3058, %v3057
      %v3143 = vpack.c.b16 %v3060, %v3059
      %v3144 = vpack.c.b16 %v3062, %v3061
      %v3145 = vpack.c.b16 %v3064, %v3063
      %v3146 = vpack.c.b16 %v3066, %v3065
      %v3147 = vpack.c.b16 %v3068, %v3067
      %v3148 = vpack.c.b16 %v3070, %v3069
      %v3149 = vpack.c.b16 %v3072, %v3071
      %v3150 = vpack.c.b16 %v3074, %v3073
      %v3151 = vpack.c.b16 %v3076, %v3075
      %v3152 = vpack.c.b16 %v3078, %v3077
      %v3153 = vpack.c.b16 %v3080, %v3079
      %v3154 = vpack.c.b16 %v3082, %v3081
      %3227 = vmatprep.subr.bf16.mxu0 0
      %3228 = vmatpush1.bf16.msra.mxu0 %v3083
      %3229 = vmatprep.subr.bf16.mxu0 0
      %3230 = vmatpush1.bf16.msra.mxu0 %v3084
      %3231 = vmatprep.subr.bf16.mxu0 0
      %3232 = vmatpush1.bf16.msra.mxu0 %v3085
      %3233 = vmatprep.subr.bf16.mxu0 0
      %3234 = vmatpush1.bf16.msra.mxu0 %v3086
      %3235 = vmatprep.subr.bf16.mxu0 0
      %3236 = vmatpush1.bf16.msra.mxu0 %v3087
      %3237 = vmatprep.subr.bf16.mxu0 0
      %3238 = vmatpush1.bf16.msra.mxu0 %v3088
      %3239 = vmatprep.subr.bf16.mxu0 0
      %3240 = vmatpush1.bf16.msra.mxu0 %v3089
      %3241 = vmatprep.subr.bf16.mxu0 0
      %3242 = vmatpush1.bf16.msra.mxu0 %v3090
      %3243 = vmatprep.subr.bf16.mxu0 0
      %3244 = vmatpush1.bf16.msra.mxu0 %v3091
      %3245 = vmatprep.subr.bf16.mxu0 0
      %3246 = vmatpush1.bf16.msra.mxu0 %v3092
      %3247 = vmatprep.subr.bf16.mxu0 0
      %3248 = vmatpush1.bf16.msra.mxu0 %v3093
      %3249 = vmatprep.subr.bf16.mxu0 0
      %3250 = vmatpush1.bf16.msra.mxu0 %v3094
      %3251 = vmatprep.subr.bf16.mxu0 0
      %3252 = vmatpush1.bf16.msra.mxu0 %v3095
      %3253 = vmatprep.subr.bf16.mxu0 0
      %3254 = vmatpush1.bf16.msra.mxu0 %v3096
      %3255 = vmatprep.subr.bf16.mxu0 0
      %3256 = vmatpush1.bf16.msra.mxu0 %v3097
      %3257 = vmatprep.subr.bf16.mxu0 0
      %3258 = vmatpush1.bf16.msra.mxu0 %v3098
      %3259 = vmatprep.mubr.bf16.mxu0 %v2413
      %3260 = vmatmul.mubr.bf16.gmra.mrb[0].mxu0 %v2383
      %v3261 = vpop.f32.mrb[0].mxu0
      %v3262 = vadd.f32 %v2794, %v3261
      %v3263 = vpop.f32.mrb[0].mxu0
      %v3264 = vpop.f32.mrb[0].mxu0
      %v3265 = vadd.f32 %v2794, %v3264
      %v3266 = vpop.f32.mrb[0].mxu0
      %3267 = vmatprep.mubr.bf16.mxu0 %v2421
      %3268 = vmatmul.mubr.bf16.gmra.mrb[0].mxu0 %v2384
      %v3269 = vpop.f32.mrb[0].mxu0
      %v3270 = vadd.f32 %v2794, %v3269
      %v3271 = vpop.f32.mrb[0].mxu0
      %v3272 = vpop.f32.mrb[0].mxu0
      %v3273 = vadd.f32 %v2794, %v3272
      %v3274 = vpop.f32.mrb[0].mxu0
      %3275 = vmatprep.mubr.bf16.mxu0 %v2429
      %3276 = vmatmul.mubr.bf16.gmra.mrb[0].mxu0 %v2385
      %v3277 = vpop.f32.mrb[0].mxu0
      %v3278 = vadd.f32 %v2794, %v3277
      %v3279 = vpop.f32.mrb[0].mxu0
      %v3280 = vpop.f32.mrb[0].mxu0
      %v3281 = vadd.f32 %v2794, %v3280
      %v3282 = vpop.f32.mrb[0].mxu0
      %3283 = vmatprep.mubr.bf16.mxu0 %v2437
      %3284 = vmatmul.mubr.bf16.gmra.mrb[0].mxu0 %v2386
      %v3285 = vpop.f32.mrb[0].mxu0
      %v3286 = vadd.f32 %v2794, %v3285
      %v3287 = vpop.f32.mrb[0].mxu0
      %v3288 = vpop.f32.mrb[0].mxu0
      %v3289 = vadd.f32 %v2794, %v3288
      %v3290 = vpop.f32.mrb[0].mxu0
      %3291 = vmatprep.mubr.bf16.mxu0 %v2445
      %3292 = vmatmul.mubr.bf16.gmra.mrb[0].mxu0 %v2387
      %v3293 = vpop.f32.mrb[0].mxu0
      %v3294 = vadd.f32 %v2794, %v3293
      %v3295 = vpop.f32.mrb[0].mxu0
      %v3296 = vpop.f32.mrb[0].mxu0
      %v3297 = vadd.f32 %v2794, %v3296
      %v3298 = vpop.f32.mrb[0].mxu0
      %3299 = vdwg.mxu0
      %3300 = vmatprep.subr.bf16.mxu0 0
      %3301 = vmatpush1.bf16.msra.mxu0 %v3099
      %3302 = vmatprep.subr.bf16.mxu0 0
      %3303 = vmatpush1.bf16.msra.mxu0 %v3100
      %3304 = vmatprep.subr.bf16.mxu0 0
      %3305 = vmatpush1.bf16.msra.mxu0 %v3101
      %3306 = vmatprep.subr.bf16.mxu0 0
      %3307 = vmatpush1.bf16.msra.mxu0 %v3102
      %3308 = vmatprep.subr.bf16.mxu0 0
      %3309 = vmatpush1.bf16.msra.mxu0 %v3103
      %3310 = vmatprep.subr.bf16.mxu0 0
      %3311 = vmatpush1.bf16.msra.mxu0 %v3104
      %3312 = vmatprep.subr.bf16.mxu0 0
      %3313 = vmatpush1.bf16.msra.mxu0 %v3105
      %3314 = vmatprep.subr.bf16.mxu0 0
      %3315 = vmatpush1.bf16.msra.mxu0 %v3106
      %3316 = vmatprep.subr.bf16.mxu0 0
      %3317 = vmatpush1.bf16.msra.mxu0 %v3107
      %3318 = vmatprep.subr.bf16.mxu0 0
      %3319 = vmatpush1.bf16.msra.mxu0 %v3108
      %3320 = vmatprep.subr.bf16.mxu0 0
      %3321 = vmatpush1.bf16.msra.mxu0 %v3109
      %3322 = vmatprep.subr.bf16.mxu0 0
      %3323 = vmatpush1.bf16.msra.mxu0 %v3110
      %3324 = vmatprep.subr.bf16.mxu0 0
      %3325 = vmatpush1.bf16.msra.mxu0 %v3111
      %3326 = vmatprep.subr.bf16.mxu0 0
      %3327 = vmatpush1.bf16.msra.mxu0 %v3112
      %3328 = vmatprep.subr.bf16.mxu0 0
      %3329 = vmatpush1.bf16.msra.mxu0 %v3113
      %3330 = vmatprep.subr.bf16.mxu0 0
      %3331 = vmatpush1.bf16.msra.mxu0 %v3114
      %3332 = vmatprep.mubr.bf16.mxu0 %v2477
      %3333 = vmatmul.mubr.bf16.gmra.mrb[0].mxu0 %v2459
      %v3334 = vpop.f32.mrb[0].mxu0
      %v3335 = vadd.f32 %v3262, %v3334
      %v3336 = vpop.f32.mrb[0].mxu0
      %v3337 = vpop.f32.mrb[0].mxu0
      %v3338 = vadd.f32 %v3265, %v3337
      %v3339 = vpop.f32.mrb[0].mxu0
      %3340 = vmatprep.mubr.bf16.mxu0 %v2479
      %3341 = vmatmul.mubr.bf16.gmra.mrb[0].mxu0 %v2461
      %v3342 = vpop.f32.mrb[0].mxu0
      %v3343 = vadd.f32 %v3270, %v3342
      %v3344 = vpop.f32.mrb[0].mxu0
      %v3345 = vpop.f32.mrb[0].mxu0
      %v3346 = vadd.f32 %v3273, %v3345
      %v3347 = vpop.f32.mrb[0].mxu0
      %3348 = vmatprep.mubr.bf16.mxu0 %v2481
      %3349 = vmatmul.mubr.bf16.gmra.mrb[0].mxu0 %v2463
      %v3350 = vpop.f32.mrb[0].mxu0
      %v3351 = vadd.f32 %v3278, %v3350
      %v3352 = vpop.f32.mrb[0].mxu0
      %v3353 = vpop.f32.mrb[0].mxu0
      %v3354 = vadd.f32 %v3281, %v3353
      %v3355 = vpop.f32.mrb[0].mxu0
      %3356 = vmatprep.mubr.bf16.mxu0 %v2483
      %3357 = vmatmul.mubr.bf16.gmra.mrb[0].mxu0 %v2465
      %v3358 = vpop.f32.mrb[0].mxu0
      %v3359 = vadd.f32 %v3286, %v3358
      %v3360 = vpop.f32.mrb[0].mxu0
      %v3361 = vpop.f32.mrb[0].mxu0
      %v3362 = vadd.f32 %v3289, %v3361
      %v3363 = vpop.f32.mrb[0].mxu0
      %3364 = vmatprep.mubr.bf16.mxu0 %v2485
      %3365 = vmatmul.mubr.bf16.gmra.mrb[0].mxu0 %v2467
      %v3366 = vpop.f32.mrb[0].mxu0
      %v3367 = vadd.f32 %v3294, %v3366
      %v3368 = vpop.f32.mrb[0].mxu0
      %v3369 = vpop.f32.mrb[0].mxu0
      %v3370 = vadd.f32 %v3297, %v3369
      %v3371 = vpop.f32.mrb[0].mxu0
      %3372 = vdwg.mxu0
      %3373 = vmatprep.subr.bf16.mxu0 0
      %3374 = vmatpush1.bf16.msra.mxu0 %v3115
      %3375 = vmatprep.subr.bf16.mxu0 0
      %3376 = vmatpush1.bf16.msra.mxu0 %v3116
      %3377 = vmatprep.subr.bf16.mxu0 0
      %3378 = vmatpush1.bf16.msra.mxu0 %v3117
      %3379 = vmatprep.subr.bf16.mxu0 0
      %3380 = vmatpush1.bf16.msra.mxu0 %v3118
      %3381 = vmatprep.subr.bf16.mxu0 0
      %3382 = vmatpush1.bf16.msra.mxu0 %v3119
      %3383 = vmatprep.subr.bf16.mxu0 0
      %3384 = vmatpush1.bf16.msra.mxu0 %v3120
      %3385 = vmatprep.subr.bf16.mxu0 0
      %3386 = vmatpush1.bf16.msra.mxu0 %v3121
      %3387 = vmatprep.subr.bf16.mxu0 0
      %3388 = vmatpush1.bf16.msra.mxu0 %v3122
      %3389 = vmatprep.subr.bf16.mxu0 0
      %3390 = vmatpush1.bf16.msra.mxu0 %v3123
      %3391 = vmatprep.subr.bf16.mxu0 0
      %3392 = vmatpush1.bf16.msra.mxu0 %v3124
      %3393 = vmatprep.subr.bf16.mxu0 0
      %3394 = vmatpush1.bf16.msra.mxu0 %v3125
      %3395 = vmatprep.subr.bf16.mxu0 0
      %3396 = vmatpush1.bf16.msra.mxu0 %v3126
      %3397 = vmatprep.subr.bf16.mxu0 0
      %3398 = vmatpush1.bf16.msra.mxu0 %v3127
      %3399 = vmatprep.subr.bf16.mxu0 0
      %3400 = vmatpush1.bf16.msra.mxu0 %v3128
      %3401 = vmatprep.subr.bf16.mxu0 0
      %3402 = vmatpush1.bf16.msra.mxu0 %v3129
      %3403 = vmatprep.subr.bf16.mxu0 0
      %3404 = vmatpush1.bf16.msra.mxu0 %v3130
      %3405 = vmatprep.mubr.bf16.mxu0 %v2533
      %3406 = vmatmul.mubr.bf16.gmra.mrb[0].mxu0 %v2502
      %v3407 = vpop.f32.mrb[0].mxu0
      %v3408 = vadd.f32 %v3335, %v3407
      %v3409 = vpop.f32.mrb[0].mxu0
      %v3410 = vpop.f32.mrb[0].mxu0
      %v3411 = vadd.f32 %v3338, %v3410
      %v3412 = vpop.f32.mrb[0].mxu0
      %3413 = vmatprep.mubr.bf16.mxu0 %v2535
      %3414 = vmatmul.mubr.bf16.gmra.mrb[0].mxu0 %v2506
      %v3415 = vpop.f32.mrb[0].mxu0
      %v3416 = vadd.f32 %v3343, %v3415
      %v3417 = vpop.f32.mrb[0].mxu0
      %v3418 = vpop.f32.mrb[0].mxu0
      %v3419 = vadd.f32 %v3346, %v3418
      %v3420 = vpop.f32.mrb[0].mxu0
      %3421 = vmatprep.mubr.bf16.mxu0 %v2537
      %3422 = vmatmul.mubr.bf16.gmra.mrb[0].mxu0 %v2510
      %v3423 = vpop.f32.mrb[0].mxu0
      %v3424 = vadd.f32 %v3351, %v3423
      %v3425 = vpop.f32.mrb[0].mxu0
      %v3426 = vpop.f32.mrb[0].mxu0
      %v3427 = vadd.f32 %v3354, %v3426
      %v3428 = vpop.f32.mrb[0].mxu0
      %3429 = vmatprep.mubr.bf16.mxu0 %v2539
      %3430 = vmatmul.mubr.bf16.gmra.mrb[0].mxu0 %v2514
      %v3431 = vpop.f32.mrb[0].mxu0
      %v3432 = vadd.f32 %v3359, %v3431
      %v3433 = vpop.f32.mrb[0].mxu0
      %v3434 = vpop.f32.mrb[0].mxu0
      %v3435 = vadd.f32 %v3362, %v3434
      %v3436 = vpop.f32.mrb[0].mxu0
      %3437 = vmatprep.mubr.bf16.mxu0 %v2541
      %3438 = vmatmul.mubr.bf16.gmra.mrb[0].mxu0 %v2523
      %v3439 = vpop.f32.mrb[0].mxu0
      %v3440 = vadd.f32 %v3367, %v3439
      %v3441 = vpop.f32.mrb[0].mxu0
      %v3442 = vpop.f32.mrb[0].mxu0
      %v3443 = vadd.f32 %v3370, %v3442
      %v3444 = vpop.f32.mrb[0].mxu0
      %3445 = vdwg.mxu0
      %3446 = vmatprep.subr.bf16.mxu0 0
      %3447 = vmatpush1.bf16.msra.mxu0 %v3131
      %3448 = vmatprep.subr.bf16.mxu0 0
      %3449 = vmatpush1.bf16.msra.mxu0 %v3132
      %3450 = vmatprep.subr.bf16.mxu0 0
      %3451 = vmatpush1.bf16.msra.mxu0 %v3133
      %3452 = vmatprep.subr.bf16.mxu0 0
      %3453 = vmatpush1.bf16.msra.mxu0 %v3134
      %3454 = vmatprep.subr.bf16.mxu0 0
      %3455 = vmatpush1.bf16.msra.mxu0 %v3135
      %3456 = vmatprep.subr.bf16.mxu0 0
      %3457 = vmatpush1.bf16.msra.mxu0 %v3136
      %3458 = vmatprep.subr.bf16.mxu0 0
      %3459 = vmatpush1.bf16.msra.mxu0 %v3137
      %3460 = vmatprep.subr.bf16.mxu0 0
      %3461 = vmatpush1.bf16.msra.mxu0 %v3138
      %3462 = vmatprep.subr.bf16.mxu0 0
      %3463 = vmatpush1.bf16.msra.mxu0 %v3139
      %3464 = vmatprep.subr.bf16.mxu0 0
      %3465 = vmatpush1.bf16.msra.mxu0 %v3140
      %3466 = vmatprep.subr.bf16.mxu0 0
      %3467 = vmatpush1.bf16.msra.mxu0 %v3141
      %3468 = vmatprep.subr.bf16.mxu0 0
      %3469 = vmatpush1.bf16.msra.mxu0 %v3142
      %3470 = vmatprep.subr.bf16.mxu0 0
      %3471 = vmatpush1.bf16.msra.mxu0 %v3143
      %3472 = vmatprep.subr.bf16.mxu0 0
      %3473 = vmatpush1.bf16.msra.mxu0 %v3144
      %3474 = vmatprep.subr.bf16.mxu0 0
      %3475 = vmatpush1.bf16.msra.mxu0 %v3145
      %3476 = vmatprep.subr.bf16.mxu0 0
      %3477 = vmatpush1.bf16.msra.mxu0 %v3146
      %3478 = vmatprep.mubr.bf16.mxu0 %v2585
      %3479 = vmatmul.mubr.bf16.gmra.mrb[0].mxu0 %v2555
      %v3480 = vpop.f32.mrb[0].mxu0
      %v3481 = vadd.f32 %v3408, %v3480
      %v3482 = vpop.f32.mrb[0].mxu0
      %v3483 = vpop.f32.mrb[0].mxu0
      %v3484 = vadd.f32 %v3411, %v3483
      %v3485 = vpop.f32.mrb[0].mxu0
      %3486 = vmatprep.mubr.bf16.mxu0 %v2594
      %3487 = vmatmul.mubr.bf16.gmra.mrb[0].mxu0 %v2557
      %v3488 = vpop.f32.mrb[0].mxu0
      %v3489 = vadd.f32 %v3416, %v3488
      %v3490 = vpop.f32.mrb[0].mxu0
      %v3491 = vpop.f32.mrb[0].mxu0
      %v3492 = vadd.f32 %v3419, %v3491
      %v3493 = vpop.f32.mrb[0].mxu0
      %3494 = vmatprep.mubr.bf16.mxu0 %v2603
      %3495 = vmatmul.mubr.bf16.gmra.mrb[0].mxu0 %v2559
      %v3496 = vpop.f32.mrb[0].mxu0
      %v3497 = vadd.f32 %v3424, %v3496
      %v3498 = vpop.f32.mrb[0].mxu0
      %v3499 = vpop.f32.mrb[0].mxu0
      %v3500 = vadd.f32 %v3427, %v3499
      %v3501 = vpop.f32.mrb[0].mxu0
      %3502 = vmatprep.mubr.bf16.mxu0 %v2612
      %3503 = vmatmul.mubr.bf16.gmra.mrb[0].mxu0 %v2561
      %v3504 = vpop.f32.mrb[0].mxu0
      %v3505 = vadd.f32 %v3432, %v3504
      %v3506 = vpop.f32.mrb[0].mxu0
      %v3507 = vpop.f32.mrb[0].mxu0
      %v3508 = vadd.f32 %v3435, %v3507
      %v3509 = vpop.f32.mrb[0].mxu0
      %3510 = vmatprep.mubr.bf16.mxu0 %v2621
      %3511 = vmatmul.mubr.bf16.gmra.mrb[0].mxu0 %v2563
      %v3512 = vpop.f32.mrb[0].mxu0
      %v3513 = vadd.f32 %v3440, %v3512
      %v3514 = vpop.f32.mrb[0].mxu0
      %v3515 = vpop.f32.mrb[0].mxu0
      %v3516 = vadd.f32 %v3443, %v3515
      %v3517 = vpop.f32.mrb[0].mxu0
      %3518 = vdwg.mxu0
      %3519 = vmatprep.subr.bf16.mxu0 0
      %3520 = vmatpush1.bf16.msra.mxu0 %v3147
      %3521 = vmatprep.subr.bf16.mxu0 0
      %3522 = vmatpush1.bf16.msra.mxu0 %v3148
      %3523 = vmatprep.subr.bf16.mxu0 0
      %3524 = vmatpush1.bf16.msra.mxu0 %v3149
      %3525 = vmatprep.subr.bf16.mxu0 0
      %3526 = vmatpush1.bf16.msra.mxu0 %v3150
      %3527 = vmatprep.subr.bf16.mxu0 0
      %3528 = vmatpush1.bf16.msra.mxu0 %v3151
      %3529 = vmatprep.subr.bf16.mxu0 0
      %3530 = vmatpush1.bf16.msra.mxu0 %v3152
      %3531 = vmatprep.subr.bf16.mxu0 0
      %3532 = vmatpush1.bf16.msra.mxu0 %v3153
      %3533 = vmatprep.subr.bf16.mxu0 0
      %3534 = vmatpush1.bf16.msra.mxu0 %v3154
      %3535 = vmatprep.subr.bf16.mxu0 0
      %3536 = vmatpush1.bf16.msra.mxu0 0
      %3537 = vmatprep.subr.bf16.mxu0 0
      %3538 = vmatpush1.bf16.msra.mxu0 0
      %3539 = vmatprep.subr.bf16.mxu0 0
      %3540 = vmatpush1.bf16.msra.mxu0 0
      %3541 = vmatprep.subr.bf16.mxu0 0
      %3542 = vmatpush1.bf16.msra.mxu0 0
      %3543 = vmatprep.subr.bf16.mxu0 0
      %3544 = vmatpush1.bf16.msra.mxu0 0
      %3545 = vmatprep.subr.bf16.mxu0 0
      %3546 = vmatpush1.bf16.msra.mxu0 0
      %3547 = vmatprep.subr.bf16.mxu0 0
      %3548 = vmatpush1.bf16.msra.mxu0 0
      %3549 = vmatprep.subr.bf16.mxu0 0
      %3550 = vmatpush1.bf16.msra.mxu0 0
      %3551 = vmatprep.mubr.bf16.mxu0 0
      %3552 = vmatmul.mubr.bf16.gmra.mrb[0].mxu0 %v2631
      %v3553 = vpop.f32.mrb[0].mxu0
      %v3554 = vadd.f32 %v3481, %v3553
      %v3555 = vpop.f32.mrb[0].mxu0
      %v3556 = vpop.f32.mrb[0].mxu0
      %v3557 = vadd.f32 %v3484, %v3556
      %v3558 = vpop.f32.mrb[0].mxu0
      %3559 = vmatprep.mubr.bf16.mxu0 0
      %3560 = vmatmul.mubr.bf16.gmra.mrb[0].mxu0 %v2633
      %v3561 = vpop.f32.mrb[0].mxu0
      %v3562 = vadd.f32 %v3489, %v3561
      %v3563 = vpop.f32.mrb[0].mxu0
      %v3564 = vpop.f32.mrb[0].mxu0
      %v3565 = vadd.f32 %v3492, %v3564
      %v3566 = vpop.f32.mrb[0].mxu0
      %3567 = vmatprep.mubr.bf16.mxu0 0
      %3568 = vmatmul.mubr.bf16.gmra.mrb[0].mxu0 %v2635
      %v3569 = vpop.f32.mrb[0].mxu0
      %v3570 = vadd.f32 %v3497, %v3569
      %v3571 = vpop.f32.mrb[0].mxu0
      %v3572 = vpop.f32.mrb[0].mxu0
      %v3573 = vadd.f32 %v3500, %v3572
      %v3574 = vpop.f32.mrb[0].mxu0
      %3575 = vmatprep.mubr.bf16.mxu0 0
      %3576 = vmatmul.mubr.bf16.gmra.mrb[0].mxu0 %v2637
      %v3577 = vpop.f32.mrb[0].mxu0
      %v3578 = vadd.f32 %v3505, %v3577
      %v3579 = vpop.f32.mrb[0].mxu0
      %v3580 = vpop.f32.mrb[0].mxu0
      %v3581 = vadd.f32 %v3508, %v3580
      %v3582 = vpop.f32.mrb[0].mxu0
      %3583 = vmatprep.mubr.bf16.mxu0 0
      %3584 = vmatmul.mubr.bf16.gmra.mrb[0].mxu0 %v2639
      %v3585 = vpop.f32.mrb[0].mxu0
      %v3586 = vadd.f32 %v3513, %v3585
      %v3587 = vpop.f32.mrb[0].mxu0
      %v3588 = vpop.f32.mrb[0].mxu0
      %v3589 = vadd.f32 %v3516, %v3588
      %v3590 = vpop.f32.mrb[0].mxu0
      %3591 = vdwg.mxu0
      %v3592 = vunpack.c.l.bf16 %v248
      %v3593 = vunpack.c.l.bf16 %v262
      %v3594 = vunpack.c.l.bf16 %v263
      %v3595 = vunpack.c.l.bf16 %v264
      %v3596 = vunpack.c.l.bf16 %v255
      %v3597 = vunpack.c.l.bf16 %v287
      %v3598 = vunpack.c.l.bf16 %v301
      %v3599 = vunpack.c.l.bf16 %v302
      %v3600 = vunpack.c.l.bf16 %v303
      %v3601 = vunpack.c.l.bf16 %v294
      %v3602 = vunpack.c.l.bf16 %v326
      %v3603 = vunpack.c.l.bf16 %v340
      %v3604 = vunpack.c.l.bf16 %v341
      %v3605 = vunpack.c.l.bf16 %v342
      %v3606 = vunpack.c.l.bf16 %v333
      %v3607 = vunpack.c.l.bf16 %v365
      %v3608 = vunpack.c.l.bf16 %v379
      %v3609 = vunpack.c.l.bf16 %v380
      %v3610 = vunpack.c.l.bf16 %v381
      %v3611 = vunpack.c.l.bf16 %v372
      %v3612 = vunpack.c.l.bf16 %v404
      %v3613 = vunpack.c.l.bf16 %v418
      %v3614 = vunpack.c.l.bf16 %v419
      %v3615 = vunpack.c.l.bf16 %v420
      %v3616 = vunpack.c.l.bf16 %v411
      %v3617 = vunpack.c.l.bf16 %v443
      %v3618 = vunpack.c.l.bf16 %v457
      %v3619 = vunpack.c.l.bf16 %v458
      %v3620 = vunpack.c.l.bf16 %v459
      %v3621 = vunpack.c.l.bf16 %v450
      %v3622 = vunpack.c.l.bf16 %v482
      %v3623 = vunpack.c.l.bf16 %v496
      %v3624 = vunpack.c.l.bf16 %v497
      %v3625 = vunpack.c.l.bf16 %v498
      %v3626 = vunpack.c.l.bf16 %v489
      %v3627 = vunpack.c.l.bf16 %v521
      %v3628 = vunpack.c.l.bf16 %v535
      %v3629 = vunpack.c.l.bf16 %v536
      %v3630 = vunpack.c.l.bf16 %v537
      %v3631 = vunpack.c.l.bf16 %v528
      %v3672 = vcombine.low %v3592, %v3593
      %v3673 = vcombine.low %v3594, %v3595
      %v3675 = vunpack.c.l.s4 1983009808
      %v3676 = vunpack.c.0.s8 %v3675
      %v3677 = vlaneseq
      %v3678 = vshrl.u32 %v3677, 7
      %v3679 = vsub.s32 %v3676, %v3678
      %v3680 = vrot.slane %v3672, %v3679
      %v3682 = vunpack.c.l.s4 1983009808
      %v3683 = vunpack.c.0.s8 %v3682
      %v3684 = vlaneseq
      %v3685 = vshrl.u32 %v3684, 7
      %v3686 = vsub.s32 %v3683, %v3685
      %v3687 = vrot.slane %v3673, %v3686
      %v3688 = vcombine.low %v3680, %v3687
      %v3689 = vcombine.low %v3596, %v3597
      %v3690 = vcombine.low %v3598, %v3599
      %v3692 = vunpack.c.l.s4 1983009808
      %v3693 = vunpack.c.0.s8 %v3692
      %v3694 = vlaneseq
      %v3695 = vshrl.u32 %v3694, 7
      %v3696 = vsub.s32 %v3693, %v3695
      %v3697 = vrot.slane %v3689, %v3696
      %v3699 = vunpack.c.l.s4 1983009808
      %v3700 = vunpack.c.0.s8 %v3699
      %v3701 = vlaneseq
      %v3702 = vshrl.u32 %v3701, 7
      %v3703 = vsub.s32 %v3700, %v3702
      %v3704 = vrot.slane %v3690, %v3703
      %v3705 = vcombine.low %v3697, %v3704
      %v3706 = vcombine.low %v3600, %v3601
      %v3707 = vcombine.low %v3602, %v3603
      %v3709 = vunpack.c.l.s4 1983009808
      %v3710 = vunpack.c.0.s8 %v3709
      %v3711 = vlaneseq
      %v3712 = vshrl.u32 %v3711, 7
      %v3713 = vsub.s32 %v3710, %v3712
      %v3714 = vrot.slane %v3706, %v3713
      %v3716 = vunpack.c.l.s4 1983009808
      %v3717 = vunpack.c.0.s8 %v3716
      %v3718 = vlaneseq
      %v3719 = vshrl.u32 %v3718, 7
      %v3720 = vsub.s32 %v3717, %v3719
      %v3721 = vrot.slane %v3707, %v3720
      %v3722 = vcombine.low %v3714, %v3721
      %v3723 = vcombine.low %v3604, %v3605
      %v3724 = vcombine.low %v3606, %v3607
      %v3726 = vunpack.c.l.s4 1983009808
      %v3727 = vunpack.c.0.s8 %v3726
      %v3728 = vlaneseq
      %v3729 = vshrl.u32 %v3728, 7
      %v3730 = vsub.s32 %v3727, %v3729
      %v3731 = vrot.slane %v3723, %v3730
      %v3733 = vunpack.c.l.s4 1983009808
      %v3734 = vunpack.c.0.s8 %v3733
      %v3735 = vlaneseq
      %v3736 = vshrl.u32 %v3735, 7
      %v3737 = vsub.s32 %v3734, %v3736
      %v3738 = vrot.slane %v3724, %v3737
      %v3739 = vcombine.low %v3731, %v3738
      %v3740 = vcombine.low %v3608, %v3609
      %v3741 = vcombine.low %v3610, %v3611
      %v3743 = vunpack.c.l.s4 1983009808
      %v3744 = vunpack.c.0.s8 %v3743
      %v3745 = vlaneseq
      %v3746 = vshrl.u32 %v3745, 7
      %v3747 = vsub.s32 %v3744, %v3746
      %v3748 = vrot.slane %v3740, %v3747
      %v3750 = vunpack.c.l.s4 1983009808
      %v3751 = vunpack.c.0.s8 %v3750
      %v3752 = vlaneseq
      %v3753 = vshrl.u32 %v3752, 7
      %v3754 = vsub.s32 %v3751, %v3753
      %v3755 = vrot.slane %v3741, %v3754
      %v3756 = vcombine.low %v3748, %v3755
      %v3757 = vcombine.low %v3612, %v3613
      %v3758 = vcombine.low %v3614, %v3615
      %v3760 = vunpack.c.l.s4 1983009808
      %v3761 = vunpack.c.0.s8 %v3760
      %v3762 = vlaneseq
      %v3763 = vshrl.u32 %v3762, 7
      %v3764 = vsub.s32 %v3761, %v3763
      %v3765 = vrot.slane %v3757, %v3764
      %v3767 = vunpack.c.l.s4 1983009808
      %v3768 = vunpack.c.0.s8 %v3767
      %v3769 = vlaneseq
      %v3770 = vshrl.u32 %v3769, 7
      %v3771 = vsub.s32 %v3768, %v3770
      %v3772 = vrot.slane %v3758, %v3771
      %v3773 = vcombine.low %v3765, %v3772
      %v3774 = vcombine.low %v3616, %v3617
      %v3775 = vcombine.low %v3618, %v3619
      %v3777 = vunpack.c.l.s4 1983009808
      %v3778 = vunpack.c.0.s8 %v3777
      %v3779 = vlaneseq
      %v3780 = vshrl.u32 %v3779, 7
      %v3781 = vsub.s32 %v3778, %v3780
      %v3782 = vrot.slane %v3774, %v3781
      %v3784 = vunpack.c.l.s4 1983009808
      %v3785 = vunpack.c.0.s8 %v3784
      %v3786 = vlaneseq
      %v3787 = vshrl.u32 %v3786, 7
      %v3788 = vsub.s32 %v3785, %v3787
      %v3789 = vrot.slane %v3775, %v3788
      %v3790 = vcombine.low %v3782, %v3789
      %v3791 = vcombine.low %v3620, %v3621
      %v3792 = vcombine.low %v3622, %v3623
      %v3794 = vunpack.c.l.s4 1983009808
      %v3795 = vunpack.c.0.s8 %v3794
      %v3796 = vlaneseq
      %v3797 = vshrl.u32 %v3796, 7
      %v3798 = vsub.s32 %v3795, %v3797
      %v3799 = vrot.slane %v3791, %v3798
      %v3801 = vunpack.c.l.s4 1983009808
      %v3802 = vunpack.c.0.s8 %v3801
      %v3803 = vlaneseq
      %v3804 = vshrl.u32 %v3803, 7
      %v3805 = vsub.s32 %v3802, %v3804
      %v3806 = vrot.slane %v3792, %v3805
      %v3807 = vcombine.low %v3799, %v3806
      %v3808 = vcombine.low %v3624, %v3625
      %v3809 = vcombine.low %v3626, %v3627
      %v3811 = vunpack.c.l.s4 1983009808
      %v3812 = vunpack.c.0.s8 %v3811
      %v3813 = vlaneseq
      %v3814 = vshrl.u32 %v3813, 7
      %v3815 = vsub.s32 %v3812, %v3814
      %v3816 = vrot.slane %v3808, %v3815
      %v3818 = vunpack.c.l.s4 1983009808
      %v3819 = vunpack.c.0.s8 %v3818
      %v3820 = vlaneseq
      %v3821 = vshrl.u32 %v3820, 7
      %v3822 = vsub.s32 %v3819, %v3821
      %v3823 = vrot.slane %v3809, %v3822
      %v3824 = vcombine.low %v3816, %v3823
      %v3825 = vcombine.low %v3628, %v3629
      %v3826 = vcombine.low %v3630, %v3631
      %v3828 = vunpack.c.l.s4 1983009808
      %v3829 = vunpack.c.0.s8 %v3828
      %v3830 = vlaneseq
      %v3831 = vshrl.u32 %v3830, 7
      %v3832 = vsub.s32 %v3829, %v3831
      %v3833 = vrot.slane %v3825, %v3832
      %v3835 = vunpack.c.l.s4 1983009808
      %v3836 = vunpack.c.0.s8 %v3835
      %v3837 = vlaneseq
      %v3838 = vshrl.u32 %v3837, 7
      %v3839 = vsub.s32 %v3836, %v3838
      %v3840 = vrot.slane %v3826, %v3839
      %v3841 = vcombine.low %v3833, %v3840
      %v3852 = vadd.f32 %v3554, %v3688
      %v3853 = vadd.f32 %v3557, %v3705
      %v3854 = vadd.f32 %v3562, %v3722
      %v3855 = vadd.f32 %v3565, %v3739
      %v3856 = vadd.f32 %v3570, %v3756
      %v3857 = vadd.f32 %v3573, %v3773
      %v3858 = vadd.f32 %v3578, %v3790
      %v3859 = vadd.f32 %v3581, %v3807
      %v3860 = vadd.f32 %v3586, %v3824
      %v3861 = vadd.f32 %v3589, %v3841
      %v3862 = vsel %vm2298, %v3852, 0.0
      %v3863 = vsel %vm2299, %v3853, 0.0
      %v3864 = vsel %vm2300, %v3854, 0.0
      %v3865 = vsel %vm2301, %v3855, 0.0
      %v3866 = vsel %vm2302, %v3856, 0.0
      %v3867 = vsel %vm2303, %v3857, 0.0
      %v3868 = vsel %vm2304, %v3858, 0.0
      %v3869 = vsel %vm2305, %v3859, 0.0
      %v3870 = vsel %vm2306, %v3860, 0.0
      %v3871 = vsel %vm2307, %v3861, 0.0
      %v3872 = vpack.c.bf16 %v3863, %v3862
      %v3873 = vpack.c.bf16 %v3865, %v3864
      %v3874 = vpack.c.bf16 %v3867, %v3866
      %v3875 = vpack.c.bf16 %v3869, %v3868
      %v3876 = vpack.c.bf16 %v3871, %v3870
      %v3878 = vshrl.u32 %v3872, 16
      %v3880 = vrot.slane %v3878, 2
      %v3881 = vshll.u32 %v3872, 16
      %v3883 = vrot.slane %v3881, 3
      %v3884 = vor.u32 %v3880, %v3883
      %v3886 = vshrl.u32 %v3873, 16
      %v3888 = vrot.slane %v3886, 2
      %v3889 = vshll.u32 %v3873, 16
      %v3891 = vrot.slane %v3889, 3
      %v3892 = vor.u32 %v3888, %v3891
      %v3893 = vsel %vm173, %v3884, %v3892
      %v3895 = vshrl.u32 %v3874, 16
      %v3897 = vrot.slane %v3895, 2
      %v3898 = vshll.u32 %v3874, 16
      %v3900 = vrot.slane %v3898, 3
      %v3901 = vor.u32 %v3897, %v3900
      %v3902 = vsel %vm173, %v3892, %v3901
      %v3904 = vshrl.u32 %v3875, 16
      %v3906 = vrot.slane %v3904, 2
      %v3907 = vshll.u32 %v3875, 16
      %v3909 = vrot.slane %v3907, 3
      %v3910 = vor.u32 %v3906, %v3909
      %v3911 = vsel %vm173, %v3901, %v3910
      %v3913 = vshrl.u32 %v3876, 16
      %v3915 = vrot.slane %v3913, 2
      %v3916 = vshll.u32 %v3876, 16
      %v3918 = vrot.slane %v3916, 3
      %v3919 = vor.u32 %v3915, %v3918
      %v3920 = vsel %vm173, %v3910, %v3919
      %v3927 = vld [vmem:[#allocation2] sm:$0xe0]
      %v3928 = vsel %vm180, %v3884, %v3927
      %3929 = vst [vmem:[#allocation2] sm:$0xe0] %v3928
      %3930 = vst [vmem:[#allocation2 + $0x8] sm:$0xff] %v3893
      %3931 = vst [vmem:[#allocation2 + $0x10] sm:$0xff] %v3902
      %3932 = vst [vmem:[#allocation2 + $0x18] sm:$0xff] %v3911
      %3933 = vst [vmem:[#allocation2 + $0x20] sm:$0xff] %v3920
      %v3934 = vld [vmem:[#allocation2 + $0x28] sm:$0x3f]
      %v3935 = vsel %vm174, %v3919, %v3934
      %3936 = vst [vmem:[#allocation2 + $0x28] sm:$0x3f] %v3935
      %v3937 = vld [vmem:[#allocation2] sm:$0xff]
      %v3938 = vld [vmem:[#allocation2 + $0x8] sm:$0xff]
      %v3939 = vld [vmem:[#allocation2 + $0x10] sm:$0xff]
      %v3940 = vld [vmem:[#allocation2 + $0x18] sm:$0xff]
      %v3941 = vld [vmem:[#allocation2 + $0x20] sm:$0xff]
      %v3942 = vld [vmem:[#allocation2 + $0x28] sm:$0x1]
      %v3943 = vld [vmem:[#allocation2] sm:$0xfe]
      %v3944 = vld [vmem:[#allocation2] sm:$0xe0]
      %v3945 = vld [vmem:[#allocation2 + $0x28] sm:$0x1f]
      %v3946 = vld [vmem:[#allocation2 + $0x28] sm:$0x3f]
      %v3947 = vld [vmem:[#allocation2] sm:$0xc0]
      %v3948 = vld [vmem:[#allocation2 + $0x8] sm:$0xfc]
      %v3949 = vld [vmem:[#allocation2 + $0x10] sm:$0xff]
      %v3950 = vld [vmem:[#allocation2 + $0x18] sm:$0xff]
      %v3951 = vld [vmem:[#allocation2 + $0x20] sm:$0xff]
      %v3952 = vld [vmem:[#allocation2 + $0x28] sm:$0xff]
      %v3953 = vld [vmem:[#allocation2 + $0x30] sm:$0x3]
      %v3954 = vld [vmem:[#allocation2 + $0x30] sm:$0x7]
      %v3955 = vld [vmem:[#allocation2 + $0x8] sm:$0xf8]
      %v3957 = vshrl.u32 %v3937, 16
      %v3959 = vshll.u32 %v3937, 16
      %v3961 = vrot.slane %v3959, 1
      %v3962 = vor.u32 %v3957, %v3961
      %v3964 = vshll.u32 %v3938, 16
      %v3966 = vrot.slane %v3964, 1
      %v3967 = vsel %vm1083, %v3962, %v3966
      %v3968 = vshrl.u32 %v3938, 16
      %v3970 = vor.u32 %v3968, %v3966
      %v3972 = vshll.u32 %v3939, 16
      %v3974 = vrot.slane %v3972, 1
      %v3975 = vsel %vm1083, %v3970, %v3974
      %v3976 = vshrl.u32 %v3939, 16
      %v3978 = vor.u32 %v3976, %v3974
      %v3980 = vshll.u32 %v3940, 16
      %v3982 = vrot.slane %v3980, 1
      %v3983 = vsel %vm1083, %v3978, %v3982
      %v3984 = vshrl.u32 %v3940, 16
      %v3986 = vor.u32 %v3984, %v3982
      %v3988 = vshll.u32 %v3941, 16
      %v3990 = vrot.slane %v3988, 1
      %v3991 = vsel %vm1083, %v3986, %v3990
      %v3992 = vshrl.u32 %v3941, 16
      %v3994 = vor.u32 %v3992, %v3990
      %v3996 = vshll.u32 %v3942, 16
      %v3998 = vrot.slane %v3996, 1
      %v3999 = vsel %vm1083, %v3994, %v3998
      %v4011 = vrot.slane %v3943, 1
      %v4012 = vrot.slane %v3938, 1
      %v4013 = vsel %vm1139, %v4011, %v4012
      %v4014 = vrot.slane %v3939, 1
      %v4015 = vsel %vm1139, %v4012, %v4014
      %v4016 = vrot.slane %v3940, 1
      %v4017 = vsel %vm1139, %v4014, %v4016
      %v4018 = vrot.slane %v3941, 1
      %v4019 = vsel %vm1139, %v4016, %v4018
      %v4020 = vrot.slane %v3942, 1
      %v4021 = vsel %vm1139, %v4018, %v4020
      %v4029 = vrot.slane %v3944, 5
      %v4030 = vrot.slane %v3938, 5
      %v4031 = vsel %vm1158, %v4029, %v4030
      %v4032 = vrot.slane %v3939, 5
      %v4033 = vsel %vm1158, %v4030, %v4032
      %v4034 = vrot.slane %v3940, 5
      %v4035 = vsel %vm1158, %v4032, %v4034
      %v4036 = vrot.slane %v3941, 5
      %v4037 = vsel %vm1158, %v4034, %v4036
      %v4038 = vrot.slane %v3945, 5
      %v4039 = vsel %vm1158, %v4036, %v4038
      %v4046 = vshrl.u32 %v3944, 16
      %v4048 = vrot.slane %v4046, 5
      %v4049 = vshll.u32 %v3944, 16
      %v4051 = vrot.slane %v4049, 6
      %v4052 = vor.u32 %v4048, %v4051
      %v4053 = vrot.slane %v3968, 5
      %v4054 = vrot.slane %v3964, 6
      %v4055 = vor.u32 %v4053, %v4054
      %v4056 = vsel %vm1175, %v4052, %v4055
      %v4057 = vrot.slane %v3976, 5
      %v4058 = vrot.slane %v3972, 6
      %v4059 = vor.u32 %v4057, %v4058
      %v4060 = vsel %vm1175, %v4055, %v4059
      %v4061 = vrot.slane %v3984, 5
      %v4062 = vrot.slane %v3980, 6
      %v4063 = vor.u32 %v4061, %v4062
      %v4064 = vsel %vm1175, %v4059, %v4063
      %v4065 = vrot.slane %v3992, 5
      %v4066 = vrot.slane %v3988, 6
      %v4067 = vor.u32 %v4065, %v4066
      %v4068 = vsel %vm1175, %v4063, %v4067
      %v4070 = vshrl.u32 %v3946, 16
      %v4072 = vrot.slane %v4070, 5
      %v4073 = vshll.u32 %v3946, 16
      %v4075 = vrot.slane %v4073, 6
      %v4076 = vor.u32 %v4072, %v4075
      %v4077 = vsel %vm1175, %v4067, %v4076
      %v4085 = vrot.slane %v3947, 6
      %v4086 = vrot.slane %v3938, 6
      %v4087 = vsel %vm1216, %v4085, %v4086
      %v4088 = vrot.slane %v3939, 6
      %v4089 = vsel %vm1216, %v4086, %v4088
      %v4090 = vrot.slane %v3940, 6
      %v4091 = vsel %vm1216, %v4088, %v4090
      %v4092 = vrot.slane %v3941, 6
      %v4093 = vsel %vm1216, %v4090, %v4092
      %v4094 = vrot.slane %v3946, 6
      %v4095 = vsel %vm1216, %v4092, %v4094
      %v4107 = vrot.slane %v3948, 2
      %v4108 = vrot.slane %v3949, 2
      %v4109 = vsel %vm172, %v4107, %v4108
      %v4110 = vrot.slane %v3950, 2
      %v4111 = vsel %vm172, %v4108, %v4110
      %v4112 = vrot.slane %v3951, 2
      %v4113 = vsel %vm172, %v4110, %v4112
      %v4114 = vrot.slane %v3952, 2
      %v4115 = vsel %vm172, %v4112, %v4114
      %v4116 = vrot.slane %v3953, 2
      %v4117 = vsel %vm172, %v4114, %v4116
      %v4124 = vshrl.u32 %v3948, 16
      %v4126 = vrot.slane %v4124, 2
      %v4127 = vshll.u32 %v3948, 16
      %v4129 = vrot.slane %v4127, 3
      %v4130 = vor.u32 %v4126, %v4129
      %v4132 = vshrl.u32 %v3949, 16
      %v4134 = vrot.slane %v4132, 2
      %v4135 = vshll.u32 %v3949, 16
      %v4137 = vrot.slane %v4135, 3
      %v4138 = vor.u32 %v4134, %v4137
      %v4139 = vsel %vm173, %v4130, %v4138
      %v4141 = vshrl.u32 %v3950, 16
      %v4143 = vrot.slane %v4141, 2
      %v4144 = vshll.u32 %v3950, 16
      %v4146 = vrot.slane %v4144, 3
      %v4147 = vor.u32 %v4143, %v4146
      %v4148 = vsel %vm173, %v4138, %v4147
      %v4150 = vshrl.u32 %v3951, 16
      %v4152 = vrot.slane %v4150, 2
      %v4153 = vshll.u32 %v3951, 16
      %v4155 = vrot.slane %v4153, 3
      %v4156 = vor.u32 %v4152, %v4155
      %v4157 = vsel %vm173, %v4147, %v4156
      %v4159 = vshrl.u32 %v3952, 16
      %v4161 = vrot.slane %v4159, 2
      %v4162 = vshll.u32 %v3952, 16
      %v4164 = vrot.slane %v4162, 3
      %v4165 = vor.u32 %v4161, %v4164
      %v4166 = vsel %vm173, %v4156, %v4165
      %v4168 = vshrl.u32 %v3954, 16
      %v4170 = vrot.slane %v4168, 2
      %v4171 = vshll.u32 %v3954, 16
      %v4173 = vrot.slane %v4171, 3
      %v4174 = vor.u32 %v4170, %v4173
      %v4175 = vsel %vm173, %v4165, %v4174
      %v4183 = vrot.slane %v3955, 3
      %v4184 = vrot.slane %v3949, 3
      %v4185 = vsel %vm1315, %v4183, %v4184
      %v4186 = vrot.slane %v3950, 3
      %v4187 = vsel %vm1315, %v4184, %v4186
      %v4188 = vrot.slane %v3951, 3
      %v4189 = vsel %vm1315, %v4186, %v4188
      %v4190 = vrot.slane %v3952, 3
      %v4191 = vsel %vm1315, %v4188, %v4190
      %v4192 = vrot.slane %v3954, 3
      %v4193 = vsel %vm1315, %v4190, %v4192
      %s4199 = scalar_lea.vmem %s1, 1152
      %v4200 = vld [vmem:[%s4199] sm:$0xf]
      %v4201 = vld [vmem:[%s4199 + $0x4] sm:$0xf]
      %v4202 = vld [vmem:[%s4199 + $0x8] sm:$0xf]
      %v4203 = vld [vmem:[%s4199 + $0xc] sm:$0xf]
      %v4204 = vld [vmem:[%s4199 + $0x10] sm:$0xf]
      %v4205 = vld [vmem:[%s4199 + $0x14] sm:$0xf]
      %v4206 = vld [vmem:[%s4199 + $0x18] sm:$0xf]
      %v4207 = vld [vmem:[%s4199 + $0x1c] sm:$0xf]
      %v4208 = vld [vmem:[%s4199 + $0x20] sm:$0xf]
      %v4209 = vld [vmem:[%s4199 + $0x24] sm:$0xf]
      %v4210 = vld [vmem:[%s4199 + $0x28] sm:$0xf]
      %v4211 = vld [vmem:[%s4199 + $0x2c] sm:$0xf]
      %v4212 = vld [vmem:[%s4199 + $0x30] sm:$0xf]
      %v4213 = vld [vmem:[%s4199 + $0x34] sm:$0xf]
      %v4214 = vld [vmem:[%s4199 + $0x38] sm:$0xf]
      %v4215 = vld [vmem:[%s4199 + $0x3c] sm:$0xf]
      %v4216 = vld [vmem:[%s4199 + $0x40] sm:$0xf]
      %v4217 = vld [vmem:[%s4199 + $0x44] sm:$0xf]
      %v4218 = vld [vmem:[%s4199 + $0x48] sm:$0xf]
      %v4219 = vld [vmem:[%s4199 + $0x4c] sm:$0xf]
      %v4220 = vld [vmem:[%s4199 + $0x50] sm:$0xf]
      %v4221 = vld [vmem:[%s4199 + $0x54] sm:$0xf]
      %v4222 = vld [vmem:[%s4199 + $0x58] sm:$0xf]
      %v4223 = vld [vmem:[%s4199 + $0x5c] sm:$0xf]
      %v4224 = vld [vmem:[%s4199 + $0x60] sm:$0xf]
      %v4225 = vld [vmem:[%s4199 + $0x64] sm:$0xf]
      %v4226 = vld [vmem:[%s4199 + $0x68] sm:$0xf]
      %v4227 = vld [vmem:[%s4199 + $0x6c] sm:$0xf]
      %v4228 = vld [vmem:[%s4199 + $0x70] sm:$0xf]
      %v4229 = vld [vmem:[%s4199 + $0x74] sm:$0xf]
      %v4230 = vld [vmem:[%s4199 + $0x78] sm:$0xf]
      %v4231 = vld [vmem:[%s4199 + $0x7c] sm:$0xf]
      %v4232 = vld [vmem:[%s4199 + $0x80] sm:$0xf]
      %v4233 = vld [vmem:[%s4199 + $0x84] sm:$0xf]
      %v4234 = vld [vmem:[%s4199 + $0x88] sm:$0xf]
      %v4235 = vld [vmem:[%s4199 + $0x8c] sm:$0xf]
      %v4236 = vld [vmem:[%s4199 + $0x90] sm:$0xf]
      %v4237 = vld [vmem:[%s4199 + $0x94] sm:$0xf]
      %v4238 = vld [vmem:[%s4199 + $0x98] sm:$0xf]
      %v4239 = vld [vmem:[%s4199 + $0x9c] sm:$0xf]
      %v4240 = vld [vmem:[%s4199 + $0xa0] sm:$0xf]
      %v4241 = vld [vmem:[%s4199 + $0xa4] sm:$0xf]
      %v4242 = vld [vmem:[%s4199 + $0xa8] sm:$0xf]
      %v4243 = vld [vmem:[%s4199 + $0xac] sm:$0xf]
      %v4244 = vld [vmem:[%s4199 + $0xb0] sm:$0xf]
      %v4245 = vld [vmem:[%s4199 + $0xb4] sm:$0xf]
      %v4246 = vld [vmem:[%s4199 + $0xb8] sm:$0xf]
      %v4247 = vld [vmem:[%s4199 + $0xbc] sm:$0xf]
      %v4248 = vld [vmem:[%s4199 + $0xc0] sm:$0xf]
      %v4249 = vld [vmem:[%s4199 + $0xc4] sm:$0xf]
      %v4250 = vld [vmem:[%s4199 + $0xc8] sm:$0xf]
      %v4251 = vld [vmem:[%s4199 + $0xcc] sm:$0xf]
      %v4252 = vld [vmem:[%s4199 + $0xd0] sm:$0xf]
      %v4253 = vld [vmem:[%s4199 + $0xd4] sm:$0xf]
      %v4254 = vld [vmem:[%s4199 + $0xd8] sm:$0xf]
      %v4255 = vld [vmem:[%s4199 + $0xdc] sm:$0xf]
      %v4256 = vld [vmem:[%s4199 + $0xe0] sm:$0xf]
      %v4257 = vld [vmem:[%s4199 + $0xe4] sm:$0xf]
      %v4258 = vld [vmem:[%s4199 + $0xe8] sm:$0xf]
      %v4259 = vld [vmem:[%s4199 + $0xec] sm:$0xf]
      %v4260 = vld [vmem:[%s4199 + $0xf0] sm:$0xf]
      %v4261 = vld [vmem:[%s4199 + $0xf4] sm:$0xf]
      %v4262 = vld [vmem:[%s4199 + $0xf8] sm:$0xf]
      %v4263 = vld [vmem:[%s4199 + $0xfc] sm:$0xf]
      %v4264 = vld [vmem:[%s4199 + $0x100] sm:$0xf]
      %v4265 = vld [vmem:[%s4199 + $0x104] sm:$0xf]
      %v4266 = vld [vmem:[%s4199 + $0x108] sm:$0xf]
      %v4267 = vld [vmem:[%s4199 + $0x10c] sm:$0xf]
      %v4268 = vld [vmem:[%s4199 + $0x110] sm:$0xf]
      %v4269 = vld [vmem:[%s4199 + $0x114] sm:$0xf]
      %v4270 = vld [vmem:[%s4199 + $0x118] sm:$0xf]
      %v4271 = vld [vmem:[%s4199 + $0x11c] sm:$0xf]
      %v4272 = vld [vmem:[%s4199 + $0x120] sm:$0xf]
      %v4273 = vld [vmem:[%s4199 + $0x124] sm:$0xf]
      %v4274 = vld [vmem:[%s4199 + $0x128] sm:$0xf]
      %v4275 = vld [vmem:[%s4199 + $0x12c] sm:$0xf]
      %v4276 = vld [vmem:[%s4199 + $0x130] sm:$0xf]
      %v4277 = vld [vmem:[%s4199 + $0x134] sm:$0xf]
      %v4278 = vld [vmem:[%s4199 + $0x138] sm:$0xf]
      %v4279 = vld [vmem:[%s4199 + $0x13c] sm:$0xf]
      %v4280 = vld [vmem:[%s4199 + $0x140] sm:$0xf]
      %v4281 = vld [vmem:[%s4199 + $0x144] sm:$0xf]
      %v4282 = vld [vmem:[%s4199 + $0x148] sm:$0xf]
      %v4283 = vld [vmem:[%s4199 + $0x14c] sm:$0xf]
      %v4284 = vld [vmem:[%s4199 + $0x150] sm:$0xf]
      %v4285 = vld [vmem:[%s4199 + $0x154] sm:$0xf]
      %v4286 = vld [vmem:[%s4199 + $0x158] sm:$0xf]
      %v4287 = vld [vmem:[%s4199 + $0x15c] sm:$0xf]
      %v4288 = vld [vmem:[%s4199 + $0x160] sm:$0xf]
      %v4289 = vld [vmem:[%s4199 + $0x164] sm:$0xf]
      %v4290 = vld [vmem:[%s4199 + $0x168] sm:$0xf]
      %v4291 = vld [vmem:[%s4199 + $0x16c] sm:$0xf]
      %v4292 = vld [vmem:[%s4199 + $0x170] sm:$0xf]
      %v4293 = vld [vmem:[%s4199 + $0x174] sm:$0xf]
      %v4294 = vld [vmem:[%s4199 + $0x178] sm:$0xf]
      %v4295 = vld [vmem:[%s4199 + $0x17c] sm:$0xf]
      %v4296 = vld [vmem:[%s4199 + $0x180] sm:$0xf]
      %v4297 = vld [vmem:[%s4199 + $0x184] sm:$0xf]
      %v4298 = vld [vmem:[%s4199 + $0x188] sm:$0xf]
      %v4299 = vld [vmem:[%s4199 + $0x18c] sm:$0xf]
      %v4300 = vld [vmem:[%s4199 + $0x190] sm:$0xf]
      %v4301 = vld [vmem:[%s4199 + $0x194] sm:$0xf]
      %v4302 = vld [vmem:[%s4199 + $0x198] sm:$0xf]
      %v4303 = vld [vmem:[%s4199 + $0x19c] sm:$0xf]
      %v4304 = vld [vmem:[%s4199 + $0x1a0] sm:$0xf]
      %v4305 = vld [vmem:[%s4199 + $0x1a4] sm:$0xf]
      %v4306 = vld [vmem:[%s4199 + $0x1a8] sm:$0xf]
      %v4307 = vld [vmem:[%s4199 + $0x1ac] sm:$0xf]
      %v4308 = vld [vmem:[%s4199 + $0x1b0] sm:$0xf]
      %v4309 = vld [vmem:[%s4199 + $0x1b4] sm:$0xf]
      %v4310 = vld [vmem:[%s4199 + $0x1b8] sm:$0xf]
      %v4311 = vld [vmem:[%s4199 + $0x1bc] sm:$0xf]
      %v4312 = vld [vmem:[%s4199 + $0x1c0] sm:$0xf]
      %v4313 = vld [vmem:[%s4199 + $0x1c4] sm:$0xf]
      %v4314 = vld [vmem:[%s4199 + $0x1c8] sm:$0xf]
      %v4315 = vld [vmem:[%s4199 + $0x1cc] sm:$0xf]
      %v4316 = vld [vmem:[%s4199 + $0x1d0] sm:$0xf]
      %v4317 = vld [vmem:[%s4199 + $0x1d4] sm:$0xf]
      %v4318 = vld [vmem:[%s4199 + $0x1d8] sm:$0xf]
      %v4319 = vld [vmem:[%s4199 + $0x1dc] sm:$0xf]
      %v4320 = vld [vmem:[%s4199 + $0x1e0] sm:$0xf]
      %v4321 = vld [vmem:[%s4199 + $0x1e4] sm:$0xf]
      %v4322 = vld [vmem:[%s4199 + $0x1e8] sm:$0xf]
      %v4323 = vld [vmem:[%s4199 + $0x1ec] sm:$0xf]
      %v4324 = vld [vmem:[%s4199 + $0x1f0] sm:$0xf]
      %v4325 = vld [vmem:[%s4199 + $0x1f4] sm:$0xf]
      %v4326 = vld [vmem:[%s4199 + $0x1f8] sm:$0xf]
      %v4327 = vld [vmem:[%s4199 + $0x1fc] sm:$0xf]
      %v4328 = vld [vmem:[%s4199 + $0x200] sm:$0xf]
      %v4329 = vld [vmem:[%s4199 + $0x204] sm:$0xf]
      %v4330 = vld [vmem:[%s4199 + $0x208] sm:$0xf]
      %v4331 = vld [vmem:[%s4199 + $0x20c] sm:$0xf]
      %v4332 = vld [vmem:[%s4199 + $0x210] sm:$0xf]
      %v4333 = vld [vmem:[%s4199 + $0x214] sm:$0xf]
      %v4334 = vld [vmem:[%s4199 + $0x218] sm:$0xf]
      %v4335 = vld [vmem:[%s4199 + $0x21c] sm:$0xf]
      %v4336 = vld [vmem:[%s4199 + $0x220] sm:$0xf]
      %v4337 = vld [vmem:[%s4199 + $0x224] sm:$0xf]
      %v4338 = vld [vmem:[%s4199 + $0x228] sm:$0xf]
      %v4339 = vld [vmem:[%s4199 + $0x22c] sm:$0xf]
      %v4340 = vld [vmem:[%s4199 + $0x230] sm:$0xf]
      %v4341 = vld [vmem:[%s4199 + $0x234] sm:$0xf]
      %v4342 = vld [vmem:[%s4199 + $0x238] sm:$0xf]
      %v4343 = vld [vmem:[%s4199 + $0x23c] sm:$0xf]
      %v4344 = vld [vmem:[%s2 + $0x2] sm:$0x1]
      %v4345 = vlaneseq
      %v4346 = vshrl.u32 %v4345, 7
      %v4347 = vsub.s32 0, %v4346
      %v4348 = vrot.slane %v4344, %v4347
      %v4493 = vunpack.c.l.b16 %v4200
      %v4494 = vunpack.c.l.b16 %v4201
      %v4495 = vunpack.c.l.b16 %v4202
      %v4496 = vunpack.c.l.b16 %v4203
      %v4497 = vunpack.c.l.b16 %v4204
      %v4498 = vunpack.c.l.b16 %v4205
      %v4499 = vunpack.c.l.b16 %v4206
      %v4500 = vunpack.c.l.b16 %v4207
      %v4501 = vunpack.c.l.b16 %v4208
      %v4502 = vunpack.c.l.b16 %v4209
      %v4503 = vunpack.c.l.b16 %v4210
      %v4504 = vunpack.c.l.b16 %v4211
      %v4505 = vunpack.c.l.b16 %v4212
      %v4506 = vunpack.c.l.b16 %v4213
      %v4507 = vunpack.c.l.b16 %v4214
      %v4508 = vunpack.c.l.b16 %v4215
      %v4509 = vunpack.c.l.b16 %v4216
      %v4510 = vunpack.c.l.b16 %v4217
      %v4511 = vunpack.c.l.b16 %v4218
      %v4512 = vunpack.c.l.b16 %v4219
      %v4513 = vunpack.c.l.b16 %v4220
      %v4514 = vunpack.c.l.b16 %v4221
      %v4515 = vunpack.c.l.b16 %v4222
      %v4516 = vunpack.c.l.b16 %v4223
      %v4517 = vunpack.c.l.b16 %v4224
      %v4518 = vunpack.c.l.b16 %v4225
      %v4519 = vunpack.c.l.b16 %v4226
      %v4520 = vunpack.c.l.b16 %v4227
      %v4521 = vunpack.c.l.b16 %v4228
      %v4522 = vunpack.c.l.b16 %v4229
      %v4523 = vunpack.c.l.b16 %v4230
      %v4524 = vunpack.c.l.b16 %v4231
      %v4525 = vunpack.c.l.b16 %v4232
      %v4526 = vunpack.c.l.b16 %v4233
      %v4527 = vunpack.c.l.b16 %v4234
      %v4528 = vunpack.c.l.b16 %v4235
      %v4529 = vunpack.c.l.b16 %v4236
      %v4530 = vunpack.c.l.b16 %v4237
      %v4531 = vunpack.c.l.b16 %v4238
      %v4532 = vunpack.c.l.b16 %v4239
      %v4533 = vunpack.c.l.b16 %v4240
      %v4534 = vunpack.c.l.b16 %v4241
      %v4535 = vunpack.c.l.b16 %v4242
      %v4536 = vunpack.c.l.b16 %v4243
      %v4537 = vunpack.c.l.b16 %v4244
      %v4538 = vunpack.c.l.b16 %v4245
      %v4539 = vunpack.c.l.b16 %v4246
      %v4540 = vunpack.c.l.b16 %v4247
      %v4541 = vunpack.c.l.b16 %v4248
      %v4542 = vunpack.c.l.b16 %v4249
      %v4543 = vunpack.c.l.b16 %v4250
      %v4544 = vunpack.c.l.b16 %v4251
      %v4545 = vunpack.c.l.b16 %v4252
      %v4546 = vunpack.c.l.b16 %v4253
      %v4547 = vunpack.c.l.b16 %v4254
      %v4548 = vunpack.c.l.b16 %v4255
      %v4549 = vunpack.c.l.b16 %v4256
      %v4550 = vunpack.c.l.b16 %v4257
      %v4551 = vunpack.c.l.b16 %v4258
      %v4552 = vunpack.c.l.b16 %v4259
      %v4553 = vunpack.c.l.b16 %v4260
      %v4554 = vunpack.c.l.b16 %v4261
      %v4555 = vunpack.c.l.b16 %v4262
      %v4556 = vunpack.c.l.b16 %v4263
      %v4557 = vunpack.c.l.b16 %v4264
      %v4558 = vunpack.c.l.b16 %v4265
      %v4559 = vunpack.c.l.b16 %v4266
      %v4560 = vunpack.c.l.b16 %v4267
      %v4561 = vunpack.c.l.b16 %v4268
      %v4562 = vunpack.c.l.b16 %v4269
      %v4563 = vunpack.c.l.b16 %v4270
      %v4564 = vunpack.c.l.b16 %v4271
      %v4565 = vunpack.c.l.b16 %v4272
      %v4566 = vunpack.c.l.b16 %v4273
      %v4567 = vunpack.c.l.b16 %v4274
      %v4568 = vunpack.c.l.b16 %v4275
      %v4569 = vunpack.c.l.b16 %v4276
      %v4570 = vunpack.c.l.b16 %v4277
      %v4571 = vunpack.c.l.b16 %v4278
      %v4572 = vunpack.c.l.b16 %v4279
      %v4573 = vunpack.c.l.b16 %v4280
      %v4574 = vunpack.c.l.b16 %v4281
      %v4575 = vunpack.c.l.b16 %v4282
      %v4576 = vunpack.c.l.b16 %v4283
      %v4577 = vunpack.c.l.b16 %v4284
      %v4578 = vunpack.c.l.b16 %v4285
      %v4579 = vunpack.c.l.b16 %v4286
      %v4580 = vunpack.c.l.b16 %v4287
      %v4581 = vunpack.c.l.b16 %v4288
      %v4582 = vunpack.c.l.b16 %v4289
      %v4583 = vunpack.c.l.b16 %v4290
      %v4584 = vunpack.c.l.b16 %v4291
      %v4585 = vunpack.c.l.b16 %v4292
      %v4586 = vunpack.c.l.b16 %v4293
      %v4587 = vunpack.c.l.b16 %v4294
      %v4588 = vunpack.c.l.b16 %v4295
      %v4589 = vunpack.c.l.b16 %v4296
      %v4590 = vunpack.c.l.b16 %v4297
      %v4591 = vunpack.c.l.b16 %v4298
      %v4592 = vunpack.c.l.b16 %v4299
      %v4593 = vunpack.c.l.b16 %v4300
      %v4594 = vunpack.c.l.b16 %v4301
      %v4595 = vunpack.c.l.b16 %v4302
      %v4596 = vunpack.c.l.b16 %v4303
      %v4597 = vunpack.c.l.b16 %v4304
      %v4598 = vunpack.c.l.b16 %v4305
      %v4599 = vunpack.c.l.b16 %v4306
      %v4600 = vunpack.c.l.b16 %v4307
      %v4601 = vunpack.c.l.b16 %v4308
      %v4602 = vunpack.c.l.b16 %v4309
      %v4603 = vunpack.c.l.b16 %v4310
      %v4604 = vunpack.c.l.b16 %v4311
      %v4605 = vunpack.c.l.b16 %v4312
      %v4606 = vunpack.c.l.b16 %v4313
      %v4607 = vunpack.c.l.b16 %v4314
      %v4608 = vunpack.c.l.b16 %v4315
      %v4609 = vunpack.c.l.b16 %v4316
      %v4610 = vunpack.c.l.b16 %v4317
      %v4611 = vunpack.c.l.b16 %v4318
      %v4612 = vunpack.c.l.b16 %v4319
      %v4613 = vunpack.c.l.b16 %v4320
      %v4614 = vunpack.c.l.b16 %v4321
      %v4615 = vunpack.c.l.b16 %v4322
      %v4616 = vunpack.c.l.b16 %v4323
      %v4617 = vunpack.c.l.b16 %v4324
      %v4618 = vunpack.c.l.b16 %v4325
      %v4619 = vunpack.c.l.b16 %v4326
      %v4620 = vunpack.c.l.b16 %v4327
      %v4621 = vunpack.c.l.b16 %v4328
      %v4622 = vunpack.c.l.b16 %v4329
      %v4623 = vunpack.c.l.b16 %v4330
      %v4624 = vunpack.c.l.b16 %v4331
      %v4625 = vunpack.c.l.b16 %v4332
      %v4626 = vunpack.c.l.b16 %v4333
      %v4627 = vunpack.c.l.b16 %v4334
      %v4628 = vunpack.c.l.b16 %v4335
      %v4629 = vunpack.c.l.b16 %v4336
      %v4630 = vunpack.c.l.b16 %v4337
      %v4631 = vunpack.c.l.b16 %v4338
      %v4632 = vunpack.c.l.b16 %v4339
      %v4633 = vunpack.c.l.b16 %v4340
      %v4634 = vunpack.c.l.b16 %v4341
      %v4635 = vunpack.c.l.b16 %v4342
      %v4636 = vunpack.c.l.b16 %v4343
      %v4637 = vpack.c.b16 %v4494, %v4493
      %v4638 = vpack.c.b16 %v4496, %v4495
      %v4639 = vpack.c.b16 %v4498, %v4497
      %v4640 = vpack.c.b16 %v4500, %v4499
      %v4641 = vpack.c.b16 %v4502, %v4501
      %v4642 = vpack.c.b16 %v4504, %v4503
      %v4643 = vpack.c.b16 %v4506, %v4505
      %v4644 = vpack.c.b16 %v4508, %v4507
      %v4645 = vpack.c.b16 %v4510, %v4509
      %v4646 = vpack.c.b16 %v4512, %v4511
      %v4647 = vpack.c.b16 %v4514, %v4513
      %v4648 = vpack.c.b16 %v4516, %v4515
      %v4649 = vpack.c.b16 %v4518, %v4517
      %v4650 = vpack.c.b16 %v4520, %v4519
      %v4651 = vpack.c.b16 %v4522, %v4521
      %v4652 = vpack.c.b16 %v4524, %v4523
      %v4653 = vpack.c.b16 %v4526, %v4525
      %v4654 = vpack.c.b16 %v4528, %v4527
      %v4655 = vpack.c.b16 %v4530, %v4529
      %v4656 = vpack.c.b16 %v4532, %v4531
      %v4657 = vpack.c.b16 %v4534, %v4533
      %v4658 = vpack.c.b16 %v4536, %v4535
      %v4659 = vpack.c.b16 %v4538, %v4537
      %v4660 = vpack.c.b16 %v4540, %v4539
      %v4661 = vpack.c.b16 %v4542, %v4541
      %v4662 = vpack.c.b16 %v4544, %v4543
      %v4663 = vpack.c.b16 %v4546, %v4545
      %v4664 = vpack.c.b16 %v4548, %v4547
      %v4665 = vpack.c.b16 %v4550, %v4549
      %v4666 = vpack.c.b16 %v4552, %v4551
      %v4667 = vpack.c.b16 %v4554, %v4553
      %v4668 = vpack.c.b16 %v4556, %v4555
      %v4669 = vpack.c.b16 %v4558, %v4557
      %v4670 = vpack.c.b16 %v4560, %v4559
      %v4671 = vpack.c.b16 %v4562, %v4561
      %v4672 = vpack.c.b16 %v4564, %v4563
      %v4673 = vpack.c.b16 %v4566, %v4565
      %v4674 = vpack.c.b16 %v4568, %v4567
      %v4675 = vpack.c.b16 %v4570, %v4569
      %v4676 = vpack.c.b16 %v4572, %v4571
      %v4677 = vpack.c.b16 %v4574, %v4573
      %v4678 = vpack.c.b16 %v4576, %v4575
      %v4679 = vpack.c.b16 %v4578, %v4577
      %v4680 = vpack.c.b16 %v4580, %v4579
      %v4681 = vpack.c.b16 %v4582, %v4581
      %v4682 = vpack.c.b16 %v4584, %v4583
      %v4683 = vpack.c.b16 %v4586, %v4585
      %v4684 = vpack.c.b16 %v4588, %v4587
      %v4685 = vpack.c.b16 %v4590, %v4589
      %v4686 = vpack.c.b16 %v4592, %v4591
      %v4687 = vpack.c.b16 %v4594, %v4593
      %v4688 = vpack.c.b16 %v4596, %v4595
      %v4689 = vpack.c.b16 %v4598, %v4597
      %v4690 = vpack.c.b16 %v4600, %v4599
      %v4691 = vpack.c.b16 %v4602, %v4601
      %v4692 = vpack.c.b16 %v4604, %v4603
      %v4693 = vpack.c.b16 %v4606, %v4605
      %v4694 = vpack.c.b16 %v4608, %v4607
      %v4695 = vpack.c.b16 %v4610, %v4609
      %v4696 = vpack.c.b16 %v4612, %v4611
      %v4697 = vpack.c.b16 %v4614, %v4613
      %v4698 = vpack.c.b16 %v4616, %v4615
      %v4699 = vpack.c.b16 %v4618, %v4617
      %v4700 = vpack.c.b16 %v4620, %v4619
      %v4701 = vpack.c.b16 %v4622, %v4621
      %v4702 = vpack.c.b16 %v4624, %v4623
      %v4703 = vpack.c.b16 %v4626, %v4625
      %v4704 = vpack.c.b16 %v4628, %v4627
      %v4705 = vpack.c.b16 %v4630, %v4629
      %v4706 = vpack.c.b16 %v4632, %v4631
      %v4707 = vpack.c.b16 %v4634, %v4633
      %v4708 = vpack.c.b16 %v4636, %v4635
      %4781 = vmatprep.subr.bf16.mxu0 0
      %4782 = vmatpush1.bf16.msra.mxu0 %v4637
      %4783 = vmatprep.subr.bf16.mxu0 0
      %4784 = vmatpush1.bf16.msra.mxu0 %v4638
      %4785 = vmatprep.subr.bf16.mxu0 0
      %4786 = vmatpush1.bf16.msra.mxu0 %v4639
      %4787 = vmatprep.subr.bf16.mxu0 0
      %4788 = vmatpush1.bf16.msra.mxu0 %v4640
      %4789 = vmatprep.subr.bf16.mxu0 0
      %4790 = vmatpush1.bf16.msra.mxu0 %v4641
      %4791 = vmatprep.subr.bf16.mxu0 0
      %4792 = vmatpush1.bf16.msra.mxu0 %v4642
      %4793 = vmatprep.subr.bf16.mxu0 0
      %4794 = vmatpush1.bf16.msra.mxu0 %v4643
      %4795 = vmatprep.subr.bf16.mxu0 0
      %4796 = vmatpush1.bf16.msra.mxu0 %v4644
      %4797 = vmatprep.subr.bf16.mxu0 0
      %4798 = vmatpush1.bf16.msra.mxu0 %v4645
      %4799 = vmatprep.subr.bf16.mxu0 0
      %4800 = vmatpush1.bf16.msra.mxu0 %v4646
      %4801 = vmatprep.subr.bf16.mxu0 0
      %4802 = vmatpush1.bf16.msra.mxu0 %v4647
      %4803 = vmatprep.subr.bf16.mxu0 0
      %4804 = vmatpush1.bf16.msra.mxu0 %v4648
      %4805 = vmatprep.subr.bf16.mxu0 0
      %4806 = vmatpush1.bf16.msra.mxu0 %v4649
      %4807 = vmatprep.subr.bf16.mxu0 0
      %4808 = vmatpush1.bf16.msra.mxu0 %v4650
      %4809 = vmatprep.subr.bf16.mxu0 0
      %4810 = vmatpush1.bf16.msra.mxu0 %v4651
      %4811 = vmatprep.subr.bf16.mxu0 0
      %4812 = vmatpush1.bf16.msra.mxu0 %v4652
      %4813 = vmatprep.mubr.bf16.mxu0 %v3967
      %4814 = vmatmul.mubr.bf16.gmra.mrb[0].mxu0 %v3937
      %v4815 = vpop.f32.mrb[0].mxu0
      %v4816 = vadd.f32 %v4348, %v4815
      %v4817 = vpop.f32.mrb[0].mxu0
      %v4818 = vpop.f32.mrb[0].mxu0
      %v4819 = vadd.f32 %v4348, %v4818
      %v4820 = vpop.f32.mrb[0].mxu0
      %4821 = vmatprep.mubr.bf16.mxu0 %v3975
      %4822 = vmatmul.mubr.bf16.gmra.mrb[0].mxu0 %v3938
      %v4823 = vpop.f32.mrb[0].mxu0
      %v4824 = vadd.f32 %v4348, %v4823
      %v4825 = vpop.f32.mrb[0].mxu0
      %v4826 = vpop.f32.mrb[0].mxu0
      %v4827 = vadd.f32 %v4348, %v4826
      %v4828 = vpop.f32.mrb[0].mxu0
      %4829 = vmatprep.mubr.bf16.mxu0 %v3983
      %4830 = vmatmul.mubr.bf16.gmra.mrb[0].mxu0 %v3939
      %v4831 = vpop.f32.mrb[0].mxu0
      %v4832 = vadd.f32 %v4348, %v4831
      %v4833 = vpop.f32.mrb[0].mxu0
      %v4834 = vpop.f32.mrb[0].mxu0
      %v4835 = vadd.f32 %v4348, %v4834
      %v4836 = vpop.f32.mrb[0].mxu0
      %4837 = vmatprep.mubr.bf16.mxu0 %v3991
      %4838 = vmatmul.mubr.bf16.gmra.mrb[0].mxu0 %v3940
      %v4839 = vpop.f32.mrb[0].mxu0
      %v4840 = vadd.f32 %v4348, %v4839
      %v4841 = vpop.f32.mrb[0].mxu0
      %v4842 = vpop.f32.mrb[0].mxu0
      %v4843 = vadd.f32 %v4348, %v4842
      %v4844 = vpop.f32.mrb[0].mxu0
      %4845 = vmatprep.mubr.bf16.mxu0 %v3999
      %4846 = vmatmul.mubr.bf16.gmra.mrb[0].mxu0 %v3941
      %v4847 = vpop.f32.mrb[0].mxu0
      %v4848 = vadd.f32 %v4348, %v4847
      %v4849 = vpop.f32.mrb[0].mxu0
      %v4850 = vpop.f32.mrb[0].mxu0
      %v4851 = vadd.f32 %v4348, %v4850
      %v4852 = vpop.f32.mrb[0].mxu0
      %4853 = vdwg.mxu0
      %4854 = vmatprep.subr.bf16.mxu0 0
      %4855 = vmatpush1.bf16.msra.mxu0 %v4653
      %4856 = vmatprep.subr.bf16.mxu0 0
      %4857 = vmatpush1.bf16.msra.mxu0 %v4654
      %4858 = vmatprep.subr.bf16.mxu0 0
      %4859 = vmatpush1.bf16.msra.mxu0 %v4655
      %4860 = vmatprep.subr.bf16.mxu0 0
      %4861 = vmatpush1.bf16.msra.mxu0 %v4656
      %4862 = vmatprep.subr.bf16.mxu0 0
      %4863 = vmatpush1.bf16.msra.mxu0 %v4657
      %4864 = vmatprep.subr.bf16.mxu0 0
      %4865 = vmatpush1.bf16.msra.mxu0 %v4658
      %4866 = vmatprep.subr.bf16.mxu0 0
      %4867 = vmatpush1.bf16.msra.mxu0 %v4659
      %4868 = vmatprep.subr.bf16.mxu0 0
      %4869 = vmatpush1.bf16.msra.mxu0 %v4660
      %4870 = vmatprep.subr.bf16.mxu0 0
      %4871 = vmatpush1.bf16.msra.mxu0 %v4661
      %4872 = vmatprep.subr.bf16.mxu0 0
      %4873 = vmatpush1.bf16.msra.mxu0 %v4662
      %4874 = vmatprep.subr.bf16.mxu0 0
      %4875 = vmatpush1.bf16.msra.mxu0 %v4663
      %4876 = vmatprep.subr.bf16.mxu0 0
      %4877 = vmatpush1.bf16.msra.mxu0 %v4664
      %4878 = vmatprep.subr.bf16.mxu0 0
      %4879 = vmatpush1.bf16.msra.mxu0 %v4665
      %4880 = vmatprep.subr.bf16.mxu0 0
      %4881 = vmatpush1.bf16.msra.mxu0 %v4666
      %4882 = vmatprep.subr.bf16.mxu0 0
      %4883 = vmatpush1.bf16.msra.mxu0 %v4667
      %4884 = vmatprep.subr.bf16.mxu0 0
      %4885 = vmatpush1.bf16.msra.mxu0 %v4668
      %4886 = vmatprep.mubr.bf16.mxu0 %v4031
      %4887 = vmatmul.mubr.bf16.gmra.mrb[0].mxu0 %v4013
      %v4888 = vpop.f32.mrb[0].mxu0
      %v4889 = vadd.f32 %v4816, %v4888
      %v4890 = vpop.f32.mrb[0].mxu0
      %v4891 = vpop.f32.mrb[0].mxu0
      %v4892 = vadd.f32 %v4819, %v4891
      %v4893 = vpop.f32.mrb[0].mxu0
      %4894 = vmatprep.mubr.bf16.mxu0 %v4033
      %4895 = vmatmul.mubr.bf16.gmra.mrb[0].mxu0 %v4015
      %v4896 = vpop.f32.mrb[0].mxu0
      %v4897 = vadd.f32 %v4824, %v4896
      %v4898 = vpop.f32.mrb[0].mxu0
      %v4899 = vpop.f32.mrb[0].mxu0
      %v4900 = vadd.f32 %v4827, %v4899
      %v4901 = vpop.f32.mrb[0].mxu0
      %4902 = vmatprep.mubr.bf16.mxu0 %v4035
      %4903 = vmatmul.mubr.bf16.gmra.mrb[0].mxu0 %v4017
      %v4904 = vpop.f32.mrb[0].mxu0
      %v4905 = vadd.f32 %v4832, %v4904
      %v4906 = vpop.f32.mrb[0].mxu0
      %v4907 = vpop.f32.mrb[0].mxu0
      %v4908 = vadd.f32 %v4835, %v4907
      %v4909 = vpop.f32.mrb[0].mxu0
      %4910 = vmatprep.mubr.bf16.mxu0 %v4037
      %4911 = vmatmul.mubr.bf16.gmra.mrb[0].mxu0 %v4019
      %v4912 = vpop.f32.mrb[0].mxu0
      %v4913 = vadd.f32 %v4840, %v4912
      %v4914 = vpop.f32.mrb[0].mxu0
      %v4915 = vpop.f32.mrb[0].mxu0
      %v4916 = vadd.f32 %v4843, %v4915
      %v4917 = vpop.f32.mrb[0].mxu0
      %4918 = vmatprep.mubr.bf16.mxu0 %v4039
      %4919 = vmatmul.mubr.bf16.gmra.mrb[0].mxu0 %v4021
      %v4920 = vpop.f32.mrb[0].mxu0
      %v4921 = vadd.f32 %v4848, %v4920
      %v4922 = vpop.f32.mrb[0].mxu0
      %v4923 = vpop.f32.mrb[0].mxu0
      %v4924 = vadd.f32 %v4851, %v4923
      %v4925 = vpop.f32.mrb[0].mxu0
      %4926 = vdwg.mxu0
      %4927 = vmatprep.subr.bf16.mxu0 0
      %4928 = vmatpush1.bf16.msra.mxu0 %v4669
      %4929 = vmatprep.subr.bf16.mxu0 0
      %4930 = vmatpush1.bf16.msra.mxu0 %v4670
      %4931 = vmatprep.subr.bf16.mxu0 0
      %4932 = vmatpush1.bf16.msra.mxu0 %v4671
      %4933 = vmatprep.subr.bf16.mxu0 0
      %4934 = vmatpush1.bf16.msra.mxu0 %v4672
      %4935 = vmatprep.subr.bf16.mxu0 0
      %4936 = vmatpush1.bf16.msra.mxu0 %v4673
      %4937 = vmatprep.subr.bf16.mxu0 0
      %4938 = vmatpush1.bf16.msra.mxu0 %v4674
      %4939 = vmatprep.subr.bf16.mxu0 0
      %4940 = vmatpush1.bf16.msra.mxu0 %v4675
      %4941 = vmatprep.subr.bf16.mxu0 0
      %4942 = vmatpush1.bf16.msra.mxu0 %v4676
      %4943 = vmatprep.subr.bf16.mxu0 0
      %4944 = vmatpush1.bf16.msra.mxu0 %v4677
      %4945 = vmatprep.subr.bf16.mxu0 0
      %4946 = vmatpush1.bf16.msra.mxu0 %v4678
      %4947 = vmatprep.subr.bf16.mxu0 0
      %4948 = vmatpush1.bf16.msra.mxu0 %v4679
      %4949 = vmatprep.subr.bf16.mxu0 0
      %4950 = vmatpush1.bf16.msra.mxu0 %v4680
      %4951 = vmatprep.subr.bf16.mxu0 0
      %4952 = vmatpush1.bf16.msra.mxu0 %v4681
      %4953 = vmatprep.subr.bf16.mxu0 0
      %4954 = vmatpush1.bf16.msra.mxu0 %v4682
      %4955 = vmatprep.subr.bf16.mxu0 0
      %4956 = vmatpush1.bf16.msra.mxu0 %v4683
      %4957 = vmatprep.subr.bf16.mxu0 0
      %4958 = vmatpush1.bf16.msra.mxu0 %v4684
      %4959 = vmatprep.mubr.bf16.mxu0 %v4087
      %4960 = vmatmul.mubr.bf16.gmra.mrb[0].mxu0 %v4056
      %v4961 = vpop.f32.mrb[0].mxu0
      %v4962 = vadd.f32 %v4889, %v4961
      %v4963 = vpop.f32.mrb[0].mxu0
      %v4964 = vpop.f32.mrb[0].mxu0
      %v4965 = vadd.f32 %v4892, %v4964
      %v4966 = vpop.f32.mrb[0].mxu0
      %4967 = vmatprep.mubr.bf16.mxu0 %v4089
      %4968 = vmatmul.mubr.bf16.gmra.mrb[0].mxu0 %v4060
      %v4969 = vpop.f32.mrb[0].mxu0
      %v4970 = vadd.f32 %v4897, %v4969
      %v4971 = vpop.f32.mrb[0].mxu0
      %v4972 = vpop.f32.mrb[0].mxu0
      %v4973 = vadd.f32 %v4900, %v4972
      %v4974 = vpop.f32.mrb[0].mxu0
      %4975 = vmatprep.mubr.bf16.mxu0 %v4091
      %4976 = vmatmul.mubr.bf16.gmra.mrb[0].mxu0 %v4064
      %v4977 = vpop.f32.mrb[0].mxu0
      %v4978 = vadd.f32 %v4905, %v4977
      %v4979 = vpop.f32.mrb[0].mxu0
      %v4980 = vpop.f32.mrb[0].mxu0
      %v4981 = vadd.f32 %v4908, %v4980
      %v4982 = vpop.f32.mrb[0].mxu0
      %4983 = vmatprep.mubr.bf16.mxu0 %v4093
      %4984 = vmatmul.mubr.bf16.gmra.mrb[0].mxu0 %v4068
      %v4985 = vpop.f32.mrb[0].mxu0
      %v4986 = vadd.f32 %v4913, %v4985
      %v4987 = vpop.f32.mrb[0].mxu0
      %v4988 = vpop.f32.mrb[0].mxu0
      %v4989 = vadd.f32 %v4916, %v4988
      %v4990 = vpop.f32.mrb[0].mxu0
      %4991 = vmatprep.mubr.bf16.mxu0 %v4095
      %4992 = vmatmul.mubr.bf16.gmra.mrb[0].mxu0 %v4077
      %v4993 = vpop.f32.mrb[0].mxu0
      %v4994 = vadd.f32 %v4921, %v4993
      %v4995 = vpop.f32.mrb[0].mxu0
      %v4996 = vpop.f32.mrb[0].mxu0
      %v4997 = vadd.f32 %v4924, %v4996
      %v4998 = vpop.f32.mrb[0].mxu0
      %4999 = vdwg.mxu0
      %5000 = vmatprep.subr.bf16.mxu0 0
      %5001 = vmatpush1.bf16.msra.mxu0 %v4685
      %5002 = vmatprep.subr.bf16.mxu0 0
      %5003 = vmatpush1.bf16.msra.mxu0 %v4686
      %5004 = vmatprep.subr.bf16.mxu0 0
      %5005 = vmatpush1.bf16.msra.mxu0 %v4687
      %5006 = vmatprep.subr.bf16.mxu0 0
      %5007 = vmatpush1.bf16.msra.mxu0 %v4688
      %5008 = vmatprep.subr.bf16.mxu0 0
      %5009 = vmatpush1.bf16.msra.mxu0 %v4689
      %5010 = vmatprep.subr.bf16.mxu0 0
      %5011 = vmatpush1.bf16.msra.mxu0 %v4690
      %5012 = vmatprep.subr.bf16.mxu0 0
      %5013 = vmatpush1.bf16.msra.mxu0 %v4691
      %5014 = vmatprep.subr.bf16.mxu0 0
      %5015 = vmatpush1.bf16.msra.mxu0 %v4692
      %5016 = vmatprep.subr.bf16.mxu0 0
      %5017 = vmatpush1.bf16.msra.mxu0 %v4693
      %5018 = vmatprep.subr.bf16.mxu0 0
      %5019 = vmatpush1.bf16.msra.mxu0 %v4694
      %5020 = vmatprep.subr.bf16.mxu0 0
      %5021 = vmatpush1.bf16.msra.mxu0 %v4695
      %5022 = vmatprep.subr.bf16.mxu0 0
      %5023 = vmatpush1.bf16.msra.mxu0 %v4696
      %5024 = vmatprep.subr.bf16.mxu0 0
      %5025 = vmatpush1.bf16.msra.mxu0 %v4697
      %5026 = vmatprep.subr.bf16.mxu0 0
      %5027 = vmatpush1.bf16.msra.mxu0 %v4698
      %5028 = vmatprep.subr.bf16.mxu0 0
      %5029 = vmatpush1.bf16.msra.mxu0 %v4699
      %5030 = vmatprep.subr.bf16.mxu0 0
      %5031 = vmatpush1.bf16.msra.mxu0 %v4700
      %5032 = vmatprep.mubr.bf16.mxu0 %v4139
      %5033 = vmatmul.mubr.bf16.gmra.mrb[0].mxu0 %v4109
      %v5034 = vpop.f32.mrb[0].mxu0
      %v5035 = vadd.f32 %v4962, %v5034
      %v5036 = vpop.f32.mrb[0].mxu0
      %v5037 = vpop.f32.mrb[0].mxu0
      %v5038 = vadd.f32 %v4965, %v5037
      %v5039 = vpop.f32.mrb[0].mxu0
      %5040 = vmatprep.mubr.bf16.mxu0 %v4148
      %5041 = vmatmul.mubr.bf16.gmra.mrb[0].mxu0 %v4111
      %v5042 = vpop.f32.mrb[0].mxu0
      %v5043 = vadd.f32 %v4970, %v5042
      %v5044 = vpop.f32.mrb[0].mxu0
      %v5045 = vpop.f32.mrb[0].mxu0
      %v5046 = vadd.f32 %v4973, %v5045
      %v5047 = vpop.f32.mrb[0].mxu0
      %5048 = vmatprep.mubr.bf16.mxu0 %v4157
      %5049 = vmatmul.mubr.bf16.gmra.mrb[0].mxu0 %v4113
      %v5050 = vpop.f32.mrb[0].mxu0
      %v5051 = vadd.f32 %v4978, %v5050
      %v5052 = vpop.f32.mrb[0].mxu0
      %v5053 = vpop.f32.mrb[0].mxu0
      %v5054 = vadd.f32 %v4981, %v5053
      %v5055 = vpop.f32.mrb[0].mxu0
      %5056 = vmatprep.mubr.bf16.mxu0 %v4166
      %5057 = vmatmul.mubr.bf16.gmra.mrb[0].mxu0 %v4115
      %v5058 = vpop.f32.mrb[0].mxu0
      %v5059 = vadd.f32 %v4986, %v5058
      %v5060 = vpop.f32.mrb[0].mxu0
      %v5061 = vpop.f32.mrb[0].mxu0
      %v5062 = vadd.f32 %v4989, %v5061
      %v5063 = vpop.f32.mrb[0].mxu0
      %5064 = vmatprep.mubr.bf16.mxu0 %v4175
      %5065 = vmatmul.mubr.bf16.gmra.mrb[0].mxu0 %v4117
      %v5066 = vpop.f32.mrb[0].mxu0
      %v5067 = vadd.f32 %v4994, %v5066
      %v5068 = vpop.f32.mrb[0].mxu0
      %v5069 = vpop.f32.mrb[0].mxu0
      %v5070 = vadd.f32 %v4997, %v5069
      %v5071 = vpop.f32.mrb[0].mxu0
      %5072 = vdwg.mxu0
      %5073 = vmatprep.subr.bf16.mxu0 0
      %5074 = vmatpush1.bf16.msra.mxu0 %v4701
      %5075 = vmatprep.subr.bf16.mxu0 0
      %5076 = vmatpush1.bf16.msra.mxu0 %v4702
      %5077 = vmatprep.subr.bf16.mxu0 0
      %5078 = vmatpush1.bf16.msra.mxu0 %v4703
      %5079 = vmatprep.subr.bf16.mxu0 0
      %5080 = vmatpush1.bf16.msra.mxu0 %v4704
      %5081 = vmatprep.subr.bf16.mxu0 0
      %5082 = vmatpush1.bf16.msra.mxu0 %v4705
      %5083 = vmatprep.subr.bf16.mxu0 0
      %5084 = vmatpush1.bf16.msra.mxu0 %v4706
      %5085 = vmatprep.subr.bf16.mxu0 0
      %5086 = vmatpush1.bf16.msra.mxu0 %v4707
      %5087 = vmatprep.subr.bf16.mxu0 0
      %5088 = vmatpush1.bf16.msra.mxu0 %v4708
      %5089 = vmatprep.subr.bf16.mxu0 0
      %5090 = vmatpush1.bf16.msra.mxu0 0
      %5091 = vmatprep.subr.bf16.mxu0 0
      %5092 = vmatpush1.bf16.msra.mxu0 0
      %5093 = vmatprep.subr.bf16.mxu0 0
      %5094 = vmatpush1.bf16.msra.mxu0 0
      %5095 = vmatprep.subr.bf16.mxu0 0
      %5096 = vmatpush1.bf16.msra.mxu0 0
      %5097 = vmatprep.subr.bf16.mxu0 0
      %5098 = vmatpush1.bf16.msra.mxu0 0
      %5099 = vmatprep.subr.bf16.mxu0 0
      %5100 = vmatpush1.bf16.msra.mxu0 0
      %5101 = vmatprep.subr.bf16.mxu0 0
      %5102 = vmatpush1.bf16.msra.mxu0 0
      %5103 = vmatprep.subr.bf16.mxu0 0
      %5104 = vmatpush1.bf16.msra.mxu0 0
      %5105 = vmatprep.mubr.bf16.mxu0 0
      %5106 = vmatmul.mubr.bf16.gmra.mrb[0].mxu0 %v4185
      %v5107 = vpop.f32.mrb[0].mxu0
      %v5108 = vadd.f32 %v5035, %v5107
      %v5109 = vpop.f32.mrb[0].mxu0
      %v5110 = vpop.f32.mrb[0].mxu0
      %v5111 = vadd.f32 %v5038, %v5110
      %v5112 = vpop.f32.mrb[0].mxu0
      %5113 = vmatprep.mubr.bf16.mxu0 0
      %5114 = vmatmul.mubr.bf16.gmra.mrb[0].mxu0 %v4187
      %v5115 = vpop.f32.mrb[0].mxu0
      %v5116 = vadd.f32 %v5043, %v5115
      %v5117 = vpop.f32.mrb[0].mxu0
      %v5118 = vpop.f32.mrb[0].mxu0
      %v5119 = vadd.f32 %v5046, %v5118
      %v5120 = vpop.f32.mrb[0].mxu0
      %5121 = vmatprep.mubr.bf16.mxu0 0
      %5122 = vmatmul.mubr.bf16.gmra.mrb[0].mxu0 %v4189
      %v5123 = vpop.f32.mrb[0].mxu0
      %v5124 = vadd.f32 %v5051, %v5123
      %v5125 = vpop.f32.mrb[0].mxu0
      %v5126 = vpop.f32.mrb[0].mxu0
      %v5127 = vadd.f32 %v5054, %v5126
      %v5128 = vpop.f32.mrb[0].mxu0
      %5129 = vmatprep.mubr.bf16.mxu0 0
      %5130 = vmatmul.mubr.bf16.gmra.mrb[0].mxu0 %v4191
      %v5131 = vpop.f32.mrb[0].mxu0
      %v5132 = vadd.f32 %v5059, %v5131
      %v5133 = vpop.f32.mrb[0].mxu0
      %v5134 = vpop.f32.mrb[0].mxu0
      %v5135 = vadd.f32 %v5062, %v5134
      %v5136 = vpop.f32.mrb[0].mxu0
      %5137 = vmatprep.mubr.bf16.mxu0 0
      %5138 = vmatmul.mubr.bf16.gmra.mrb[0].mxu0 %v4193
      %v5139 = vpop.f32.mrb[0].mxu0
      %v5140 = vadd.f32 %v5067, %v5139
      %v5141 = vpop.f32.mrb[0].mxu0
      %v5142 = vpop.f32.mrb[0].mxu0
      %v5143 = vadd.f32 %v5070, %v5142
      %v5144 = vpop.f32.mrb[0].mxu0
      %5145 = vdwg.mxu0
      %v5146 = vmax.f32 %v5108, 0.0
      %v5147 = vmax.f32 %v5111, 0.0
      %v5148 = vmax.f32 %v5116, 0.0
      %v5149 = vmax.f32 %v5119, 0.0
      %v5150 = vmax.f32 %v5124, 0.0
      %v5151 = vmax.f32 %v5127, 0.0
      %v5152 = vmax.f32 %v5132, 0.0
      %v5153 = vmax.f32 %v5135, 0.0
      %v5154 = vmax.f32 %v5140, 0.0
      %v5155 = vmax.f32 %v5143, 0.0
      %v5156 = vsel %vm2298, %v5146, 0.0
      %v5157 = vsel %vm2299, %v5147, 0.0
      %v5158 = vsel %vm2300, %v5148, 0.0
      %v5159 = vsel %vm2301, %v5149, 0.0
      %v5160 = vsel %vm2302, %v5150, 0.0
      %v5161 = vsel %vm2303, %v5151, 0.0
      %v5162 = vsel %vm2304, %v5152, 0.0
      %v5163 = vsel %vm2305, %v5153, 0.0
      %v5164 = vsel %vm2306, %v5154, 0.0
      %v5165 = vsel %vm2307, %v5155, 0.0
      %v5166 = vpack.c.bf16 %v5157, %v5156
      %v5167 = vpack.c.bf16 %v5159, %v5158
      %v5168 = vpack.c.bf16 %v5161, %v5160
      %v5169 = vpack.c.bf16 %v5163, %v5162
      %v5170 = vpack.c.bf16 %v5165, %v5164
      %v5172 = vshrl.u32 %v5166, 16
      %v5174 = vrot.slane %v5172, 2
      %v5175 = vshll.u32 %v5166, 16
      %v5177 = vrot.slane %v5175, 3
      %v5178 = vor.u32 %v5174, %v5177
      %v5180 = vshrl.u32 %v5167, 16
      %v5182 = vrot.slane %v5180, 2
      %v5183 = vshll.u32 %v5167, 16
      %v5185 = vrot.slane %v5183, 3
      %v5186 = vor.u32 %v5182, %v5185
      %v5187 = vsel %vm173, %v5178, %v5186
      %v5189 = vshrl.u32 %v5168, 16
      %v5191 = vrot.slane %v5189, 2
      %v5192 = vshll.u32 %v5168, 16
      %v5194 = vrot.slane %v5192, 3
      %v5195 = vor.u32 %v5191, %v5194
      %v5196 = vsel %vm173, %v5186, %v5195
      %v5198 = vshrl.u32 %v5169, 16
      %v5200 = vrot.slane %v5198, 2
      %v5201 = vshll.u32 %v5169, 16
      %v5203 = vrot.slane %v5201, 3
      %v5204 = vor.u32 %v5200, %v5203
      %v5205 = vsel %vm173, %v5195, %v5204
      %v5207 = vshrl.u32 %v5170, 16
      %v5209 = vrot.slane %v5207, 2
      %v5210 = vshll.u32 %v5170, 16
      %v5212 = vrot.slane %v5210, 3
      %v5213 = vor.u32 %v5209, %v5212
      %v5214 = vsel %vm173, %v5204, %v5213
      %v5221 = vld [vmem:[#allocation3] sm:$0xe0]
      %v5222 = vsel %vm180, %v5178, %v5221
      %5223 = vst [vmem:[#allocation3] sm:$0xe0] %v5222
      %5224 = vst [vmem:[#allocation3 + $0x8] sm:$0xff] %v5187
      %5225 = vst [vmem:[#allocation3 + $0x10] sm:$0xff] %v5196
      %5226 = vst [vmem:[#allocation3 + $0x18] sm:$0xff] %v5205
      %5227 = vst [vmem:[#allocation3 + $0x20] sm:$0xff] %v5214
      %v5228 = vld [vmem:[#allocation3 + $0x28] sm:$0x3f]
      %v5229 = vsel %vm174, %v5213, %v5228
      %5230 = vst [vmem:[#allocation3 + $0x28] sm:$0x3f] %v5229
      %v5231 = vld [vmem:[#allocation3] sm:$0xff]
      %v5232 = vld [vmem:[#allocation3 + $0x8] sm:$0xff]
      %v5233 = vld [vmem:[#allocation3 + $0x10] sm:$0xff]
      %v5234 = vld [vmem:[#allocation3 + $0x18] sm:$0xff]
      %v5235 = vld [vmem:[#allocation3 + $0x20] sm:$0xff]
      %v5236 = vld [vmem:[#allocation3 + $0x28] sm:$0x1]
      %v5237 = vld [vmem:[#allocation3] sm:$0xfe]
      %v5238 = vld [vmem:[#allocation3] sm:$0xe0]
      %v5239 = vld [vmem:[#allocation3 + $0x28] sm:$0x1f]
      %v5240 = vld [vmem:[#allocation3 + $0x28] sm:$0x3f]
      %v5241 = vld [vmem:[#allocation3] sm:$0xc0]
      %v5242 = vld [vmem:[#allocation3 + $0x8] sm:$0xfc]
      %v5243 = vld [vmem:[#allocation3 + $0x10] sm:$0xff]
      %v5244 = vld [vmem:[#allocation3 + $0x18] sm:$0xff]
      %v5245 = vld [vmem:[#allocation3 + $0x20] sm:$0xff]
      %v5246 = vld [vmem:[#allocation3 + $0x28] sm:$0xff]
      %v5247 = vld [vmem:[#allocation3 + $0x30] sm:$0x3]
      %v5248 = vld [vmem:[#allocation3 + $0x30] sm:$0x7]
      %v5249 = vld [vmem:[#allocation3 + $0x8] sm:$0xf8]
      %v5251 = vshrl.u32 %v5231, 16
      %v5253 = vshll.u32 %v5231, 16
      %v5255 = vrot.slane %v5253, 1
      %v5256 = vor.u32 %v5251, %v5255
      %v5258 = vshll.u32 %v5232, 16
      %v5260 = vrot.slane %v5258, 1
      %v5261 = vsel %vm1083, %v5256, %v5260
      %v5262 = vshrl.u32 %v5232, 16
      %v5264 = vor.u32 %v5262, %v5260
      %v5266 = vshll.u32 %v5233, 16
      %v5268 = vrot.slane %v5266, 1
      %v5269 = vsel %vm1083, %v5264, %v5268
      %v5270 = vshrl.u32 %v5233, 16
      %v5272 = vor.u32 %v5270, %v5268
      %v5274 = vshll.u32 %v5234, 16
      %v5276 = vrot.slane %v5274, 1
      %v5277 = vsel %vm1083, %v5272, %v5276
      %v5278 = vshrl.u32 %v5234, 16
      %v5280 = vor.u32 %v5278, %v5276
      %v5282 = vshll.u32 %v5235, 16
      %v5284 = vrot.slane %v5282, 1
      %v5285 = vsel %vm1083, %v5280, %v5284
      %v5286 = vshrl.u32 %v5235, 16
      %v5288 = vor.u32 %v5286, %v5284
      %v5290 = vshll.u32 %v5236, 16
      %v5292 = vrot.slane %v5290, 1
      %v5293 = vsel %vm1083, %v5288, %v5292
      %v5305 = vrot.slane %v5237, 1
      %v5306 = vrot.slane %v5232, 1
      %v5307 = vsel %vm1139, %v5305, %v5306
      %v5308 = vrot.slane %v5233, 1
      %v5309 = vsel %vm1139, %v5306, %v5308
      %v5310 = vrot.slane %v5234, 1
      %v5311 = vsel %vm1139, %v5308, %v5310
      %v5312 = vrot.slane %v5235, 1
      %v5313 = vsel %vm1139, %v5310, %v5312
      %v5314 = vrot.slane %v5236, 1
      %v5315 = vsel %vm1139, %v5312, %v5314
      %v5323 = vrot.slane %v5238, 5
      %v5324 = vrot.slane %v5232, 5
      %v5325 = vsel %vm1158, %v5323, %v5324
      %v5326 = vrot.slane %v5233, 5
      %v5327 = vsel %vm1158, %v5324, %v5326
      %v5328 = vrot.slane %v5234, 5
      %v5329 = vsel %vm1158, %v5326, %v5328
      %v5330 = vrot.slane %v5235, 5
      %v5331 = vsel %vm1158, %v5328, %v5330
      %v5332 = vrot.slane %v5239, 5
      %v5333 = vsel %vm1158, %v5330, %v5332
      %v5340 = vshrl.u32 %v5238, 16
      %v5342 = vrot.slane %v5340, 5
      %v5343 = vshll.u32 %v5238, 16
      %v5345 = vrot.slane %v5343, 6
      %v5346 = vor.u32 %v5342, %v5345
      %v5347 = vrot.slane %v5262, 5
      %v5348 = vrot.slane %v5258, 6
      %v5349 = vor.u32 %v5347, %v5348
      %v5350 = vsel %vm1175, %v5346, %v5349
      %v5351 = vrot.slane %v5270, 5
      %v5352 = vrot.slane %v5266, 6
      %v5353 = vor.u32 %v5351, %v5352
      %v5354 = vsel %vm1175, %v5349, %v5353
      %v5355 = vrot.slane %v5278, 5
      %v5356 = vrot.slane %v5274, 6
      %v5357 = vor.u32 %v5355, %v5356
      %v5358 = vsel %vm1175, %v5353, %v5357
      %v5359 = vrot.slane %v5286, 5
      %v5360 = vrot.slane %v5282, 6
      %v5361 = vor.u32 %v5359, %v5360
      %v5362 = vsel %vm1175, %v5357, %v5361
      %v5364 = vshrl.u32 %v5240, 16
      %v5366 = vrot.slane %v5364, 5
      %v5367 = vshll.u32 %v5240, 16
      %v5369 = vrot.slane %v5367, 6
      %v5370 = vor.u32 %v5366, %v5369
      %v5371 = vsel %vm1175, %v5361, %v5370
      %v5379 = vrot.slane %v5241, 6
      %v5380 = vrot.slane %v5232, 6
      %v5381 = vsel %vm1216, %v5379, %v5380
      %v5382 = vrot.slane %v5233, 6
      %v5383 = vsel %vm1216, %v5380, %v5382
      %v5384 = vrot.slane %v5234, 6
      %v5385 = vsel %vm1216, %v5382, %v5384
      %v5386 = vrot.slane %v5235, 6
      %v5387 = vsel %vm1216, %v5384, %v5386
      %v5388 = vrot.slane %v5240, 6
      %v5389 = vsel %vm1216, %v5386, %v5388
      %v5401 = vrot.slane %v5242, 2
      %v5402 = vrot.slane %v5243, 2
      %v5403 = vsel %vm172, %v5401, %v5402
      %v5404 = vrot.slane %v5244, 2
      %v5405 = vsel %vm172, %v5402, %v5404
      %v5406 = vrot.slane %v5245, 2
      %v5407 = vsel %vm172, %v5404, %v5406
      %v5408 = vrot.slane %v5246, 2
      %v5409 = vsel %vm172, %v5406, %v5408
      %v5410 = vrot.slane %v5247, 2
      %v5411 = vsel %vm172, %v5408, %v5410
      %v5418 = vshrl.u32 %v5242, 16
      %v5420 = vrot.slane %v5418, 2
      %v5421 = vshll.u32 %v5242, 16
      %v5423 = vrot.slane %v5421, 3
      %v5424 = vor.u32 %v5420, %v5423
      %v5426 = vshrl.u32 %v5243, 16
      %v5428 = vrot.slane %v5426, 2
      %v5429 = vshll.u32 %v5243, 16
      %v5431 = vrot.slane %v5429, 3
      %v5432 = vor.u32 %v5428, %v5431
      %v5433 = vsel %vm173, %v5424, %v5432
      %v5435 = vshrl.u32 %v5244, 16
      %v5437 = vrot.slane %v5435, 2
      %v5438 = vshll.u32 %v5244, 16
      %v5440 = vrot.slane %v5438, 3
      %v5441 = vor.u32 %v5437, %v5440
      %v5442 = vsel %vm173, %v5432, %v5441
      %v5444 = vshrl.u32 %v5245, 16
      %v5446 = vrot.slane %v5444, 2
      %v5447 = vshll.u32 %v5245, 16
      %v5449 = vrot.slane %v5447, 3
      %v5450 = vor.u32 %v5446, %v5449
      %v5451 = vsel %vm173, %v5441, %v5450
      %v5453 = vshrl.u32 %v5246, 16
      %v5455 = vrot.slane %v5453, 2
      %v5456 = vshll.u32 %v5246, 16
      %v5458 = vrot.slane %v5456, 3
      %v5459 = vor.u32 %v5455, %v5458
      %v5460 = vsel %vm173, %v5450, %v5459
      %v5462 = vshrl.u32 %v5248, 16
      %v5464 = vrot.slane %v5462, 2
      %v5465 = vshll.u32 %v5248, 16
      %v5467 = vrot.slane %v5465, 3
      %v5468 = vor.u32 %v5464, %v5467
      %v5469 = vsel %vm173, %v5459, %v5468
      %v5477 = vrot.slane %v5249, 3
      %v5478 = vrot.slane %v5243, 3
      %v5479 = vsel %vm1315, %v5477, %v5478
      %v5480 = vrot.slane %v5244, 3
      %v5481 = vsel %vm1315, %v5478, %v5480
      %v5482 = vrot.slane %v5245, 3
      %v5483 = vsel %vm1315, %v5480, %v5482
      %v5484 = vrot.slane %v5246, 3
      %v5485 = vsel %vm1315, %v5482, %v5484
      %v5486 = vrot.slane %v5248, 3
      %v5487 = vsel %vm1315, %v5484, %v5486
      %s5493 = scalar_lea.vmem %s1, 1728
      %v5494 = vld [vmem:[%s5493] sm:$0xf]
      %v5495 = vld [vmem:[%s5493 + $0x4] sm:$0xf]
      %v5496 = vld [vmem:[%s5493 + $0x8] sm:$0xf]
      %v5497 = vld [vmem:[%s5493 + $0xc] sm:$0xf]
      %v5498 = vld [vmem:[%s5493 + $0x10] sm:$0xf]
      %v5499 = vld [vmem:[%s5493 + $0x14] sm:$0xf]
      %v5500 = vld [vmem:[%s5493 + $0x18] sm:$0xf]
      %v5501 = vld [vmem:[%s5493 + $0x1c] sm:$0xf]
      %v5502 = vld [vmem:[%s5493 + $0x20] sm:$0xf]
      %v5503 = vld [vmem:[%s5493 + $0x24] sm:$0xf]
      %v5504 = vld [vmem:[%s5493 + $0x28] sm:$0xf]
      %v5505 = vld [vmem:[%s5493 + $0x2c] sm:$0xf]
      %v5506 = vld [vmem:[%s5493 + $0x30] sm:$0xf]
      %v5507 = vld [vmem:[%s5493 + $0x34] sm:$0xf]
      %v5508 = vld [vmem:[%s5493 + $0x38] sm:$0xf]
      %v5509 = vld [vmem:[%s5493 + $0x3c] sm:$0xf]
      %v5510 = vld [vmem:[%s5493 + $0x40] sm:$0xf]
      %v5511 = vld [vmem:[%s5493 + $0x44] sm:$0xf]
      %v5512 = vld [vmem:[%s5493 + $0x48] sm:$0xf]
      %v5513 = vld [vmem:[%s5493 + $0x4c] sm:$0xf]
      %v5514 = vld [vmem:[%s5493 + $0x50] sm:$0xf]
      %v5515 = vld [vmem:[%s5493 + $0x54] sm:$0xf]
      %v5516 = vld [vmem:[%s5493 + $0x58] sm:$0xf]
      %v5517 = vld [vmem:[%s5493 + $0x5c] sm:$0xf]
      %v5518 = vld [vmem:[%s5493 + $0x60] sm:$0xf]
      %v5519 = vld [vmem:[%s5493 + $0x64] sm:$0xf]
      %v5520 = vld [vmem:[%s5493 + $0x68] sm:$0xf]
      %v5521 = vld [vmem:[%s5493 + $0x6c] sm:$0xf]
      %v5522 = vld [vmem:[%s5493 + $0x70] sm:$0xf]
      %v5523 = vld [vmem:[%s5493 + $0x74] sm:$0xf]
      %v5524 = vld [vmem:[%s5493 + $0x78] sm:$0xf]
      %v5525 = vld [vmem:[%s5493 + $0x7c] sm:$0xf]
      %v5526 = vld [vmem:[%s5493 + $0x80] sm:$0xf]
      %v5527 = vld [vmem:[%s5493 + $0x84] sm:$0xf]
      %v5528 = vld [vmem:[%s5493 + $0x88] sm:$0xf]
      %v5529 = vld [vmem:[%s5493 + $0x8c] sm:$0xf]
      %v5530 = vld [vmem:[%s5493 + $0x90] sm:$0xf]
      %v5531 = vld [vmem:[%s5493 + $0x94] sm:$0xf]
      %v5532 = vld [vmem:[%s5493 + $0x98] sm:$0xf]
      %v5533 = vld [vmem:[%s5493 + $0x9c] sm:$0xf]
      %v5534 = vld [vmem:[%s5493 + $0xa0] sm:$0xf]
      %v5535 = vld [vmem:[%s5493 + $0xa4] sm:$0xf]
      %v5536 = vld [vmem:[%s5493 + $0xa8] sm:$0xf]
      %v5537 = vld [vmem:[%s5493 + $0xac] sm:$0xf]
      %v5538 = vld [vmem:[%s5493 + $0xb0] sm:$0xf]
      %v5539 = vld [vmem:[%s5493 + $0xb4] sm:$0xf]
      %v5540 = vld [vmem:[%s5493 + $0xb8] sm:$0xf]
      %v5541 = vld [vmem:[%s5493 + $0xbc] sm:$0xf]
      %v5542 = vld [vmem:[%s5493 + $0xc0] sm:$0xf]
      %v5543 = vld [vmem:[%s5493 + $0xc4] sm:$0xf]
      %v5544 = vld [vmem:[%s5493 + $0xc8] sm:$0xf]
      %v5545 = vld [vmem:[%s5493 + $0xcc] sm:$0xf]
      %v5546 = vld [vmem:[%s5493 + $0xd0] sm:$0xf]
      %v5547 = vld [vmem:[%s5493 + $0xd4] sm:$0xf]
      %v5548 = vld [vmem:[%s5493 + $0xd8] sm:$0xf]
      %v5549 = vld [vmem:[%s5493 + $0xdc] sm:$0xf]
      %v5550 = vld [vmem:[%s5493 + $0xe0] sm:$0xf]
      %v5551 = vld [vmem:[%s5493 + $0xe4] sm:$0xf]
      %v5552 = vld [vmem:[%s5493 + $0xe8] sm:$0xf]
      %v5553 = vld [vmem:[%s5493 + $0xec] sm:$0xf]
      %v5554 = vld [vmem:[%s5493 + $0xf0] sm:$0xf]
      %v5555 = vld [vmem:[%s5493 + $0xf4] sm:$0xf]
      %v5556 = vld [vmem:[%s5493 + $0xf8] sm:$0xf]
      %v5557 = vld [vmem:[%s5493 + $0xfc] sm:$0xf]
      %v5558 = vld [vmem:[%s5493 + $0x100] sm:$0xf]
      %v5559 = vld [vmem:[%s5493 + $0x104] sm:$0xf]
      %v5560 = vld [vmem:[%s5493 + $0x108] sm:$0xf]
      %v5561 = vld [vmem:[%s5493 + $0x10c] sm:$0xf]
      %v5562 = vld [vmem:[%s5493 + $0x110] sm:$0xf]
      %v5563 = vld [vmem:[%s5493 + $0x114] sm:$0xf]
      %v5564 = vld [vmem:[%s5493 + $0x118] sm:$0xf]
      %v5565 = vld [vmem:[%s5493 + $0x11c] sm:$0xf]
      %v5566 = vld [vmem:[%s5493 + $0x120] sm:$0xf]
      %v5567 = vld [vmem:[%s5493 + $0x124] sm:$0xf]
      %v5568 = vld [vmem:[%s5493 + $0x128] sm:$0xf]
      %v5569 = vld [vmem:[%s5493 + $0x12c] sm:$0xf]
      %v5570 = vld [vmem:[%s5493 + $0x130] sm:$0xf]
      %v5571 = vld [vmem:[%s5493 + $0x134] sm:$0xf]
      %v5572 = vld [vmem:[%s5493 + $0x138] sm:$0xf]
      %v5573 = vld [vmem:[%s5493 + $0x13c] sm:$0xf]
      %v5574 = vld [vmem:[%s5493 + $0x140] sm:$0xf]
      %v5575 = vld [vmem:[%s5493 + $0x144] sm:$0xf]
      %v5576 = vld [vmem:[%s5493 + $0x148] sm:$0xf]
      %v5577 = vld [vmem:[%s5493 + $0x14c] sm:$0xf]
      %v5578 = vld [vmem:[%s5493 + $0x150] sm:$0xf]
      %v5579 = vld [vmem:[%s5493 + $0x154] sm:$0xf]
      %v5580 = vld [vmem:[%s5493 + $0x158] sm:$0xf]
      %v5581 = vld [vmem:[%s5493 + $0x15c] sm:$0xf]
      %v5582 = vld [vmem:[%s5493 + $0x160] sm:$0xf]
      %v5583 = vld [vmem:[%s5493 + $0x164] sm:$0xf]
      %v5584 = vld [vmem:[%s5493 + $0x168] sm:$0xf]
      %v5585 = vld [vmem:[%s5493 + $0x16c] sm:$0xf]
      %v5586 = vld [vmem:[%s5493 + $0x170] sm:$0xf]
      %v5587 = vld [vmem:[%s5493 + $0x174] sm:$0xf]
      %v5588 = vld [vmem:[%s5493 + $0x178] sm:$0xf]
      %v5589 = vld [vmem:[%s5493 + $0x17c] sm:$0xf]
      %v5590 = vld [vmem:[%s5493 + $0x180] sm:$0xf]
      %v5591 = vld [vmem:[%s5493 + $0x184] sm:$0xf]
      %v5592 = vld [vmem:[%s5493 + $0x188] sm:$0xf]
      %v5593 = vld [vmem:[%s5493 + $0x18c] sm:$0xf]
      %v5594 = vld [vmem:[%s5493 + $0x190] sm:$0xf]
      %v5595 = vld [vmem:[%s5493 + $0x194] sm:$0xf]
      %v5596 = vld [vmem:[%s5493 + $0x198] sm:$0xf]
      %v5597 = vld [vmem:[%s5493 + $0x19c] sm:$0xf]
      %v5598 = vld [vmem:[%s5493 + $0x1a0] sm:$0xf]
      %v5599 = vld [vmem:[%s5493 + $0x1a4] sm:$0xf]
      %v5600 = vld [vmem:[%s5493 + $0x1a8] sm:$0xf]
      %v5601 = vld [vmem:[%s5493 + $0x1ac] sm:$0xf]
      %v5602 = vld [vmem:[%s5493 + $0x1b0] sm:$0xf]
      %v5603 = vld [vmem:[%s5493 + $0x1b4] sm:$0xf]
      %v5604 = vld [vmem:[%s5493 + $0x1b8] sm:$0xf]
      %v5605 = vld [vmem:[%s5493 + $0x1bc] sm:$0xf]
      %v5606 = vld [vmem:[%s5493 + $0x1c0] sm:$0xf]
      %v5607 = vld [vmem:[%s5493 + $0x1c4] sm:$0xf]
      %v5608 = vld [vmem:[%s5493 + $0x1c8] sm:$0xf]
      %v5609 = vld [vmem:[%s5493 + $0x1cc] sm:$0xf]
      %v5610 = vld [vmem:[%s5493 + $0x1d0] sm:$0xf]
      %v5611 = vld [vmem:[%s5493 + $0x1d4] sm:$0xf]
      %v5612 = vld [vmem:[%s5493 + $0x1d8] sm:$0xf]
      %v5613 = vld [vmem:[%s5493 + $0x1dc] sm:$0xf]
      %v5614 = vld [vmem:[%s5493 + $0x1e0] sm:$0xf]
      %v5615 = vld [vmem:[%s5493 + $0x1e4] sm:$0xf]
      %v5616 = vld [vmem:[%s5493 + $0x1e8] sm:$0xf]
      %v5617 = vld [vmem:[%s5493 + $0x1ec] sm:$0xf]
      %v5618 = vld [vmem:[%s5493 + $0x1f0] sm:$0xf]
      %v5619 = vld [vmem:[%s5493 + $0x1f4] sm:$0xf]
      %v5620 = vld [vmem:[%s5493 + $0x1f8] sm:$0xf]
      %v5621 = vld [vmem:[%s5493 + $0x1fc] sm:$0xf]
      %v5622 = vld [vmem:[%s5493 + $0x200] sm:$0xf]
      %v5623 = vld [vmem:[%s5493 + $0x204] sm:$0xf]
      %v5624 = vld [vmem:[%s5493 + $0x208] sm:$0xf]
      %v5625 = vld [vmem:[%s5493 + $0x20c] sm:$0xf]
      %v5626 = vld [vmem:[%s5493 + $0x210] sm:$0xf]
      %v5627 = vld [vmem:[%s5493 + $0x214] sm:$0xf]
      %v5628 = vld [vmem:[%s5493 + $0x218] sm:$0xf]
      %v5629 = vld [vmem:[%s5493 + $0x21c] sm:$0xf]
      %v5630 = vld [vmem:[%s5493 + $0x220] sm:$0xf]
      %v5631 = vld [vmem:[%s5493 + $0x224] sm:$0xf]
      %v5632 = vld [vmem:[%s5493 + $0x228] sm:$0xf]
      %v5633 = vld [vmem:[%s5493 + $0x22c] sm:$0xf]
      %v5634 = vld [vmem:[%s5493 + $0x230] sm:$0xf]
      %v5635 = vld [vmem:[%s5493 + $0x234] sm:$0xf]
      %v5636 = vld [vmem:[%s5493 + $0x238] sm:$0xf]
      %v5637 = vld [vmem:[%s5493 + $0x23c] sm:$0xf]
      %v5638 = vld [vmem:[%s2 + $0x3] sm:$0x1]
      %v5639 = vlaneseq
      %v5640 = vshrl.u32 %v5639, 7
      %v5641 = vsub.s32 0, %v5640
      %v5642 = vrot.slane %v5638, %v5641
      %v5787 = vunpack.c.l.b16 %v5494
      %v5788 = vunpack.c.l.b16 %v5495
      %v5789 = vunpack.c.l.b16 %v5496
      %v5790 = vunpack.c.l.b16 %v5497
      %v5791 = vunpack.c.l.b16 %v5498
      %v5792 = vunpack.c.l.b16 %v5499
      %v5793 = vunpack.c.l.b16 %v5500
      %v5794 = vunpack.c.l.b16 %v5501
      %v5795 = vunpack.c.l.b16 %v5502
      %v5796 = vunpack.c.l.b16 %v5503
      %v5797 = vunpack.c.l.b16 %v5504
      %v5798 = vunpack.c.l.b16 %v5505
      %v5799 = vunpack.c.l.b16 %v5506
      %v5800 = vunpack.c.l.b16 %v5507
      %v5801 = vunpack.c.l.b16 %v5508
      %v5802 = vunpack.c.l.b16 %v5509
      %v5803 = vunpack.c.l.b16 %v5510
      %v5804 = vunpack.c.l.b16 %v5511
      %v5805 = vunpack.c.l.b16 %v5512
      %v5806 = vunpack.c.l.b16 %v5513
      %v5807 = vunpack.c.l.b16 %v5514
      %v5808 = vunpack.c.l.b16 %v5515
      %v5809 = vunpack.c.l.b16 %v5516
      %v5810 = vunpack.c.l.b16 %v5517
      %v5811 = vunpack.c.l.b16 %v5518
      %v5812 = vunpack.c.l.b16 %v5519
      %v5813 = vunpack.c.l.b16 %v5520
      %v5814 = vunpack.c.l.b16 %v5521
      %v5815 = vunpack.c.l.b16 %v5522
      %v5816 = vunpack.c.l.b16 %v5523
      %v5817 = vunpack.c.l.b16 %v5524
      %v5818 = vunpack.c.l.b16 %v5525
      %v5819 = vunpack.c.l.b16 %v5526
      %v5820 = vunpack.c.l.b16 %v5527
      %v5821 = vunpack.c.l.b16 %v5528
      %v5822 = vunpack.c.l.b16 %v5529
      %v5823 = vunpack.c.l.b16 %v5530
      %v5824 = vunpack.c.l.b16 %v5531
      %v5825 = vunpack.c.l.b16 %v5532
      %v5826 = vunpack.c.l.b16 %v5533
      %v5827 = vunpack.c.l.b16 %v5534
      %v5828 = vunpack.c.l.b16 %v5535
      %v5829 = vunpack.c.l.b16 %v5536
      %v5830 = vunpack.c.l.b16 %v5537
      %v5831 = vunpack.c.l.b16 %v5538
      %v5832 = vunpack.c.l.b16 %v5539
      %v5833 = vunpack.c.l.b16 %v5540
      %v5834 = vunpack.c.l.b16 %v5541
      %v5835 = vunpack.c.l.b16 %v5542
      %v5836 = vunpack.c.l.b16 %v5543
      %v5837 = vunpack.c.l.b16 %v5544
      %v5838 = vunpack.c.l.b16 %v5545
      %v5839 = vunpack.c.l.b16 %v5546
      %v5840 = vunpack.c.l.b16 %v5547
      %v5841 = vunpack.c.l.b16 %v5548
      %v5842 = vunpack.c.l.b16 %v5549
      %v5843 = vunpack.c.l.b16 %v5550
      %v5844 = vunpack.c.l.b16 %v5551
      %v5845 = vunpack.c.l.b16 %v5552
      %v5846 = vunpack.c.l.b16 %v5553
      %v5847 = vunpack.c.l.b16 %v5554
      %v5848 = vunpack.c.l.b16 %v5555
      %v5849 = vunpack.c.l.b16 %v5556
      %v5850 = vunpack.c.l.b16 %v5557
      %v5851 = vunpack.c.l.b16 %v5558
      %v5852 = vunpack.c.l.b16 %v5559
      %v5853 = vunpack.c.l.b16 %v5560
      %v5854 = vunpack.c.l.b16 %v5561
      %v5855 = vunpack.c.l.b16 %v5562
      %v5856 = vunpack.c.l.b16 %v5563
      %v5857 = vunpack.c.l.b16 %v5564
      %v5858 = vunpack.c.l.b16 %v5565
      %v5859 = vunpack.c.l.b16 %v5566
      %v5860 = vunpack.c.l.b16 %v5567
      %v5861 = vunpack.c.l.b16 %v5568
      %v5862 = vunpack.c.l.b16 %v5569
      %v5863 = vunpack.c.l.b16 %v5570
      %v5864 = vunpack.c.l.b16 %v5571
      %v5865 = vunpack.c.l.b16 %v5572
      %v5866 = vunpack.c.l.b16 %v5573
      %v5867 = vunpack.c.l.b16 %v5574
      %v5868 = vunpack.c.l.b16 %v5575
      %v5869 = vunpack.c.l.b16 %v5576
      %v5870 = vunpack.c.l.b16 %v5577
      %v5871 = vunpack.c.l.b16 %v5578
      %v5872 = vunpack.c.l.b16 %v5579
      %v5873 = vunpack.c.l.b16 %v5580
      %v5874 = vunpack.c.l.b16 %v5581
      %v5875 = vunpack.c.l.b16 %v5582
      %v5876 = vunpack.c.l.b16 %v5583
      %v5877 = vunpack.c.l.b16 %v5584
      %v5878 = vunpack.c.l.b16 %v5585
      %v5879 = vunpack.c.l.b16 %v5586
      %v5880 = vunpack.c.l.b16 %v5587
      %v5881 = vunpack.c.l.b16 %v5588
      %v5882 = vunpack.c.l.b16 %v5589
      %v5883 = vunpack.c.l.b16 %v5590
      %v5884 = vunpack.c.l.b16 %v5591
      %v5885 = vunpack.c.l.b16 %v5592
      %v5886 = vunpack.c.l.b16 %v5593
      %v5887 = vunpack.c.l.b16 %v5594
      %v5888 = vunpack.c.l.b16 %v5595
      %v5889 = vunpack.c.l.b16 %v5596
      %v5890 = vunpack.c.l.b16 %v5597
      %v5891 = vunpack.c.l.b16 %v5598
      %v5892 = vunpack.c.l.b16 %v5599
      %v5893 = vunpack.c.l.b16 %v5600
      %v5894 = vunpack.c.l.b16 %v5601
      %v5895 = vunpack.c.l.b16 %v5602
      %v5896 = vunpack.c.l.b16 %v5603
      %v5897 = vunpack.c.l.b16 %v5604
      %v5898 = vunpack.c.l.b16 %v5605
      %v5899 = vunpack.c.l.b16 %v5606
      %v5900 = vunpack.c.l.b16 %v5607
      %v5901 = vunpack.c.l.b16 %v5608
      %v5902 = vunpack.c.l.b16 %v5609
      %v5903 = vunpack.c.l.b16 %v5610
      %v5904 = vunpack.c.l.b16 %v5611
      %v5905 = vunpack.c.l.b16 %v5612
      %v5906 = vunpack.c.l.b16 %v5613
      %v5907 = vunpack.c.l.b16 %v5614
      %v5908 = vunpack.c.l.b16 %v5615
      %v5909 = vunpack.c.l.b16 %v5616
      %v5910 = vunpack.c.l.b16 %v5617
      %v5911 = vunpack.c.l.b16 %v5618
      %v5912 = vunpack.c.l.b16 %v5619
      %v5913 = vunpack.c.l.b16 %v5620
      %v5914 = vunpack.c.l.b16 %v5621
      %v5915 = vunpack.c.l.b16 %v5622
      %v5916 = vunpack.c.l.b16 %v5623
      %v5917 = vunpack.c.l.b16 %v5624
      %v5918 = vunpack.c.l.b16 %v5625
      %v5919 = vunpack.c.l.b16 %v5626
      %v5920 = vunpack.c.l.b16 %v5627
      %v5921 = vunpack.c.l.b16 %v5628
      %v5922 = vunpack.c.l.b16 %v5629
      %v5923 = vunpack.c.l.b16 %v5630
      %v5924 = vunpack.c.l.b16 %v5631
      %v5925 = vunpack.c.l.b16 %v5632
      %v5926 = vunpack.c.l.b16 %v5633
      %v5927 = vunpack.c.l.b16 %v5634
      %v5928 = vunpack.c.l.b16 %v5635
      %v5929 = vunpack.c.l.b16 %v5636
      %v5930 = vunpack.c.l.b16 %v5637
      %v5931 = vpack.c.b16 %v5788, %v5787
      %v5932 = vpack.c.b16 %v5790, %v5789
      %v5933 = vpack.c.b16 %v5792, %v5791
      %v5934 = vpack.c.b16 %v5794, %v5793
      %v5935 = vpack.c.b16 %v5796, %v5795
      %v5936 = vpack.c.b16 %v5798, %v5797
      %v5937 = vpack.c.b16 %v5800, %v5799
      %v5938 = vpack.c.b16 %v5802, %v5801
      %v5939 = vpack.c.b16 %v5804, %v5803
      %v5940 = vpack.c.b16 %v5806, %v5805
      %v5941 = vpack.c.b16 %v5808, %v5807
      %v5942 = vpack.c.b16 %v5810, %v5809
      %v5943 = vpack.c.b16 %v5812, %v5811
      %v5944 = vpack.c.b16 %v5814, %v5813
      %v5945 = vpack.c.b16 %v5816, %v5815
      %v5946 = vpack.c.b16 %v5818, %v5817
      %v5947 = vpack.c.b16 %v5820, %v5819
      %v5948 = vpack.c.b16 %v5822, %v5821
      %v5949 = vpack.c.b16 %v5824, %v5823
      %v5950 = vpack.c.b16 %v5826, %v5825
      %v5951 = vpack.c.b16 %v5828, %v5827
      %v5952 = vpack.c.b16 %v5830, %v5829
      %v5953 = vpack.c.b16 %v5832, %v5831
      %v5954 = vpack.c.b16 %v5834, %v5833
      %v5955 = vpack.c.b16 %v5836, %v5835
      %v5956 = vpack.c.b16 %v5838, %v5837
      %v5957 = vpack.c.b16 %v5840, %v5839
      %v5958 = vpack.c.b16 %v5842, %v5841
      %v5959 = vpack.c.b16 %v5844, %v5843
      %v5960 = vpack.c.b16 %v5846, %v5845
      %v5961 = vpack.c.b16 %v5848, %v5847
      %v5962 = vpack.c.b16 %v5850, %v5849
      %v5963 = vpack.c.b16 %v5852, %v5851
      %v5964 = vpack.c.b16 %v5854, %v5853
      %v5965 = vpack.c.b16 %v5856, %v5855
      %v5966 = vpack.c.b16 %v5858, %v5857
      %v5967 = vpack.c.b16 %v5860, %v5859
      %v5968 = vpack.c.b16 %v5862, %v5861
      %v5969 = vpack.c.b16 %v5864, %v5863
      %v5970 = vpack.c.b16 %v5866, %v5865
      %v5971 = vpack.c.b16 %v5868, %v5867
      %v5972 = vpack.c.b16 %v5870, %v5869
      %v5973 = vpack.c.b16 %v5872, %v5871
      %v5974 = vpack.c.b16 %v5874, %v5873
      %v5975 = vpack.c.b16 %v5876, %v5875
      %v5976 = vpack.c.b16 %v5878, %v5877
      %v5977 = vpack.c.b16 %v5880, %v5879
      %v5978 = vpack.c.b16 %v5882, %v5881
      %v5979 = vpack.c.b16 %v5884, %v5883
      %v5980 = vpack.c.b16 %v5886, %v5885
      %v5981 = vpack.c.b16 %v5888, %v5887
      %v5982 = vpack.c.b16 %v5890, %v5889
      %v5983 = vpack.c.b16 %v5892, %v5891
      %v5984 = vpack.c.b16 %v5894, %v5893
      %v5985 = vpack.c.b16 %v5896, %v5895
      %v5986 = vpack.c.b16 %v5898, %v5897
      %v5987 = vpack.c.b16 %v5900, %v5899
      %v5988 = vpack.c.b16 %v5902, %v5901
      %v5989 = vpack.c.b16 %v5904, %v5903
      %v5990 = vpack.c.b16 %v5906, %v5905
      %v5991 = vpack.c.b16 %v5908, %v5907
      %v5992 = vpack.c.b16 %v5910, %v5909
      %v5993 = vpack.c.b16 %v5912, %v5911
      %v5994 = vpack.c.b16 %v5914, %v5913
      %v5995 = vpack.c.b16 %v5916, %v5915
      %v5996 = vpack.c.b16 %v5918, %v5917
      %v5997 = vpack.c.b16 %v5920, %v5919
      %v5998 = vpack.c.b16 %v5922, %v5921
      %v5999 = vpack.c.b16 %v5924, %v5923
      %v6000 = vpack.c.b16 %v5926, %v5925
      %v6001 = vpack.c.b16 %v5928, %v5927
      %v6002 = vpack.c.b16 %v5930, %v5929
      %6075 = vmatprep.subr.bf16.mxu0 0
      %6076 = vmatpush1.bf16.msra.mxu0 %v5931
      %6077 = vmatprep.subr.bf16.mxu0 0
      %6078 = vmatpush1.bf16.msra.mxu0 %v5932
      %6079 = vmatprep.subr.bf16.mxu0 0
      %6080 = vmatpush1.bf16.msra.mxu0 %v5933
      %6081 = vmatprep.subr.bf16.mxu0 0
      %6082 = vmatpush1.bf16.msra.mxu0 %v5934
      %6083 = vmatprep.subr.bf16.mxu0 0
      %6084 = vmatpush1.bf16.msra.mxu0 %v5935
      %6085 = vmatprep.subr.bf16.mxu0 0
      %6086 = vmatpush1.bf16.msra.mxu0 %v5936
      %6087 = vmatprep.subr.bf16.mxu0 0
      %6088 = vmatpush1.bf16.msra.mxu0 %v5937
      %6089 = vmatprep.subr.bf16.mxu0 0
      %6090 = vmatpush1.bf16.msra.mxu0 %v5938
      %6091 = vmatprep.subr.bf16.mxu0 0
      %6092 = vmatpush1.bf16.msra.mxu0 %v5939
      %6093 = vmatprep.subr.bf16.mxu0 0
      %6094 = vmatpush1.bf16.msra.mxu0 %v5940
      %6095 = vmatprep.subr.bf16.mxu0 0
      %6096 = vmatpush1.bf16.msra.mxu0 %v5941
      %6097 = vmatprep.subr.bf16.mxu0 0
      %6098 = vmatpush1.bf16.msra.mxu0 %v5942
      %6099 = vmatprep.subr.bf16.mxu0 0
      %6100 = vmatpush1.bf16.msra.mxu0 %v5943
      %6101 = vmatprep.subr.bf16.mxu0 0
      %6102 = vmatpush1.bf16.msra.mxu0 %v5944
      %6103 = vmatprep.subr.bf16.mxu0 0
      %6104 = vmatpush1.bf16.msra.mxu0 %v5945
      %6105 = vmatprep.subr.bf16.mxu0 0
      %6106 = vmatpush1.bf16.msra.mxu0 %v5946
      %6107 = vmatprep.mubr.bf16.mxu0 %v5261
      %6108 = vmatmul.mubr.bf16.gmra.mrb[0].mxu0 %v5231
      %v6109 = vpop.f32.mrb[0].mxu0
      %v6110 = vadd.f32 %v5642, %v6109
      %v6111 = vpop.f32.mrb[0].mxu0
      %v6112 = vpop.f32.mrb[0].mxu0
      %v6113 = vadd.f32 %v5642, %v6112
      %v6114 = vpop.f32.mrb[0].mxu0
      %6115 = vmatprep.mubr.bf16.mxu0 %v5269
      %6116 = vmatmul.mubr.bf16.gmra.mrb[0].mxu0 %v5232
      %v6117 = vpop.f32.mrb[0].mxu0
      %v6118 = vadd.f32 %v5642, %v6117
      %v6119 = vpop.f32.mrb[0].mxu0
      %v6120 = vpop.f32.mrb[0].mxu0
      %v6121 = vadd.f32 %v5642, %v6120
      %v6122 = vpop.f32.mrb[0].mxu0
      %6123 = vmatprep.mubr.bf16.mxu0 %v5277
      %6124 = vmatmul.mubr.bf16.gmra.mrb[0].mxu0 %v5233
      %v6125 = vpop.f32.mrb[0].mxu0
      %v6126 = vadd.f32 %v5642, %v6125
      %v6127 = vpop.f32.mrb[0].mxu0
      %v6128 = vpop.f32.mrb[0].mxu0
      %v6129 = vadd.f32 %v5642, %v6128
      %v6130 = vpop.f32.mrb[0].mxu0
      %6131 = vmatprep.mubr.bf16.mxu0 %v5285
      %6132 = vmatmul.mubr.bf16.gmra.mrb[0].mxu0 %v5234
      %v6133 = vpop.f32.mrb[0].mxu0
      %v6134 = vadd.f32 %v5642, %v6133
      %v6135 = vpop.f32.mrb[0].mxu0
      %v6136 = vpop.f32.mrb[0].mxu0
      %v6137 = vadd.f32 %v5642, %v6136
      %v6138 = vpop.f32.mrb[0].mxu0
      %6139 = vmatprep.mubr.bf16.mxu0 %v5293
      %6140 = vmatmul.mubr.bf16.gmra.mrb[0].mxu0 %v5235
      %v6141 = vpop.f32.mrb[0].mxu0
      %v6142 = vadd.f32 %v5642, %v6141
      %v6143 = vpop.f32.mrb[0].mxu0
      %v6144 = vpop.f32.mrb[0].mxu0
      %v6145 = vadd.f32 %v5642, %v6144
      %v6146 = vpop.f32.mrb[0].mxu0
      %6147 = vdwg.mxu0
      %6148 = vmatprep.subr.bf16.mxu0 0
      %6149 = vmatpush1.bf16.msra.mxu0 %v5947
      %6150 = vmatprep.subr.bf16.mxu0 0
      %6151 = vmatpush1.bf16.msra.mxu0 %v5948
      %6152 = vmatprep.subr.bf16.mxu0 0
      %6153 = vmatpush1.bf16.msra.mxu0 %v5949
      %6154 = vmatprep.subr.bf16.mxu0 0
      %6155 = vmatpush1.bf16.msra.mxu0 %v5950
      %6156 = vmatprep.subr.bf16.mxu0 0
      %6157 = vmatpush1.bf16.msra.mxu0 %v5951
      %6158 = vmatprep.subr.bf16.mxu0 0
      %6159 = vmatpush1.bf16.msra.mxu0 %v5952
      %6160 = vmatprep.subr.bf16.mxu0 0
      %6161 = vmatpush1.bf16.msra.mxu0 %v5953
      %6162 = vmatprep.subr.bf16.mxu0 0
      %6163 = vmatpush1.bf16.msra.mxu0 %v5954
      %6164 = vmatprep.subr.bf16.mxu0 0
      %6165 = vmatpush1.bf16.msra.mxu0 %v5955
      %6166 = vmatprep.subr.bf16.mxu0 0
      %6167 = vmatpush1.bf16.msra.mxu0 %v5956
      %6168 = vmatprep.subr.bf16.mxu0 0
      %6169 = vmatpush1.bf16.msra.mxu0 %v5957
      %6170 = vmatprep.subr.bf16.mxu0 0
      %6171 = vmatpush1.bf16.msra.mxu0 %v5958
      %6172 = vmatprep.subr.bf16.mxu0 0
      %6173 = vmatpush1.bf16.msra.mxu0 %v5959
      %6174 = vmatprep.subr.bf16.mxu0 0
      %6175 = vmatpush1.bf16.msra.mxu0 %v5960
      %6176 = vmatprep.subr.bf16.mxu0 0
      %6177 = vmatpush1.bf16.msra.mxu0 %v5961
      %6178 = vmatprep.subr.bf16.mxu0 0
      %6179 = vmatpush1.bf16.msra.mxu0 %v5962
      %6180 = vmatprep.mubr.bf16.mxu0 %v5325
      %6181 = vmatmul.mubr.bf16.gmra.mrb[0].mxu0 %v5307
      %v6182 = vpop.f32.mrb[0].mxu0
      %v6183 = vadd.f32 %v6110, %v6182
      %v6184 = vpop.f32.mrb[0].mxu0
      %v6185 = vpop.f32.mrb[0].mxu0
      %v6186 = vadd.f32 %v6113, %v6185
      %v6187 = vpop.f32.mrb[0].mxu0
      %6188 = vmatprep.mubr.bf16.mxu0 %v5327
      %6189 = vmatmul.mubr.bf16.gmra.mrb[0].mxu0 %v5309
      %v6190 = vpop.f32.mrb[0].mxu0
      %v6191 = vadd.f32 %v6118, %v6190
      %v6192 = vpop.f32.mrb[0].mxu0
      %v6193 = vpop.f32.mrb[0].mxu0
      %v6194 = vadd.f32 %v6121, %v6193
      %v6195 = vpop.f32.mrb[0].mxu0
      %6196 = vmatprep.mubr.bf16.mxu0 %v5329
      %6197 = vmatmul.mubr.bf16.gmra.mrb[0].mxu0 %v5311
      %v6198 = vpop.f32.mrb[0].mxu0
      %v6199 = vadd.f32 %v6126, %v6198
      %v6200 = vpop.f32.mrb[0].mxu0
      %v6201 = vpop.f32.mrb[0].mxu0
      %v6202 = vadd.f32 %v6129, %v6201
      %v6203 = vpop.f32.mrb[0].mxu0
      %6204 = vmatprep.mubr.bf16.mxu0 %v5331
      %6205 = vmatmul.mubr.bf16.gmra.mrb[0].mxu0 %v5313
      %v6206 = vpop.f32.mrb[0].mxu0
      %v6207 = vadd.f32 %v6134, %v6206
      %v6208 = vpop.f32.mrb[0].mxu0
      %v6209 = vpop.f32.mrb[0].mxu0
      %v6210 = vadd.f32 %v6137, %v6209
      %v6211 = vpop.f32.mrb[0].mxu0
      %6212 = vmatprep.mubr.bf16.mxu0 %v5333
      %6213 = vmatmul.mubr.bf16.gmra.mrb[0].mxu0 %v5315
      %v6214 = vpop.f32.mrb[0].mxu0
      %v6215 = vadd.f32 %v6142, %v6214
      %v6216 = vpop.f32.mrb[0].mxu0
      %v6217 = vpop.f32.mrb[0].mxu0
      %v6218 = vadd.f32 %v6145, %v6217
      %v6219 = vpop.f32.mrb[0].mxu0
      %6220 = vdwg.mxu0
      %6221 = vmatprep.subr.bf16.mxu0 0
      %6222 = vmatpush1.bf16.msra.mxu0 %v5963
      %6223 = vmatprep.subr.bf16.mxu0 0
      %6224 = vmatpush1.bf16.msra.mxu0 %v5964
      %6225 = vmatprep.subr.bf16.mxu0 0
      %6226 = vmatpush1.bf16.msra.mxu0 %v5965
      %6227 = vmatprep.subr.bf16.mxu0 0
      %6228 = vmatpush1.bf16.msra.mxu0 %v5966
      %6229 = vmatprep.subr.bf16.mxu0 0
      %6230 = vmatpush1.bf16.msra.mxu0 %v5967
      %6231 = vmatprep.subr.bf16.mxu0 0
      %6232 = vmatpush1.bf16.msra.mxu0 %v5968
      %6233 = vmatprep.subr.bf16.mxu0 0
      %6234 = vmatpush1.bf16.msra.mxu0 %v5969
      %6235 = vmatprep.subr.bf16.mxu0 0
      %6236 = vmatpush1.bf16.msra.mxu0 %v5970
      %6237 = vmatprep.subr.bf16.mxu0 0
      %6238 = vmatpush1.bf16.msra.mxu0 %v5971
      %6239 = vmatprep.subr.bf16.mxu0 0
      %6240 = vmatpush1.bf16.msra.mxu0 %v5972
      %6241 = vmatprep.subr.bf16.mxu0 0
      %6242 = vmatpush1.bf16.msra.mxu0 %v5973
      %6243 = vmatprep.subr.bf16.mxu0 0
      %6244 = vmatpush1.bf16.msra.mxu0 %v5974
      %6245 = vmatprep.subr.bf16.mxu0 0
      %6246 = vmatpush1.bf16.msra.mxu0 %v5975
      %6247 = vmatprep.subr.bf16.mxu0 0
      %6248 = vmatpush1.bf16.msra.mxu0 %v5976
      %6249 = vmatprep.subr.bf16.mxu0 0
      %6250 = vmatpush1.bf16.msra.mxu0 %v5977
      %6251 = vmatprep.subr.bf16.mxu0 0
      %6252 = vmatpush1.bf16.msra.mxu0 %v5978
      %6253 = vmatprep.mubr.bf16.mxu0 %v5381
      %6254 = vmatmul.mubr.bf16.gmra.mrb[0].mxu0 %v5350
      %v6255 = vpop.f32.mrb[0].mxu0
      %v6256 = vadd.f32 %v6183, %v6255
      %v6257 = vpop.f32.mrb[0].mxu0
      %v6258 = vpop.f32.mrb[0].mxu0
      %v6259 = vadd.f32 %v6186, %v6258
      %v6260 = vpop.f32.mrb[0].mxu0
      %6261 = vmatprep.mubr.bf16.mxu0 %v5383
      %6262 = vmatmul.mubr.bf16.gmra.mrb[0].mxu0 %v5354
      %v6263 = vpop.f32.mrb[0].mxu0
      %v6264 = vadd.f32 %v6191, %v6263
      %v6265 = vpop.f32.mrb[0].mxu0
      %v6266 = vpop.f32.mrb[0].mxu0
      %v6267 = vadd.f32 %v6194, %v6266
      %v6268 = vpop.f32.mrb[0].mxu0
      %6269 = vmatprep.mubr.bf16.mxu0 %v5385
      %6270 = vmatmul.mubr.bf16.gmra.mrb[0].mxu0 %v5358
      %v6271 = vpop.f32.mrb[0].mxu0
      %v6272 = vadd.f32 %v6199, %v6271
      %v6273 = vpop.f32.mrb[0].mxu0
      %v6274 = vpop.f32.mrb[0].mxu0
      %v6275 = vadd.f32 %v6202, %v6274
      %v6276 = vpop.f32.mrb[0].mxu0
      %6277 = vmatprep.mubr.bf16.mxu0 %v5387
      %6278 = vmatmul.mubr.bf16.gmra.mrb[0].mxu0 %v5362
      %v6279 = vpop.f32.mrb[0].mxu0
      %v6280 = vadd.f32 %v6207, %v6279
      %v6281 = vpop.f32.mrb[0].mxu0
      %v6282 = vpop.f32.mrb[0].mxu0
      %v6283 = vadd.f32 %v6210, %v6282
      %v6284 = vpop.f32.mrb[0].mxu0
      %6285 = vmatprep.mubr.bf16.mxu0 %v5389
      %6286 = vmatmul.mubr.bf16.gmra.mrb[0].mxu0 %v5371
      %v6287 = vpop.f32.mrb[0].mxu0
      %v6288 = vadd.f32 %v6215, %v6287
      %v6289 = vpop.f32.mrb[0].mxu0
      %v6290 = vpop.f32.mrb[0].mxu0
      %v6291 = vadd.f32 %v6218, %v6290
      %v6292 = vpop.f32.mrb[0].mxu0
      %6293 = vdwg.mxu0
      %6294 = vmatprep.subr.bf16.mxu0 0
      %6295 = vmatpush1.bf16.msra.mxu0 %v5979
      %6296 = vmatprep.subr.bf16.mxu0 0
      %6297 = vmatpush1.bf16.msra.mxu0 %v5980
      %6298 = vmatprep.subr.bf16.mxu0 0
      %6299 = vmatpush1.bf16.msra.mxu0 %v5981
      %6300 = vmatprep.subr.bf16.mxu0 0
      %6301 = vmatpush1.bf16.msra.mxu0 %v5982
      %6302 = vmatprep.subr.bf16.mxu0 0
      %6303 = vmatpush1.bf16.msra.mxu0 %v5983
      %6304 = vmatprep.subr.bf16.mxu0 0
      %6305 = vmatpush1.bf16.msra.mxu0 %v5984
      %6306 = vmatprep.subr.bf16.mxu0 0
      %6307 = vmatpush1.bf16.msra.mxu0 %v5985
      %6308 = vmatprep.subr.bf16.mxu0 0
      %6309 = vmatpush1.bf16.msra.mxu0 %v5986
      %6310 = vmatprep.subr.bf16.mxu0 0
      %6311 = vmatpush1.bf16.msra.mxu0 %v5987
      %6312 = vmatprep.subr.bf16.mxu0 0
      %6313 = vmatpush1.bf16.msra.mxu0 %v5988
      %6314 = vmatprep.subr.bf16.mxu0 0
      %6315 = vmatpush1.bf16.msra.mxu0 %v5989
      %6316 = vmatprep.subr.bf16.mxu0 0
      %6317 = vmatpush1.bf16.msra.mxu0 %v5990
      %6318 = vmatprep.subr.bf16.mxu0 0
      %6319 = vmatpush1.bf16.msra.mxu0 %v5991
      %6320 = vmatprep.subr.bf16.mxu0 0
      %6321 = vmatpush1.bf16.msra.mxu0 %v5992
      %6322 = vmatprep.subr.bf16.mxu0 0
      %6323 = vmatpush1.bf16.msra.mxu0 %v5993
      %6324 = vmatprep.subr.bf16.mxu0 0
      %6325 = vmatpush1.bf16.msra.mxu0 %v5994
      %6326 = vmatprep.mubr.bf16.mxu0 %v5433
      %6327 = vmatmul.mubr.bf16.gmra.mrb[0].mxu0 %v5403
      %v6328 = vpop.f32.mrb[0].mxu0
      %v6329 = vadd.f32 %v6256, %v6328
      %v6330 = vpop.f32.mrb[0].mxu0
      %v6331 = vpop.f32.mrb[0].mxu0
      %v6332 = vadd.f32 %v6259, %v6331
      %v6333 = vpop.f32.mrb[0].mxu0
      %6334 = vmatprep.mubr.bf16.mxu0 %v5442
      %6335 = vmatmul.mubr.bf16.gmra.mrb[0].mxu0 %v5405
      %v6336 = vpop.f32.mrb[0].mxu0
      %v6337 = vadd.f32 %v6264, %v6336
      %v6338 = vpop.f32.mrb[0].mxu0
      %v6339 = vpop.f32.mrb[0].mxu0
      %v6340 = vadd.f32 %v6267, %v6339
      %v6341 = vpop.f32.mrb[0].mxu0
      %6342 = vmatprep.mubr.bf16.mxu0 %v5451
      %6343 = vmatmul.mubr.bf16.gmra.mrb[0].mxu0 %v5407
      %v6344 = vpop.f32.mrb[0].mxu0
      %v6345 = vadd.f32 %v6272, %v6344
      %v6346 = vpop.f32.mrb[0].mxu0
      %v6347 = vpop.f32.mrb[0].mxu0
      %v6348 = vadd.f32 %v6275, %v6347
      %v6349 = vpop.f32.mrb[0].mxu0
      %6350 = vmatprep.mubr.bf16.mxu0 %v5460
      %6351 = vmatmul.mubr.bf16.gmra.mrb[0].mxu0 %v5409
      %v6352 = vpop.f32.mrb[0].mxu0
      %v6353 = vadd.f32 %v6280, %v6352
      %v6354 = vpop.f32.mrb[0].mxu0
      %v6355 = vpop.f32.mrb[0].mxu0
      %v6356 = vadd.f32 %v6283, %v6355
      %v6357 = vpop.f32.mrb[0].mxu0
      %6358 = vmatprep.mubr.bf16.mxu0 %v5469
      %6359 = vmatmul.mubr.bf16.gmra.mrb[0].mxu0 %v5411
      %v6360 = vpop.f32.mrb[0].mxu0
      %v6361 = vadd.f32 %v6288, %v6360
      %v6362 = vpop.f32.mrb[0].mxu0
      %v6363 = vpop.f32.mrb[0].mxu0
      %v6364 = vadd.f32 %v6291, %v6363
      %v6365 = vpop.f32.mrb[0].mxu0
      %6366 = vdwg.mxu0
      %6367 = vmatprep.subr.bf16.mxu0 0
      %6368 = vmatpush1.bf16.msra.mxu0 %v5995
      %6369 = vmatprep.subr.bf16.mxu0 0
      %6370 = vmatpush1.bf16.msra.mxu0 %v5996
      %6371 = vmatprep.subr.bf16.mxu0 0
      %6372 = vmatpush1.bf16.msra.mxu0 %v5997
      %6373 = vmatprep.subr.bf16.mxu0 0
      %6374 = vmatpush1.bf16.msra.mxu0 %v5998
      %6375 = vmatprep.subr.bf16.mxu0 0
      %6376 = vmatpush1.bf16.msra.mxu0 %v5999
      %6377 = vmatprep.subr.bf16.mxu0 0
      %6378 = vmatpush1.bf16.msra.mxu0 %v6000
      %6379 = vmatprep.subr.bf16.mxu0 0
      %6380 = vmatpush1.bf16.msra.mxu0 %v6001
      %6381 = vmatprep.subr.bf16.mxu0 0
      %6382 = vmatpush1.bf16.msra.mxu0 %v6002
      %6383 = vmatprep.subr.bf16.mxu0 0
      %6384 = vmatpush1.bf16.msra.mxu0 0
      %6385 = vmatprep.subr.bf16.mxu0 0
      %6386 = vmatpush1.bf16.msra.mxu0 0
      %6387 = vmatprep.subr.bf16.mxu0 0
      %6388 = vmatpush1.bf16.msra.mxu0 0
      %6389 = vmatprep.subr.bf16.mxu0 0
      %6390 = vmatpush1.bf16.msra.mxu0 0
      %6391 = vmatprep.subr.bf16.mxu0 0
      %6392 = vmatpush1.bf16.msra.mxu0 0
      %6393 = vmatprep.subr.bf16.mxu0 0
      %6394 = vmatpush1.bf16.msra.mxu0 0
      %6395 = vmatprep.subr.bf16.mxu0 0
      %6396 = vmatpush1.bf16.msra.mxu0 0
      %6397 = vmatprep.subr.bf16.mxu0 0
      %6398 = vmatpush1.bf16.msra.mxu0 0
      %6399 = vmatprep.mubr.bf16.mxu0 0
      %6400 = vmatmul.mubr.bf16.gmra.mrb[0].mxu0 %v5479
      %v6401 = vpop.f32.mrb[0].mxu0
      %v6402 = vadd.f32 %v6329, %v6401
      %v6403 = vpop.f32.mrb[0].mxu0
      %v6404 = vpop.f32.mrb[0].mxu0
      %v6405 = vadd.f32 %v6332, %v6404
      %v6406 = vpop.f32.mrb[0].mxu0
      %6407 = vmatprep.mubr.bf16.mxu0 0
      %6408 = vmatmul.mubr.bf16.gmra.mrb[0].mxu0 %v5481
      %v6409 = vpop.f32.mrb[0].mxu0
      %v6410 = vadd.f32 %v6337, %v6409
      %v6411 = vpop.f32.mrb[0].mxu0
      %v6412 = vpop.f32.mrb[0].mxu0
      %v6413 = vadd.f32 %v6340, %v6412
      %v6414 = vpop.f32.mrb[0].mxu0
      %6415 = vmatprep.mubr.bf16.mxu0 0
      %6416 = vmatmul.mubr.bf16.gmra.mrb[0].mxu0 %v5483
      %v6417 = vpop.f32.mrb[0].mxu0
      %v6418 = vadd.f32 %v6345, %v6417
      %v6419 = vpop.f32.mrb[0].mxu0
      %v6420 = vpop.f32.mrb[0].mxu0
      %v6421 = vadd.f32 %v6348, %v6420
      %v6422 = vpop.f32.mrb[0].mxu0
      %6423 = vmatprep.mubr.bf16.mxu0 0
      %6424 = vmatmul.mubr.bf16.gmra.mrb[0].mxu0 %v5485
      %v6425 = vpop.f32.mrb[0].mxu0
      %v6426 = vadd.f32 %v6353, %v6425
      %v6427 = vpop.f32.mrb[0].mxu0
      %v6428 = vpop.f32.mrb[0].mxu0
      %v6429 = vadd.f32 %v6356, %v6428
      %v6430 = vpop.f32.mrb[0].mxu0
      %6431 = vmatprep.mubr.bf16.mxu0 0
      %6432 = vmatmul.mubr.bf16.gmra.mrb[0].mxu0 %v5487
      %v6433 = vpop.f32.mrb[0].mxu0
      %v6434 = vadd.f32 %v6361, %v6433
      %v6435 = vpop.f32.mrb[0].mxu0
      %v6436 = vpop.f32.mrb[0].mxu0
      %v6437 = vadd.f32 %v6364, %v6436
      %v6438 = vpop.f32.mrb[0].mxu0
      %6439 = vdwg.mxu0
      %v6440 = vunpack.c.l.bf16 %v3872
      %v6441 = vunpack.c.h.bf16 %v3872
      %v6442 = vunpack.c.l.bf16 %v3873
      %v6443 = vunpack.c.h.bf16 %v3873
      %v6444 = vunpack.c.l.bf16 %v3874
      %v6445 = vunpack.c.h.bf16 %v3874
      %v6446 = vunpack.c.l.bf16 %v3875
      %v6447 = vunpack.c.h.bf16 %v3875
      %v6448 = vunpack.c.l.bf16 %v3876
      %v6449 = vunpack.c.h.bf16 %v3876
      %v6450 = vadd.f32 %v6402, %v6440
      %v6451 = vadd.f32 %v6405, %v6441
      %v6452 = vadd.f32 %v6410, %v6442
      %v6453 = vadd.f32 %v6413, %v6443
      %v6454 = vadd.f32 %v6418, %v6444
      %v6455 = vadd.f32 %v6421, %v6445
      %v6456 = vadd.f32 %v6426, %v6446
      %v6457 = vadd.f32 %v6429, %v6447
      %v6458 = vadd.f32 %v6434, %v6448
      %v6459 = vadd.f32 %v6437, %v6449
      %v6460 = vsel %vm2298, %v6450, 0.0
      %v6461 = vsel %vm2299, %v6451, 0.0
      %v6462 = vsel %vm2300, %v6452, 0.0
      %v6463 = vsel %vm2301, %v6453, 0.0
      %v6464 = vsel %vm2302, %v6454, 0.0
      %v6465 = vsel %vm2303, %v6455, 0.0
      %v6466 = vsel %vm2304, %v6456, 0.0
      %v6467 = vsel %vm2305, %v6457, 0.0
      %v6468 = vsel %vm2306, %v6458, 0.0
      %v6469 = vsel %vm2307, %v6459, 0.0
      %v6470 = vpack.c.bf16 %v6461, %v6460
      %v6471 = vpack.c.bf16 %v6463, %v6462
      %v6472 = vpack.c.bf16 %v6465, %v6464
      %v6473 = vpack.c.bf16 %v6467, %v6466
      %v6474 = vpack.c.bf16 %v6469, %v6468
      %v6476 = vshrl.u32 %v6470, 16
      %v6478 = vrot.slane %v6476, 2
      %v6479 = vshll.u32 %v6470, 16
      %v6481 = vrot.slane %v6479, 3
      %v6482 = vor.u32 %v6478, %v6481
      %v6484 = vshrl.u32 %v6471, 16
      %v6486 = vrot.slane %v6484, 2
      %v6487 = vshll.u32 %v6471, 16
      %v6489 = vrot.slane %v6487, 3
      %v6490 = vor.u32 %v6486, %v6489
      %v6491 = vsel %vm173, %v6482, %v6490
      %v6493 = vshrl.u32 %v6472, 16
      %v6495 = vrot.slane %v6493, 2
      %v6496 = vshll.u32 %v6472, 16
      %v6498 = vrot.slane %v6496, 3
      %v6499 = vor.u32 %v6495, %v6498
      %v6500 = vsel %vm173, %v6490, %v6499
      %v6502 = vshrl.u32 %v6473, 16
      %v6504 = vrot.slane %v6502, 2
      %v6505 = vshll.u32 %v6473, 16
      %v6507 = vrot.slane %v6505, 3
      %v6508 = vor.u32 %v6504, %v6507
      %v6509 = vsel %vm173, %v6499, %v6508
      %v6511 = vshrl.u32 %v6474, 16
      %v6513 = vrot.slane %v6511, 2
      %v6514 = vshll.u32 %v6474, 16
      %v6516 = vrot.slane %v6514, 3
      %v6517 = vor.u32 %v6513, %v6516
      %v6518 = vsel %vm173, %v6508, %v6517
      %v6525 = vld [vmem:[#allocation2] sm:$0xe0]
      %v6526 = vsel %vm180, %v6482, %v6525
      %6527 = vst [vmem:[#allocation2] sm:$0xe0] %v6526
      %6528 = vst [vmem:[#allocation2 + $0x8] sm:$0xff] %v6491
      %6529 = vst [vmem:[#allocation2 + $0x10] sm:$0xff] %v6500
      %6530 = vst [vmem:[#allocation2 + $0x18] sm:$0xff] %v6509
      %6531 = vst [vmem:[#allocation2 + $0x20] sm:$0xff] %v6518
      %v6532 = vld [vmem:[#allocation2 + $0x28] sm:$0x3f]
      %v6533 = vsel %vm174, %v6517, %v6532
      %6534 = vst [vmem:[#allocation2 + $0x28] sm:$0x3f] %v6533
      %v6535 = vld [vmem:[#allocation2] sm:$0xff]
      %v6536 = vld [vmem:[#allocation2 + $0x8] sm:$0xff]
      %v6537 = vld [vmem:[#allocation2 + $0x10] sm:$0xff]
      %v6538 = vld [vmem:[#allocation2 + $0x18] sm:$0xff]
      %v6539 = vld [vmem:[#allocation2 + $0x20] sm:$0xff]
      %v6540 = vld [vmem:[#allocation2 + $0x28] sm:$0x1]
      %v6541 = vld [vmem:[#allocation2] sm:$0xfe]
      %v6542 = vld [vmem:[#allocation2] sm:$0xe0]
      %v6543 = vld [vmem:[#allocation2 + $0x28] sm:$0x1f]
      %v6544 = vld [vmem:[#allocation2 + $0x28] sm:$0x3f]
      %v6545 = vld [vmem:[#allocation2] sm:$0xc0]
      %v6546 = vld [vmem:[#allocation2 + $0x8] sm:$0xfc]
      %v6547 = vld [vmem:[#allocation2 + $0x10] sm:$0xff]
      %v6548 = vld [vmem:[#allocation2 + $0x18] sm:$0xff]
      %v6549 = vld [vmem:[#allocation2 + $0x20] sm:$0xff]
      %v6550 = vld [vmem:[#allocation2 + $0x28] sm:$0xff]
      %v6551 = vld [vmem:[#allocation2 + $0x30] sm:$0x3]
      %v6552 = vld [vmem:[#allocation2 + $0x30] sm:$0x7]
      %v6553 = vld [vmem:[#allocation2 + $0x8] sm:$0xf8]
      %v6555 = vshrl.u32 %v6535, 16
      %v6557 = vshll.u32 %v6535, 16
      %v6559 = vrot.slane %v6557, 1
      %v6560 = vor.u32 %v6555, %v6559
      %v6562 = vshll.u32 %v6536, 16
      %v6564 = vrot.slane %v6562, 1
      %v6565 = vsel %vm1083, %v6560, %v6564
      %v6566 = vshrl.u32 %v6536, 16
      %v6568 = vor.u32 %v6566, %v6564
      %v6570 = vshll.u32 %v6537, 16
      %v6572 = vrot.slane %v6570, 1
      %v6573 = vsel %vm1083, %v6568, %v6572
      %v6574 = vshrl.u32 %v6537, 16
      %v6576 = vor.u32 %v6574, %v6572
      %v6578 = vshll.u32 %v6538, 16
      %v6580 = vrot.slane %v6578, 1
      %v6581 = vsel %vm1083, %v6576, %v6580
      %v6582 = vshrl.u32 %v6538, 16
      %v6584 = vor.u32 %v6582, %v6580
      %v6586 = vshll.u32 %v6539, 16
      %v6588 = vrot.slane %v6586, 1
      %v6589 = vsel %vm1083, %v6584, %v6588
      %v6590 = vshrl.u32 %v6539, 16
      %v6592 = vor.u32 %v6590, %v6588
      %v6594 = vshll.u32 %v6540, 16
      %v6596 = vrot.slane %v6594, 1
      %v6597 = vsel %vm1083, %v6592, %v6596
      %v6609 = vrot.slane %v6541, 1
      %v6610 = vrot.slane %v6536, 1
      %v6611 = vsel %vm1139, %v6609, %v6610
      %v6612 = vrot.slane %v6537, 1
      %v6613 = vsel %vm1139, %v6610, %v6612
      %v6614 = vrot.slane %v6538, 1
      %v6615 = vsel %vm1139, %v6612, %v6614
      %v6616 = vrot.slane %v6539, 1
      %v6617 = vsel %vm1139, %v6614, %v6616
      %v6618 = vrot.slane %v6540, 1
      %v6619 = vsel %vm1139, %v6616, %v6618
      %v6627 = vrot.slane %v6542, 5
      %v6628 = vrot.slane %v6536, 5
      %v6629 = vsel %vm1158, %v6627, %v6628
      %v6630 = vrot.slane %v6537, 5
      %v6631 = vsel %vm1158, %v6628, %v6630
      %v6632 = vrot.slane %v6538, 5
      %v6633 = vsel %vm1158, %v6630, %v6632
      %v6634 = vrot.slane %v6539, 5
      %v6635 = vsel %vm1158, %v6632, %v6634
      %v6636 = vrot.slane %v6543, 5
      %v6637 = vsel %vm1158, %v6634, %v6636
      %v6644 = vshrl.u32 %v6542, 16
      %v6646 = vrot.slane %v6644, 5
      %v6647 = vshll.u32 %v6542, 16
      %v6649 = vrot.slane %v6647, 6
      %v6650 = vor.u32 %v6646, %v6649
      %v6651 = vrot.slane %v6566, 5
      %v6652 = vrot.slane %v6562, 6
      %v6653 = vor.u32 %v6651, %v6652
      %v6654 = vsel %vm1175, %v6650, %v6653
      %v6655 = vrot.slane %v6574, 5
      %v6656 = vrot.slane %v6570, 6
      %v6657 = vor.u32 %v6655, %v6656
      %v6658 = vsel %vm1175, %v6653, %v6657
      %v6659 = vrot.slane %v6582, 5
      %v6660 = vrot.slane %v6578, 6
      %v6661 = vor.u32 %v6659, %v6660
      %v6662 = vsel %vm1175, %v6657, %v6661
      %v6663 = vrot.slane %v6590, 5
      %v6664 = vrot.slane %v6586, 6
      %v6665 = vor.u32 %v6663, %v6664
      %v6666 = vsel %vm1175, %v6661, %v6665
      %v6668 = vshrl.u32 %v6544, 16
      %v6670 = vrot.slane %v6668, 5
      %v6671 = vshll.u32 %v6544, 16
      %v6673 = vrot.slane %v6671, 6
      %v6674 = vor.u32 %v6670, %v6673
      %v6675 = vsel %vm1175, %v6665, %v6674
      %v6683 = vrot.slane %v6545, 6
      %v6684 = vrot.slane %v6536, 6
      %v6685 = vsel %vm1216, %v6683, %v6684
      %v6686 = vrot.slane %v6537, 6
      %v6687 = vsel %vm1216, %v6684, %v6686
      %v6688 = vrot.slane %v6538, 6
      %v6689 = vsel %vm1216, %v6686, %v6688
      %v6690 = vrot.slane %v6539, 6
      %v6691 = vsel %vm1216, %v6688, %v6690
      %v6692 = vrot.slane %v6544, 6
      %v6693 = vsel %vm1216, %v6690, %v6692
      %v6705 = vrot.slane %v6546, 2
      %v6706 = vrot.slane %v6547, 2
      %v6707 = vsel %vm172, %v6705, %v6706
      %v6708 = vrot.slane %v6548, 2
      %v6709 = vsel %vm172, %v6706, %v6708
      %v6710 = vrot.slane %v6549, 2
      %v6711 = vsel %vm172, %v6708, %v6710
      %v6712 = vrot.slane %v6550, 2
      %v6713 = vsel %vm172, %v6710, %v6712
      %v6714 = vrot.slane %v6551, 2
      %v6715 = vsel %vm172, %v6712, %v6714
      %v6722 = vshrl.u32 %v6546, 16
      %v6724 = vrot.slane %v6722, 2
      %v6725 = vshll.u32 %v6546, 16
      %v6727 = vrot.slane %v6725, 3
      %v6728 = vor.u32 %v6724, %v6727
      %v6730 = vshrl.u32 %v6547, 16
      %v6732 = vrot.slane %v6730, 2
      %v6733 = vshll.u32 %v6547, 16
      %v6735 = vrot.slane %v6733, 3
      %v6736 = vor.u32 %v6732, %v6735
      %v6737 = vsel %vm173, %v6728, %v6736
      %v6739 = vshrl.u32 %v6548, 16
      %v6741 = vrot.slane %v6739, 2
      %v6742 = vshll.u32 %v6548, 16
      %v6744 = vrot.slane %v6742, 3
      %v6745 = vor.u32 %v6741, %v6744
      %v6746 = vsel %vm173, %v6736, %v6745
      %v6748 = vshrl.u32 %v6549, 16
      %v6750 = vrot.slane %v6748, 2
      %v6751 = vshll.u32 %v6549, 16
      %v6753 = vrot.slane %v6751, 3
      %v6754 = vor.u32 %v6750, %v6753
      %v6755 = vsel %vm173, %v6745, %v6754
      %v6757 = vshrl.u32 %v6550, 16
      %v6759 = vrot.slane %v6757, 2
      %v6760 = vshll.u32 %v6550, 16
      %v6762 = vrot.slane %v6760, 3
      %v6763 = vor.u32 %v6759, %v6762
      %v6764 = vsel %vm173, %v6754, %v6763
      %v6766 = vshrl.u32 %v6552, 16
      %v6768 = vrot.slane %v6766, 2
      %v6769 = vshll.u32 %v6552, 16
      %v6771 = vrot.slane %v6769, 3
      %v6772 = vor.u32 %v6768, %v6771
      %v6773 = vsel %vm173, %v6763, %v6772
      %v6781 = vrot.slane %v6553, 3
      %v6782 = vrot.slane %v6547, 3
      %v6783 = vsel %vm1315, %v6781, %v6782
      %v6784 = vrot.slane %v6548, 3
      %v6785 = vsel %vm1315, %v6782, %v6784
      %v6786 = vrot.slane %v6549, 3
      %v6787 = vsel %vm1315, %v6784, %v6786
      %v6788 = vrot.slane %v6550, 3
      %v6789 = vsel %vm1315, %v6786, %v6788
      %v6790 = vrot.slane %v6552, 3
      %v6791 = vsel %vm1315, %v6788, %v6790
      %s6797 = scalar_lea.vmem %s1, 2304
      %v6798 = vld [vmem:[%s6797] sm:$0xf]
      %v6799 = vld [vmem:[%s6797 + $0x4] sm:$0xf]
      %v6800 = vld [vmem:[%s6797 + $0x8] sm:$0xf]
      %v6801 = vld [vmem:[%s6797 + $0xc] sm:$0xf]
      %v6802 = vld [vmem:[%s6797 + $0x10] sm:$0xf]
      %v6803 = vld [vmem:[%s6797 + $0x14] sm:$0xf]
      %v6804 = vld [vmem:[%s6797 + $0x18] sm:$0xf]
      %v6805 = vld [vmem:[%s6797 + $0x1c] sm:$0xf]
      %v6806 = vld [vmem:[%s6797 + $0x20] sm:$0xf]
      %v6807 = vld [vmem:[%s6797 + $0x24] sm:$0xf]
      %v6808 = vld [vmem:[%s6797 + $0x28] sm:$0xf]
      %v6809 = vld [vmem:[%s6797 + $0x2c] sm:$0xf]
      %v6810 = vld [vmem:[%s6797 + $0x30] sm:$0xf]
      %v6811 = vld [vmem:[%s6797 + $0x34] sm:$0xf]
      %v6812 = vld [vmem:[%s6797 + $0x38] sm:$0xf]
      %v6813 = vld [vmem:[%s6797 + $0x3c] sm:$0xf]
      %v6814 = vld [vmem:[%s6797 + $0x40] sm:$0xf]
      %v6815 = vld [vmem:[%s6797 + $0x44] sm:$0xf]
      %v6816 = vld [vmem:[%s6797 + $0x48] sm:$0xf]
      %v6817 = vld [vmem:[%s6797 + $0x4c] sm:$0xf]
      %v6818 = vld [vmem:[%s6797 + $0x50] sm:$0xf]
      %v6819 = vld [vmem:[%s6797 + $0x54] sm:$0xf]
      %v6820 = vld [vmem:[%s6797 + $0x58] sm:$0xf]
      %v6821 = vld [vmem:[%s6797 + $0x5c] sm:$0xf]
      %v6822 = vld [vmem:[%s6797 + $0x60] sm:$0xf]
      %v6823 = vld [vmem:[%s6797 + $0x64] sm:$0xf]
      %v6824 = vld [vmem:[%s6797 + $0x68] sm:$0xf]
      %v6825 = vld [vmem:[%s6797 + $0x6c] sm:$0xf]
      %v6826 = vld [vmem:[%s6797 + $0x70] sm:$0xf]
      %v6827 = vld [vmem:[%s6797 + $0x74] sm:$0xf]
      %v6828 = vld [vmem:[%s6797 + $0x78] sm:$0xf]
      %v6829 = vld [vmem:[%s6797 + $0x7c] sm:$0xf]
      %v6830 = vld [vmem:[%s6797 + $0x80] sm:$0xf]
      %v6831 = vld [vmem:[%s6797 + $0x84] sm:$0xf]
      %v6832 = vld [vmem:[%s6797 + $0x88] sm:$0xf]
      %v6833 = vld [vmem:[%s6797 + $0x8c] sm:$0xf]
      %v6834 = vld [vmem:[%s6797 + $0x90] sm:$0xf]
      %v6835 = vld [vmem:[%s6797 + $0x94] sm:$0xf]
      %v6836 = vld [vmem:[%s6797 + $0x98] sm:$0xf]
      %v6837 = vld [vmem:[%s6797 + $0x9c] sm:$0xf]
      %v6838 = vld [vmem:[%s6797 + $0xa0] sm:$0xf]
      %v6839 = vld [vmem:[%s6797 + $0xa4] sm:$0xf]
      %v6840 = vld [vmem:[%s6797 + $0xa8] sm:$0xf]
      %v6841 = vld [vmem:[%s6797 + $0xac] sm:$0xf]
      %v6842 = vld [vmem:[%s6797 + $0xb0] sm:$0xf]
      %v6843 = vld [vmem:[%s6797 + $0xb4] sm:$0xf]
      %v6844 = vld [vmem:[%s6797 + $0xb8] sm:$0xf]
      %v6845 = vld [vmem:[%s6797 + $0xbc] sm:$0xf]
      %v6846 = vld [vmem:[%s6797 + $0xc0] sm:$0xf]
      %v6847 = vld [vmem:[%s6797 + $0xc4] sm:$0xf]
      %v6848 = vld [vmem:[%s6797 + $0xc8] sm:$0xf]
      %v6849 = vld [vmem:[%s6797 + $0xcc] sm:$0xf]
      %v6850 = vld [vmem:[%s6797 + $0xd0] sm:$0xf]
      %v6851 = vld [vmem:[%s6797 + $0xd4] sm:$0xf]
      %v6852 = vld [vmem:[%s6797 + $0xd8] sm:$0xf]
      %v6853 = vld [vmem:[%s6797 + $0xdc] sm:$0xf]
      %v6854 = vld [vmem:[%s6797 + $0xe0] sm:$0xf]
      %v6855 = vld [vmem:[%s6797 + $0xe4] sm:$0xf]
      %v6856 = vld [vmem:[%s6797 + $0xe8] sm:$0xf]
      %v6857 = vld [vmem:[%s6797 + $0xec] sm:$0xf]
      %v6858 = vld [vmem:[%s6797 + $0xf0] sm:$0xf]
      %v6859 = vld [vmem:[%s6797 + $0xf4] sm:$0xf]
      %v6860 = vld [vmem:[%s6797 + $0xf8] sm:$0xf]
      %v6861 = vld [vmem:[%s6797 + $0xfc] sm:$0xf]
      %v6862 = vld [vmem:[%s6797 + $0x100] sm:$0xf]
      %v6863 = vld [vmem:[%s6797 + $0x104] sm:$0xf]
      %v6864 = vld [vmem:[%s6797 + $0x108] sm:$0xf]
      %v6865 = vld [vmem:[%s6797 + $0x10c] sm:$0xf]
      %v6866 = vld [vmem:[%s6797 + $0x110] sm:$0xf]
      %v6867 = vld [vmem:[%s6797 + $0x114] sm:$0xf]
      %v6868 = vld [vmem:[%s6797 + $0x118] sm:$0xf]
      %v6869 = vld [vmem:[%s6797 + $0x11c] sm:$0xf]
      %v6870 = vld [vmem:[%s6797 + $0x120] sm:$0xf]
      %v6871 = vld [vmem:[%s6797 + $0x124] sm:$0xf]
      %v6872 = vld [vmem:[%s6797 + $0x128] sm:$0xf]
      %v6873 = vld [vmem:[%s6797 + $0x12c] sm:$0xf]
      %v6874 = vld [vmem:[%s6797 + $0x130] sm:$0xf]
      %v6875 = vld [vmem:[%s6797 + $0x134] sm:$0xf]
      %v6876 = vld [vmem:[%s6797 + $0x138] sm:$0xf]
      %v6877 = vld [vmem:[%s6797 + $0x13c] sm:$0xf]
      %v6878 = vld [vmem:[%s6797 + $0x140] sm:$0xf]
      %v6879 = vld [vmem:[%s6797 + $0x144] sm:$0xf]
      %v6880 = vld [vmem:[%s6797 + $0x148] sm:$0xf]
      %v6881 = vld [vmem:[%s6797 + $0x14c] sm:$0xf]
      %v6882 = vld [vmem:[%s6797 + $0x150] sm:$0xf]
      %v6883 = vld [vmem:[%s6797 + $0x154] sm:$0xf]
      %v6884 = vld [vmem:[%s6797 + $0x158] sm:$0xf]
      %v6885 = vld [vmem:[%s6797 + $0x15c] sm:$0xf]
      %v6886 = vld [vmem:[%s6797 + $0x160] sm:$0xf]
      %v6887 = vld [vmem:[%s6797 + $0x164] sm:$0xf]
      %v6888 = vld [vmem:[%s6797 + $0x168] sm:$0xf]
      %v6889 = vld [vmem:[%s6797 + $0x16c] sm:$0xf]
      %v6890 = vld [vmem:[%s6797 + $0x170] sm:$0xf]
      %v6891 = vld [vmem:[%s6797 + $0x174] sm:$0xf]
      %v6892 = vld [vmem:[%s6797 + $0x178] sm:$0xf]
      %v6893 = vld [vmem:[%s6797 + $0x17c] sm:$0xf]
      %v6894 = vld [vmem:[%s6797 + $0x180] sm:$0xf]
      %v6895 = vld [vmem:[%s6797 + $0x184] sm:$0xf]
      %v6896 = vld [vmem:[%s6797 + $0x188] sm:$0xf]
      %v6897 = vld [vmem:[%s6797 + $0x18c] sm:$0xf]
      %v6898 = vld [vmem:[%s6797 + $0x190] sm:$0xf]
      %v6899 = vld [vmem:[%s6797 + $0x194] sm:$0xf]
      %v6900 = vld [vmem:[%s6797 + $0x198] sm:$0xf]
      %v6901 = vld [vmem:[%s6797 + $0x19c] sm:$0xf]
      %v6902 = vld [vmem:[%s6797 + $0x1a0] sm:$0xf]
      %v6903 = vld [vmem:[%s6797 + $0x1a4] sm:$0xf]
      %v6904 = vld [vmem:[%s6797 + $0x1a8] sm:$0xf]
      %v6905 = vld [vmem:[%s6797 + $0x1ac] sm:$0xf]
      %v6906 = vld [vmem:[%s6797 + $0x1b0] sm:$0xf]
      %v6907 = vld [vmem:[%s6797 + $0x1b4] sm:$0xf]
      %v6908 = vld [vmem:[%s6797 + $0x1b8] sm:$0xf]
      %v6909 = vld [vmem:[%s6797 + $0x1bc] sm:$0xf]
      %v6910 = vld [vmem:[%s6797 + $0x1c0] sm:$0xf]
      %v6911 = vld [vmem:[%s6797 + $0x1c4] sm:$0xf]
      %v6912 = vld [vmem:[%s6797 + $0x1c8] sm:$0xf]
      %v6913 = vld [vmem:[%s6797 + $0x1cc] sm:$0xf]
      %v6914 = vld [vmem:[%s6797 + $0x1d0] sm:$0xf]
      %v6915 = vld [vmem:[%s6797 + $0x1d4] sm:$0xf]
      %v6916 = vld [vmem:[%s6797 + $0x1d8] sm:$0xf]
      %v6917 = vld [vmem:[%s6797 + $0x1dc] sm:$0xf]
      %v6918 = vld [vmem:[%s6797 + $0x1e0] sm:$0xf]
      %v6919 = vld [vmem:[%s6797 + $0x1e4] sm:$0xf]
      %v6920 = vld [vmem:[%s6797 + $0x1e8] sm:$0xf]
      %v6921 = vld [vmem:[%s6797 + $0x1ec] sm:$0xf]
      %v6922 = vld [vmem:[%s6797 + $0x1f0] sm:$0xf]
      %v6923 = vld [vmem:[%s6797 + $0x1f4] sm:$0xf]
      %v6924 = vld [vmem:[%s6797 + $0x1f8] sm:$0xf]
      %v6925 = vld [vmem:[%s6797 + $0x1fc] sm:$0xf]
      %v6926 = vld [vmem:[%s6797 + $0x200] sm:$0xf]
      %v6927 = vld [vmem:[%s6797 + $0x204] sm:$0xf]
      %v6928 = vld [vmem:[%s6797 + $0x208] sm:$0xf]
      %v6929 = vld [vmem:[%s6797 + $0x20c] sm:$0xf]
      %v6930 = vld [vmem:[%s6797 + $0x210] sm:$0xf]
      %v6931 = vld [vmem:[%s6797 + $0x214] sm:$0xf]
      %v6932 = vld [vmem:[%s6797 + $0x218] sm:$0xf]
      %v6933 = vld [vmem:[%s6797 + $0x21c] sm:$0xf]
      %v6934 = vld [vmem:[%s6797 + $0x220] sm:$0xf]
      %v6935 = vld [vmem:[%s6797 + $0x224] sm:$0xf]
      %v6936 = vld [vmem:[%s6797 + $0x228] sm:$0xf]
      %v6937 = vld [vmem:[%s6797 + $0x22c] sm:$0xf]
      %v6938 = vld [vmem:[%s6797 + $0x230] sm:$0xf]
      %v6939 = vld [vmem:[%s6797 + $0x234] sm:$0xf]
      %v6940 = vld [vmem:[%s6797 + $0x238] sm:$0xf]
      %v6941 = vld [vmem:[%s6797 + $0x23c] sm:$0xf]
      %v6942 = vld [vmem:[%s2 + $0x4] sm:$0x1]
      %v6943 = vlaneseq
      %v6944 = vshrl.u32 %v6943, 7
      %v6945 = vsub.s32 0, %v6944
      %v6946 = vrot.slane %v6942, %v6945
      %v7091 = vunpack.c.l.b16 %v6798
      %v7092 = vunpack.c.l.b16 %v6799
      %v7093 = vunpack.c.l.b16 %v6800
      %v7094 = vunpack.c.l.b16 %v6801
      %v7095 = vunpack.c.l.b16 %v6802
      %v7096 = vunpack.c.l.b16 %v6803
      %v7097 = vunpack.c.l.b16 %v6804
      %v7098 = vunpack.c.l.b16 %v6805
      %v7099 = vunpack.c.l.b16 %v6806
      %v7100 = vunpack.c.l.b16 %v6807
      %v7101 = vunpack.c.l.b16 %v6808
      %v7102 = vunpack.c.l.b16 %v6809
      %v7103 = vunpack.c.l.b16 %v6810
      %v7104 = vunpack.c.l.b16 %v6811
      %v7105 = vunpack.c.l.b16 %v6812
      %v7106 = vunpack.c.l.b16 %v6813
      %v7107 = vunpack.c.l.b16 %v6814
      %v7108 = vunpack.c.l.b16 %v6815
      %v7109 = vunpack.c.l.b16 %v6816
      %v7110 = vunpack.c.l.b16 %v6817
      %v7111 = vunpack.c.l.b16 %v6818
      %v7112 = vunpack.c.l.b16 %v6819
      %v7113 = vunpack.c.l.b16 %v6820
      %v7114 = vunpack.c.l.b16 %v6821
      %v7115 = vunpack.c.l.b16 %v6822
      %v7116 = vunpack.c.l.b16 %v6823
      %v7117 = vunpack.c.l.b16 %v6824
      %v7118 = vunpack.c.l.b16 %v6825
      %v7119 = vunpack.c.l.b16 %v6826
      %v7120 = vunpack.c.l.b16 %v6827
      %v7121 = vunpack.c.l.b16 %v6828
      %v7122 = vunpack.c.l.b16 %v6829
      %v7123 = vunpack.c.l.b16 %v6830
      %v7124 = vunpack.c.l.b16 %v6831
      %v7125 = vunpack.c.l.b16 %v6832
      %v7126 = vunpack.c.l.b16 %v6833
      %v7127 = vunpack.c.l.b16 %v6834
      %v7128 = vunpack.c.l.b16 %v6835
      %v7129 = vunpack.c.l.b16 %v6836
      %v7130 = vunpack.c.l.b16 %v6837
      %v7131 = vunpack.c.l.b16 %v6838
      %v7132 = vunpack.c.l.b16 %v6839
      %v7133 = vunpack.c.l.b16 %v6840
      %v7134 = vunpack.c.l.b16 %v6841
      %v7135 = vunpack.c.l.b16 %v6842
      %v7136 = vunpack.c.l.b16 %v6843
      %v7137 = vunpack.c.l.b16 %v6844
      %v7138 = vunpack.c.l.b16 %v6845
      %v7139 = vunpack.c.l.b16 %v6846
      %v7140 = vunpack.c.l.b16 %v6847
      %v7141 = vunpack.c.l.b16 %v6848
      %v7142 = vunpack.c.l.b16 %v6849
      %v7143 = vunpack.c.l.b16 %v6850
      %v7144 = vunpack.c.l.b16 %v6851
      %v7145 = vunpack.c.l.b16 %v6852
      %v7146 = vunpack.c.l.b16 %v6853
      %v7147 = vunpack.c.l.b16 %v6854
      %v7148 = vunpack.c.l.b16 %v6855
      %v7149 = vunpack.c.l.b16 %v6856
      %v7150 = vunpack.c.l.b16 %v6857
      %v7151 = vunpack.c.l.b16 %v6858
      %v7152 = vunpack.c.l.b16 %v6859
      %v7153 = vunpack.c.l.b16 %v6860
      %v7154 = vunpack.c.l.b16 %v6861
      %v7155 = vunpack.c.l.b16 %v6862
      %v7156 = vunpack.c.l.b16 %v6863
      %v7157 = vunpack.c.l.b16 %v6864
      %v7158 = vunpack.c.l.b16 %v6865
      %v7159 = vunpack.c.l.b16 %v6866
      %v7160 = vunpack.c.l.b16 %v6867
      %v7161 = vunpack.c.l.b16 %v6868
      %v7162 = vunpack.c.l.b16 %v6869
      %v7163 = vunpack.c.l.b16 %v6870
      %v7164 = vunpack.c.l.b16 %v6871
      %v7165 = vunpack.c.l.b16 %v6872
      %v7166 = vunpack.c.l.b16 %v6873
      %v7167 = vunpack.c.l.b16 %v6874
      %v7168 = vunpack.c.l.b16 %v6875
      %v7169 = vunpack.c.l.b16 %v6876
      %v7170 = vunpack.c.l.b16 %v6877
      %v7171 = vunpack.c.l.b16 %v6878
      %v7172 = vunpack.c.l.b16 %v6879
      %v7173 = vunpack.c.l.b16 %v6880
      %v7174 = vunpack.c.l.b16 %v6881
      %v7175 = vunpack.c.l.b16 %v6882
      %v7176 = vunpack.c.l.b16 %v6883
      %v7177 = vunpack.c.l.b16 %v6884
      %v7178 = vunpack.c.l.b16 %v6885
      %v7179 = vunpack.c.l.b16 %v6886
      %v7180 = vunpack.c.l.b16 %v6887
      %v7181 = vunpack.c.l.b16 %v6888
      %v7182 = vunpack.c.l.b16 %v6889
      %v7183 = vunpack.c.l.b16 %v6890
      %v7184 = vunpack.c.l.b16 %v6891
      %v7185 = vunpack.c.l.b16 %v6892
      %v7186 = vunpack.c.l.b16 %v6893
      %v7187 = vunpack.c.l.b16 %v6894
      %v7188 = vunpack.c.l.b16 %v6895
      %v7189 = vunpack.c.l.b16 %v6896
      %v7190 = vunpack.c.l.b16 %v6897
      %v7191 = vunpack.c.l.b16 %v6898
      %v7192 = vunpack.c.l.b16 %v6899
      %v7193 = vunpack.c.l.b16 %v6900
      %v7194 = vunpack.c.l.b16 %v6901
      %v7195 = vunpack.c.l.b16 %v6902
      %v7196 = vunpack.c.l.b16 %v6903
      %v7197 = vunpack.c.l.b16 %v6904
      %v7198 = vunpack.c.l.b16 %v6905
      %v7199 = vunpack.c.l.b16 %v6906
      %v7200 = vunpack.c.l.b16 %v6907
      %v7201 = vunpack.c.l.b16 %v6908
      %v7202 = vunpack.c.l.b16 %v6909
      %v7203 = vunpack.c.l.b16 %v6910
      %v7204 = vunpack.c.l.b16 %v6911
      %v7205 = vunpack.c.l.b16 %v6912
      %v7206 = vunpack.c.l.b16 %v6913
      %v7207 = vunpack.c.l.b16 %v6914
      %v7208 = vunpack.c.l.b16 %v6915
      %v7209 = vunpack.c.l.b16 %v6916
      %v7210 = vunpack.c.l.b16 %v6917
      %v7211 = vunpack.c.l.b16 %v6918
      %v7212 = vunpack.c.l.b16 %v6919
      %v7213 = vunpack.c.l.b16 %v6920
      %v7214 = vunpack.c.l.b16 %v6921
      %v7215 = vunpack.c.l.b16 %v6922
      %v7216 = vunpack.c.l.b16 %v6923
      %v7217 = vunpack.c.l.b16 %v6924
      %v7218 = vunpack.c.l.b16 %v6925
      %v7219 = vunpack.c.l.b16 %v6926
      %v7220 = vunpack.c.l.b16 %v6927
      %v7221 = vunpack.c.l.b16 %v6928
      %v7222 = vunpack.c.l.b16 %v6929
      %v7223 = vunpack.c.l.b16 %v6930
      %v7224 = vunpack.c.l.b16 %v6931
      %v7225 = vunpack.c.l.b16 %v6932
      %v7226 = vunpack.c.l.b16 %v6933
      %v7227 = vunpack.c.l.b16 %v6934
      %v7228 = vunpack.c.l.b16 %v6935
      %v7229 = vunpack.c.l.b16 %v6936
      %v7230 = vunpack.c.l.b16 %v6937
      %v7231 = vunpack.c.l.b16 %v6938
      %v7232 = vunpack.c.l.b16 %v6939
      %v7233 = vunpack.c.l.b16 %v6940
      %v7234 = vunpack.c.l.b16 %v6941
      %v7235 = vpack.c.b16 %v7092, %v7091
      %v7236 = vpack.c.b16 %v7094, %v7093
      %v7237 = vpack.c.b16 %v7096, %v7095
      %v7238 = vpack.c.b16 %v7098, %v7097
      %v7239 = vpack.c.b16 %v7100, %v7099
      %v7240 = vpack.c.b16 %v7102, %v7101
      %v7241 = vpack.c.b16 %v7104, %v7103
      %v7242 = vpack.c.b16 %v7106, %v7105
      %v7243 = vpack.c.b16 %v7108, %v7107
      %v7244 = vpack.c.b16 %v7110, %v7109
      %v7245 = vpack.c.b16 %v7112, %v7111
      %v7246 = vpack.c.b16 %v7114, %v7113
      %v7247 = vpack.c.b16 %v7116, %v7115
      %v7248 = vpack.c.b16 %v7118, %v7117
      %v7249 = vpack.c.b16 %v7120, %v7119
      %v7250 = vpack.c.b16 %v7122, %v7121
      %v7251 = vpack.c.b16 %v7124, %v7123
      %v7252 = vpack.c.b16 %v7126, %v7125
      %v7253 = vpack.c.b16 %v7128, %v7127
      %v7254 = vpack.c.b16 %v7130, %v7129
      %v7255 = vpack.c.b16 %v7132, %v7131
      %v7256 = vpack.c.b16 %v7134, %v7133
      %v7257 = vpack.c.b16 %v7136, %v7135
      %v7258 = vpack.c.b16 %v7138, %v7137
      %v7259 = vpack.c.b16 %v7140, %v7139
      %v7260 = vpack.c.b16 %v7142, %v7141
      %v7261 = vpack.c.b16 %v7144, %v7143
      %v7262 = vpack.c.b16 %v7146, %v7145
      %v7263 = vpack.c.b16 %v7148, %v7147
      %v7264 = vpack.c.b16 %v7150, %v7149
      %v7265 = vpack.c.b16 %v7152, %v7151
      %v7266 = vpack.c.b16 %v7154, %v7153
      %v7267 = vpack.c.b16 %v7156, %v7155
      %v7268 = vpack.c.b16 %v7158, %v7157
      %v7269 = vpack.c.b16 %v7160, %v7159
      %v7270 = vpack.c.b16 %v7162, %v7161
      %v7271 = vpack.c.b16 %v7164, %v7163
      %v7272 = vpack.c.b16 %v7166, %v7165
      %v7273 = vpack.c.b16 %v7168, %v7167
      %v7274 = vpack.c.b16 %v7170, %v7169
      %v7275 = vpack.c.b16 %v7172, %v7171
      %v7276 = vpack.c.b16 %v7174, %v7173
      %v7277 = vpack.c.b16 %v7176, %v7175
      %v7278 = vpack.c.b16 %v7178, %v7177
      %v7279 = vpack.c.b16 %v7180, %v7179
      %v7280 = vpack.c.b16 %v7182, %v7181
      %v7281 = vpack.c.b16 %v7184, %v7183
      %v7282 = vpack.c.b16 %v7186, %v7185
      %v7283 = vpack.c.b16 %v7188, %v7187
      %v7284 = vpack.c.b16 %v7190, %v7189
      %v7285 = vpack.c.b16 %v7192, %v7191
      %v7286 = vpack.c.b16 %v7194, %v7193
      %v7287 = vpack.c.b16 %v7196, %v7195
      %v7288 = vpack.c.b16 %v7198, %v7197
      %v7289 = vpack.c.b16 %v7200, %v7199
      %v7290 = vpack.c.b16 %v7202, %v7201
      %v7291 = vpack.c.b16 %v7204, %v7203
      %v7292 = vpack.c.b16 %v7206, %v7205
      %v7293 = vpack.c.b16 %v7208, %v7207
      %v7294 = vpack.c.b16 %v7210, %v7209
      %v7295 = vpack.c.b16 %v7212, %v7211
      %v7296 = vpack.c.b16 %v7214, %v7213
      %v7297 = vpack.c.b16 %v7216, %v7215
      %v7298 = vpack.c.b16 %v7218, %v7217
      %v7299 = vpack.c.b16 %v7220, %v7219
      %v7300 = vpack.c.b16 %v7222, %v7221
      %v7301 = vpack.c.b16 %v7224, %v7223
      %v7302 = vpack.c.b16 %v7226, %v7225
      %v7303 = vpack.c.b16 %v7228, %v7227
      %v7304 = vpack.c.b16 %v7230, %v7229
      %v7305 = vpack.c.b16 %v7232, %v7231
      %v7306 = vpack.c.b16 %v7234, %v7233
      %7379 = vmatprep.subr.bf16.mxu0 0
      %7380 = vmatpush1.bf16.msra.mxu0 %v7235
      %7381 = vmatprep.subr.bf16.mxu0 0
      %7382 = vmatpush1.bf16.msra.mxu0 %v7236
      %7383 = vmatprep.subr.bf16.mxu0 0
      %7384 = vmatpush1.bf16.msra.mxu0 %v7237
      %7385 = vmatprep.subr.bf16.mxu0 0
      %7386 = vmatpush1.bf16.msra.mxu0 %v7238
      %7387 = vmatprep.subr.bf16.mxu0 0
      %7388 = vmatpush1.bf16.msra.mxu0 %v7239
      %7389 = vmatprep.subr.bf16.mxu0 0
      %7390 = vmatpush1.bf16.msra.mxu0 %v7240
      %7391 = vmatprep.subr.bf16.mxu0 0
      %7392 = vmatpush1.bf16.msra.mxu0 %v7241
      %7393 = vmatprep.subr.bf16.mxu0 0
      %7394 = vmatpush1.bf16.msra.mxu0 %v7242
      %7395 = vmatprep.subr.bf16.mxu0 0
      %7396 = vmatpush1.bf16.msra.mxu0 %v7243
      %7397 = vmatprep.subr.bf16.mxu0 0
      %7398 = vmatpush1.bf16.msra.mxu0 %v7244
      %7399 = vmatprep.subr.bf16.mxu0 0
      %7400 = vmatpush1.bf16.msra.mxu0 %v7245
      %7401 = vmatprep.subr.bf16.mxu0 0
      %7402 = vmatpush1.bf16.msra.mxu0 %v7246
      %7403 = vmatprep.subr.bf16.mxu0 0
      %7404 = vmatpush1.bf16.msra.mxu0 %v7247
      %7405 = vmatprep.subr.bf16.mxu0 0
      %7406 = vmatpush1.bf16.msra.mxu0 %v7248
      %7407 = vmatprep.subr.bf16.mxu0 0
      %7408 = vmatpush1.bf16.msra.mxu0 %v7249
      %7409 = vmatprep.subr.bf16.mxu0 0
      %7410 = vmatpush1.bf16.msra.mxu0 %v7250
      %7411 = vmatprep.mubr.bf16.mxu0 %v6565
      %7412 = vmatmul.mubr.bf16.gmra.mrb[0].mxu0 %v6535
      %v7413 = vpop.f32.mrb[0].mxu0
      %v7414 = vadd.f32 %v6946, %v7413
      %v7415 = vpop.f32.mrb[0].mxu0
      %v7416 = vpop.f32.mrb[0].mxu0
      %v7417 = vadd.f32 %v6946, %v7416
      %v7418 = vpop.f32.mrb[0].mxu0
      %7419 = vmatprep.mubr.bf16.mxu0 %v6573
      %7420 = vmatmul.mubr.bf16.gmra.mrb[0].mxu0 %v6536
      %v7421 = vpop.f32.mrb[0].mxu0
      %v7422 = vadd.f32 %v6946, %v7421
      %v7423 = vpop.f32.mrb[0].mxu0
      %v7424 = vpop.f32.mrb[0].mxu0
      %v7425 = vadd.f32 %v6946, %v7424
      %v7426 = vpop.f32.mrb[0].mxu0
      %7427 = vmatprep.mubr.bf16.mxu0 %v6581
      %7428 = vmatmul.mubr.bf16.gmra.mrb[0].mxu0 %v6537
      %v7429 = vpop.f32.mrb[0].mxu0
      %v7430 = vadd.f32 %v6946, %v7429
      %v7431 = vpop.f32.mrb[0].mxu0
      %v7432 = vpop.f32.mrb[0].mxu0
      %v7433 = vadd.f32 %v6946, %v7432
      %v7434 = vpop.f32.mrb[0].mxu0
      %7435 = vmatprep.mubr.bf16.mxu0 %v6589
      %7436 = vmatmul.mubr.bf16.gmra.mrb[0].mxu0 %v6538
      %v7437 = vpop.f32.mrb[0].mxu0
      %v7438 = vadd.f32 %v6946, %v7437
      %v7439 = vpop.f32.mrb[0].mxu0
      %v7440 = vpop.f32.mrb[0].mxu0
      %v7441 = vadd.f32 %v6946, %v7440
      %v7442 = vpop.f32.mrb[0].mxu0
      %7443 = vmatprep.mubr.bf16.mxu0 %v6597
      %7444 = vmatmul.mubr.bf16.gmra.mrb[0].mxu0 %v6539
      %v7445 = vpop.f32.mrb[0].mxu0
      %v7446 = vadd.f32 %v6946, %v7445
      %v7447 = vpop.f32.mrb[0].mxu0
      %v7448 = vpop.f32.mrb[0].mxu0
      %v7449 = vadd.f32 %v6946, %v7448
      %v7450 = vpop.f32.mrb[0].mxu0
      %7451 = vdwg.mxu0
      %7452 = vmatprep.subr.bf16.mxu0 0
      %7453 = vmatpush1.bf16.msra.mxu0 %v7251
      %7454 = vmatprep.subr.bf16.mxu0 0
      %7455 = vmatpush1.bf16.msra.mxu0 %v7252
      %7456 = vmatprep.subr.bf16.mxu0 0
      %7457 = vmatpush1.bf16.msra.mxu0 %v7253
      %7458 = vmatprep.subr.bf16.mxu0 0
      %7459 = vmatpush1.bf16.msra.mxu0 %v7254
      %7460 = vmatprep.subr.bf16.mxu0 0
      %7461 = vmatpush1.bf16.msra.mxu0 %v7255
      %7462 = vmatprep.subr.bf16.mxu0 0
      %7463 = vmatpush1.bf16.msra.mxu0 %v7256
      %7464 = vmatprep.subr.bf16.mxu0 0
      %7465 = vmatpush1.bf16.msra.mxu0 %v7257
      %7466 = vmatprep.subr.bf16.mxu0 0
      %7467 = vmatpush1.bf16.msra.mxu0 %v7258
      %7468 = vmatprep.subr.bf16.mxu0 0
      %7469 = vmatpush1.bf16.msra.mxu0 %v7259
      %7470 = vmatprep.subr.bf16.mxu0 0
      %7471 = vmatpush1.bf16.msra.mxu0 %v7260
      %7472 = vmatprep.subr.bf16.mxu0 0
      %7473 = vmatpush1.bf16.msra.mxu0 %v7261
      %7474 = vmatprep.subr.bf16.mxu0 0
      %7475 = vmatpush1.bf16.msra.mxu0 %v7262
      %7476 = vmatprep.subr.bf16.mxu0 0
      %7477 = vmatpush1.bf16.msra.mxu0 %v7263
      %7478 = vmatprep.subr.bf16.mxu0 0
      %7479 = vmatpush1.bf16.msra.mxu0 %v7264
      %7480 = vmatprep.subr.bf16.mxu0 0
      %7481 = vmatpush1.bf16.msra.mxu0 %v7265
      %7482 = vmatprep.subr.bf16.mxu0 0
      %7483 = vmatpush1.bf16.msra.mxu0 %v7266
      %7484 = vmatprep.mubr.bf16.mxu0 %v6629
      %7485 = vmatmul.mubr.bf16.gmra.mrb[0].mxu0 %v6611
      %v7486 = vpop.f32.mrb[0].mxu0
      %v7487 = vadd.f32 %v7414, %v7486
      %v7488 = vpop.f32.mrb[0].mxu0
      %v7489 = vpop.f32.mrb[0].mxu0
      %v7490 = vadd.f32 %v7417, %v7489
      %v7491 = vpop.f32.mrb[0].mxu0
      %7492 = vmatprep.mubr.bf16.mxu0 %v6631
      %7493 = vmatmul.mubr.bf16.gmra.mrb[0].mxu0 %v6613
      %v7494 = vpop.f32.mrb[0].mxu0
      %v7495 = vadd.f32 %v7422, %v7494
      %v7496 = vpop.f32.mrb[0].mxu0
      %v7497 = vpop.f32.mrb[0].mxu0
      %v7498 = vadd.f32 %v7425, %v7497
      %v7499 = vpop.f32.mrb[0].mxu0
      %7500 = vmatprep.mubr.bf16.mxu0 %v6633
      %7501 = vmatmul.mubr.bf16.gmra.mrb[0].mxu0 %v6615
      %v7502 = vpop.f32.mrb[0].mxu0
      %v7503 = vadd.f32 %v7430, %v7502
      %v7504 = vpop.f32.mrb[0].mxu0
      %v7505 = vpop.f32.mrb[0].mxu0
      %v7506 = vadd.f32 %v7433, %v7505
      %v7507 = vpop.f32.mrb[0].mxu0
      %7508 = vmatprep.mubr.bf16.mxu0 %v6635
      %7509 = vmatmul.mubr.bf16.gmra.mrb[0].mxu0 %v6617
      %v7510 = vpop.f32.mrb[0].mxu0
      %v7511 = vadd.f32 %v7438, %v7510
      %v7512 = vpop.f32.mrb[0].mxu0
      %v7513 = vpop.f32.mrb[0].mxu0
      %v7514 = vadd.f32 %v7441, %v7513
      %v7515 = vpop.f32.mrb[0].mxu0
      %7516 = vmatprep.mubr.bf16.mxu0 %v6637
      %7517 = vmatmul.mubr.bf16.gmra.mrb[0].mxu0 %v6619
      %v7518 = vpop.f32.mrb[0].mxu0
      %v7519 = vadd.f32 %v7446, %v7518
      %v7520 = vpop.f32.mrb[0].mxu0
      %v7521 = vpop.f32.mrb[0].mxu0
      %v7522 = vadd.f32 %v7449, %v7521
      %v7523 = vpop.f32.mrb[0].mxu0
      %7524 = vdwg.mxu0
      %7525 = vmatprep.subr.bf16.mxu0 0
      %7526 = vmatpush1.bf16.msra.mxu0 %v7267
      %7527 = vmatprep.subr.bf16.mxu0 0
      %7528 = vmatpush1.bf16.msra.mxu0 %v7268
      %7529 = vmatprep.subr.bf16.mxu0 0
      %7530 = vmatpush1.bf16.msra.mxu0 %v7269
      %7531 = vmatprep.subr.bf16.mxu0 0
      %7532 = vmatpush1.bf16.msra.mxu0 %v7270
      %7533 = vmatprep.subr.bf16.mxu0 0
      %7534 = vmatpush1.bf16.msra.mxu0 %v7271
      %7535 = vmatprep.subr.bf16.mxu0 0
      %7536 = vmatpush1.bf16.msra.mxu0 %v7272
      %7537 = vmatprep.subr.bf16.mxu0 0
      %7538 = vmatpush1.bf16.msra.mxu0 %v7273
      %7539 = vmatprep.subr.bf16.mxu0 0
      %7540 = vmatpush1.bf16.msra.mxu0 %v7274
      %7541 = vmatprep.subr.bf16.mxu0 0
      %7542 = vmatpush1.bf16.msra.mxu0 %v7275
      %7543 = vmatprep.subr.bf16.mxu0 0
      %7544 = vmatpush1.bf16.msra.mxu0 %v7276
      %7545 = vmatprep.subr.bf16.mxu0 0
      %7546 = vmatpush1.bf16.msra.mxu0 %v7277
      %7547 = vmatprep.subr.bf16.mxu0 0
      %7548 = vmatpush1.bf16.msra.mxu0 %v7278
      %7549 = vmatprep.subr.bf16.mxu0 0
      %7550 = vmatpush1.bf16.msra.mxu0 %v7279
      %7551 = vmatprep.subr.bf16.mxu0 0
      %7552 = vmatpush1.bf16.msra.mxu0 %v7280
      %7553 = vmatprep.subr.bf16.mxu0 0
      %7554 = vmatpush1.bf16.msra.mxu0 %v7281
      %7555 = vmatprep.subr.bf16.mxu0 0
      %7556 = vmatpush1.bf16.msra.mxu0 %v7282
      %7557 = vmatprep.mubr.bf16.mxu0 %v6685
      %7558 = vmatmul.mubr.bf16.gmra.mrb[0].mxu0 %v6654
      %v7559 = vpop.f32.mrb[0].mxu0
      %v7560 = vadd.f32 %v7487, %v7559
      %v7561 = vpop.f32.mrb[0].mxu0
      %v7562 = vpop.f32.mrb[0].mxu0
      %v7563 = vadd.f32 %v7490, %v7562
      %v7564 = vpop.f32.mrb[0].mxu0
      %7565 = vmatprep.mubr.bf16.mxu0 %v6687
      %7566 = vmatmul.mubr.bf16.gmra.mrb[0].mxu0 %v6658
      %v7567 = vpop.f32.mrb[0].mxu0
      %v7568 = vadd.f32 %v7495, %v7567
      %v7569 = vpop.f32.mrb[0].mxu0
      %v7570 = vpop.f32.mrb[0].mxu0
      %v7571 = vadd.f32 %v7498, %v7570
      %v7572 = vpop.f32.mrb[0].mxu0
      %7573 = vmatprep.mubr.bf16.mxu0 %v6689
      %7574 = vmatmul.mubr.bf16.gmra.mrb[0].mxu0 %v6662
      %v7575 = vpop.f32.mrb[0].mxu0
      %v7576 = vadd.f32 %v7503, %v7575
      %v7577 = vpop.f32.mrb[0].mxu0
      %v7578 = vpop.f32.mrb[0].mxu0
      %v7579 = vadd.f32 %v7506, %v7578
      %v7580 = vpop.f32.mrb[0].mxu0
      %7581 = vmatprep.mubr.bf16.mxu0 %v6691
      %7582 = vmatmul.mubr.bf16.gmra.mrb[0].mxu0 %v6666
      %v7583 = vpop.f32.mrb[0].mxu0
      %v7584 = vadd.f32 %v7511, %v7583
      %v7585 = vpop.f32.mrb[0].mxu0
      %v7586 = vpop.f32.mrb[0].mxu0
      %v7587 = vadd.f32 %v7514, %v7586
      %v7588 = vpop.f32.mrb[0].mxu0
      %7589 = vmatprep.mubr.bf16.mxu0 %v6693
      %7590 = vmatmul.mubr.bf16.gmra.mrb[0].mxu0 %v6675
      %v7591 = vpop.f32.mrb[0].mxu0
      %v7592 = vadd.f32 %v7519, %v7591
      %v7593 = vpop.f32.mrb[0].mxu0
      %v7594 = vpop.f32.mrb[0].mxu0
      %v7595 = vadd.f32 %v7522, %v7594
      %v7596 = vpop.f32.mrb[0].mxu0
      %7597 = vdwg.mxu0
      %7598 = vmatprep.subr.bf16.mxu0 0
      %7599 = vmatpush1.bf16.msra.mxu0 %v7283
      %7600 = vmatprep.subr.bf16.mxu0 0
      %7601 = vmatpush1.bf16.msra.mxu0 %v7284
      %7602 = vmatprep.subr.bf16.mxu0 0
      %7603 = vmatpush1.bf16.msra.mxu0 %v7285
      %7604 = vmatprep.subr.bf16.mxu0 0
      %7605 = vmatpush1.bf16.msra.mxu0 %v7286
      %7606 = vmatprep.subr.bf16.mxu0 0
      %7607 = vmatpush1.bf16.msra.mxu0 %v7287
      %7608 = vmatprep.subr.bf16.mxu0 0
      %7609 = vmatpush1.bf16.msra.mxu0 %v7288
      %7610 = vmatprep.subr.bf16.mxu0 0
      %7611 = vmatpush1.bf16.msra.mxu0 %v7289
      %7612 = vmatprep.subr.bf16.mxu0 0
      %7613 = vmatpush1.bf16.msra.mxu0 %v7290
      %7614 = vmatprep.subr.bf16.mxu0 0
      %7615 = vmatpush1.bf16.msra.mxu0 %v7291
      %7616 = vmatprep.subr.bf16.mxu0 0
      %7617 = vmatpush1.bf16.msra.mxu0 %v7292
      %7618 = vmatprep.subr.bf16.mxu0 0
      %7619 = vmatpush1.bf16.msra.mxu0 %v7293
      %7620 = vmatprep.subr.bf16.mxu0 0
      %7621 = vmatpush1.bf16.msra.mxu0 %v7294
      %7622 = vmatprep.subr.bf16.mxu0 0
      %7623 = vmatpush1.bf16.msra.mxu0 %v7295
      %7624 = vmatprep.subr.bf16.mxu0 0
      %7625 = vmatpush1.bf16.msra.mxu0 %v7296
      %7626 = vmatprep.subr.bf16.mxu0 0
      %7627 = vmatpush1.bf16.msra.mxu0 %v7297
      %7628 = vmatprep.subr.bf16.mxu0 0
      %7629 = vmatpush1.bf16.msra.mxu0 %v7298
      %7630 = vmatprep.mubr.bf16.mxu0 %v6737
      %7631 = vmatmul.mubr.bf16.gmra.mrb[0].mxu0 %v6707
      %v7632 = vpop.f32.mrb[0].mxu0
      %v7633 = vadd.f32 %v7560, %v7632
      %v7634 = vpop.f32.mrb[0].mxu0
      %v7635 = vpop.f32.mrb[0].mxu0
      %v7636 = vadd.f32 %v7563, %v7635
      %v7637 = vpop.f32.mrb[0].mxu0
      %7638 = vmatprep.mubr.bf16.mxu0 %v6746
      %7639 = vmatmul.mubr.bf16.gmra.mrb[0].mxu0 %v6709
      %v7640 = vpop.f32.mrb[0].mxu0
      %v7641 = vadd.f32 %v7568, %v7640
      %v7642 = vpop.f32.mrb[0].mxu0
      %v7643 = vpop.f32.mrb[0].mxu0
      %v7644 = vadd.f32 %v7571, %v7643
      %v7645 = vpop.f32.mrb[0].mxu0
      %7646 = vmatprep.mubr.bf16.mxu0 %v6755
      %7647 = vmatmul.mubr.bf16.gmra.mrb[0].mxu0 %v6711
      %v7648 = vpop.f32.mrb[0].mxu0
      %v7649 = vadd.f32 %v7576, %v7648
      %v7650 = vpop.f32.mrb[0].mxu0
      %v7651 = vpop.f32.mrb[0].mxu0
      %v7652 = vadd.f32 %v7579, %v7651
      %v7653 = vpop.f32.mrb[0].mxu0
      %7654 = vmatprep.mubr.bf16.mxu0 %v6764
      %7655 = vmatmul.mubr.bf16.gmra.mrb[0].mxu0 %v6713
      %v7656 = vpop.f32.mrb[0].mxu0
      %v7657 = vadd.f32 %v7584, %v7656
      %v7658 = vpop.f32.mrb[0].mxu0
      %v7659 = vpop.f32.mrb[0].mxu0
      %v7660 = vadd.f32 %v7587, %v7659
      %v7661 = vpop.f32.mrb[0].mxu0
      %7662 = vmatprep.mubr.bf16.mxu0 %v6773
      %7663 = vmatmul.mubr.bf16.gmra.mrb[0].mxu0 %v6715
      %v7664 = vpop.f32.mrb[0].mxu0
      %v7665 = vadd.f32 %v7592, %v7664
      %v7666 = vpop.f32.mrb[0].mxu0
      %v7667 = vpop.f32.mrb[0].mxu0
      %v7668 = vadd.f32 %v7595, %v7667
      %v7669 = vpop.f32.mrb[0].mxu0
      %7670 = vdwg.mxu0
      %7671 = vmatprep.subr.bf16.mxu0 0
      %7672 = vmatpush1.bf16.msra.mxu0 %v7299
      %7673 = vmatprep.subr.bf16.mxu0 0
      %7674 = vmatpush1.bf16.msra.mxu0 %v7300
      %7675 = vmatprep.subr.bf16.mxu0 0
      %7676 = vmatpush1.bf16.msra.mxu0 %v7301
      %7677 = vmatprep.subr.bf16.mxu0 0
      %7678 = vmatpush1.bf16.msra.mxu0 %v7302
      %7679 = vmatprep.subr.bf16.mxu0 0
      %7680 = vmatpush1.bf16.msra.mxu0 %v7303
      %7681 = vmatprep.subr.bf16.mxu0 0
      %7682 = vmatpush1.bf16.msra.mxu0 %v7304
      %7683 = vmatprep.subr.bf16.mxu0 0
      %7684 = vmatpush1.bf16.msra.mxu0 %v7305
      %7685 = vmatprep.subr.bf16.mxu0 0
      %7686 = vmatpush1.bf16.msra.mxu0 %v7306
      %7687 = vmatprep.subr.bf16.mxu0 0
      %7688 = vmatpush1.bf16.msra.mxu0 0
      %7689 = vmatprep.subr.bf16.mxu0 0
      %7690 = vmatpush1.bf16.msra.mxu0 0
      %7691 = vmatprep.subr.bf16.mxu0 0
      %7692 = vmatpush1.bf16.msra.mxu0 0
      %7693 = vmatprep.subr.bf16.mxu0 0
      %7694 = vmatpush1.bf16.msra.mxu0 0
      %7695 = vmatprep.subr.bf16.mxu0 0
      %7696 = vmatpush1.bf16.msra.mxu0 0
      %7697 = vmatprep.subr.bf16.mxu0 0
      %7698 = vmatpush1.bf16.msra.mxu0 0
      %7699 = vmatprep.subr.bf16.mxu0 0
      %7700 = vmatpush1.bf16.msra.mxu0 0
      %7701 = vmatprep.subr.bf16.mxu0 0
      %7702 = vmatpush1.bf16.msra.mxu0 0
      %7703 = vmatprep.mubr.bf16.mxu0 0
      %7704 = vmatmul.mubr.bf16.gmra.mrb[0].mxu0 %v6783
      %v7705 = vpop.f32.mrb[0].mxu0
      %v7706 = vadd.f32 %v7633, %v7705
      %v7707 = vpop.f32.mrb[0].mxu0
      %v7708 = vpop.f32.mrb[0].mxu0
      %v7709 = vadd.f32 %v7636, %v7708
      %v7710 = vpop.f32.mrb[0].mxu0
      %7711 = vmatprep.mubr.bf16.mxu0 0
      %7712 = vmatmul.mubr.bf16.gmra.mrb[0].mxu0 %v6785
      %v7713 = vpop.f32.mrb[0].mxu0
      %v7714 = vadd.f32 %v7641, %v7713
      %v7715 = vpop.f32.mrb[0].mxu0
      %v7716 = vpop.f32.mrb[0].mxu0
      %v7717 = vadd.f32 %v7644, %v7716
      %v7718 = vpop.f32.mrb[0].mxu0
      %7719 = vmatprep.mubr.bf16.mxu0 0
      %7720 = vmatmul.mubr.bf16.gmra.mrb[0].mxu0 %v6787
      %v7721 = vpop.f32.mrb[0].mxu0
      %v7722 = vadd.f32 %v7649, %v7721
      %v7723 = vpop.f32.mrb[0].mxu0
      %v7724 = vpop.f32.mrb[0].mxu0
      %v7725 = vadd.f32 %v7652, %v7724
      %v7726 = vpop.f32.mrb[0].mxu0
      %7727 = vmatprep.mubr.bf16.mxu0 0
      %7728 = vmatmul.mubr.bf16.gmra.mrb[0].mxu0 %v6789
      %v7729 = vpop.f32.mrb[0].mxu0
      %v7730 = vadd.f32 %v7657, %v7729
      %v7731 = vpop.f32.mrb[0].mxu0
      %v7732 = vpop.f32.mrb[0].mxu0
      %v7733 = vadd.f32 %v7660, %v7732
      %v7734 = vpop.f32.mrb[0].mxu0
      %7735 = vmatprep.mubr.bf16.mxu0 0
      %7736 = vmatmul.mubr.bf16.gmra.mrb[0].mxu0 %v6791
      %v7737 = vpop.f32.mrb[0].mxu0
      %v7738 = vadd.f32 %v7665, %v7737
      %v7739 = vpop.f32.mrb[0].mxu0
      %v7740 = vpop.f32.mrb[0].mxu0
      %v7741 = vadd.f32 %v7668, %v7740
      %v7742 = vpop.f32.mrb[0].mxu0
      %7743 = vdwg.mxu0
      %v7744 = vmax.f32 %v7706, 0.0
      %v7745 = vmax.f32 %v7709, 0.0
      %v7746 = vmax.f32 %v7714, 0.0
      %v7747 = vmax.f32 %v7717, 0.0
      %v7748 = vmax.f32 %v7722, 0.0
      %v7749 = vmax.f32 %v7725, 0.0
      %v7750 = vmax.f32 %v7730, 0.0
      %v7751 = vmax.f32 %v7733, 0.0
      %v7752 = vmax.f32 %v7738, 0.0
      %v7753 = vmax.f32 %v7741, 0.0
      %v7754 = vsel %vm2298, %v7744, 0.0
      %v7755 = vsel %vm2299, %v7745, 0.0
      %v7756 = vsel %vm2300, %v7746, 0.0
      %v7757 = vsel %vm2301, %v7747, 0.0
      %v7758 = vsel %vm2302, %v7748, 0.0
      %v7759 = vsel %vm2303, %v7749, 0.0
      %v7760 = vsel %vm2304, %v7750, 0.0
      %v7761 = vsel %vm2305, %v7751, 0.0
      %v7762 = vsel %vm2306, %v7752, 0.0
      %v7763 = vsel %vm2307, %v7753, 0.0
      %v7764 = vpack.c.bf16 %v7755, %v7754
      %v7765 = vpack.c.bf16 %v7757, %v7756
      %v7766 = vpack.c.bf16 %v7759, %v7758
      %v7767 = vpack.c.bf16 %v7761, %v7760
      %v7768 = vpack.c.bf16 %v7763, %v7762
      %v7770 = vshrl.u32 %v7764, 16
      %v7772 = vrot.slane %v7770, 2
      %v7773 = vshll.u32 %v7764, 16
      %v7775 = vrot.slane %v7773, 3
      %v7776 = vor.u32 %v7772, %v7775
      %v7778 = vshrl.u32 %v7765, 16
      %v7780 = vrot.slane %v7778, 2
      %v7781 = vshll.u32 %v7765, 16
      %v7783 = vrot.slane %v7781, 3
      %v7784 = vor.u32 %v7780, %v7783
      %v7785 = vsel %vm173, %v7776, %v7784
      %v7787 = vshrl.u32 %v7766, 16
      %v7789 = vrot.slane %v7787, 2
      %v7790 = vshll.u32 %v7766, 16
      %v7792 = vrot.slane %v7790, 3
      %v7793 = vor.u32 %v7789, %v7792
      %v7794 = vsel %vm173, %v7784, %v7793
      %v7796 = vshrl.u32 %v7767, 16
      %v7798 = vrot.slane %v7796, 2
      %v7799 = vshll.u32 %v7767, 16
      %v7801 = vrot.slane %v7799, 3
      %v7802 = vor.u32 %v7798, %v7801
      %v7803 = vsel %vm173, %v7793, %v7802
      %v7805 = vshrl.u32 %v7768, 16
      %v7807 = vrot.slane %v7805, 2
      %v7808 = vshll.u32 %v7768, 16
      %v7810 = vrot.slane %v7808, 3
      %v7811 = vor.u32 %v7807, %v7810
      %v7812 = vsel %vm173, %v7802, %v7811
      %v7819 = vld [vmem:[#allocation3] sm:$0xe0]
      %v7820 = vsel %vm180, %v7776, %v7819
      %7821 = vst [vmem:[#allocation3] sm:$0xe0] %v7820
      %7822 = vst [vmem:[#allocation3 + $0x8] sm:$0xff] %v7785
      %7823 = vst [vmem:[#allocation3 + $0x10] sm:$0xff] %v7794
      %7824 = vst [vmem:[#allocation3 + $0x18] sm:$0xff] %v7803
      %7825 = vst [vmem:[#allocation3 + $0x20] sm:$0xff] %v7812
      %v7826 = vld [vmem:[#allocation3 + $0x28] sm:$0x3f]
      %v7827 = vsel %vm174, %v7811, %v7826
      %7828 = vst [vmem:[#allocation3 + $0x28] sm:$0x3f] %v7827
      %v7829 = vld [vmem:[#allocation3] sm:$0xff]
      %v7830 = vld [vmem:[#allocation3 + $0x8] sm:$0xff]
      %v7831 = vld [vmem:[#allocation3 + $0x10] sm:$0xff]
      %v7832 = vld [vmem:[#allocation3 + $0x18] sm:$0xff]
      %v7833 = vld [vmem:[#allocation3 + $0x20] sm:$0xff]
      %v7834 = vld [vmem:[#allocation3 + $0x28] sm:$0x1]
      %v7835 = vld [vmem:[#allocation3] sm:$0xfe]
      %v7836 = vld [vmem:[#allocation3] sm:$0xe0]
      %v7837 = vld [vmem:[#allocation3 + $0x28] sm:$0x1f]
      %v7838 = vld [vmem:[#allocation3 + $0x28] sm:$0x3f]
      %v7839 = vld [vmem:[#allocation3] sm:$0xc0]
      %v7840 = vld [vmem:[#allocation3 + $0x8] sm:$0xfc]
      %v7841 = vld [vmem:[#allocation3 + $0x10] sm:$0xff]
      %v7842 = vld [vmem:[#allocation3 + $0x18] sm:$0xff]
      %v7843 = vld [vmem:[#allocation3 + $0x20] sm:$0xff]
      %v7844 = vld [vmem:[#allocation3 + $0x28] sm:$0xff]
      %v7845 = vld [vmem:[#allocation3 + $0x30] sm:$0x3]
      %v7846 = vld [vmem:[#allocation3 + $0x30] sm:$0x7]
      %v7847 = vld [vmem:[#allocation3 + $0x8] sm:$0xf8]
      %v7849 = vshrl.u32 %v7829, 16
      %v7851 = vshll.u32 %v7829, 16
      %v7853 = vrot.slane %v7851, 1
      %v7854 = vor.u32 %v7849, %v7853
      %v7856 = vshll.u32 %v7830, 16
      %v7858 = vrot.slane %v7856, 1
      %v7859 = vsel %vm1083, %v7854, %v7858
      %v7860 = vshrl.u32 %v7830, 16
      %v7862 = vor.u32 %v7860, %v7858
      %v7864 = vshll.u32 %v7831, 16
      %v7866 = vrot.slane %v7864, 1
      %v7867 = vsel %vm1083, %v7862, %v7866
      %v7868 = vshrl.u32 %v7831, 16
      %v7870 = vor.u32 %v7868, %v7866
      %v7872 = vshll.u32 %v7832, 16
      %v7874 = vrot.slane %v7872, 1
      %v7875 = vsel %vm1083, %v7870, %v7874
      %v7876 = vshrl.u32 %v7832, 16
      %v7878 = vor.u32 %v7876, %v7874
      %v7880 = vshll.u32 %v7833, 16
      %v7882 = vrot.slane %v7880, 1
      %v7883 = vsel %vm1083, %v7878, %v7882
      %v7884 = vshrl.u32 %v7833, 16
      %v7886 = vor.u32 %v7884, %v7882
      %v7888 = vshll.u32 %v7834, 16
      %v7890 = vrot.slane %v7888, 1
      %v7891 = vsel %vm1083, %v7886, %v7890
      %v7903 = vrot.slane %v7835, 1
      %v7904 = vrot.slane %v7830, 1
      %v7905 = vsel %vm1139, %v7903, %v7904
      %v7906 = vrot.slane %v7831, 1
      %v7907 = vsel %vm1139, %v7904, %v7906
      %v7908 = vrot.slane %v7832, 1
      %v7909 = vsel %vm1139, %v7906, %v7908
      %v7910 = vrot.slane %v7833, 1
      %v7911 = vsel %vm1139, %v7908, %v7910
      %v7912 = vrot.slane %v7834, 1
      %v7913 = vsel %vm1139, %v7910, %v7912
      %v7921 = vrot.slane %v7836, 5
      %v7922 = vrot.slane %v7830, 5
      %v7923 = vsel %vm1158, %v7921, %v7922
      %v7924 = vrot.slane %v7831, 5
      %v7925 = vsel %vm1158, %v7922, %v7924
      %v7926 = vrot.slane %v7832, 5
      %v7927 = vsel %vm1158, %v7924, %v7926
      %v7928 = vrot.slane %v7833, 5
      %v7929 = vsel %vm1158, %v7926, %v7928
      %v7930 = vrot.slane %v7837, 5
      %v7931 = vsel %vm1158, %v7928, %v7930
      %v7938 = vshrl.u32 %v7836, 16
      %v7940 = vrot.slane %v7938, 5
      %v7941 = vshll.u32 %v7836, 16
      %v7943 = vrot.slane %v7941, 6
      %v7944 = vor.u32 %v7940, %v7943
      %v7945 = vrot.slane %v7860, 5
      %v7946 = vrot.slane %v7856, 6
      %v7947 = vor.u32 %v7945, %v7946
      %v7948 = vsel %vm1175, %v7944, %v7947
      %v7949 = vrot.slane %v7868, 5
      %v7950 = vrot.slane %v7864, 6
      %v7951 = vor.u32 %v7949, %v7950
      %v7952 = vsel %vm1175, %v7947, %v7951
      %v7953 = vrot.slane %v7876, 5
      %v7954 = vrot.slane %v7872, 6
      %v7955 = vor.u32 %v7953, %v7954
      %v7956 = vsel %vm1175, %v7951, %v7955
      %v7957 = vrot.slane %v7884, 5
      %v7958 = vrot.slane %v7880, 6
      %v7959 = vor.u32 %v7957, %v7958
      %v7960 = vsel %vm1175, %v7955, %v7959
      %v7962 = vshrl.u32 %v7838, 16
      %v7964 = vrot.slane %v7962, 5
      %v7965 = vshll.u32 %v7838, 16
      %v7967 = vrot.slane %v7965, 6
      %v7968 = vor.u32 %v7964, %v7967
      %v7969 = vsel %vm1175, %v7959, %v7968
      %v7977 = vrot.slane %v7839, 6
      %v7978 = vrot.slane %v7830, 6
      %v7979 = vsel %vm1216, %v7977, %v7978
      %v7980 = vrot.slane %v7831, 6
      %v7981 = vsel %vm1216, %v7978, %v7980
      %v7982 = vrot.slane %v7832, 6
      %v7983 = vsel %vm1216, %v7980, %v7982
      %v7984 = vrot.slane %v7833, 6
      %v7985 = vsel %vm1216, %v7982, %v7984
      %v7986 = vrot.slane %v7838, 6
      %v7987 = vsel %vm1216, %v7984, %v7986
      %v7999 = vrot.slane %v7840, 2
      %v8000 = vrot.slane %v7841, 2
      %v8001 = vsel %vm172, %v7999, %v8000
      %v8002 = vrot.slane %v7842, 2
      %v8003 = vsel %vm172, %v8000, %v8002
      %v8004 = vrot.slane %v7843, 2
      %v8005 = vsel %vm172, %v8002, %v8004
      %v8006 = vrot.slane %v7844, 2
      %v8007 = vsel %vm172, %v8004, %v8006
      %v8008 = vrot.slane %v7845, 2
      %v8009 = vsel %vm172, %v8006, %v8008
      %v8016 = vshrl.u32 %v7840, 16
      %v8018 = vrot.slane %v8016, 2
      %v8019 = vshll.u32 %v7840, 16
      %v8021 = vrot.slane %v8019, 3
      %v8022 = vor.u32 %v8018, %v8021
      %v8024 = vshrl.u32 %v7841, 16
      %v8026 = vrot.slane %v8024, 2
      %v8027 = vshll.u32 %v7841, 16
      %v8029 = vrot.slane %v8027, 3
      %v8030 = vor.u32 %v8026, %v8029
      %v8031 = vsel %vm173, %v8022, %v8030
      %v8033 = vshrl.u32 %v7842, 16
      %v8035 = vrot.slane %v8033, 2
      %v8036 = vshll.u32 %v7842, 16
      %v8038 = vrot.slane %v8036, 3
      %v8039 = vor.u32 %v8035, %v8038
      %v8040 = vsel %vm173, %v8030, %v8039
      %v8042 = vshrl.u32 %v7843, 16
      %v8044 = vrot.slane %v8042, 2
      %v8045 = vshll.u32 %v7843, 16
      %v8047 = vrot.slane %v8045, 3
      %v8048 = vor.u32 %v8044, %v8047
      %v8049 = vsel %vm173, %v8039, %v8048
      %v8051 = vshrl.u32 %v7844, 16
      %v8053 = vrot.slane %v8051, 2
      %v8054 = vshll.u32 %v7844, 16
      %v8056 = vrot.slane %v8054, 3
      %v8057 = vor.u32 %v8053, %v8056
      %v8058 = vsel %vm173, %v8048, %v8057
      %v8060 = vshrl.u32 %v7846, 16
      %v8062 = vrot.slane %v8060, 2
      %v8063 = vshll.u32 %v7846, 16
      %v8065 = vrot.slane %v8063, 3
      %v8066 = vor.u32 %v8062, %v8065
      %v8067 = vsel %vm173, %v8057, %v8066
      %v8075 = vrot.slane %v7847, 3
      %v8076 = vrot.slane %v7841, 3
      %v8077 = vsel %vm1315, %v8075, %v8076
      %v8078 = vrot.slane %v7842, 3
      %v8079 = vsel %vm1315, %v8076, %v8078
      %v8080 = vrot.slane %v7843, 3
      %v8081 = vsel %vm1315, %v8078, %v8080
      %v8082 = vrot.slane %v7844, 3
      %v8083 = vsel %vm1315, %v8080, %v8082
      %v8084 = vrot.slane %v7846, 3
      %v8085 = vsel %vm1315, %v8082, %v8084
      %s8091 = scalar_lea.vmem %s1, 2880
      %v8092 = vld [vmem:[%s8091] sm:$0xf]
      %v8093 = vld [vmem:[%s8091 + $0x4] sm:$0xf]
      %v8094 = vld [vmem:[%s8091 + $0x8] sm:$0xf]
      %v8095 = vld [vmem:[%s8091 + $0xc] sm:$0xf]
      %v8096 = vld [vmem:[%s8091 + $0x10] sm:$0xf]
      %v8097 = vld [vmem:[%s8091 + $0x14] sm:$0xf]
      %v8098 = vld [vmem:[%s8091 + $0x18] sm:$0xf]
      %v8099 = vld [vmem:[%s8091 + $0x1c] sm:$0xf]
      %v8100 = vld [vmem:[%s8091 + $0x20] sm:$0xf]
      %v8101 = vld [vmem:[%s8091 + $0x24] sm:$0xf]
      %v8102 = vld [vmem:[%s8091 + $0x28] sm:$0xf]
      %v8103 = vld [vmem:[%s8091 + $0x2c] sm:$0xf]
      %v8104 = vld [vmem:[%s8091 + $0x30] sm:$0xf]
      %v8105 = vld [vmem:[%s8091 + $0x34] sm:$0xf]
      %v8106 = vld [vmem:[%s8091 + $0x38] sm:$0xf]
      %v8107 = vld [vmem:[%s8091 + $0x3c] sm:$0xf]
      %v8108 = vld [vmem:[%s8091 + $0x40] sm:$0xf]
      %v8109 = vld [vmem:[%s8091 + $0x44] sm:$0xf]
      %v8110 = vld [vmem:[%s8091 + $0x48] sm:$0xf]
      %v8111 = vld [vmem:[%s8091 + $0x4c] sm:$0xf]
      %v8112 = vld [vmem:[%s8091 + $0x50] sm:$0xf]
      %v8113 = vld [vmem:[%s8091 + $0x54] sm:$0xf]
      %v8114 = vld [vmem:[%s8091 + $0x58] sm:$0xf]
      %v8115 = vld [vmem:[%s8091 + $0x5c] sm:$0xf]
      %v8116 = vld [vmem:[%s8091 + $0x60] sm:$0xf]
      %v8117 = vld [vmem:[%s8091 + $0x64] sm:$0xf]
      %v8118 = vld [vmem:[%s8091 + $0x68] sm:$0xf]
      %v8119 = vld [vmem:[%s8091 + $0x6c] sm:$0xf]
      %v8120 = vld [vmem:[%s8091 + $0x70] sm:$0xf]
      %v8121 = vld [vmem:[%s8091 + $0x74] sm:$0xf]
      %v8122 = vld [vmem:[%s8091 + $0x78] sm:$0xf]
      %v8123 = vld [vmem:[%s8091 + $0x7c] sm:$0xf]
      %v8124 = vld [vmem:[%s8091 + $0x80] sm:$0xf]
      %v8125 = vld [vmem:[%s8091 + $0x84] sm:$0xf]
      %v8126 = vld [vmem:[%s8091 + $0x88] sm:$0xf]
      %v8127 = vld [vmem:[%s8091 + $0x8c] sm:$0xf]
      %v8128 = vld [vmem:[%s8091 + $0x90] sm:$0xf]
      %v8129 = vld [vmem:[%s8091 + $0x94] sm:$0xf]
      %v8130 = vld [vmem:[%s8091 + $0x98] sm:$0xf]
      %v8131 = vld [vmem:[%s8091 + $0x9c] sm:$0xf]
      %v8132 = vld [vmem:[%s8091 + $0xa0] sm:$0xf]
      %v8133 = vld [vmem:[%s8091 + $0xa4] sm:$0xf]
      %v8134 = vld [vmem:[%s8091 + $0xa8] sm:$0xf]
      %v8135 = vld [vmem:[%s8091 + $0xac] sm:$0xf]
      %v8136 = vld [vmem:[%s8091 + $0xb0] sm:$0xf]
      %v8137 = vld [vmem:[%s8091 + $0xb4] sm:$0xf]
      %v8138 = vld [vmem:[%s8091 + $0xb8] sm:$0xf]
      %v8139 = vld [vmem:[%s8091 + $0xbc] sm:$0xf]
      %v8140 = vld [vmem:[%s8091 + $0xc0] sm:$0xf]
      %v8141 = vld [vmem:[%s8091 + $0xc4] sm:$0xf]
      %v8142 = vld [vmem:[%s8091 + $0xc8] sm:$0xf]
      %v8143 = vld [vmem:[%s8091 + $0xcc] sm:$0xf]
      %v8144 = vld [vmem:[%s8091 + $0xd0] sm:$0xf]
      %v8145 = vld [vmem:[%s8091 + $0xd4] sm:$0xf]
      %v8146 = vld [vmem:[%s8091 + $0xd8] sm:$0xf]
      %v8147 = vld [vmem:[%s8091 + $0xdc] sm:$0xf]
      %v8148 = vld [vmem:[%s8091 + $0xe0] sm:$0xf]
      %v8149 = vld [vmem:[%s8091 + $0xe4] sm:$0xf]
      %v8150 = vld [vmem:[%s8091 + $0xe8] sm:$0xf]
      %v8151 = vld [vmem:[%s8091 + $0xec] sm:$0xf]
      %v8152 = vld [vmem:[%s8091 + $0xf0] sm:$0xf]
      %v8153 = vld [vmem:[%s8091 + $0xf4] sm:$0xf]
      %v8154 = vld [vmem:[%s8091 + $0xf8] sm:$0xf]
      %v8155 = vld [vmem:[%s8091 + $0xfc] sm:$0xf]
      %v8156 = vld [vmem:[%s8091 + $0x100] sm:$0xf]
      %v8157 = vld [vmem:[%s8091 + $0x104] sm:$0xf]
      %v8158 = vld [vmem:[%s8091 + $0x108] sm:$0xf]
      %v8159 = vld [vmem:[%s8091 + $0x10c] sm:$0xf]
      %v8160 = vld [vmem:[%s8091 + $0x110] sm:$0xf]
      %v8161 = vld [vmem:[%s8091 + $0x114] sm:$0xf]
      %v8162 = vld [vmem:[%s8091 + $0x118] sm:$0xf]
      %v8163 = vld [vmem:[%s8091 + $0x11c] sm:$0xf]
      %v8164 = vld [vmem:[%s8091 + $0x120] sm:$0xf]
      %v8165 = vld [vmem:[%s8091 + $0x124] sm:$0xf]
      %v8166 = vld [vmem:[%s8091 + $0x128] sm:$0xf]
      %v8167 = vld [vmem:[%s8091 + $0x12c] sm:$0xf]
      %v8168 = vld [vmem:[%s8091 + $0x130] sm:$0xf]
      %v8169 = vld [vmem:[%s8091 + $0x134] sm:$0xf]
      %v8170 = vld [vmem:[%s8091 + $0x138] sm:$0xf]
      %v8171 = vld [vmem:[%s8091 + $0x13c] sm:$0xf]
      %v8172 = vld [vmem:[%s8091 + $0x140] sm:$0xf]
      %v8173 = vld [vmem:[%s8091 + $0x144] sm:$0xf]
      %v8174 = vld [vmem:[%s8091 + $0x148] sm:$0xf]
      %v8175 = vld [vmem:[%s8091 + $0x14c] sm:$0xf]
      %v8176 = vld [vmem:[%s8091 + $0x150] sm:$0xf]
      %v8177 = vld [vmem:[%s8091 + $0x154] sm:$0xf]
      %v8178 = vld [vmem:[%s8091 + $0x158] sm:$0xf]
      %v8179 = vld [vmem:[%s8091 + $0x15c] sm:$0xf]
      %v8180 = vld [vmem:[%s8091 + $0x160] sm:$0xf]
      %v8181 = vld [vmem:[%s8091 + $0x164] sm:$0xf]
      %v8182 = vld [vmem:[%s8091 + $0x168] sm:$0xf]
      %v8183 = vld [vmem:[%s8091 + $0x16c] sm:$0xf]
      %v8184 = vld [vmem:[%s8091 + $0x170] sm:$0xf]
      %v8185 = vld [vmem:[%s8091 + $0x174] sm:$0xf]
      %v8186 = vld [vmem:[%s8091 + $0x178] sm:$0xf]
      %v8187 = vld [vmem:[%s8091 + $0x17c] sm:$0xf]
      %v8188 = vld [vmem:[%s8091 + $0x180] sm:$0xf]
      %v8189 = vld [vmem:[%s8091 + $0x184] sm:$0xf]
      %v8190 = vld [vmem:[%s8091 + $0x188] sm:$0xf]
      %v8191 = vld [vmem:[%s8091 + $0x18c] sm:$0xf]
      %v8192 = vld [vmem:[%s8091 + $0x190] sm:$0xf]
      %v8193 = vld [vmem:[%s8091 + $0x194] sm:$0xf]
      %v8194 = vld [vmem:[%s8091 + $0x198] sm:$0xf]
      %v8195 = vld [vmem:[%s8091 + $0x19c] sm:$0xf]
      %v8196 = vld [vmem:[%s8091 + $0x1a0] sm:$0xf]
      %v8197 = vld [vmem:[%s8091 + $0x1a4] sm:$0xf]
      %v8198 = vld [vmem:[%s8091 + $0x1a8] sm:$0xf]
      %v8199 = vld [vmem:[%s8091 + $0x1ac] sm:$0xf]
      %v8200 = vld [vmem:[%s8091 + $0x1b0] sm:$0xf]
      %v8201 = vld [vmem:[%s8091 + $0x1b4] sm:$0xf]
      %v8202 = vld [vmem:[%s8091 + $0x1b8] sm:$0xf]
      %v8203 = vld [vmem:[%s8091 + $0x1bc] sm:$0xf]
      %v8204 = vld [vmem:[%s8091 + $0x1c0] sm:$0xf]
      %v8205 = vld [vmem:[%s8091 + $0x1c4] sm:$0xf]
      %v8206 = vld [vmem:[%s8091 + $0x1c8] sm:$0xf]
      %v8207 = vld [vmem:[%s8091 + $0x1cc] sm:$0xf]
      %v8208 = vld [vmem:[%s8091 + $0x1d0] sm:$0xf]
      %v8209 = vld [vmem:[%s8091 + $0x1d4] sm:$0xf]
      %v8210 = vld [vmem:[%s8091 + $0x1d8] sm:$0xf]
      %v8211 = vld [vmem:[%s8091 + $0x1dc] sm:$0xf]
      %v8212 = vld [vmem:[%s8091 + $0x1e0] sm:$0xf]
      %v8213 = vld [vmem:[%s8091 + $0x1e4] sm:$0xf]
      %v8214 = vld [vmem:[%s8091 + $0x1e8] sm:$0xf]
      %v8215 = vld [vmem:[%s8091 + $0x1ec] sm:$0xf]
      %v8216 = vld [vmem:[%s8091 + $0x1f0] sm:$0xf]
      %v8217 = vld [vmem:[%s8091 + $0x1f4] sm:$0xf]
      %v8218 = vld [vmem:[%s8091 + $0x1f8] sm:$0xf]
      %v8219 = vld [vmem:[%s8091 + $0x1fc] sm:$0xf]
      %v8220 = vld [vmem:[%s8091 + $0x200] sm:$0xf]
      %v8221 = vld [vmem:[%s8091 + $0x204] sm:$0xf]
      %v8222 = vld [vmem:[%s8091 + $0x208] sm:$0xf]
      %v8223 = vld [vmem:[%s8091 + $0x20c] sm:$0xf]
      %v8224 = vld [vmem:[%s8091 + $0x210] sm:$0xf]
      %v8225 = vld [vmem:[%s8091 + $0x214] sm:$0xf]
      %v8226 = vld [vmem:[%s8091 + $0x218] sm:$0xf]
      %v8227 = vld [vmem:[%s8091 + $0x21c] sm:$0xf]
      %v8228 = vld [vmem:[%s8091 + $0x220] sm:$0xf]
      %v8229 = vld [vmem:[%s8091 + $0x224] sm:$0xf]
      %v8230 = vld [vmem:[%s8091 + $0x228] sm:$0xf]
      %v8231 = vld [vmem:[%s8091 + $0x22c] sm:$0xf]
      %v8232 = vld [vmem:[%s8091 + $0x230] sm:$0xf]
      %v8233 = vld [vmem:[%s8091 + $0x234] sm:$0xf]
      %v8234 = vld [vmem:[%s8091 + $0x238] sm:$0xf]
      %v8235 = vld [vmem:[%s8091 + $0x23c] sm:$0xf]
      %v8236 = vld [vmem:[%s2 + $0x5] sm:$0x1]
      %v8237 = vlaneseq
      %v8238 = vshrl.u32 %v8237, 7
      %v8239 = vsub.s32 0, %v8238
      %v8240 = vrot.slane %v8236, %v8239
      %v8385 = vunpack.c.l.b16 %v8092
      %v8386 = vunpack.c.l.b16 %v8093
      %v8387 = vunpack.c.l.b16 %v8094
      %v8388 = vunpack.c.l.b16 %v8095
      %v8389 = vunpack.c.l.b16 %v8096
      %v8390 = vunpack.c.l.b16 %v8097
      %v8391 = vunpack.c.l.b16 %v8098
      %v8392 = vunpack.c.l.b16 %v8099
      %v8393 = vunpack.c.l.b16 %v8100
      %v8394 = vunpack.c.l.b16 %v8101
      %v8395 = vunpack.c.l.b16 %v8102
      %v8396 = vunpack.c.l.b16 %v8103
      %v8397 = vunpack.c.l.b16 %v8104
      %v8398 = vunpack.c.l.b16 %v8105
      %v8399 = vunpack.c.l.b16 %v8106
      %v8400 = vunpack.c.l.b16 %v8107
      %v8401 = vunpack.c.l.b16 %v8108
      %v8402 = vunpack.c.l.b16 %v8109
      %v8403 = vunpack.c.l.b16 %v8110
      %v8404 = vunpack.c.l.b16 %v8111
      %v8405 = vunpack.c.l.b16 %v8112
      %v8406 = vunpack.c.l.b16 %v8113
      %v8407 = vunpack.c.l.b16 %v8114
      %v8408 = vunpack.c.l.b16 %v8115
      %v8409 = vunpack.c.l.b16 %v8116
      %v8410 = vunpack.c.l.b16 %v8117
      %v8411 = vunpack.c.l.b16 %v8118
      %v8412 = vunpack.c.l.b16 %v8119
      %v8413 = vunpack.c.l.b16 %v8120
      %v8414 = vunpack.c.l.b16 %v8121
      %v8415 = vunpack.c.l.b16 %v8122
      %v8416 = vunpack.c.l.b16 %v8123
      %v8417 = vunpack.c.l.b16 %v8124
      %v8418 = vunpack.c.l.b16 %v8125
      %v8419 = vunpack.c.l.b16 %v8126
      %v8420 = vunpack.c.l.b16 %v8127
      %v8421 = vunpack.c.l.b16 %v8128
      %v8422 = vunpack.c.l.b16 %v8129
      %v8423 = vunpack.c.l.b16 %v8130
      %v8424 = vunpack.c.l.b16 %v8131
      %v8425 = vunpack.c.l.b16 %v8132
      %v8426 = vunpack.c.l.b16 %v8133
      %v8427 = vunpack.c.l.b16 %v8134
      %v8428 = vunpack.c.l.b16 %v8135
      %v8429 = vunpack.c.l.b16 %v8136
      %v8430 = vunpack.c.l.b16 %v8137
      %v8431 = vunpack.c.l.b16 %v8138
      %v8432 = vunpack.c.l.b16 %v8139
      %v8433 = vunpack.c.l.b16 %v8140
      %v8434 = vunpack.c.l.b16 %v8141
      %v8435 = vunpack.c.l.b16 %v8142
      %v8436 = vunpack.c.l.b16 %v8143
      %v8437 = vunpack.c.l.b16 %v8144
      %v8438 = vunpack.c.l.b16 %v8145
      %v8439 = vunpack.c.l.b16 %v8146
      %v8440 = vunpack.c.l.b16 %v8147
      %v8441 = vunpack.c.l.b16 %v8148
      %v8442 = vunpack.c.l.b16 %v8149
      %v8443 = vunpack.c.l.b16 %v8150
      %v8444 = vunpack.c.l.b16 %v8151
      %v8445 = vunpack.c.l.b16 %v8152
      %v8446 = vunpack.c.l.b16 %v8153
      %v8447 = vunpack.c.l.b16 %v8154
      %v8448 = vunpack.c.l.b16 %v8155
      %v8449 = vunpack.c.l.b16 %v8156
      %v8450 = vunpack.c.l.b16 %v8157
      %v8451 = vunpack.c.l.b16 %v8158
      %v8452 = vunpack.c.l.b16 %v8159
      %v8453 = vunpack.c.l.b16 %v8160
      %v8454 = vunpack.c.l.b16 %v8161
      %v8455 = vunpack.c.l.b16 %v8162
      %v8456 = vunpack.c.l.b16 %v8163
      %v8457 = vunpack.c.l.b16 %v8164
      %v8458 = vunpack.c.l.b16 %v8165
      %v8459 = vunpack.c.l.b16 %v8166
      %v8460 = vunpack.c.l.b16 %v8167
      %v8461 = vunpack.c.l.b16 %v8168
      %v8462 = vunpack.c.l.b16 %v8169
      %v8463 = vunpack.c.l.b16 %v8170
      %v8464 = vunpack.c.l.b16 %v8171
      %v8465 = vunpack.c.l.b16 %v8172
      %v8466 = vunpack.c.l.b16 %v8173
      %v8467 = vunpack.c.l.b16 %v8174
      %v8468 = vunpack.c.l.b16 %v8175
      %v8469 = vunpack.c.l.b16 %v8176
      %v8470 = vunpack.c.l.b16 %v8177
      %v8471 = vunpack.c.l.b16 %v8178
      %v8472 = vunpack.c.l.b16 %v8179
      %v8473 = vunpack.c.l.b16 %v8180
      %v8474 = vunpack.c.l.b16 %v8181
      %v8475 = vunpack.c.l.b16 %v8182
      %v8476 = vunpack.c.l.b16 %v8183
      %v8477 = vunpack.c.l.b16 %v8184
      %v8478 = vunpack.c.l.b16 %v8185
      %v8479 = vunpack.c.l.b16 %v8186
      %v8480 = vunpack.c.l.b16 %v8187
      %v8481 = vunpack.c.l.b16 %v8188
      %v8482 = vunpack.c.l.b16 %v8189
      %v8483 = vunpack.c.l.b16 %v8190
      %v8484 = vunpack.c.l.b16 %v8191
      %v8485 = vunpack.c.l.b16 %v8192
      %v8486 = vunpack.c.l.b16 %v8193
      %v8487 = vunpack.c.l.b16 %v8194
      %v8488 = vunpack.c.l.b16 %v8195
      %v8489 = vunpack.c.l.b16 %v8196
      %v8490 = vunpack.c.l.b16 %v8197
      %v8491 = vunpack.c.l.b16 %v8198
      %v8492 = vunpack.c.l.b16 %v8199
      %v8493 = vunpack.c.l.b16 %v8200
      %v8494 = vunpack.c.l.b16 %v8201
      %v8495 = vunpack.c.l.b16 %v8202
      %v8496 = vunpack.c.l.b16 %v8203
      %v8497 = vunpack.c.l.b16 %v8204
      %v8498 = vunpack.c.l.b16 %v8205
      %v8499 = vunpack.c.l.b16 %v8206
      %v8500 = vunpack.c.l.b16 %v8207
      %v8501 = vunpack.c.l.b16 %v8208
      %v8502 = vunpack.c.l.b16 %v8209
      %v8503 = vunpack.c.l.b16 %v8210
      %v8504 = vunpack.c.l.b16 %v8211
      %v8505 = vunpack.c.l.b16 %v8212
      %v8506 = vunpack.c.l.b16 %v8213
      %v8507 = vunpack.c.l.b16 %v8214
      %v8508 = vunpack.c.l.b16 %v8215
      %v8509 = vunpack.c.l.b16 %v8216
      %v8510 = vunpack.c.l.b16 %v8217
      %v8511 = vunpack.c.l.b16 %v8218
      %v8512 = vunpack.c.l.b16 %v8219
      %v8513 = vunpack.c.l.b16 %v8220
      %v8514 = vunpack.c.l.b16 %v8221
      %v8515 = vunpack.c.l.b16 %v8222
      %v8516 = vunpack.c.l.b16 %v8223
      %v8517 = vunpack.c.l.b16 %v8224
      %v8518 = vunpack.c.l.b16 %v8225
      %v8519 = vunpack.c.l.b16 %v8226
      %v8520 = vunpack.c.l.b16 %v8227
      %v8521 = vunpack.c.l.b16 %v8228
      %v8522 = vunpack.c.l.b16 %v8229
      %v8523 = vunpack.c.l.b16 %v8230
      %v8524 = vunpack.c.l.b16 %v8231
      %v8525 = vunpack.c.l.b16 %v8232
      %v8526 = vunpack.c.l.b16 %v8233
      %v8527 = vunpack.c.l.b16 %v8234
      %v8528 = vunpack.c.l.b16 %v8235
      %v8529 = vpack.c.b16 %v8386, %v8385
      %v8530 = vpack.c.b16 %v8388, %v8387
      %v8531 = vpack.c.b16 %v8390, %v8389
      %v8532 = vpack.c.b16 %v8392, %v8391
      %v8533 = vpack.c.b16 %v8394, %v8393
      %v8534 = vpack.c.b16 %v8396, %v8395
      %v8535 = vpack.c.b16 %v8398, %v8397
      %v8536 = vpack.c.b16 %v8400, %v8399
      %v8537 = vpack.c.b16 %v8402, %v8401
      %v8538 = vpack.c.b16 %v8404, %v8403
      %v8539 = vpack.c.b16 %v8406, %v8405
      %v8540 = vpack.c.b16 %v8408, %v8407
      %v8541 = vpack.c.b16 %v8410, %v8409
      %v8542 = vpack.c.b16 %v8412, %v8411
      %v8543 = vpack.c.b16 %v8414, %v8413
      %v8544 = vpack.c.b16 %v8416, %v8415
      %v8545 = vpack.c.b16 %v8418, %v8417
      %v8546 = vpack.c.b16 %v8420, %v8419
      %v8547 = vpack.c.b16 %v8422, %v8421
      %v8548 = vpack.c.b16 %v8424, %v8423
      %v8549 = vpack.c.b16 %v8426, %v8425
      %v8550 = vpack.c.b16 %v8428, %v8427
      %v8551 = vpack.c.b16 %v8430, %v8429
      %v8552 = vpack.c.b16 %v8432, %v8431
      %v8553 = vpack.c.b16 %v8434, %v8433
      %v8554 = vpack.c.b16 %v8436, %v8435
      %v8555 = vpack.c.b16 %v8438, %v8437
      %v8556 = vpack.c.b16 %v8440, %v8439
      %v8557 = vpack.c.b16 %v8442, %v8441
      %v8558 = vpack.c.b16 %v8444, %v8443
      %v8559 = vpack.c.b16 %v8446, %v8445
      %v8560 = vpack.c.b16 %v8448, %v8447
      %v8561 = vpack.c.b16 %v8450, %v8449
      %v8562 = vpack.c.b16 %v8452, %v8451
      %v8563 = vpack.c.b16 %v8454, %v8453
      %v8564 = vpack.c.b16 %v8456, %v8455
      %v8565 = vpack.c.b16 %v8458, %v8457
      %v8566 = vpack.c.b16 %v8460, %v8459
      %v8567 = vpack.c.b16 %v8462, %v8461
      %v8568 = vpack.c.b16 %v8464, %v8463
      %v8569 = vpack.c.b16 %v8466, %v8465
      %v8570 = vpack.c.b16 %v8468, %v8467
      %v8571 = vpack.c.b16 %v8470, %v8469
      %v8572 = vpack.c.b16 %v8472, %v8471
      %v8573 = vpack.c.b16 %v8474, %v8473
      %v8574 = vpack.c.b16 %v8476, %v8475
      %v8575 = vpack.c.b16 %v8478, %v8477
      %v8576 = vpack.c.b16 %v8480, %v8479
      %v8577 = vpack.c.b16 %v8482, %v8481
      %v8578 = vpack.c.b16 %v8484, %v8483
      %v8579 = vpack.c.b16 %v8486, %v8485
      %v8580 = vpack.c.b16 %v8488, %v8487
      %v8581 = vpack.c.b16 %v8490, %v8489
      %v8582 = vpack.c.b16 %v8492, %v8491
      %v8583 = vpack.c.b16 %v8494, %v8493
      %v8584 = vpack.c.b16 %v8496, %v8495
      %v8585 = vpack.c.b16 %v8498, %v8497
      %v8586 = vpack.c.b16 %v8500, %v8499
      %v8587 = vpack.c.b16 %v8502, %v8501
      %v8588 = vpack.c.b16 %v8504, %v8503
      %v8589 = vpack.c.b16 %v8506, %v8505
      %v8590 = vpack.c.b16 %v8508, %v8507
      %v8591 = vpack.c.b16 %v8510, %v8509
      %v8592 = vpack.c.b16 %v8512, %v8511
      %v8593 = vpack.c.b16 %v8514, %v8513
      %v8594 = vpack.c.b16 %v8516, %v8515
      %v8595 = vpack.c.b16 %v8518, %v8517
      %v8596 = vpack.c.b16 %v8520, %v8519
      %v8597 = vpack.c.b16 %v8522, %v8521
      %v8598 = vpack.c.b16 %v8524, %v8523
      %v8599 = vpack.c.b16 %v8526, %v8525
      %v8600 = vpack.c.b16 %v8528, %v8527
      %8673 = vmatprep.subr.bf16.mxu0 0
      %8674 = vmatpush1.bf16.msra.mxu0 %v8529
      %8675 = vmatprep.subr.bf16.mxu0 0
      %8676 = vmatpush1.bf16.msra.mxu0 %v8530
      %8677 = vmatprep.subr.bf16.mxu0 0
      %8678 = vmatpush1.bf16.msra.mxu0 %v8531
      %8679 = vmatprep.subr.bf16.mxu0 0
      %8680 = vmatpush1.bf16.msra.mxu0 %v8532
      %8681 = vmatprep.subr.bf16.mxu0 0
      %8682 = vmatpush1.bf16.msra.mxu0 %v8533
      %8683 = vmatprep.subr.bf16.mxu0 0
      %8684 = vmatpush1.bf16.msra.mxu0 %v8534
      %8685 = vmatprep.subr.bf16.mxu0 0
      %8686 = vmatpush1.bf16.msra.mxu0 %v8535
      %8687 = vmatprep.subr.bf16.mxu0 0
      %8688 = vmatpush1.bf16.msra.mxu0 %v8536
      %8689 = vmatprep.subr.bf16.mxu0 0
      %8690 = vmatpush1.bf16.msra.mxu0 %v8537
      %8691 = vmatprep.subr.bf16.mxu0 0
      %8692 = vmatpush1.bf16.msra.mxu0 %v8538
      %8693 = vmatprep.subr.bf16.mxu0 0
      %8694 = vmatpush1.bf16.msra.mxu0 %v8539
      %8695 = vmatprep.subr.bf16.mxu0 0
      %8696 = vmatpush1.bf16.msra.mxu0 %v8540
      %8697 = vmatprep.subr.bf16.mxu0 0
      %8698 = vmatpush1.bf16.msra.mxu0 %v8541
      %8699 = vmatprep.subr.bf16.mxu0 0
      %8700 = vmatpush1.bf16.msra.mxu0 %v8542
      %8701 = vmatprep.subr.bf16.mxu0 0
      %8702 = vmatpush1.bf16.msra.mxu0 %v8543
      %8703 = vmatprep.subr.bf16.mxu0 0
      %8704 = vmatpush1.bf16.msra.mxu0 %v8544
      %8705 = vmatprep.mubr.bf16.mxu0 %v7859
      %8706 = vmatmul.mubr.bf16.gmra.mrb[0].mxu0 %v7829
      %v8707 = vpop.f32.mrb[0].mxu0
      %v8708 = vadd.f32 %v8240, %v8707
      %v8709 = vpop.f32.mrb[0].mxu0
      %v8710 = vpop.f32.mrb[0].mxu0
      %v8711 = vadd.f32 %v8240, %v8710
      %v8712 = vpop.f32.mrb[0].mxu0
      %8713 = vmatprep.mubr.bf16.mxu0 %v7867
      %8714 = vmatmul.mubr.bf16.gmra.mrb[0].mxu0 %v7830
      %v8715 = vpop.f32.mrb[0].mxu0
      %v8716 = vadd.f32 %v8240, %v8715
      %v8717 = vpop.f32.mrb[0].mxu0
      %v8718 = vpop.f32.mrb[0].mxu0
      %v8719 = vadd.f32 %v8240, %v8718
      %v8720 = vpop.f32.mrb[0].mxu0
      %8721 = vmatprep.mubr.bf16.mxu0 %v7875
      %8722 = vmatmul.mubr.bf16.gmra.mrb[0].mxu0 %v7831
      %v8723 = vpop.f32.mrb[0].mxu0
      %v8724 = vadd.f32 %v8240, %v8723
      %v8725 = vpop.f32.mrb[0].mxu0
      %v8726 = vpop.f32.mrb[0].mxu0
      %v8727 = vadd.f32 %v8240, %v8726
      %v8728 = vpop.f32.mrb[0].mxu0
      %8729 = vmatprep.mubr.bf16.mxu0 %v7883
      %8730 = vmatmul.mubr.bf16.gmra.mrb[0].mxu0 %v7832
      %v8731 = vpop.f32.mrb[0].mxu0
      %v8732 = vadd.f32 %v8240, %v8731
      %v8733 = vpop.f32.mrb[0].mxu0
      %v8734 = vpop.f32.mrb[0].mxu0
      %v8735 = vadd.f32 %v8240, %v8734
      %v8736 = vpop.f32.mrb[0].mxu0
      %8737 = vmatprep.mubr.bf16.mxu0 %v7891
      %8738 = vmatmul.mubr.bf16.gmra.mrb[0].mxu0 %v7833
      %v8739 = vpop.f32.mrb[0].mxu0
      %v8740 = vadd.f32 %v8240, %v8739
      %v8741 = vpop.f32.mrb[0].mxu0
      %v8742 = vpop.f32.mrb[0].mxu0
      %v8743 = vadd.f32 %v8240, %v8742
      %v8744 = vpop.f32.mrb[0].mxu0
      %8745 = vdwg.mxu0
      %8746 = vmatprep.subr.bf16.mxu0 0
      %8747 = vmatpush1.bf16.msra.mxu0 %v8545
      %8748 = vmatprep.subr.bf16.mxu0 0
      %8749 = vmatpush1.bf16.msra.mxu0 %v8546
      %8750 = vmatprep.subr.bf16.mxu0 0
      %8751 = vmatpush1.bf16.msra.mxu0 %v8547
      %8752 = vmatprep.subr.bf16.mxu0 0
      %8753 = vmatpush1.bf16.msra.mxu0 %v8548
      %8754 = vmatprep.subr.bf16.mxu0 0
      %8755 = vmatpush1.bf16.msra.mxu0 %v8549
      %8756 = vmatprep.subr.bf16.mxu0 0
      %8757 = vmatpush1.bf16.msra.mxu0 %v8550
      %8758 = vmatprep.subr.bf16.mxu0 0
      %8759 = vmatpush1.bf16.msra.mxu0 %v8551
      %8760 = vmatprep.subr.bf16.mxu0 0
      %8761 = vmatpush1.bf16.msra.mxu0 %v8552
      %8762 = vmatprep.subr.bf16.mxu0 0
      %8763 = vmatpush1.bf16.msra.mxu0 %v8553
      %8764 = vmatprep.subr.bf16.mxu0 0
      %8765 = vmatpush1.bf16.msra.mxu0 %v8554
      %8766 = vmatprep.subr.bf16.mxu0 0
      %8767 = vmatpush1.bf16.msra.mxu0 %v8555
      %8768 = vmatprep.subr.bf16.mxu0 0
      %8769 = vmatpush1.bf16.msra.mxu0 %v8556
      %8770 = vmatprep.subr.bf16.mxu0 0
      %8771 = vmatpush1.bf16.msra.mxu0 %v8557
      %8772 = vmatprep.subr.bf16.mxu0 0
      %8773 = vmatpush1.bf16.msra.mxu0 %v8558
      %8774 = vmatprep.subr.bf16.mxu0 0
      %8775 = vmatpush1.bf16.msra.mxu0 %v8559
      %8776 = vmatprep.subr.bf16.mxu0 0
      %8777 = vmatpush1.bf16.msra.mxu0 %v8560
      %8778 = vmatprep.mubr.bf16.mxu0 %v7923
      %8779 = vmatmul.mubr.bf16.gmra.mrb[0].mxu0 %v7905
      %v8780 = vpop.f32.mrb[0].mxu0
      %v8781 = vadd.f32 %v8708, %v8780
      %v8782 = vpop.f32.mrb[0].mxu0
      %v8783 = vpop.f32.mrb[0].mxu0
      %v8784 = vadd.f32 %v8711, %v8783
      %v8785 = vpop.f32.mrb[0].mxu0
      %8786 = vmatprep.mubr.bf16.mxu0 %v7925
      %8787 = vmatmul.mubr.bf16.gmra.mrb[0].mxu0 %v7907
      %v8788 = vpop.f32.mrb[0].mxu0
      %v8789 = vadd.f32 %v8716, %v8788
      %v8790 = vpop.f32.mrb[0].mxu0
      %v8791 = vpop.f32.mrb[0].mxu0
      %v8792 = vadd.f32 %v8719, %v8791
      %v8793 = vpop.f32.mrb[0].mxu0
      %8794 = vmatprep.mubr.bf16.mxu0 %v7927
      %8795 = vmatmul.mubr.bf16.gmra.mrb[0].mxu0 %v7909
      %v8796 = vpop.f32.mrb[0].mxu0
      %v8797 = vadd.f32 %v8724, %v8796
      %v8798 = vpop.f32.mrb[0].mxu0
      %v8799 = vpop.f32.mrb[0].mxu0
      %v8800 = vadd.f32 %v8727, %v8799
      %v8801 = vpop.f32.mrb[0].mxu0
      %8802 = vmatprep.mubr.bf16.mxu0 %v7929
      %8803 = vmatmul.mubr.bf16.gmra.mrb[0].mxu0 %v7911
      %v8804 = vpop.f32.mrb[0].mxu0
      %v8805 = vadd.f32 %v8732, %v8804
      %v8806 = vpop.f32.mrb[0].mxu0
      %v8807 = vpop.f32.mrb[0].mxu0
      %v8808 = vadd.f32 %v8735, %v8807
      %v8809 = vpop.f32.mrb[0].mxu0
      %8810 = vmatprep.mubr.bf16.mxu0 %v7931
      %8811 = vmatmul.mubr.bf16.gmra.mrb[0].mxu0 %v7913
      %v8812 = vpop.f32.mrb[0].mxu0
      %v8813 = vadd.f32 %v8740, %v8812
      %v8814 = vpop.f32.mrb[0].mxu0
      %v8815 = vpop.f32.mrb[0].mxu0
      %v8816 = vadd.f32 %v8743, %v8815
      %v8817 = vpop.f32.mrb[0].mxu0
      %8818 = vdwg.mxu0
      %8819 = vmatprep.subr.bf16.mxu0 0
      %8820 = vmatpush1.bf16.msra.mxu0 %v8561
      %8821 = vmatprep.subr.bf16.mxu0 0
      %8822 = vmatpush1.bf16.msra.mxu0 %v8562
      %8823 = vmatprep.subr.bf16.mxu0 0
      %8824 = vmatpush1.bf16.msra.mxu0 %v8563
      %8825 = vmatprep.subr.bf16.mxu0 0
      %8826 = vmatpush1.bf16.msra.mxu0 %v8564
      %8827 = vmatprep.subr.bf16.mxu0 0
      %8828 = vmatpush1.bf16.msra.mxu0 %v8565
      %8829 = vmatprep.subr.bf16.mxu0 0
      %8830 = vmatpush1.bf16.msra.mxu0 %v8566
      %8831 = vmatprep.subr.bf16.mxu0 0
      %8832 = vmatpush1.bf16.msra.mxu0 %v8567
      %8833 = vmatprep.subr.bf16.mxu0 0
      %8834 = vmatpush1.bf16.msra.mxu0 %v8568
      %8835 = vmatprep.subr.bf16.mxu0 0
      %8836 = vmatpush1.bf16.msra.mxu0 %v8569
      %8837 = vmatprep.subr.bf16.mxu0 0
      %8838 = vmatpush1.bf16.msra.mxu0 %v8570
      %8839 = vmatprep.subr.bf16.mxu0 0
      %8840 = vmatpush1.bf16.msra.mxu0 %v8571
      %8841 = vmatprep.subr.bf16.mxu0 0
      %8842 = vmatpush1.bf16.msra.mxu0 %v8572
      %8843 = vmatprep.subr.bf16.mxu0 0
      %8844 = vmatpush1.bf16.msra.mxu0 %v8573
      %8845 = vmatprep.subr.bf16.mxu0 0
      %8846 = vmatpush1.bf16.msra.mxu0 %v8574
      %8847 = vmatprep.subr.bf16.mxu0 0
      %8848 = vmatpush1.bf16.msra.mxu0 %v8575
      %8849 = vmatprep.subr.bf16.mxu0 0
      %8850 = vmatpush1.bf16.msra.mxu0 %v8576
      %8851 = vmatprep.mubr.bf16.mxu0 %v7979
      %8852 = vmatmul.mubr.bf16.gmra.mrb[0].mxu0 %v7948
      %v8853 = vpop.f32.mrb[0].mxu0
      %v8854 = vadd.f32 %v8781, %v8853
      %v8855 = vpop.f32.mrb[0].mxu0
      %v8856 = vpop.f32.mrb[0].mxu0
      %v8857 = vadd.f32 %v8784, %v8856
      %v8858 = vpop.f32.mrb[0].mxu0
      %8859 = vmatprep.mubr.bf16.mxu0 %v7981
      %8860 = vmatmul.mubr.bf16.gmra.mrb[0].mxu0 %v7952
      %v8861 = vpop.f32.mrb[0].mxu0
      %v8862 = vadd.f32 %v8789, %v8861
      %v8863 = vpop.f32.mrb[0].mxu0
      %v8864 = vpop.f32.mrb[0].mxu0
      %v8865 = vadd.f32 %v8792, %v8864
      %v8866 = vpop.f32.mrb[0].mxu0
      %8867 = vmatprep.mubr.bf16.mxu0 %v7983
      %8868 = vmatmul.mubr.bf16.gmra.mrb[0].mxu0 %v7956
      %v8869 = vpop.f32.mrb[0].mxu0
      %v8870 = vadd.f32 %v8797, %v8869
      %v8871 = vpop.f32.mrb[0].mxu0
      %v8872 = vpop.f32.mrb[0].mxu0
      %v8873 = vadd.f32 %v8800, %v8872
      %v8874 = vpop.f32.mrb[0].mxu0
      %8875 = vmatprep.mubr.bf16.mxu0 %v7985
      %8876 = vmatmul.mubr.bf16.gmra.mrb[0].mxu0 %v7960
      %v8877 = vpop.f32.mrb[0].mxu0
      %v8878 = vadd.f32 %v8805, %v8877
      %v8879 = vpop.f32.mrb[0].mxu0
      %v8880 = vpop.f32.mrb[0].mxu0
      %v8881 = vadd.f32 %v8808, %v8880
      %v8882 = vpop.f32.mrb[0].mxu0
      %8883 = vmatprep.mubr.bf16.mxu0 %v7987
      %8884 = vmatmul.mubr.bf16.gmra.mrb[0].mxu0 %v7969
      %v8885 = vpop.f32.mrb[0].mxu0
      %v8886 = vadd.f32 %v8813, %v8885
      %v8887 = vpop.f32.mrb[0].mxu0
      %v8888 = vpop.f32.mrb[0].mxu0
      %v8889 = vadd.f32 %v8816, %v8888
      %v8890 = vpop.f32.mrb[0].mxu0
      %8891 = vdwg.mxu0
      %8892 = vmatprep.subr.bf16.mxu0 0
      %8893 = vmatpush1.bf16.msra.mxu0 %v8577
      %8894 = vmatprep.subr.bf16.mxu0 0
      %8895 = vmatpush1.bf16.msra.mxu0 %v8578
      %8896 = vmatprep.subr.bf16.mxu0 0
      %8897 = vmatpush1.bf16.msra.mxu0 %v8579
      %8898 = vmatprep.subr.bf16.mxu0 0
      %8899 = vmatpush1.bf16.msra.mxu0 %v8580
      %8900 = vmatprep.subr.bf16.mxu0 0
      %8901 = vmatpush1.bf16.msra.mxu0 %v8581
      %8902 = vmatprep.subr.bf16.mxu0 0
      %8903 = vmatpush1.bf16.msra.mxu0 %v8582
      %8904 = vmatprep.subr.bf16.mxu0 0
      %8905 = vmatpush1.bf16.msra.mxu0 %v8583
      %8906 = vmatprep.subr.bf16.mxu0 0
      %8907 = vmatpush1.bf16.msra.mxu0 %v8584
      %8908 = vmatprep.subr.bf16.mxu0 0
      %8909 = vmatpush1.bf16.msra.mxu0 %v8585
      %8910 = vmatprep.subr.bf16.mxu0 0
      %8911 = vmatpush1.bf16.msra.mxu0 %v8586
      %8912 = vmatprep.subr.bf16.mxu0 0
      %8913 = vmatpush1.bf16.msra.mxu0 %v8587
      %8914 = vmatprep.subr.bf16.mxu0 0
      %8915 = vmatpush1.bf16.msra.mxu0 %v8588
      %8916 = vmatprep.subr.bf16.mxu0 0
      %8917 = vmatpush1.bf16.msra.mxu0 %v8589
      %8918 = vmatprep.subr.bf16.mxu0 0
      %8919 = vmatpush1.bf16.msra.mxu0 %v8590
      %8920 = vmatprep.subr.bf16.mxu0 0
      %8921 = vmatpush1.bf16.msra.mxu0 %v8591
      %8922 = vmatprep.subr.bf16.mxu0 0
      %8923 = vmatpush1.bf16.msra.mxu0 %v8592
      %8924 = vmatprep.mubr.bf16.mxu0 %v8031
      %8925 = vmatmul.mubr.bf16.gmra.mrb[0].mxu0 %v8001
      %v8926 = vpop.f32.mrb[0].mxu0
      %v8927 = vadd.f32 %v8854, %v8926
      %v8928 = vpop.f32.mrb[0].mxu0
      %v8929 = vpop.f32.mrb[0].mxu0
      %v8930 = vadd.f32 %v8857, %v8929
      %v8931 = vpop.f32.mrb[0].mxu0
      %8932 = vmatprep.mubr.bf16.mxu0 %v8040
      %8933 = vmatmul.mubr.bf16.gmra.mrb[0].mxu0 %v8003
      %v8934 = vpop.f32.mrb[0].mxu0
      %v8935 = vadd.f32 %v8862, %v8934
      %v8936 = vpop.f32.mrb[0].mxu0
      %v8937 = vpop.f32.mrb[0].mxu0
      %v8938 = vadd.f32 %v8865, %v8937
      %v8939 = vpop.f32.mrb[0].mxu0
      %8940 = vmatprep.mubr.bf16.mxu0 %v8049
      %8941 = vmatmul.mubr.bf16.gmra.mrb[0].mxu0 %v8005
      %v8942 = vpop.f32.mrb[0].mxu0
      %v8943 = vadd.f32 %v8870, %v8942
      %v8944 = vpop.f32.mrb[0].mxu0
      %v8945 = vpop.f32.mrb[0].mxu0
      %v8946 = vadd.f32 %v8873, %v8945
      %v8947 = vpop.f32.mrb[0].mxu0
      %8948 = vmatprep.mubr.bf16.mxu0 %v8058
      %8949 = vmatmul.mubr.bf16.gmra.mrb[0].mxu0 %v8007
      %v8950 = vpop.f32.mrb[0].mxu0
      %v8951 = vadd.f32 %v8878, %v8950
      %v8952 = vpop.f32.mrb[0].mxu0
      %v8953 = vpop.f32.mrb[0].mxu0
      %v8954 = vadd.f32 %v8881, %v8953
      %v8955 = vpop.f32.mrb[0].mxu0
      %8956 = vmatprep.mubr.bf16.mxu0 %v8067
      %8957 = vmatmul.mubr.bf16.gmra.mrb[0].mxu0 %v8009
      %v8958 = vpop.f32.mrb[0].mxu0
      %v8959 = vadd.f32 %v8886, %v8958
      %v8960 = vpop.f32.mrb[0].mxu0
      %v8961 = vpop.f32.mrb[0].mxu0
      %v8962 = vadd.f32 %v8889, %v8961
      %v8963 = vpop.f32.mrb[0].mxu0
      %8964 = vdwg.mxu0
      %8965 = vmatprep.subr.bf16.mxu0 0
      %8966 = vmatpush1.bf16.msra.mxu0 %v8593
      %8967 = vmatprep.subr.bf16.mxu0 0
      %8968 = vmatpush1.bf16.msra.mxu0 %v8594
      %8969 = vmatprep.subr.bf16.mxu0 0
      %8970 = vmatpush1.bf16.msra.mxu0 %v8595
      %8971 = vmatprep.subr.bf16.mxu0 0
      %8972 = vmatpush1.bf16.msra.mxu0 %v8596
      %8973 = vmatprep.subr.bf16.mxu0 0
      %8974 = vmatpush1.bf16.msra.mxu0 %v8597
      %8975 = vmatprep.subr.bf16.mxu0 0
      %8976 = vmatpush1.bf16.msra.mxu0 %v8598
      %8977 = vmatprep.subr.bf16.mxu0 0
      %8978 = vmatpush1.bf16.msra.mxu0 %v8599
      %8979 = vmatprep.subr.bf16.mxu0 0
      %8980 = vmatpush1.bf16.msra.mxu0 %v8600
      %8981 = vmatprep.subr.bf16.mxu0 0
      %8982 = vmatpush1.bf16.msra.mxu0 0
      %8983 = vmatprep.subr.bf16.mxu0 0
      %8984 = vmatpush1.bf16.msra.mxu0 0
      %8985 = vmatprep.subr.bf16.mxu0 0
      %8986 = vmatpush1.bf16.msra.mxu0 0
      %8987 = vmatprep.subr.bf16.mxu0 0
      %8988 = vmatpush1.bf16.msra.mxu0 0
      %8989 = vmatprep.subr.bf16.mxu0 0
      %8990 = vmatpush1.bf16.msra.mxu0 0
      %8991 = vmatprep.subr.bf16.mxu0 0
      %8992 = vmatpush1.bf16.msra.mxu0 0
      %8993 = vmatprep.subr.bf16.mxu0 0
      %8994 = vmatpush1.bf16.msra.mxu0 0
      %8995 = vmatprep.subr.bf16.mxu0 0
      %8996 = vmatpush1.bf16.msra.mxu0 0
      %8997 = vmatprep.mubr.bf16.mxu0 0
      %8998 = vmatmul.mubr.bf16.gmra.mrb[0].mxu0 %v8077
      %v8999 = vpop.f32.mrb[0].mxu0
      %v9000 = vadd.f32 %v8927, %v8999
      %v9001 = vpop.f32.mrb[0].mxu0
      %v9002 = vpop.f32.mrb[0].mxu0
      %v9003 = vadd.f32 %v8930, %v9002
      %v9004 = vpop.f32.mrb[0].mxu0
      %9005 = vmatprep.mubr.bf16.mxu0 0
      %9006 = vmatmul.mubr.bf16.gmra.mrb[0].mxu0 %v8079
      %v9007 = vpop.f32.mrb[0].mxu0
      %v9008 = vadd.f32 %v8935, %v9007
      %v9009 = vpop.f32.mrb[0].mxu0
      %v9010 = vpop.f32.mrb[0].mxu0
      %v9011 = vadd.f32 %v8938, %v9010
      %v9012 = vpop.f32.mrb[0].mxu0
      %9013 = vmatprep.mubr.bf16.mxu0 0
      %9014 = vmatmul.mubr.bf16.gmra.mrb[0].mxu0 %v8081
      %v9015 = vpop.f32.mrb[0].mxu0
      %v9016 = vadd.f32 %v8943, %v9015
      %v9017 = vpop.f32.mrb[0].mxu0
      %v9018 = vpop.f32.mrb[0].mxu0
      %v9019 = vadd.f32 %v8946, %v9018
      %v9020 = vpop.f32.mrb[0].mxu0
      %9021 = vmatprep.mubr.bf16.mxu0 0
      %9022 = vmatmul.mubr.bf16.gmra.mrb[0].mxu0 %v8083
      %v9023 = vpop.f32.mrb[0].mxu0
      %v9024 = vadd.f32 %v8951, %v9023
      %v9025 = vpop.f32.mrb[0].mxu0
      %v9026 = vpop.f32.mrb[0].mxu0
      %v9027 = vadd.f32 %v8954, %v9026
      %v9028 = vpop.f32.mrb[0].mxu0
      %9029 = vmatprep.mubr.bf16.mxu0 0
      %9030 = vmatmul.mubr.bf16.gmra.mrb[0].mxu0 %v8085
      %v9031 = vpop.f32.mrb[0].mxu0
      %v9032 = vadd.f32 %v8959, %v9031
      %v9033 = vpop.f32.mrb[0].mxu0
      %v9034 = vpop.f32.mrb[0].mxu0
      %v9035 = vadd.f32 %v8962, %v9034
      %v9036 = vpop.f32.mrb[0].mxu0
      %9037 = vdwg.mxu0
      %v9038 = vunpack.c.l.bf16 %v6470
      %v9039 = vunpack.c.h.bf16 %v6470
      %v9040 = vunpack.c.l.bf16 %v6471
      %v9041 = vunpack.c.h.bf16 %v6471
      %v9042 = vunpack.c.l.bf16 %v6472
      %v9043 = vunpack.c.h.bf16 %v6472
      %v9044 = vunpack.c.l.bf16 %v6473
      %v9045 = vunpack.c.h.bf16 %v6473
      %v9046 = vunpack.c.l.bf16 %v6474
      %v9047 = vunpack.c.h.bf16 %v6474
      %v9048 = vadd.f32 %v9000, %v9038
      %v9049 = vadd.f32 %v9003, %v9039
      %v9050 = vadd.f32 %v9008, %v9040
      %v9051 = vadd.f32 %v9011, %v9041
      %v9052 = vadd.f32 %v9016, %v9042
      %v9053 = vadd.f32 %v9019, %v9043
      %v9054 = vadd.f32 %v9024, %v9044
      %v9055 = vadd.f32 %v9027, %v9045
      %v9056 = vadd.f32 %v9032, %v9046
      %v9057 = vadd.f32 %v9035, %v9047
      %v9068 = vcombine.high %v9048, %v9048
      %v9070 = vunpack.c.l.s4 1983009808
      %v9071 = vunpack.c.0.s8 %v9070
      %v9072 = vlaneseq
      %v9073 = vshrl.u32 %v9072, 7
      %v9074 = vsub.s32 %v9071, %v9073
      %v9075 = vrot.slane %v9048, %v9074
      %v9077 = vunpack.c.l.s4 1983009808
      %v9078 = vunpack.c.0.s8 %v9077
      %v9079 = vlaneseq
      %v9080 = vshrl.u32 %v9079, 7
      %v9081 = vsub.s32 %v9078, %v9080
      %v9082 = vrot.slane %v9068, %v9081
      %v9083 = vcombine.high %v9075, %v9075
      %v9084 = vcombine.high %v9082, %v9082
      %v9085 = vcombine.high %v9049, %v9049
      %v9087 = vunpack.c.l.s4 1983009808
      %v9088 = vunpack.c.0.s8 %v9087
      %v9089 = vlaneseq
      %v9090 = vshrl.u32 %v9089, 7
      %v9091 = vsub.s32 %v9088, %v9090
      %v9092 = vrot.slane %v9049, %v9091
      %v9094 = vunpack.c.l.s4 1983009808
      %v9095 = vunpack.c.0.s8 %v9094
      %v9096 = vlaneseq
      %v9097 = vshrl.u32 %v9096, 7
      %v9098 = vsub.s32 %v9095, %v9097
      %v9099 = vrot.slane %v9085, %v9098
      %v9100 = vcombine.high %v9092, %v9092
      %v9101 = vcombine.high %v9099, %v9099
      %v9102 = vcombine.high %v9050, %v9050
      %v9104 = vunpack.c.l.s4 1983009808
      %v9105 = vunpack.c.0.s8 %v9104
      %v9106 = vlaneseq
      %v9107 = vshrl.u32 %v9106, 7
      %v9108 = vsub.s32 %v9105, %v9107
      %v9109 = vrot.slane %v9050, %v9108
      %v9111 = vunpack.c.l.s4 1983009808
      %v9112 = vunpack.c.0.s8 %v9111
      %v9113 = vlaneseq
      %v9114 = vshrl.u32 %v9113, 7
      %v9115 = vsub.s32 %v9112, %v9114
      %v9116 = vrot.slane %v9102, %v9115
      %v9117 = vcombine.high %v9116, %v9116
      %v9118 = vcombine.high %v9051, %v9051
      %v9120 = vunpack.c.l.s4 1983009808
      %v9121 = vunpack.c.0.s8 %v9120
      %v9122 = vlaneseq
      %v9123 = vshrl.u32 %v9122, 7
      %v9124 = vsub.s32 %v9121, %v9123
      %v9125 = vrot.slane %v9051, %v9124
      %v9127 = vunpack.c.l.s4 1983009808
      %v9128 = vunpack.c.0.s8 %v9127
      %v9129 = vlaneseq
      %v9130 = vshrl.u32 %v9129, 7
      %v9131 = vsub.s32 %v9128, %v9130
      %v9132 = vrot.slane %v9118, %v9131
      %v9133 = vcombine.high %v9125, %v9125
      %v9134 = vcombine.high %v9132, %v9132
      %v9135 = vcombine.high %v9052, %v9052
      %v9137 = vunpack.c.l.s4 1983009808
      %v9138 = vunpack.c.0.s8 %v9137
      %v9139 = vlaneseq
      %v9140 = vshrl.u32 %v9139, 7
      %v9141 = vsub.s32 %v9138, %v9140
      %v9142 = vrot.slane %v9052, %v9141
      %v9144 = vunpack.c.l.s4 1983009808
      %v9145 = vunpack.c.0.s8 %v9144
      %v9146 = vlaneseq
      %v9147 = vshrl.u32 %v9146, 7
      %v9148 = vsub.s32 %v9145, %v9147
      %v9149 = vrot.slane %v9135, %v9148
      %v9150 = vcombine.high %v9142, %v9142
      %v9151 = vcombine.high %v9053, %v9053
      %v9153 = vunpack.c.l.s4 1983009808
      %v9154 = vunpack.c.0.s8 %v9153
      %v9155 = vlaneseq
      %v9156 = vshrl.u32 %v9155, 7
      %v9157 = vsub.s32 %v9154, %v9156
      %v9158 = vrot.slane %v9053, %v9157
      %v9160 = vunpack.c.l.s4 1983009808
      %v9161 = vunpack.c.0.s8 %v9160
      %v9162 = vlaneseq
      %v9163 = vshrl.u32 %v9162, 7
      %v9164 = vsub.s32 %v9161, %v9163
      %v9165 = vrot.slane %v9151, %v9164
      %v9166 = vcombine.high %v9158, %v9158
      %v9167 = vcombine.high %v9165, %v9165
      %v9168 = vcombine.high %v9054, %v9054
      %v9170 = vunpack.c.l.s4 1983009808
      %v9171 = vunpack.c.0.s8 %v9170
      %v9172 = vlaneseq
      %v9173 = vshrl.u32 %v9172, 7
      %v9174 = vsub.s32 %v9171, %v9173
      %v9175 = vrot.slane %v9054, %v9174
      %v9177 = vunpack.c.l.s4 1983009808
      %v9178 = vunpack.c.0.s8 %v9177
      %v9179 = vlaneseq
      %v9180 = vshrl.u32 %v9179, 7
      %v9181 = vsub.s32 %v9178, %v9180
      %v9182 = vrot.slane %v9168, %v9181
      %v9183 = vcombine.high %v9175, %v9175
      %v9184 = vcombine.high %v9182, %v9182
      %v9185 = vcombine.high %v9055, %v9055
      %v9187 = vunpack.c.l.s4 1983009808
      %v9188 = vunpack.c.0.s8 %v9187
      %v9189 = vlaneseq
      %v9190 = vshrl.u32 %v9189, 7
      %v9191 = vsub.s32 %v9188, %v9190
      %v9192 = vrot.slane %v9055, %v9191
      %v9194 = vunpack.c.l.s4 1983009808
      %v9195 = vunpack.c.0.s8 %v9194
      %v9196 = vlaneseq
      %v9197 = vshrl.u32 %v9196, 7
      %v9198 = vsub.s32 %v9195, %v9197
      %v9199 = vrot.slane %v9185, %v9198
      %v9200 = vcombine.high %v9199, %v9199
      %v9201 = vcombine.high %v9056, %v9056
      %v9203 = vunpack.c.l.s4 1983009808
      %v9204 = vunpack.c.0.s8 %v9203
      %v9205 = vlaneseq
      %v9206 = vshrl.u32 %v9205, 7
      %v9207 = vsub.s32 %v9204, %v9206
      %v9208 = vrot.slane %v9056, %v9207
      %v9210 = vunpack.c.l.s4 1983009808
      %v9211 = vunpack.c.0.s8 %v9210
      %v9212 = vlaneseq
      %v9213 = vshrl.u32 %v9212, 7
      %v9214 = vsub.s32 %v9211, %v9213
      %v9215 = vrot.slane %v9201, %v9214
      %v9216 = vcombine.high %v9208, %v9208
      %v9217 = vcombine.high %v9215, %v9215
      %v9218 = vcombine.high %v9057, %v9057
      %v9220 = vunpack.c.l.s4 1983009808
      %v9221 = vunpack.c.0.s8 %v9220
      %v9222 = vlaneseq
      %v9223 = vshrl.u32 %v9222, 7
      %v9224 = vsub.s32 %v9221, %v9223
      %v9225 = vrot.slane %v9057, %v9224
      %v9227 = vunpack.c.l.s4 1983009808
      %v9228 = vunpack.c.0.s8 %v9227
      %v9229 = vlaneseq
      %v9230 = vshrl.u32 %v9229, 7
      %v9231 = vsub.s32 %v9228, %v9230
      %v9232 = vrot.slane %v9218, %v9231
      %v9233 = vcombine.high %v9225, %v9225
      %v9266 = vunpack.c.l.bf16 %v192
      %v9267 = vunpack.c.l.bf16 %v193
      %v9268 = vunpack.c.l.bf16 %v194
      %v9269 = vunpack.c.l.bf16 %v195
      %v9270 = vunpack.c.l.bf16 %v196
      %v9271 = vunpack.c.l.bf16 %v197
      %v9272 = vunpack.c.l.bf16 %v198
      %v9273 = vunpack.c.l.bf16 %v199
      %v9282 = vcombine.high %v9266, %v9266
      %v9284 = vunpack.c.l.s4 1983009808
      %v9285 = vunpack.c.0.s8 %v9284
      %v9286 = vlaneseq
      %v9287 = vshrl.u32 %v9286, 7
      %v9288 = vsub.s32 %v9285, %v9287
      %v9289 = vrot.slane %v9266, %v9288
      %v9291 = vunpack.c.l.s4 1983009808
      %v9292 = vunpack.c.0.s8 %v9291
      %v9293 = vlaneseq
      %v9294 = vshrl.u32 %v9293, 7
      %v9295 = vsub.s32 %v9292, %v9294
      %v9296 = vrot.slane %v9282, %v9295
      %v9297 = vcombine.high %v9289, %v9289
      %v9298 = vcombine.high %v9296, %v9296
      %v9299 = vcombine.high %v9267, %v9267
      %v9301 = vunpack.c.l.s4 1983009808
      %v9302 = vunpack.c.0.s8 %v9301
      %v9303 = vlaneseq
      %v9304 = vshrl.u32 %v9303, 7
      %v9305 = vsub.s32 %v9302, %v9304
      %v9306 = vrot.slane %v9267, %v9305
      %v9308 = vunpack.c.l.s4 1983009808
      %v9309 = vunpack.c.0.s8 %v9308
      %v9310 = vlaneseq
      %v9311 = vshrl.u32 %v9310, 7
      %v9312 = vsub.s32 %v9309, %v9311
      %v9313 = vrot.slane %v9299, %v9312
      %v9314 = vcombine.high %v9306, %v9306
      %v9315 = vcombine.high %v9313, %v9313
      %v9316 = vcombine.high %v9268, %v9268
      %v9318 = vunpack.c.l.s4 1983009808
      %v9319 = vunpack.c.0.s8 %v9318
      %v9320 = vlaneseq
      %v9321 = vshrl.u32 %v9320, 7
      %v9322 = vsub.s32 %v9319, %v9321
      %v9323 = vrot.slane %v9268, %v9322
      %v9325 = vunpack.c.l.s4 1983009808
      %v9326 = vunpack.c.0.s8 %v9325
      %v9327 = vlaneseq
      %v9328 = vshrl.u32 %v9327, 7
      %v9329 = vsub.s32 %v9326, %v9328
      %v9330 = vrot.slane %v9316, %v9329
      %v9331 = vcombine.high %v9323, %v9323
      %v9332 = vcombine.high %v9330, %v9330
      %v9333 = vcombine.high %v9269, %v9269
      %v9335 = vunpack.c.l.s4 1983009808
      %v9336 = vunpack.c.0.s8 %v9335
      %v9337 = vlaneseq
      %v9338 = vshrl.u32 %v9337, 7
      %v9339 = vsub.s32 %v9336, %v9338
      %v9340 = vrot.slane %v9269, %v9339
      %v9342 = vunpack.c.l.s4 1983009808
      %v9343 = vunpack.c.0.s8 %v9342
      %v9344 = vlaneseq
      %v9345 = vshrl.u32 %v9344, 7
      %v9346 = vsub.s32 %v9343, %v9345
      %v9347 = vrot.slane %v9333, %v9346
      %v9348 = vcombine.high %v9340, %v9340
      %v9349 = vcombine.high %v9347, %v9347
      %v9350 = vcombine.high %v9270, %v9270
      %v9352 = vunpack.c.l.s4 1983009808
      %v9353 = vunpack.c.0.s8 %v9352
      %v9354 = vlaneseq
      %v9355 = vshrl.u32 %v9354, 7
      %v9356 = vsub.s32 %v9353, %v9355
      %v9357 = vrot.slane %v9270, %v9356
      %v9359 = vunpack.c.l.s4 1983009808
      %v9360 = vunpack.c.0.s8 %v9359
      %v9361 = vlaneseq
      %v9362 = vshrl.u32 %v9361, 7
      %v9363 = vsub.s32 %v9360, %v9362
      %v9364 = vrot.slane %v9350, %v9363
      %v9365 = vcombine.high %v9357, %v9357
      %v9366 = vcombine.high %v9364, %v9364
      %v9367 = vcombine.high %v9271, %v9271
      %v9369 = vunpack.c.l.s4 1983009808
      %v9370 = vunpack.c.0.s8 %v9369
      %v9371 = vlaneseq
      %v9372 = vshrl.u32 %v9371, 7
      %v9373 = vsub.s32 %v9370, %v9372
      %v9374 = vrot.slane %v9271, %v9373
      %v9376 = vunpack.c.l.s4 1983009808
      %v9377 = vunpack.c.0.s8 %v9376
      %v9378 = vlaneseq
      %v9379 = vshrl.u32 %v9378, 7
      %v9380 = vsub.s32 %v9377, %v9379
      %v9381 = vrot.slane %v9367, %v9380
      %v9382 = vcombine.high %v9374, %v9374
      %v9383 = vcombine.high %v9381, %v9381
      %v9384 = vcombine.high %v9272, %v9272
      %v9386 = vunpack.c.l.s4 1983009808
      %v9387 = vunpack.c.0.s8 %v9386
      %v9388 = vlaneseq
      %v9389 = vshrl.u32 %v9388, 7
      %v9390 = vsub.s32 %v9387, %v9389
      %v9391 = vrot.slane %v9272, %v9390
      %v9393 = vunpack.c.l.s4 1983009808
      %v9394 = vunpack.c.0.s8 %v9393
      %v9395 = vlaneseq
      %v9396 = vshrl.u32 %v9395, 7
      %v9397 = vsub.s32 %v9394, %v9396
      %v9398 = vrot.slane %v9384, %v9397
      %v9399 = vcombine.high %v9391, %v9391
      %v9400 = vcombine.high %v9398, %v9398
      %v9401 = vcombine.high %v9273, %v9273
      %v9403 = vunpack.c.l.s4 1983009808
      %v9404 = vunpack.c.0.s8 %v9403
      %v9405 = vlaneseq
      %v9406 = vshrl.u32 %v9405, 7
      %v9407 = vsub.s32 %v9404, %v9406
      %v9408 = vrot.slane %v9273, %v9407
      %v9410 = vunpack.c.l.s4 1983009808
      %v9411 = vunpack.c.0.s8 %v9410
      %v9412 = vlaneseq
      %v9413 = vshrl.u32 %v9412, 7
      %v9414 = vsub.s32 %v9411, %v9413
      %v9415 = vrot.slane %v9401, %v9414
      %v9416 = vcombine.high %v9408, %v9408
      %v9417 = vcombine.high %v9415, %v9415
      %v9450 = vadd.f32 %v9075, %v9289
      %v9451 = vadd.f32 %v9083, %v9297
      %v9452 = vadd.f32 %v9082, %v9296
      %v9453 = vadd.f32 %v9084, %v9298
      %v9454 = vadd.f32 %v9100, %v9306
      %v9455 = vadd.f32 %v9099, %v9314
      %v9456 = vadd.f32 %v9101, %v9313
      %v9457 = vadd.f32 %v9109, %v9315
      %v9458 = vadd.f32 %v9116, %v9323
      %v9459 = vadd.f32 %v9117, %v9331
      %v9460 = vadd.f32 %v9125, %v9330
      %v9461 = vadd.f32 %v9133, %v9332
      %v9462 = vadd.f32 %v9134, %v9340
      %v9463 = vadd.f32 %v9142, %v9348
      %v9464 = vadd.f32 %v9150, %v9347
      %v9465 = vadd.f32 %v9149, %v9349
      %v9466 = vadd.f32 %v9158, %v9357
      %v9467 = vadd.f32 %v9166, %v9365
      %v9468 = vadd.f32 %v9165, %v9364
      %v9469 = vadd.f32 %v9167, %v9366
      %v9470 = vadd.f32 %v9183, %v9374
      %v9471 = vadd.f32 %v9182, %v9382
      %v9472 = vadd.f32 %v9184, %v9381
      %v9473 = vadd.f32 %v9192, %v9383
      %v9474 = vadd.f32 %v9199, %v9391
      %v9475 = vadd.f32 %v9200, %v9399
      %v9476 = vadd.f32 %v9208, %v9398
      %v9477 = vadd.f32 %v9216, %v9400
      %v9478 = vadd.f32 %v9217, %v9408
      %v9479 = vadd.f32 %v9225, %v9416
      %v9480 = vadd.f32 %v9233, %v9415
      %v9481 = vadd.f32 %v9232, %v9417
      %v9514 = vcombine.low %v9450, %v9451
      %v9515 = vcombine.low %v9452, %v9453
      %v9517 = vunpack.c.l.s4 1983009808
      %v9518 = vunpack.c.0.s8 %v9517
      %v9519 = vlaneseq
      %v9520 = vshrl.u32 %v9519, 7
      %v9521 = vsub.s32 %v9518, %v9520
      %v9522 = vrot.slane %v9514, %v9521
      %v9524 = vunpack.c.l.s4 1983009808
      %v9525 = vunpack.c.0.s8 %v9524
      %v9526 = vlaneseq
      %v9527 = vshrl.u32 %v9526, 7
      %v9528 = vsub.s32 %v9525, %v9527
      %v9529 = vrot.slane %v9515, %v9528
      %v9530 = vcombine.low %v9522, %v9529
      %v9531 = vcombine.low %v9454, %v9455
      %v9532 = vcombine.low %v9456, %v9457
      %v9534 = vunpack.c.l.s4 1983009808
      %v9535 = vunpack.c.0.s8 %v9534
      %v9536 = vlaneseq
      %v9537 = vshrl.u32 %v9536, 7
      %v9538 = vsub.s32 %v9535, %v9537
      %v9539 = vrot.slane %v9531, %v9538
      %v9541 = vunpack.c.l.s4 1983009808
      %v9542 = vunpack.c.0.s8 %v9541
      %v9543 = vlaneseq
      %v9544 = vshrl.u32 %v9543, 7
      %v9545 = vsub.s32 %v9542, %v9544
      %v9546 = vrot.slane %v9532, %v9545
      %v9547 = vcombine.low %v9539, %v9546
      %v9548 = vcombine.low %v9458, %v9459
      %v9549 = vcombine.low %v9460, %v9461
      %v9551 = vunpack.c.l.s4 1983009808
      %v9552 = vunpack.c.0.s8 %v9551
      %v9553 = vlaneseq
      %v9554 = vshrl.u32 %v9553, 7
      %v9555 = vsub.s32 %v9552, %v9554
      %v9556 = vrot.slane %v9548, %v9555
      %v9558 = vunpack.c.l.s4 1983009808
      %v9559 = vunpack.c.0.s8 %v9558
      %v9560 = vlaneseq
      %v9561 = vshrl.u32 %v9560, 7
      %v9562 = vsub.s32 %v9559, %v9561
      %v9563 = vrot.slane %v9549, %v9562
      %v9564 = vcombine.low %v9556, %v9563
      %v9565 = vcombine.low %v9462, %v9463
      %v9566 = vcombine.low %v9464, %v9465
      %v9568 = vunpack.c.l.s4 1983009808
      %v9569 = vunpack.c.0.s8 %v9568
      %v9570 = vlaneseq
      %v9571 = vshrl.u32 %v9570, 7
      %v9572 = vsub.s32 %v9569, %v9571
      %v9573 = vrot.slane %v9565, %v9572
      %v9575 = vunpack.c.l.s4 1983009808
      %v9576 = vunpack.c.0.s8 %v9575
      %v9577 = vlaneseq
      %v9578 = vshrl.u32 %v9577, 7
      %v9579 = vsub.s32 %v9576, %v9578
      %v9580 = vrot.slane %v9566, %v9579
      %v9581 = vcombine.low %v9573, %v9580
      %v9582 = vcombine.low %v9466, %v9467
      %v9583 = vcombine.low %v9468, %v9469
      %v9585 = vunpack.c.l.s4 1983009808
      %v9586 = vunpack.c.0.s8 %v9585
      %v9587 = vlaneseq
      %v9588 = vshrl.u32 %v9587, 7
      %v9589 = vsub.s32 %v9586, %v9588
      %v9590 = vrot.slane %v9582, %v9589
      %v9592 = vunpack.c.l.s4 1983009808
      %v9593 = vunpack.c.0.s8 %v9592
      %v9594 = vlaneseq
      %v9595 = vshrl.u32 %v9594, 7
      %v9596 = vsub.s32 %v9593, %v9595
      %v9597 = vrot.slane %v9583, %v9596
      %v9598 = vcombine.low %v9590, %v9597
      %v9599 = vcombine.low %v9470, %v9471
      %v9600 = vcombine.low %v9472, %v9473
      %v9602 = vunpack.c.l.s4 1983009808
      %v9603 = vunpack.c.0.s8 %v9602
      %v9604 = vlaneseq
      %v9605 = vshrl.u32 %v9604, 7
      %v9606 = vsub.s32 %v9603, %v9605
      %v9607 = vrot.slane %v9599, %v9606
      %v9609 = vunpack.c.l.s4 1983009808
      %v9610 = vunpack.c.0.s8 %v9609
      %v9611 = vlaneseq
      %v9612 = vshrl.u32 %v9611, 7
      %v9613 = vsub.s32 %v9610, %v9612
      %v9614 = vrot.slane %v9600, %v9613
      %v9615 = vcombine.low %v9607, %v9614
      %v9616 = vcombine.low %v9474, %v9475
      %v9617 = vcombine.low %v9476, %v9477
      %v9619 = vunpack.c.l.s4 1983009808
      %v9620 = vunpack.c.0.s8 %v9619
      %v9621 = vlaneseq
      %v9622 = vshrl.u32 %v9621, 7
      %v9623 = vsub.s32 %v9620, %v9622
      %v9624 = vrot.slane %v9616, %v9623
      %v9626 = vunpack.c.l.s4 1983009808
      %v9627 = vunpack.c.0.s8 %v9626
      %v9628 = vlaneseq
      %v9629 = vshrl.u32 %v9628, 7
      %v9630 = vsub.s32 %v9627, %v9629
      %v9631 = vrot.slane %v9617, %v9630
      %v9632 = vcombine.low %v9624, %v9631
      %v9633 = vcombine.low %v9478, %v9479
      %v9634 = vcombine.low %v9480, %v9481
      %v9636 = vunpack.c.l.s4 1983009808
      %v9637 = vunpack.c.0.s8 %v9636
      %v9638 = vlaneseq
      %v9639 = vshrl.u32 %v9638, 7
      %v9640 = vsub.s32 %v9637, %v9639
      %v9641 = vrot.slane %v9633, %v9640
      %v9643 = vunpack.c.l.s4 1983009808
      %v9644 = vunpack.c.0.s8 %v9643
      %v9645 = vlaneseq
      %v9646 = vshrl.u32 %v9645, 7
      %v9647 = vsub.s32 %v9644, %v9646
      %v9648 = vrot.slane %v9634, %v9647
      %v9649 = vcombine.low %v9641, %v9648
      %v9658 = vpack.c.bf16 %v9530, %v9530
      %v9659 = vpack.c.bf16 %v9547, %v9547
      %v9660 = vpack.c.bf16 %v9564, %v9564
      %v9661 = vpack.c.bf16 %v9581, %v9581
      %v9662 = vpack.c.bf16 %v9598, %v9598
      %v9663 = vpack.c.bf16 %v9615, %v9615
      %v9664 = vpack.c.bf16 %v9632, %v9632
      %v9665 = vpack.c.bf16 %v9649, %v9649
      %9666 = vst [vmem:[%s170] sm:$0xf] %v9658
      %9667 = vst [vmem:[%s170 + $0x4] sm:$0xf] %v9659
      %9668 = vst [vmem:[%s170 + $0x8] sm:$0xf] %v9660
      %9669 = vst [vmem:[%s170 + $0xc] sm:$0xf] %v9661
      %9670 = vst [vmem:[%s170 + $0x10] sm:$0xf] %v9662
      %9671 = vst [vmem:[%s170 + $0x14] sm:$0xf] %v9663
      %9672 = vst [vmem:[%s170 + $0x18] sm:$0xf] %v9664
      %9673 = vst [vmem:[%s170 + $0x1c] sm:$0xf] %v9665
      %p9674 = scmp.lt.s32.totalorder %s14, 1
      %s9675 = scalar_select %p9674, %s14, 1
      %s9676 = smul.addr %s9675, 8
      %s9677 = smul.addr %s9676, 4
      %s9678 = scalar_lea.vmem %s3, %s9677
      // Predicated region
      $region33: #{fea_encoder_pallas.3} parent=31 // pred_check
        %p9679 = pneg %p100
      $region34: #{fea_encoder_pallas.3} parent=31 // pred_check_branch
        %9681 = sbr.rel (%p9679) target = $region36
      $region35: #{fea_encoder_pallas.3} parent=31 // pred_region
        _
      $region36: #{fea_encoder_pallas.3} parent=31 // pred_fallthru
        _
    $region32: #{fea_encoder_pallas.3} parent=5 // pred_fallthru
      _
    %p9682 = scmp.le.s32.totalorder 2, %s9
    // Predicated region
    $region37: #{fea_encoder_pallas.3} parent=5 // pred_check
      %p9683 = pneg %p9682
    $region38: #{fea_encoder_pallas.3} parent=5 // pred_check_branch
      %9685 = sbr.rel (%p9683) target = $region40
    $region39: #{fea_encoder_pallas.3} parent=5 // pred_region
      %s9686 = ssub.s32 %s9, 2
      // Predicated region
      $region41: #{fea_encoder_pallas.3} parent=39 // pred_check
        %p9687 = pneg %p106
      $region42: #{fea_encoder_pallas.3} parent=39 // pred_check_branch
        %9689 = sbr.rel (%p9687) target = $region44
      $region43: #{fea_encoder_pallas.3} parent=39 // pred_region
        %p9690 = scmp.lt.s32.totalorder %s15, 1
        %s9691 = scalar_select %p9690, %s15, 1
        %s9692 = smul.addr %s9691, 8
        %s9693 = smul.addr %s9692, 4
        %s9694 = scalar_lea.vmem %s3, %s9693
      $region44: #{fea_encoder_pallas.3} parent=39 // pred_fallthru
        _
    $region40: #{fea_encoder_pallas.3} parent=5 // pred_fallthru
      _
  $region6: #{fea_encoder_pallas.3} parent=0 // loop_footer
    %s13 = sadd.s32 1, %s9
  $region7: #{fea_encoder_pallas.3} parent=0 // loop_footer_branch
    %8 = sbr.rel target = $region3
  $region8: #{fea_encoder_pallas.3} parent=0 // loop_exit
    _

</llo_original>
